<compile_context>
chip_gen: v7x
topology: tpu7x:2x2x1
jax: 0.10.0
libtpu: 0.0.40
codegen_flags: <defaults>
</compile_context>

<pallas_src>
import jax
import jax.numpy as jnp
from jax import lax
from jax.experimental import pallas as pl
from jax.experimental.pallas import tpu as pltpu

# ---- small-but-consistent config (module hard-codes n_embd=384 etc.; scaled down) ----
N_EMBD = 128
N_HEAD = 4
HEAD_SIZE = N_EMBD // N_HEAD
N_LAYER = 2
BLOCK_SIZE = 64      # T (sequence length == block_size)
VOCAB_SIZE = 65
VOCAB_PAD = 128      # lane-dense logits; sliced back to VOCAB_SIZE in the wrapper
BATCH = 2
LN_EPS = 1e-5        # PyTorch nn.LayerNorm default
MASK_VALUE = -1e30   # plain Python float -> stays a jaxpr literal (no captured constant)


def _layernorm(x, g, b):
    mu = jnp.mean(x, axis=-1, keepdims=True)
    var = jnp.mean((x - mu) ** 2, axis=-1, keepdims=True)
    return (x - mu) * lax.rsqrt(var + LN_EPS) * g + b


# ----------------------------- fused Pallas kernel ------------------------------------

def make_fused_forward_kernel(nb):
    """nb = sequences handled per grid step (batch-folded: nb=B; per-core: nb=1)."""
    T, C = BLOCK_SIZE, N_EMBD
    M = nb * T
    scale = float(C) ** (-0.5)   # NB: reference scales by n_embd, not head_size (matches spec)

    def kernel(x_ref, ln1_ref, wqkv_ref, wproj_ref, bproj_ref,
               ln2_ref, w1_ref, b1_ref, w2_ref, b2_ref,
               lnf_ref, wlm_ref, blm_ref, o_ref):
        # Fold batch into the M dim of every dense matmul (M = nb*T).
        x = x_ref[...].reshape(M, C)                         # (M, C) float32

        # Causal additive mask bias built exactly once (shared by all layers/heads/seqs).
        row = lax.broadcasted_iota(jnp.int32, (T, T), 0)
        col = lax.broadcasted_iota(jnp.int32, (T, T), 1)
        mask_bias = (col > row).astype(jnp.float32) * MASK_VALUE   # 0 allowed / -1e30 future

        for l in range(N_LAYER):                              # static unroll over layers
            # --- self-attention: x = x + proj(concat_heads(attn(ln1(x)))) + b_proj ---
            gb1 = ln1_ref[l]                                  # (2, C): [gamma; beta]
            xn = _layernorm(x, gb1[0:1], gb1[1:2])
            qkv = jnp.dot(xn.astype(jnp.bfloat16), wqkv_ref[l],
                          preferred_element_type=jnp.float32)          # (M, 3C)
            # scale folded into Q once; single bf16 cast per operand per layer
            q_bf = (qkv[:, :C] * scale).astype(jnp.bfloat16)
            k_bf = qkv[:, C:2 * C].astype(jnp.bfloat16)
            v_bf = qkv[:, 2 * C:].astype(jnp.bfloat16)

            attn_rows = []
            for b in range(nb):                               # static unroll: per-sequence
                r0 = b * T
                outs = []
                for h in range(N_HEAD):                       # static unroll over heads
                    lo = h * HEAD_SIZE
                    qh = q_bf[r0:r0 + T, lo:lo + HEAD_SIZE]
                    kh = k_bf[r0:r0 + T, lo:lo + HEAD_SIZE]
                    vh = v_bf[r0:r0 + T, lo:lo + HEAD_SIZE]
                    # NT matmul: contract on dim 1 of both -> no explicit kh.T transpose
                    s = lax.dot_general(qh, kh, (((1,), (1,)), ((), ())),
                                        preferred_element_type=jnp.float32)  # (T, T)
                    s = s + mask_bias
                    m = jnp.max(s, axis=-1, keepdims=True)
                    p = jnp.exp(s - m)
                    denom = jnp.sum(p, axis=-1, keepdims=True)
                    p = p * pl.reciprocal(denom, approx=True)  # EUP, no VPU divide
                    # attention dropout: identity at inference
                    outs.append(jnp.dot(p.astype(jnp.bfloat16), vh,
                                        preferred_element_type=jnp.float32
                                        ).astype(jnp.bfloat16))             # (T, D)
                attn_rows.append(jnp.concatenate(outs, axis=-1))            # (T, C) bf16
            attn_cat = attn_rows[0] if nb == 1 else jnp.concatenate(attn_rows, axis=0)
            # ONE full-K (K=C) output projection instead of N_HEAD partial K=D matmuls
            sa = jnp.dot(attn_cat, wproj_ref[l],
                         preferred_element_type=jnp.float32) + bproj_ref[l]  # (M, C)
            x = x + sa                                         # proj dropout: identity

            # --- feed-forward: x = x + W2 relu(W1 ln2(x) + b1) + b2 ---
            gb2 = ln2_ref[l]
            xn2 = _layernorm(x, gb2[0:1], gb2[1:2])
            h1 = jnp.dot(xn2.astype(jnp.bfloat16), w1_ref[l],
                         preferred_element_type=jnp.float32) + b1_ref[l]
            h1 = jnp.maximum(h1, 0.0)
            ff = jnp.dot(h1.astype(jnp.bfloat16), w2_ref[l],
                         preferred_element_type=jnp.float32) + b2_ref[l]
            x = x + ff                                         # ffn dropout: identity

        # --- final LayerNorm + lm_head (vocab padded to 128 lanes -> lane-dense store) ---
        lnf = lnf_ref[...]
        xn = _layernorm(x, lnf[0:1], lnf[1:2])
        logits = jnp.dot(xn.astype(jnp.bfloat16), wlm_ref[...],
                         preferred_element_type=jnp.float32) + blm_ref[...]
        o_ref[...] = logits.reshape(nb, T, VOCAB_PAD)

    return kernel


# ----------------------------- wrapper -------------------------------------------------

def _use_batch_grid():
    """grid=(B,) + parallel semantics only pays off on chips with >1 TensorCore (v7x)."""
    try:
        kind = jax.devices()[0].device_kind.lower()
    except Exception:
        return False
    return ("v7" in kind) or ("7x" in kind)


def bigram_lm_forward(idx, params, *, batch_grid=None):
    """idx: (B, T) int32 token ids.  Returns logits (B, T, VOCAB_SIZE).  targets=None path."""
    B, T = idx.shape
    tok_emb = jnp.take(params["tok_table"], idx, axis=0)          # (B, T, C) - glue gather
    pos_emb = params["pos_table"][:T]                             # (T, C)
    x = (tok_emb + pos_emb[None, :, :]).astype(jnp.float32)

    if batch_grid is None:
        batch_grid = _use_batch_grid()
    nb = 1 if batch_grid else B        # sequences per grid step
    steps = B // nb

    weights = [params["ln1"], params["wqkv"], params["wproj"], params["bproj"],
               params["ln2"], params["w1"], params["b1"], params["w2"], params["b2"],
               params["lnf"], params["wlm"], params["blm"]]

    # NOTE: weight index_maps are constant across the grid; pipeline_mode=pl.Buffered(1)
    # would halve their VMEM footprint but is irrelevant at this (<1 MiB) size.
    def wspec(a):
        nd = a.ndim
        return pl.BlockSpec(a.shape, lambda i: (0,) * nd)

    logits_pad = pl.pallas_call(
        make_fused_forward_kernel(nb),
        out_shape=jax.ShapeDtypeStruct((B, T, VOCAB_PAD), jnp.float32),
        grid_spec=pltpu.PrefetchScalarGridSpec(
            num_scalar_prefetch=0,
            grid=(steps,),
            in_specs=[pl.BlockSpec((nb, T, N_EMBD), lambda i: (i, 0, 0))]
                     + [wspec(w) for w in weights],
            out_specs=pl.BlockSpec((nb, T, VOCAB_PAD), lambda i: (i, 0, 0)),
        ),
        compiler_params=pltpu.CompilerParams(
            dimension_semantics=("parallel",) if batch_grid else ("arbitrary",)),
    )(x, *weights)

    # TODO(synk): cross-entropy loss branch (targets is not None) and generate() sampling
    # loop are not implemented; forward returns logits only.
    return logits_pad[:, :, :VOCAB_SIZE]


# ----------------------------- deterministic parameter init ---------------------------

def init_params(key):
    kit = iter(jax.random.split(key, 16))

    def nrm(shape, dtype=jnp.float32):
        return (0.02 * jax.random.normal(next(kit), shape)).astype(dtype)

    def ln_init():   # distinct array per call (no ln1/ln2 aliasing)
        return jnp.stack([jnp.ones((N_LAYER, N_EMBD), jnp.float32),
                          jnp.zeros((N_LAYER, N_EMBD), jnp.float32)], axis=1)   # (L, 2, C)

    params = {
        "tok_table": nrm((VOCAB_SIZE, N_EMBD)),
        "pos_table": nrm((BLOCK_SIZE, N_EMBD)),
        # stacked per-layer weights; matmul weights stored bf16 (MXU inputs), biases/LN f32
        "ln1": ln_init(),
        "ln2": ln_init(),
        "wqkv": nrm((N_LAYER, N_EMBD, 3 * N_EMBD), jnp.bfloat16),   # fused q|k|v
        "wproj": nrm((N_LAYER, N_EMBD, N_EMBD), jnp.bfloat16),      # rows = [head0|head1|...]
        "bproj": nrm((N_LAYER, 1, N_EMBD)),
        "w1": nrm((N_LAYER, N_EMBD, 4 * N_EMBD), jnp.bfloat16),
        "b1": nrm((N_LAYER, 1, 4 * N_EMBD)),
        "w2": nrm((N_LAYER, 4 * N_EMBD, N_EMBD), jnp.bfloat16),
        "b2": nrm((N_LAYER, 1, N_EMBD)),
        "lnf": jnp.concatenate([jnp.ones((1, N_EMBD), jnp.float32),
                                jnp.zeros((1, N_EMBD), jnp.float32)], axis=0),   # (2, C)
        "wlm": jnp.pad(nrm((N_EMBD, VOCAB_SIZE), jnp.bfloat16),
                       ((0, 0), (0, VOCAB_PAD - VOCAB_SIZE))),
        "blm": jnp.pad(nrm((1, VOCAB_SIZE)), ((0, 0), (0, VOCAB_PAD - VOCAB_SIZE))),
    }
    return params


# ----------------------------- pure-JAX reference (same numeric recipe) ---------------

def _ref_forward(idx, params):
    B, T = idx.shape
    C = N_EMBD
    x = (jnp.take(params["tok_table"], idx, axis=0)
         + params["pos_table"][:T][None]).astype(jnp.float32)
    causal = jnp.tril(jnp.ones((T, T), bool))
    scale = C ** (-0.5)
    for l in range(N_LAYER):
        gb1 = params["ln1"][l]
        xn = _layernorm(x, gb1[0:1], gb1[1:2])
        qkv = jnp.einsum("btc,cd->btd", xn.astype(jnp.bfloat16), params["wqkv"][l],
                         preferred_element_type=jnp.float32)
        q = (qkv[..., :C] * scale).astype(jnp.bfloat16)
        k = qkv[..., C:2 * C].astype(jnp.bfloat16)
        v = qkv[..., 2 * C:].astype(jnp.bfloat16)
        outs = []
        for h in range(N_HEAD):
            lo = h * HEAD_SIZE
            s = jnp.einsum("btd,bsd->bts", q[..., lo:lo + HEAD_SIZE],
                           k[..., lo:lo + HEAD_SIZE],
                           preferred_element_type=jnp.float32)
            s = jnp.where(causal, s, MASK_VALUE)
            p = jax.nn.softmax(s, axis=-1)
            outs.append(jnp.einsum("bts,bsd->btd", p.astype(jnp.bfloat16),
                                   v[..., lo:lo + HEAD_SIZE],
                                   preferred_element_type=jnp.float32).astype(jnp.bfloat16))
        cat = jnp.concatenate(outs, axis=-1)                       # (B, T, C) bf16
        sa = jnp.einsum("btc,cd->btd", cat, params["wproj"][l],
                        preferred_element_type=jnp.float32) + params["bproj"][l]
        x = x + sa
        gb2 = params["ln2"][l]
        xn2 = _layernorm(x, gb2[0:1], gb2[1:2])
        h1 = jnp.einsum("btc,cd->btd", xn2.astype(jnp.bfloat16), params["w1"][l],
                        preferred_element_type=jnp.float32) + params["b1"][l]
        h1 = jnp.maximum(h1, 0.0)
        ff = jnp.einsum("btd,dc->btc", h1.astype(jnp.bfloat16), params["w2"][l],
                        preferred_element_type=jnp.float32) + params["b2"][l]
        x = x + ff
    lnf = params["lnf"]
    xn = _layernorm(x, lnf[0:1], lnf[1:2])
    logits = jnp.einsum("btc,cv->btv", xn.astype(jnp.bfloat16), params["wlm"],
                        preferred_element_type=jnp.float32) + params["blm"]
    return logits[:, :, :VOCAB_SIZE]


# ----------------------------- main ----------------------------------------------------

if __name__ == "__main__":
    key = jax.random.PRNGKey(0)
    pkey, ikey = jax.random.split(key)
    params = init_params(pkey)

    idx = jax.random.randint(ikey, (BATCH, BLOCK_SIZE), 0, VOCAB_SIZE, dtype=jnp.int32)

    logits = jax.block_until_ready(bigram_lm_forward(idx, params))
    assert logits.shape == (BATCH, BLOCK_SIZE, VOCAB_SIZE), logits.shape
    assert bool(jnp.all(jnp.isfinite(logits)))

    ref = jax.block_until_ready(_ref_forward(idx, params))
    max_err = float(jnp.max(jnp.abs(logits - ref)))
    assert bool(jnp.allclose(logits, ref, atol=2e-2, rtol=2e-2)), max_err

    print("KERNEL_OK")
</pallas_src>

<mosaic_0001>
module attributes {stable_mosaic.version = 11 : i64} {
  func.func @kernel(%arg0: i32, %arg1: memref<2x64x128xf32, #tpu.memory_space<vmem>>, %arg2: memref<2x2x128xf32, #tpu.memory_space<vmem>>, %arg3: memref<2x128x384xbf16, #tpu.memory_space<vmem>>, %arg4: memref<2x128x128xbf16, #tpu.memory_space<vmem>>, %arg5: memref<2x1x128xf32, #tpu.memory_space<vmem>>, %arg6: memref<2x2x128xf32, #tpu.memory_space<vmem>>, %arg7: memref<2x128x512xbf16, #tpu.memory_space<vmem>>, %arg8: memref<2x1x512xf32, #tpu.memory_space<vmem>>, %arg9: memref<2x512x128xbf16, #tpu.memory_space<vmem>>, %arg10: memref<2x1x128xf32, #tpu.memory_space<vmem>>, %arg11: memref<2x128xf32, #tpu.memory_space<vmem>>, %arg12: memref<128x128xbf16, #tpu.memory_space<vmem>>, %arg13: memref<1x128xf32, #tpu.memory_space<vmem>>, %arg14: memref<2x64x128xf32, #tpu.memory_space<vmem>>) attributes {dimension_semantics = [#tpu.dimension_semantics<arbitrary>], iteration_bounds = array<i64: 1>, scalar_prefetch = 0 : i64, scratch_operands = 0 : i64, tpu.core_type = #tpu.core_type<tc>, window_params = [{transform_indices = @transform_0, window_bounds = array<i64: 2, 64, 128>}, {pipeline_mode = #tpu.pipeline_mode<synchronous>, transform_indices = @transform_1, window_bounds = array<i64: 2, 2, 128>}, {pipeline_mode = #tpu.pipeline_mode<synchronous>, transform_indices = @transform_2, window_bounds = array<i64: 2, 128, 384>}, {pipeline_mode = #tpu.pipeline_mode<synchronous>, transform_indices = @transform_3, window_bounds = array<i64: 2, 128, 128>}, {pipeline_mode = #tpu.pipeline_mode<synchronous>, transform_indices = @transform_4, window_bounds = array<i64: 2, 1, 128>}, {pipeline_mode = #tpu.pipeline_mode<synchronous>, transform_indices = @transform_5, window_bounds = array<i64: 2, 2, 128>}, {pipeline_mode = #tpu.pipeline_mode<synchronous>, transform_indices = @transform_6, window_bounds = array<i64: 2, 128, 512>}, {pipeline_mode = #tpu.pipeline_mode<synchronous>, transform_indices = @transform_7, window_bounds = array<i64: 2, 1, 512>}, {pipeline_mode = #tpu.pipeline_mode<synchronous>, transform_indices = @transform_8, window_bounds = array<i64: 2, 512, 128>}, {pipeline_mode = #tpu.pipeline_mode<synchronous>, transform_indices = @transform_9, window_bounds = array<i64: 2, 1, 128>}, {pipeline_mode = #tpu.pipeline_mode<synchronous>, transform_indices = @transform_10, window_bounds = array<i64: 2, 128>}, {pipeline_mode = #tpu.pipeline_mode<synchronous>, transform_indices = @transform_11, window_bounds = array<i64: 128, 128>}, {pipeline_mode = #tpu.pipeline_mode<synchronous>, transform_indices = @transform_12, window_bounds = array<i64: 1, 128>}, {transform_indices = @transform_13, window_bounds = array<i64: 2, 64, 128>}]} {
    %c0 = arith.constant 0 : index
    %c0_0 = arith.constant 0 : index
    %c0_1 = arith.constant 0 : index
    %0 = vector.load %arg1[%c0, %c0_0, %c0_1] : memref<2x64x128xf32, #tpu.memory_space<vmem>>, vector<2x64x128xf32>
    %1 = vector.shape_cast %0 : vector<2x64x128xf32> to vector<128x128xf32>
    %2 = tpu.iota {dimensions = array<i32: 0>} : vector<64x64xi32>
    %3 = tpu.iota {dimensions = array<i32: 1>} : vector<64x64xi32>
    %4 = arith.cmpi sgt, %3, %2 : vector<64x64xi32>
    %5 = arith.extui %4 : vector<64x64xi1> to vector<64x64xi32>
    %6 = arith.sitofp %5 : vector<64x64xi32> to vector<64x64xf32>
    %cst = arith.constant -1.000000e+30 : f32
    %7 = vector.broadcast %cst : f32 to vector<64x64xf32>
    %8 = arith.mulf %6, %7 : vector<64x64xf32>
    %c0_2 = arith.constant 0 : index
    %c0_3 = arith.constant 0 : index
    %c0_4 = arith.constant 0 : index
    %9 = vector.load %arg2[%c0_2, %c0_3, %c0_4] : memref<2x2x128xf32, #tpu.memory_space<vmem>>, vector<1x2x128xf32>
    %10 = vector.shape_cast %9 : vector<1x2x128xf32> to vector<2x128xf32>
    %11 = vector.extract_strided_slice %10 {offsets = [0, 0], sizes = [1, 128], strides = [1, 1]} : vector<2x128xf32> to vector<1x128xf32>
    %12 = vector.extract_strided_slice %10 {offsets = [1, 0], sizes = [1, 128], strides = [1, 1]} : vector<2x128xf32> to vector<1x128xf32>
    %cst_5 = arith.constant dense<0.000000e+00> : vector<128xf32>
    %13 = vector.multi_reduction <add>, %1, %cst_5 [1] : vector<128x128xf32> to vector<128xf32>
    %14 = vector.shape_cast %13 : vector<128xf32> to vector<128x1xf32>
    %cst_6 = arith.constant 1.280000e+02 : f32
    %15 = vector.broadcast %cst_6 : f32 to vector<128x1xf32>
    %16 = arith.divf %14, %15 : vector<128x1xf32>
    %17 = vector.broadcast %16 : vector<128x1xf32> to vector<128x128xf32>
    %18 = arith.subf %1, %17 : vector<128x128xf32>
    %19 = arith.mulf %18, %18 : vector<128x128xf32>
    %cst_7 = arith.constant dense<0.000000e+00> : vector<128xf32>
    %20 = vector.multi_reduction <add>, %19, %cst_7 [1] : vector<128x128xf32> to vector<128xf32>
    %21 = vector.shape_cast %20 : vector<128xf32> to vector<128x1xf32>
    %cst_8 = arith.constant 1.280000e+02 : f32
    %22 = vector.broadcast %cst_8 : f32 to vector<128x1xf32>
    %23 = arith.divf %21, %22 : vector<128x1xf32>
    %24 = vector.broadcast %16 : vector<128x1xf32> to vector<128x128xf32>
    %25 = arith.subf %1, %24 : vector<128x128xf32>
    %cst_9 = arith.constant 9.99999974E-6 : f32
    %26 = vector.broadcast %cst_9 : f32 to vector<128x1xf32>
    %27 = arith.addf %23, %26 : vector<128x1xf32>
    %28 = math.rsqrt %27 : vector<128x1xf32>
    %29 = vector.broadcast %28 : vector<128x1xf32> to vector<128x128xf32>
    %30 = arith.mulf %25, %29 : vector<128x128xf32>
    %31 = vector.broadcast %11 : vector<1x128xf32> to vector<128x128xf32>
    %32 = arith.mulf %30, %31 : vector<128x128xf32>
    %33 = vector.broadcast %12 : vector<1x128xf32> to vector<128x128xf32>
    %34 = arith.addf %32, %33 : vector<128x128xf32>
    %35 = arith.truncf %34 : vector<128x128xf32> to vector<128x128xbf16>
    %c0_10 = arith.constant 0 : index
    %c0_11 = arith.constant 0 : index
    %c0_12 = arith.constant 0 : index
    %36 = vector.load %arg3[%c0_10, %c0_11, %c0_12] : memref<2x128x384xbf16, #tpu.memory_space<vmem>>, vector<1x128x384xbf16>
    %37 = vector.shape_cast %36 : vector<1x128x384xbf16> to vector<128x384xbf16>
    %cst_13 = arith.constant dense<0.000000e+00> : vector<128x384xf32>
    %38 = tpu.matmul %35, %37, %cst_13 {dimension_numbers = #tpu.dot_dimension_numbers<[1], [0], [0], [1], [0, 0, 1, 1], [], []>} : vector<128x128xbf16>, vector<128x384xbf16>, vector<128x384xf32> -> vector<128x384xf32>
    %39 = vector.extract_strided_slice %38 {offsets = [0, 0], sizes = [128, 128], strides = [1, 1]} : vector<128x384xf32> to vector<128x128xf32>
    %cst_14 = arith.constant 0.0883883461 : f32
    %40 = vector.broadcast %cst_14 : f32 to vector<128x128xf32>
    %41 = arith.mulf %39, %40 : vector<128x128xf32>
    %42 = arith.truncf %41 : vector<128x128xf32> to vector<128x128xbf16>
    %43 = vector.extract_strided_slice %38 {offsets = [0, 128], sizes = [128, 128], strides = [1, 1]} : vector<128x384xf32> to vector<128x128xf32>
    %44 = arith.truncf %43 : vector<128x128xf32> to vector<128x128xbf16>
    %45 = vector.extract_strided_slice %38 {offsets = [0, 256], sizes = [128, 128], strides = [1, 1]} : vector<128x384xf32> to vector<128x128xf32>
    %46 = arith.truncf %45 : vector<128x128xf32> to vector<128x128xbf16>
    %47 = vector.extract_strided_slice %42 {offsets = [0, 0], sizes = [64, 32], strides = [1, 1]} : vector<128x128xbf16> to vector<64x32xbf16>
    %48 = vector.extract_strided_slice %44 {offsets = [0, 0], sizes = [64, 32], strides = [1, 1]} : vector<128x128xbf16> to vector<64x32xbf16>
    %49 = vector.extract_strided_slice %46 {offsets = [0, 0], sizes = [64, 32], strides = [1, 1]} : vector<128x128xbf16> to vector<64x32xbf16>
    %cst_15 = arith.constant dense<0.000000e+00> : vector<64x64xf32>
    %50 = tpu.matmul %47, %48, %cst_15 {dimension_numbers = #tpu.dot_dimension_numbers<[1], [1], [0], [0], [0, 0, 1, 0], [], []>} : vector<64x32xbf16>, vector<64x32xbf16>, vector<64x64xf32> -> vector<64x64xf32>
    %51 = arith.addf %50, %8 : vector<64x64xf32>
    %cst_16 = arith.constant dense<0xFF800000> : vector<64xf32>
    %52 = vector.multi_reduction <maximumf>, %51, %cst_16 [1] : vector<64x64xf32> to vector<64xf32>
    %53 = vector.shape_cast %52 : vector<64xf32> to vector<64x1xf32>
    %54 = vector.broadcast %53 : vector<64x1xf32> to vector<64x64xf32>
    %55 = arith.subf %51, %54 : vector<64x64xf32>
    %56 = math.exp %55 : vector<64x64xf32>
    %cst_17 = arith.constant dense<0.000000e+00> : vector<64xf32>
    %57 = vector.multi_reduction <add>, %56, %cst_17 [1] : vector<64x64xf32> to vector<64xf32>
    %58 = vector.shape_cast %57 : vector<64xf32> to vector<64x1xf32>
    %59 = tpu.reciprocal %58 {approx = true} : vector<64x1xf32> -> vector<64x1xf32>
    %60 = vector.broadcast %59 : vector<64x1xf32> to vector<64x64xf32>
    %61 = arith.mulf %56, %60 : vector<64x64xf32>
    %62 = arith.truncf %61 : vector<64x64xf32> to vector<64x64xbf16>
    %cst_18 = arith.constant dense<0.000000e+00> : vector<64x32xf32>
    %63 = tpu.matmul %62, %49, %cst_18 {dimension_numbers = #tpu.dot_dimension_numbers<[1], [0], [0], [1], [0, 0, 1, 1], [], []>} : vector<64x64xbf16>, vector<64x32xbf16>, vector<64x32xf32> -> vector<64x32xf32>
    %64 = arith.truncf %63 : vector<64x32xf32> to vector<64x32xbf16>
    %65 = vector.extract_strided_slice %42 {offsets = [0, 32], sizes = [64, 32], strides = [1, 1]} : vector<128x128xbf16> to vector<64x32xbf16>
    %66 = vector.extract_strided_slice %44 {offsets = [0, 32], sizes = [64, 32], strides = [1, 1]} : vector<128x128xbf16> to vector<64x32xbf16>
    %67 = vector.extract_strided_slice %46 {offsets = [0, 32], sizes = [64, 32], strides = [1, 1]} : vector<128x128xbf16> to vector<64x32xbf16>
    %cst_19 = arith.constant dense<0.000000e+00> : vector<64x64xf32>
    %68 = tpu.matmul %65, %66, %cst_19 {dimension_numbers = #tpu.dot_dimension_numbers<[1], [1], [0], [0], [0, 0, 1, 0], [], []>} : vector<64x32xbf16>, vector<64x32xbf16>, vector<64x64xf32> -> vector<64x64xf32>
    %69 = arith.addf %68, %8 : vector<64x64xf32>
    %cst_20 = arith.constant dense<0xFF800000> : vector<64xf32>
    %70 = vector.multi_reduction <maximumf>, %69, %cst_20 [1] : vector<64x64xf32> to vector<64xf32>
    %71 = vector.shape_cast %70 : vector<64xf32> to vector<64x1xf32>
    %72 = vector.broadcast %71 : vector<64x1xf32> to vector<64x64xf32>
    %73 = arith.subf %69, %72 : vector<64x64xf32>
    %74 = math.exp %73 : vector<64x64xf32>
    %cst_21 = arith.constant dense<0.000000e+00> : vector<64xf32>
    %75 = vector.multi_reduction <add>, %74, %cst_21 [1] : vector<64x64xf32> to vector<64xf32>
    %76 = vector.shape_cast %75 : vector<64xf32> to vector<64x1xf32>
    %77 = tpu.reciprocal %76 {approx = true} : vector<64x1xf32> -> vector<64x1xf32>
    %78 = vector.broadcast %77 : vector<64x1xf32> to vector<64x64xf32>
    %79 = arith.mulf %74, %78 : vector<64x64xf32>
    %80 = arith.truncf %79 : vector<64x64xf32> to vector<64x64xbf16>
    %cst_22 = arith.constant dense<0.000000e+00> : vector<64x32xf32>
    %81 = tpu.matmul %80, %67, %cst_22 {dimension_numbers = #tpu.dot_dimension_numbers<[1], [0], [0], [1], [0, 0, 1, 1], [], []>} : vector<64x64xbf16>, vector<64x32xbf16>, vector<64x32xf32> -> vector<64x32xf32>
    %82 = arith.truncf %81 : vector<64x32xf32> to vector<64x32xbf16>
    %83 = vector.extract_strided_slice %42 {offsets = [0, 64], sizes = [64, 32], strides = [1, 1]} : vector<128x128xbf16> to vector<64x32xbf16>
    %84 = vector.extract_strided_slice %44 {offsets = [0, 64], sizes = [64, 32], strides = [1, 1]} : vector<128x128xbf16> to vector<64x32xbf16>
    %85 = vector.extract_strided_slice %46 {offsets = [0, 64], sizes = [64, 32], strides = [1, 1]} : vector<128x128xbf16> to vector<64x32xbf16>
    %cst_23 = arith.constant dense<0.000000e+00> : vector<64x64xf32>
    %86 = tpu.matmul %83, %84, %cst_23 {dimension_numbers = #tpu.dot_dimension_numbers<[1], [1], [0], [0], [0, 0, 1, 0], [], []>} : vector<64x32xbf16>, vector<64x32xbf16>, vector<64x64xf32> -> vector<64x64xf32>
    %87 = arith.addf %86, %8 : vector<64x64xf32>
    %cst_24 = arith.constant dense<0xFF800000> : vector<64xf32>
    %88 = vector.multi_reduction <maximumf>, %87, %cst_24 [1] : vector<64x64xf32> to vector<64xf32>
    %89 = vector.shape_cast %88 : vector<64xf32> to vector<64x1xf32>
    %90 = vector.broadcast %89 : vector<64x1xf32> to vector<64x64xf32>
    %91 = arith.subf %87, %90 : vector<64x64xf32>
    %92 = math.exp %91 : vector<64x64xf32>
    %cst_25 = arith.constant dense<0.000000e+00> : vector<64xf32>
    %93 = vector.multi_reduction <add>, %92, %cst_25 [1] : vector<64x64xf32> to vector<64xf32>
    %94 = vector.shape_cast %93 : vector<64xf32> to vector<64x1xf32>
    %95 = tpu.reciprocal %94 {approx = true} : vector<64x1xf32> -> vector<64x1xf32>
    %96 = vector.broadcast %95 : vector<64x1xf32> to vector<64x64xf32>
    %97 = arith.mulf %92, %96 : vector<64x64xf32>
    %98 = arith.truncf %97 : vector<64x64xf32> to vector<64x64xbf16>
    %cst_26 = arith.constant dense<0.000000e+00> : vector<64x32xf32>
    %99 = tpu.matmul %98, %85, %cst_26 {dimension_numbers = #tpu.dot_dimension_numbers<[1], [0], [0], [1], [0, 0, 1, 1], [], []>} : vector<64x64xbf16>, vector<64x32xbf16>, vector<64x32xf32> -> vector<64x32xf32>
    %100 = arith.truncf %99 : vector<64x32xf32> to vector<64x32xbf16>
    %101 = vector.extract_strided_slice %42 {offsets = [0, 96], sizes = [64, 32], strides = [1, 1]} : vector<128x128xbf16> to vector<64x32xbf16>
    %102 = vector.extract_strided_slice %44 {offsets = [0, 96], sizes = [64, 32], strides = [1, 1]} : vector<128x128xbf16> to vector<64x32xbf16>
    %103 = vector.extract_strided_slice %46 {offsets = [0, 96], sizes = [64, 32], strides = [1, 1]} : vector<128x128xbf16> to vector<64x32xbf16>
    %cst_27 = arith.constant dense<0.000000e+00> : vector<64x64xf32>
    %104 = tpu.matmul %101, %102, %cst_27 {dimension_numbers = #tpu.dot_dimension_numbers<[1], [1], [0], [0], [0, 0, 1, 0], [], []>} : vector<64x32xbf16>, vector<64x32xbf16>, vector<64x64xf32> -> vector<64x64xf32>
    %105 = arith.addf %104, %8 : vector<64x64xf32>
    %cst_28 = arith.constant dense<0xFF800000> : vector<64xf32>
    %106 = vector.multi_reduction <maximumf>, %105, %cst_28 [1] : vector<64x64xf32> to vector<64xf32>
    %107 = vector.shape_cast %106 : vector<64xf32> to vector<64x1xf32>
    %108 = vector.broadcast %107 : vector<64x1xf32> to vector<64x64xf32>
    %109 = arith.subf %105, %108 : vector<64x64xf32>
    %110 = math.exp %109 : vector<64x64xf32>
    %cst_29 = arith.constant dense<0.000000e+00> : vector<64xf32>
    %111 = vector.multi_reduction <add>, %110, %cst_29 [1] : vector<64x64xf32> to vector<64xf32>
    %112 = vector.shape_cast %111 : vector<64xf32> to vector<64x1xf32>
    %113 = tpu.reciprocal %112 {approx = true} : vector<64x1xf32> -> vector<64x1xf32>
    %114 = vector.broadcast %113 : vector<64x1xf32> to vector<64x64xf32>
    %115 = arith.mulf %110, %114 : vector<64x64xf32>
    %116 = arith.truncf %115 : vector<64x64xf32> to vector<64x64xbf16>
    %cst_30 = arith.constant dense<0.000000e+00> : vector<64x32xf32>
    %117 = tpu.matmul %116, %103, %cst_30 {dimension_numbers = #tpu.dot_dimension_numbers<[1], [0], [0], [1], [0, 0, 1, 1], [], []>} : vector<64x64xbf16>, vector<64x32xbf16>, vector<64x32xf32> -> vector<64x32xf32>
    %118 = arith.truncf %117 : vector<64x32xf32> to vector<64x32xbf16>
    %119 = tpu.concatenate %64, %82, %100, %118 in 1 : vector<64x32xbf16>, vector<64x32xbf16>, vector<64x32xbf16>, vector<64x32xbf16> -> vector<64x128xbf16>
    %120 = vector.extract_strided_slice %42 {offsets = [64, 0], sizes = [64, 32], strides = [1, 1]} : vector<128x128xbf16> to vector<64x32xbf16>
    %121 = vector.extract_strided_slice %44 {offsets = [64, 0], sizes = [64, 32], strides = [1, 1]} : vector<128x128xbf16> to vector<64x32xbf16>
    %122 = vector.extract_strided_slice %46 {offsets = [64, 0], sizes = [64, 32], strides = [1, 1]} : vector<128x128xbf16> to vector<64x32xbf16>
    %cst_31 = arith.constant dense<0.000000e+00> : vector<64x64xf32>
    %123 = tpu.matmul %120, %121, %cst_31 {dimension_numbers = #tpu.dot_dimension_numbers<[1], [1], [0], [0], [0, 0, 1, 0], [], []>} : vector<64x32xbf16>, vector<64x32xbf16>, vector<64x64xf32> -> vector<64x64xf32>
    %124 = arith.addf %123, %8 : vector<64x64xf32>
    %cst_32 = arith.constant dense<0xFF800000> : vector<64xf32>
    %125 = vector.multi_reduction <maximumf>, %124, %cst_32 [1] : vector<64x64xf32> to vector<64xf32>
    %126 = vector.shape_cast %125 : vector<64xf32> to vector<64x1xf32>
    %127 = vector.broadcast %126 : vector<64x1xf32> to vector<64x64xf32>
    %128 = arith.subf %124, %127 : vector<64x64xf32>
    %129 = math.exp %128 : vector<64x64xf32>
    %cst_33 = arith.constant dense<0.000000e+00> : vector<64xf32>
    %130 = vector.multi_reduction <add>, %129, %cst_33 [1] : vector<64x64xf32> to vector<64xf32>
    %131 = vector.shape_cast %130 : vector<64xf32> to vector<64x1xf32>
    %132 = tpu.reciprocal %131 {approx = true} : vector<64x1xf32> -> vector<64x1xf32>
    %133 = vector.broadcast %132 : vector<64x1xf32> to vector<64x64xf32>
    %134 = arith.mulf %129, %133 : vector<64x64xf32>
    %135 = arith.truncf %134 : vector<64x64xf32> to vector<64x64xbf16>
    %cst_34 = arith.constant dense<0.000000e+00> : vector<64x32xf32>
    %136 = tpu.matmul %135, %122, %cst_34 {dimension_numbers = #tpu.dot_dimension_numbers<[1], [0], [0], [1], [0, 0, 1, 1], [], []>} : vector<64x64xbf16>, vector<64x32xbf16>, vector<64x32xf32> -> vector<64x32xf32>
    %137 = arith.truncf %136 : vector<64x32xf32> to vector<64x32xbf16>
    %138 = vector.extract_strided_slice %42 {offsets = [64, 32], sizes = [64, 32], strides = [1, 1]} : vector<128x128xbf16> to vector<64x32xbf16>
    %139 = vector.extract_strided_slice %44 {offsets = [64, 32], sizes = [64, 32], strides = [1, 1]} : vector<128x128xbf16> to vector<64x32xbf16>
    %140 = vector.extract_strided_slice %46 {offsets = [64, 32], sizes = [64, 32], strides = [1, 1]} : vector<128x128xbf16> to vector<64x32xbf16>
    %cst_35 = arith.constant dense<0.000000e+00> : vector<64x64xf32>
    %141 = tpu.matmul %138, %139, %cst_35 {dimension_numbers = #tpu.dot_dimension_numbers<[1], [1], [0], [0], [0, 0, 1, 0], [], []>} : vector<64x32xbf16>, vector<64x32xbf16>, vector<64x64xf32> -> vector<64x64xf32>
    %142 = arith.addf %141, %8 : vector<64x64xf32>
    %cst_36 = arith.constant dense<0xFF800000> : vector<64xf32>
    %143 = vector.multi_reduction <maximumf>, %142, %cst_36 [1] : vector<64x64xf32> to vector<64xf32>
    %144 = vector.shape_cast %143 : vector<64xf32> to vector<64x1xf32>
    %145 = vector.broadcast %144 : vector<64x1xf32> to vector<64x64xf32>
    %146 = arith.subf %142, %145 : vector<64x64xf32>
    %147 = math.exp %146 : vector<64x64xf32>
    %cst_37 = arith.constant dense<0.000000e+00> : vector<64xf32>
    %148 = vector.multi_reduction <add>, %147, %cst_37 [1] : vector<64x64xf32> to vector<64xf32>
    %149 = vector.shape_cast %148 : vector<64xf32> to vector<64x1xf32>
    %150 = tpu.reciprocal %149 {approx = true} : vector<64x1xf32> -> vector<64x1xf32>
    %151 = vector.broadcast %150 : vector<64x1xf32> to vector<64x64xf32>
    %152 = arith.mulf %147, %151 : vector<64x64xf32>
    %153 = arith.truncf %152 : vector<64x64xf32> to vector<64x64xbf16>
    %cst_38 = arith.constant dense<0.000000e+00> : vector<64x32xf32>
    %154 = tpu.matmul %153, %140, %cst_38 {dimension_numbers = #tpu.dot_dimension_numbers<[1], [0], [0], [1], [0, 0, 1, 1], [], []>} : vector<64x64xbf16>, vector<64x32xbf16>, vector<64x32xf32> -> vector<64x32xf32>
    %155 = arith.truncf %154 : vector<64x32xf32> to vector<64x32xbf16>
    %156 = vector.extract_strided_slice %42 {offsets = [64, 64], sizes = [64, 32], strides = [1, 1]} : vector<128x128xbf16> to vector<64x32xbf16>
    %157 = vector.extract_strided_slice %44 {offsets = [64, 64], sizes = [64, 32], strides = [1, 1]} : vector<128x128xbf16> to vector<64x32xbf16>
    %158 = vector.extract_strided_slice %46 {offsets = [64, 64], sizes = [64, 32], strides = [1, 1]} : vector<128x128xbf16> to vector<64x32xbf16>
    %cst_39 = arith.constant dense<0.000000e+00> : vector<64x64xf32>
    %159 = tpu.matmul %156, %157, %cst_39 {dimension_numbers = #tpu.dot_dimension_numbers<[1], [1], [0], [0], [0, 0, 1, 0], [], []>} : vector<64x32xbf16>, vector<64x32xbf16>, vector<64x64xf32> -> vector<64x64xf32>
    %160 = arith.addf %159, %8 : vector<64x64xf32>
    %cst_40 = arith.constant dense<0xFF800000> : vector<64xf32>
    %161 = vector.multi_reduction <maximumf>, %160, %cst_40 [1] : vector<64x64xf32> to vector<64xf32>
    %162 = vector.shape_cast %161 : vector<64xf32> to vector<64x1xf32>
    %163 = vector.broadcast %162 : vector<64x1xf32> to vector<64x64xf32>
    %164 = arith.subf %160, %163 : vector<64x64xf32>
    %165 = math.exp %164 : vector<64x64xf32>
    %cst_41 = arith.constant dense<0.000000e+00> : vector<64xf32>
    %166 = vector.multi_reduction <add>, %165, %cst_41 [1] : vector<64x64xf32> to vector<64xf32>
    %167 = vector.shape_cast %166 : vector<64xf32> to vector<64x1xf32>
    %168 = tpu.reciprocal %167 {approx = true} : vector<64x1xf32> -> vector<64x1xf32>
    %169 = vector.broadcast %168 : vector<64x1xf32> to vector<64x64xf32>
    %170 = arith.mulf %165, %169 : vector<64x64xf32>
    %171 = arith.truncf %170 : vector<64x64xf32> to vector<64x64xbf16>
    %cst_42 = arith.constant dense<0.000000e+00> : vector<64x32xf32>
    %172 = tpu.matmul %171, %158, %cst_42 {dimension_numbers = #tpu.dot_dimension_numbers<[1], [0], [0], [1], [0, 0, 1, 1], [], []>} : vector<64x64xbf16>, vector<64x32xbf16>, vector<64x32xf32> -> vector<64x32xf32>
    %173 = arith.truncf %172 : vector<64x32xf32> to vector<64x32xbf16>
    %174 = vector.extract_strided_slice %42 {offsets = [64, 96], sizes = [64, 32], strides = [1, 1]} : vector<128x128xbf16> to vector<64x32xbf16>
    %175 = vector.extract_strided_slice %44 {offsets = [64, 96], sizes = [64, 32], strides = [1, 1]} : vector<128x128xbf16> to vector<64x32xbf16>
    %176 = vector.extract_strided_slice %46 {offsets = [64, 96], sizes = [64, 32], strides = [1, 1]} : vector<128x128xbf16> to vector<64x32xbf16>
    %cst_43 = arith.constant dense<0.000000e+00> : vector<64x64xf32>
    %177 = tpu.matmul %174, %175, %cst_43 {dimension_numbers = #tpu.dot_dimension_numbers<[1], [1], [0], [0], [0, 0, 1, 0], [], []>} : vector<64x32xbf16>, vector<64x32xbf16>, vector<64x64xf32> -> vector<64x64xf32>
    %178 = arith.addf %177, %8 : vector<64x64xf32>
    %cst_44 = arith.constant dense<0xFF800000> : vector<64xf32>
    %179 = vector.multi_reduction <maximumf>, %178, %cst_44 [1] : vector<64x64xf32> to vector<64xf32>
    %180 = vector.shape_cast %179 : vector<64xf32> to vector<64x1xf32>
    %181 = vector.broadcast %180 : vector<64x1xf32> to vector<64x64xf32>
    %182 = arith.subf %178, %181 : vector<64x64xf32>
    %183 = math.exp %182 : vector<64x64xf32>
    %cst_45 = arith.constant dense<0.000000e+00> : vector<64xf32>
    %184 = vector.multi_reduction <add>, %183, %cst_45 [1] : vector<64x64xf32> to vector<64xf32>
    %185 = vector.shape_cast %184 : vector<64xf32> to vector<64x1xf32>
    %186 = tpu.reciprocal %185 {approx = true} : vector<64x1xf32> -> vector<64x1xf32>
    %187 = vector.broadcast %186 : vector<64x1xf32> to vector<64x64xf32>
    %188 = arith.mulf %183, %187 : vector<64x64xf32>
    %189 = arith.truncf %188 : vector<64x64xf32> to vector<64x64xbf16>
    %cst_46 = arith.constant dense<0.000000e+00> : vector<64x32xf32>
    %190 = tpu.matmul %189, %176, %cst_46 {dimension_numbers = #tpu.dot_dimension_numbers<[1], [0], [0], [1], [0, 0, 1, 1], [], []>} : vector<64x64xbf16>, vector<64x32xbf16>, vector<64x32xf32> -> vector<64x32xf32>
    %191 = arith.truncf %190 : vector<64x32xf32> to vector<64x32xbf16>
    %192 = tpu.concatenate %137, %155, %173, %191 in 1 : vector<64x32xbf16>, vector<64x32xbf16>, vector<64x32xbf16>, vector<64x32xbf16> -> vector<64x128xbf16>
    %193 = tpu.concatenate %119, %192 in 0 : vector<64x128xbf16>, vector<64x128xbf16> -> vector<128x128xbf16>
    %c0_47 = arith.constant 0 : index
    %c0_48 = arith.constant 0 : index
    %c0_49 = arith.constant 0 : index
    %194 = vector.load %arg4[%c0_47, %c0_48, %c0_49] : memref<2x128x128xbf16, #tpu.memory_space<vmem>>, vector<1x128x128xbf16>
    %195 = vector.shape_cast %194 : vector<1x128x128xbf16> to vector<128x128xbf16>
    %cst_50 = arith.constant dense<0.000000e+00> : vector<128x128xf32>
    %196 = tpu.matmul %193, %195, %cst_50 {dimension_numbers = #tpu.dot_dimension_numbers<[1], [0], [0], [1], [0, 0, 1, 1], [], []>} : vector<128x128xbf16>, vector<128x128xbf16>, vector<128x128xf32> -> vector<128x128xf32>
    %c0_51 = arith.constant 0 : index
    %c0_52 = arith.constant 0 : index
    %c0_53 = arith.constant 0 : index
    %197 = vector.load %arg5[%c0_51, %c0_52, %c0_53] : memref<2x1x128xf32, #tpu.memory_space<vmem>>, vector<1x1x128xf32>
    %198 = vector.shape_cast %197 : vector<1x1x128xf32> to vector<1x128xf32>
    %199 = vector.broadcast %198 : vector<1x128xf32> to vector<128x128xf32>
    %200 = arith.addf %196, %199 : vector<128x128xf32>
    %201 = arith.addf %1, %200 : vector<128x128xf32>
    %c0_54 = arith.constant 0 : index
    %c0_55 = arith.constant 0 : index
    %c0_56 = arith.constant 0 : index
    %202 = vector.load %arg6[%c0_54, %c0_55, %c0_56] : memref<2x2x128xf32, #tpu.memory_space<vmem>>, vector<1x2x128xf32>
    %203 = vector.shape_cast %202 : vector<1x2x128xf32> to vector<2x128xf32>
    %204 = vector.extract_strided_slice %203 {offsets = [0, 0], sizes = [1, 128], strides = [1, 1]} : vector<2x128xf32> to vector<1x128xf32>
    %205 = vector.extract_strided_slice %203 {offsets = [1, 0], sizes = [1, 128], strides = [1, 1]} : vector<2x128xf32> to vector<1x128xf32>
    %cst_57 = arith.constant dense<0.000000e+00> : vector<128xf32>
    %206 = vector.multi_reduction <add>, %201, %cst_57 [1] : vector<128x128xf32> to vector<128xf32>
    %207 = vector.shape_cast %206 : vector<128xf32> to vector<128x1xf32>
    %cst_58 = arith.constant 1.280000e+02 : f32
    %208 = vector.broadcast %cst_58 : f32 to vector<128x1xf32>
    %209 = arith.divf %207, %208 : vector<128x1xf32>
    %210 = vector.broadcast %209 : vector<128x1xf32> to vector<128x128xf32>
    %211 = arith.subf %201, %210 : vector<128x128xf32>
    %212 = arith.mulf %211, %211 : vector<128x128xf32>
    %cst_59 = arith.constant dense<0.000000e+00> : vector<128xf32>
    %213 = vector.multi_reduction <add>, %212, %cst_59 [1] : vector<128x128xf32> to vector<128xf32>
    %214 = vector.shape_cast %213 : vector<128xf32> to vector<128x1xf32>
    %cst_60 = arith.constant 1.280000e+02 : f32
    %215 = vector.broadcast %cst_60 : f32 to vector<128x1xf32>
    %216 = arith.divf %214, %215 : vector<128x1xf32>
    %217 = vector.broadcast %209 : vector<128x1xf32> to vector<128x128xf32>
    %218 = arith.subf %201, %217 : vector<128x128xf32>
    %cst_61 = arith.constant 9.99999974E-6 : f32
    %219 = vector.broadcast %cst_61 : f32 to vector<128x1xf32>
    %220 = arith.addf %216, %219 : vector<128x1xf32>
    %221 = math.rsqrt %220 : vector<128x1xf32>
    %222 = vector.broadcast %221 : vector<128x1xf32> to vector<128x128xf32>
    %223 = arith.mulf %218, %222 : vector<128x128xf32>
    %224 = vector.broadcast %204 : vector<1x128xf32> to vector<128x128xf32>
    %225 = arith.mulf %223, %224 : vector<128x128xf32>
    %226 = vector.broadcast %205 : vector<1x128xf32> to vector<128x128xf32>
    %227 = arith.addf %225, %226 : vector<128x128xf32>
    %228 = arith.truncf %227 : vector<128x128xf32> to vector<128x128xbf16>
    %c0_62 = arith.constant 0 : index
    %c0_63 = arith.constant 0 : index
    %c0_64 = arith.constant 0 : index
    %229 = vector.load %arg7[%c0_62, %c0_63, %c0_64] : memref<2x128x512xbf16, #tpu.memory_space<vmem>>, vector<1x128x512xbf16>
    %230 = vector.shape_cast %229 : vector<1x128x512xbf16> to vector<128x512xbf16>
    %cst_65 = arith.constant dense<0.000000e+00> : vector<128x512xf32>
    %231 = tpu.matmul %228, %230, %cst_65 {dimension_numbers = #tpu.dot_dimension_numbers<[1], [0], [0], [1], [0, 0, 1, 1], [], []>} : vector<128x128xbf16>, vector<128x512xbf16>, vector<128x512xf32> -> vector<128x512xf32>
    %c0_66 = arith.constant 0 : index
    %c0_67 = arith.constant 0 : index
    %c0_68 = arith.constant 0 : index
    %232 = vector.load %arg8[%c0_66, %c0_67, %c0_68] : memref<2x1x512xf32, #tpu.memory_space<vmem>>, vector<1x1x512xf32>
    %233 = vector.shape_cast %232 : vector<1x1x512xf32> to vector<1x512xf32>
    %234 = vector.broadcast %233 : vector<1x512xf32> to vector<128x512xf32>
    %235 = arith.addf %231, %234 : vector<128x512xf32>
    %cst_69 = arith.constant 0.000000e+00 : f32
    %236 = vector.broadcast %cst_69 : f32 to vector<128x512xf32>
    %237 = arith.maximumf %235, %236 : vector<128x512xf32>
    %238 = arith.truncf %237 : vector<128x512xf32> to vector<128x512xbf16>
    %c0_70 = arith.constant 0 : index
    %c0_71 = arith.constant 0 : index
    %c0_72 = arith.constant 0 : index
    %239 = vector.load %arg9[%c0_70, %c0_71, %c0_72] : memref<2x512x128xbf16, #tpu.memory_space<vmem>>, vector<1x512x128xbf16>
    %240 = vector.shape_cast %239 : vector<1x512x128xbf16> to vector<512x128xbf16>
    %cst_73 = arith.constant dense<0.000000e+00> : vector<128x128xf32>
    %241 = tpu.matmul %238, %240, %cst_73 {dimension_numbers = #tpu.dot_dimension_numbers<[1], [0], [0], [1], [0, 0, 1, 1], [], []>} : vector<128x512xbf16>, vector<512x128xbf16>, vector<128x128xf32> -> vector<128x128xf32>
    %c0_74 = arith.constant 0 : index
    %c0_75 = arith.constant 0 : index
    %c0_76 = arith.constant 0 : index
    %242 = vector.load %arg10[%c0_74, %c0_75, %c0_76] : memref<2x1x128xf32, #tpu.memory_space<vmem>>, vector<1x1x128xf32>
    %243 = vector.shape_cast %242 : vector<1x1x128xf32> to vector<1x128xf32>
    %244 = vector.broadcast %243 : vector<1x128xf32> to vector<128x128xf32>
    %245 = arith.addf %241, %244 : vector<128x128xf32>
    %246 = arith.addf %201, %245 : vector<128x128xf32>
    %c1 = arith.constant 1 : index
    %c0_77 = arith.constant 0 : index
    %c0_78 = arith.constant 0 : index
    %247 = vector.load %arg2[%c1, %c0_77, %c0_78] : memref<2x2x128xf32, #tpu.memory_space<vmem>>, vector<1x2x128xf32>
    %248 = vector.shape_cast %247 : vector<1x2x128xf32> to vector<2x128xf32>
    %249 = vector.extract_strided_slice %248 {offsets = [0, 0], sizes = [1, 128], strides = [1, 1]} : vector<2x128xf32> to vector<1x128xf32>
    %250 = vector.extract_strided_slice %248 {offsets = [1, 0], sizes = [1, 128], strides = [1, 1]} : vector<2x128xf32> to vector<1x128xf32>
    %cst_79 = arith.constant dense<0.000000e+00> : vector<128xf32>
    %251 = vector.multi_reduction <add>, %246, %cst_79 [1] : vector<128x128xf32> to vector<128xf32>
    %252 = vector.shape_cast %251 : vector<128xf32> to vector<128x1xf32>
    %cst_80 = arith.constant 1.280000e+02 : f32
    %253 = vector.broadcast %cst_80 : f32 to vector<128x1xf32>
    %254 = arith.divf %252, %253 : vector<128x1xf32>
    %255 = vector.broadcast %254 : vector<128x1xf32> to vector<128x128xf32>
    %256 = arith.subf %246, %255 : vector<128x128xf32>
    %257 = arith.mulf %256, %256 : vector<128x128xf32>
    %cst_81 = arith.constant dense<0.000000e+00> : vector<128xf32>
    %258 = vector.multi_reduction <add>, %257, %cst_81 [1] : vector<128x128xf32> to vector<128xf32>
    %259 = vector.shape_cast %258 : vector<128xf32> to vector<128x1xf32>
    %cst_82 = arith.constant 1.280000e+02 : f32
    %260 = vector.broadcast %cst_82 : f32 to vector<128x1xf32>
    %261 = arith.divf %259, %260 : vector<128x1xf32>
    %262 = vector.broadcast %254 : vector<128x1xf32> to vector<128x128xf32>
    %263 = arith.subf %246, %262 : vector<128x128xf32>
    %cst_83 = arith.constant 9.99999974E-6 : f32
    %264 = vector.broadcast %cst_83 : f32 to vector<128x1xf32>
    %265 = arith.addf %261, %264 : vector<128x1xf32>
    %266 = math.rsqrt %265 : vector<128x1xf32>
    %267 = vector.broadcast %266 : vector<128x1xf32> to vector<128x128xf32>
    %268 = arith.mulf %263, %267 : vector<128x128xf32>
    %269 = vector.broadcast %249 : vector<1x128xf32> to vector<128x128xf32>
    %270 = arith.mulf %268, %269 : vector<128x128xf32>
    %271 = vector.broadcast %250 : vector<1x128xf32> to vector<128x128xf32>
    %272 = arith.addf %270, %271 : vector<128x128xf32>
    %273 = arith.truncf %272 : vector<128x128xf32> to vector<128x128xbf16>
    %c1_84 = arith.constant 1 : index
    %c0_85 = arith.constant 0 : index
    %c0_86 = arith.constant 0 : index
    %274 = vector.load %arg3[%c1_84, %c0_85, %c0_86] : memref<2x128x384xbf16, #tpu.memory_space<vmem>>, vector<1x128x384xbf16>
    %275 = vector.shape_cast %274 : vector<1x128x384xbf16> to vector<128x384xbf16>
    %cst_87 = arith.constant dense<0.000000e+00> : vector<128x384xf32>
    %276 = tpu.matmul %273, %275, %cst_87 {dimension_numbers = #tpu.dot_dimension_numbers<[1], [0], [0], [1], [0, 0, 1, 1], [], []>} : vector<128x128xbf16>, vector<128x384xbf16>, vector<128x384xf32> -> vector<128x384xf32>
    %277 = vector.extract_strided_slice %276 {offsets = [0, 0], sizes = [128, 128], strides = [1, 1]} : vector<128x384xf32> to vector<128x128xf32>
    %cst_88 = arith.constant 0.0883883461 : f32
    %278 = vector.broadcast %cst_88 : f32 to vector<128x128xf32>
    %279 = arith.mulf %277, %278 : vector<128x128xf32>
    %280 = arith.truncf %279 : vector<128x128xf32> to vector<128x128xbf16>
    %281 = vector.extract_strided_slice %276 {offsets = [0, 128], sizes = [128, 128], strides = [1, 1]} : vector<128x384xf32> to vector<128x128xf32>
    %282 = arith.truncf %281 : vector<128x128xf32> to vector<128x128xbf16>
    %283 = vector.extract_strided_slice %276 {offsets = [0, 256], sizes = [128, 128], strides = [1, 1]} : vector<128x384xf32> to vector<128x128xf32>
    %284 = arith.truncf %283 : vector<128x128xf32> to vector<128x128xbf16>
    %285 = vector.extract_strided_slice %280 {offsets = [0, 0], sizes = [64, 32], strides = [1, 1]} : vector<128x128xbf16> to vector<64x32xbf16>
    %286 = vector.extract_strided_slice %282 {offsets = [0, 0], sizes = [64, 32], strides = [1, 1]} : vector<128x128xbf16> to vector<64x32xbf16>
    %287 = vector.extract_strided_slice %284 {offsets = [0, 0], sizes = [64, 32], strides = [1, 1]} : vector<128x128xbf16> to vector<64x32xbf16>
    %cst_89 = arith.constant dense<0.000000e+00> : vector<64x64xf32>
    %288 = tpu.matmul %285, %286, %cst_89 {dimension_numbers = #tpu.dot_dimension_numbers<[1], [1], [0], [0], [0, 0, 1, 0], [], []>} : vector<64x32xbf16>, vector<64x32xbf16>, vector<64x64xf32> -> vector<64x64xf32>
    %289 = arith.addf %288, %8 : vector<64x64xf32>
    %cst_90 = arith.constant dense<0xFF800000> : vector<64xf32>
    %290 = vector.multi_reduction <maximumf>, %289, %cst_90 [1] : vector<64x64xf32> to vector<64xf32>
    %291 = vector.shape_cast %290 : vector<64xf32> to vector<64x1xf32>
    %292 = vector.broadcast %291 : vector<64x1xf32> to vector<64x64xf32>
    %293 = arith.subf %289, %292 : vector<64x64xf32>
    %294 = math.exp %293 : vector<64x64xf32>
    %cst_91 = arith.constant dense<0.000000e+00> : vector<64xf32>
    %295 = vector.multi_reduction <add>, %294, %cst_91 [1] : vector<64x64xf32> to vector<64xf32>
    %296 = vector.shape_cast %295 : vector<64xf32> to vector<64x1xf32>
    %297 = tpu.reciprocal %296 {approx = true} : vector<64x1xf32> -> vector<64x1xf32>
    %298 = vector.broadcast %297 : vector<64x1xf32> to vector<64x64xf32>
    %299 = arith.mulf %294, %298 : vector<64x64xf32>
    %300 = arith.truncf %299 : vector<64x64xf32> to vector<64x64xbf16>
    %cst_92 = arith.constant dense<0.000000e+00> : vector<64x32xf32>
    %301 = tpu.matmul %300, %287, %cst_92 {dimension_numbers = #tpu.dot_dimension_numbers<[1], [0], [0], [1], [0, 0, 1, 1], [], []>} : vector<64x64xbf16>, vector<64x32xbf16>, vector<64x32xf32> -> vector<64x32xf32>
    %302 = arith.truncf %301 : vector<64x32xf32> to vector<64x32xbf16>
    %303 = vector.extract_strided_slice %280 {offsets = [0, 32], sizes = [64, 32], strides = [1, 1]} : vector<128x128xbf16> to vector<64x32xbf16>
    %304 = vector.extract_strided_slice %282 {offsets = [0, 32], sizes = [64, 32], strides = [1, 1]} : vector<128x128xbf16> to vector<64x32xbf16>
    %305 = vector.extract_strided_slice %284 {offsets = [0, 32], sizes = [64, 32], strides = [1, 1]} : vector<128x128xbf16> to vector<64x32xbf16>
    %cst_93 = arith.constant dense<0.000000e+00> : vector<64x64xf32>
    %306 = tpu.matmul %303, %304, %cst_93 {dimension_numbers = #tpu.dot_dimension_numbers<[1], [1], [0], [0], [0, 0, 1, 0], [], []>} : vector<64x32xbf16>, vector<64x32xbf16>, vector<64x64xf32> -> vector<64x64xf32>
    %307 = arith.addf %306, %8 : vector<64x64xf32>
    %cst_94 = arith.constant dense<0xFF800000> : vector<64xf32>
    %308 = vector.multi_reduction <maximumf>, %307, %cst_94 [1] : vector<64x64xf32> to vector<64xf32>
    %309 = vector.shape_cast %308 : vector<64xf32> to vector<64x1xf32>
    %310 = vector.broadcast %309 : vector<64x1xf32> to vector<64x64xf32>
    %311 = arith.subf %307, %310 : vector<64x64xf32>
    %312 = math.exp %311 : vector<64x64xf32>
    %cst_95 = arith.constant dense<0.000000e+00> : vector<64xf32>
    %313 = vector.multi_reduction <add>, %312, %cst_95 [1] : vector<64x64xf32> to vector<64xf32>
    %314 = vector.shape_cast %313 : vector<64xf32> to vector<64x1xf32>
    %315 = tpu.reciprocal %314 {approx = true} : vector<64x1xf32> -> vector<64x1xf32>
    %316 = vector.broadcast %315 : vector<64x1xf32> to vector<64x64xf32>
    %317 = arith.mulf %312, %316 : vector<64x64xf32>
    %318 = arith.truncf %317 : vector<64x64xf32> to vector<64x64xbf16>
    %cst_96 = arith.constant dense<0.000000e+00> : vector<64x32xf32>
    %319 = tpu.matmul %318, %305, %cst_96 {dimension_numbers = #tpu.dot_dimension_numbers<[1], [0], [0], [1], [0, 0, 1, 1], [], []>} : vector<64x64xbf16>, vector<64x32xbf16>, vector<64x32xf32> -> vector<64x32xf32>
    %320 = arith.truncf %319 : vector<64x32xf32> to vector<64x32xbf16>
    %321 = vector.extract_strided_slice %280 {offsets = [0, 64], sizes = [64, 32], strides = [1, 1]} : vector<128x128xbf16> to vector<64x32xbf16>
    %322 = vector.extract_strided_slice %282 {offsets = [0, 64], sizes = [64, 32], strides = [1, 1]} : vector<128x128xbf16> to vector<64x32xbf16>
    %323 = vector.extract_strided_slice %284 {offsets = [0, 64], sizes = [64, 32], strides = [1, 1]} : vector<128x128xbf16> to vector<64x32xbf16>
    %cst_97 = arith.constant dense<0.000000e+00> : vector<64x64xf32>
    %324 = tpu.matmul %321, %322, %cst_97 {dimension_numbers = #tpu.dot_dimension_numbers<[1], [1], [0], [0], [0, 0, 1, 0], [], []>} : vector<64x32xbf16>, vector<64x32xbf16>, vector<64x64xf32> -> vector<64x64xf32>
    %325 = arith.addf %324, %8 : vector<64x64xf32>
    %cst_98 = arith.constant dense<0xFF800000> : vector<64xf32>
    %326 = vector.multi_reduction <maximumf>, %325, %cst_98 [1] : vector<64x64xf32> to vector<64xf32>
    %327 = vector.shape_cast %326 : vector<64xf32> to vector<64x1xf32>
    %328 = vector.broadcast %327 : vector<64x1xf32> to vector<64x64xf32>
    %329 = arith.subf %325, %328 : vector<64x64xf32>
    %330 = math.exp %329 : vector<64x64xf32>
    %cst_99 = arith.constant dense<0.000000e+00> : vector<64xf32>
    %331 = vector.multi_reduction <add>, %330, %cst_99 [1] : vector<64x64xf32> to vector<64xf32>
    %332 = vector.shape_cast %331 : vector<64xf32> to vector<64x1xf32>
    %333 = tpu.reciprocal %332 {approx = true} : vector<64x1xf32> -> vector<64x1xf32>
    %334 = vector.broadcast %333 : vector<64x1xf32> to vector<64x64xf32>
    %335 = arith.mulf %330, %334 : vector<64x64xf32>
    %336 = arith.truncf %335 : vector<64x64xf32> to vector<64x64xbf16>
    %cst_100 = arith.constant dense<0.000000e+00> : vector<64x32xf32>
    %337 = tpu.matmul %336, %323, %cst_100 {dimension_numbers = #tpu.dot_dimension_numbers<[1], [0], [0], [1], [0, 0, 1, 1], [], []>} : vector<64x64xbf16>, vector<64x32xbf16>, vector<64x32xf32> -> vector<64x32xf32>
    %338 = arith.truncf %337 : vector<64x32xf32> to vector<64x32xbf16>
    %339 = vector.extract_strided_slice %280 {offsets = [0, 96], sizes = [64, 32], strides = [1, 1]} : vector<128x128xbf16> to vector<64x32xbf16>
    %340 = vector.extract_strided_slice %282 {offsets = [0, 96], sizes = [64, 32], strides = [1, 1]} : vector<128x128xbf16> to vector<64x32xbf16>
    %341 = vector.extract_strided_slice %284 {offsets = [0, 96], sizes = [64, 32], strides = [1, 1]} : vector<128x128xbf16> to vector<64x32xbf16>
    %cst_101 = arith.constant dense<0.000000e+00> : vector<64x64xf32>
    %342 = tpu.matmul %339, %340, %cst_101 {dimension_numbers = #tpu.dot_dimension_numbers<[1], [1], [0], [0], [0, 0, 1, 0], [], []>} : vector<64x32xbf16>, vector<64x32xbf16>, vector<64x64xf32> -> vector<64x64xf32>
    %343 = arith.addf %342, %8 : vector<64x64xf32>
    %cst_102 = arith.constant dense<0xFF800000> : vector<64xf32>
    %344 = vector.multi_reduction <maximumf>, %343, %cst_102 [1] : vector<64x64xf32> to vector<64xf32>
    %345 = vector.shape_cast %344 : vector<64xf32> to vector<64x1xf32>
    %346 = vector.broadcast %345 : vector<64x1xf32> to vector<64x64xf32>
    %347 = arith.subf %343, %346 : vector<64x64xf32>
    %348 = math.exp %347 : vector<64x64xf32>
    %cst_103 = arith.constant dense<0.000000e+00> : vector<64xf32>
    %349 = vector.multi_reduction <add>, %348, %cst_103 [1] : vector<64x64xf32> to vector<64xf32>
    %350 = vector.shape_cast %349 : vector<64xf32> to vector<64x1xf32>
    %351 = tpu.reciprocal %350 {approx = true} : vector<64x1xf32> -> vector<64x1xf32>
    %352 = vector.broadcast %351 : vector<64x1xf32> to vector<64x64xf32>
    %353 = arith.mulf %348, %352 : vector<64x64xf32>
    %354 = arith.truncf %353 : vector<64x64xf32> to vector<64x64xbf16>
    %cst_104 = arith.constant dense<0.000000e+00> : vector<64x32xf32>
    %355 = tpu.matmul %354, %341, %cst_104 {dimension_numbers = #tpu.dot_dimension_numbers<[1], [0], [0], [1], [0, 0, 1, 1], [], []>} : vector<64x64xbf16>, vector<64x32xbf16>, vector<64x32xf32> -> vector<64x32xf32>
    %356 = arith.truncf %355 : vector<64x32xf32> to vector<64x32xbf16>
    %357 = tpu.concatenate %302, %320, %338, %356 in 1 : vector<64x32xbf16>, vector<64x32xbf16>, vector<64x32xbf16>, vector<64x32xbf16> -> vector<64x128xbf16>
    %358 = vector.extract_strided_slice %280 {offsets = [64, 0], sizes = [64, 32], strides = [1, 1]} : vector<128x128xbf16> to vector<64x32xbf16>
    %359 = vector.extract_strided_slice %282 {offsets = [64, 0], sizes = [64, 32], strides = [1, 1]} : vector<128x128xbf16> to vector<64x32xbf16>
    %360 = vector.extract_strided_slice %284 {offsets = [64, 0], sizes = [64, 32], strides = [1, 1]} : vector<128x128xbf16> to vector<64x32xbf16>
    %cst_105 = arith.constant dense<0.000000e+00> : vector<64x64xf32>
    %361 = tpu.matmul %358, %359, %cst_105 {dimension_numbers = #tpu.dot_dimension_numbers<[1], [1], [0], [0], [0, 0, 1, 0], [], []>} : vector<64x32xbf16>, vector<64x32xbf16>, vector<64x64xf32> -> vector<64x64xf32>
    %362 = arith.addf %361, %8 : vector<64x64xf32>
    %cst_106 = arith.constant dense<0xFF800000> : vector<64xf32>
    %363 = vector.multi_reduction <maximumf>, %362, %cst_106 [1] : vector<64x64xf32> to vector<64xf32>
    %364 = vector.shape_cast %363 : vector<64xf32> to vector<64x1xf32>
    %365 = vector.broadcast %364 : vector<64x1xf32> to vector<64x64xf32>
    %366 = arith.subf %362, %365 : vector<64x64xf32>
    %367 = math.exp %366 : vector<64x64xf32>
    %cst_107 = arith.constant dense<0.000000e+00> : vector<64xf32>
    %368 = vector.multi_reduction <add>, %367, %cst_107 [1] : vector<64x64xf32> to vector<64xf32>
    %369 = vector.shape_cast %368 : vector<64xf32> to vector<64x1xf32>
    %370 = tpu.reciprocal %369 {approx = true} : vector<64x1xf32> -> vector<64x1xf32>
    %371 = vector.broadcast %370 : vector<64x1xf32> to vector<64x64xf32>
    %372 = arith.mulf %367, %371 : vector<64x64xf32>
    %373 = arith.truncf %372 : vector<64x64xf32> to vector<64x64xbf16>
    %cst_108 = arith.constant dense<0.000000e+00> : vector<64x32xf32>
    %374 = tpu.matmul %373, %360, %cst_108 {dimension_numbers = #tpu.dot_dimension_numbers<[1], [0], [0], [1], [0, 0, 1, 1], [], []>} : vector<64x64xbf16>, vector<64x32xbf16>, vector<64x32xf32> -> vector<64x32xf32>
    %375 = arith.truncf %374 : vector<64x32xf32> to vector<64x32xbf16>
    %376 = vector.extract_strided_slice %280 {offsets = [64, 32], sizes = [64, 32], strides = [1, 1]} : vector<128x128xbf16> to vector<64x32xbf16>
    %377 = vector.extract_strided_slice %282 {offsets = [64, 32], sizes = [64, 32], strides = [1, 1]} : vector<128x128xbf16> to vector<64x32xbf16>
    %378 = vector.extract_strided_slice %284 {offsets = [64, 32], sizes = [64, 32], strides = [1, 1]} : vector<128x128xbf16> to vector<64x32xbf16>
    %cst_109 = arith.constant dense<0.000000e+00> : vector<64x64xf32>
    %379 = tpu.matmul %376, %377, %cst_109 {dimension_numbers = #tpu.dot_dimension_numbers<[1], [1], [0], [0], [0, 0, 1, 0], [], []>} : vector<64x32xbf16>, vector<64x32xbf16>, vector<64x64xf32> -> vector<64x64xf32>
    %380 = arith.addf %379, %8 : vector<64x64xf32>
    %cst_110 = arith.constant dense<0xFF800000> : vector<64xf32>
    %381 = vector.multi_reduction <maximumf>, %380, %cst_110 [1] : vector<64x64xf32> to vector<64xf32>
    %382 = vector.shape_cast %381 : vector<64xf32> to vector<64x1xf32>
    %383 = vector.broadcast %382 : vector<64x1xf32> to vector<64x64xf32>
    %384 = arith.subf %380, %383 : vector<64x64xf32>
    %385 = math.exp %384 : vector<64x64xf32>
    %cst_111 = arith.constant dense<0.000000e+00> : vector<64xf32>
    %386 = vector.multi_reduction <add>, %385, %cst_111 [1] : vector<64x64xf32> to vector<64xf32>
    %387 = vector.shape_cast %386 : vector<64xf32> to vector<64x1xf32>
    %388 = tpu.reciprocal %387 {approx = true} : vector<64x1xf32> -> vector<64x1xf32>
    %389 = vector.broadcast %388 : vector<64x1xf32> to vector<64x64xf32>
    %390 = arith.mulf %385, %389 : vector<64x64xf32>
    %391 = arith.truncf %390 : vector<64x64xf32> to vector<64x64xbf16>
    %cst_112 = arith.constant dense<0.000000e+00> : vector<64x32xf32>
    %392 = tpu.matmul %391, %378, %cst_112 {dimension_numbers = #tpu.dot_dimension_numbers<[1], [0], [0], [1], [0, 0, 1, 1], [], []>} : vector<64x64xbf16>, vector<64x32xbf16>, vector<64x32xf32> -> vector<64x32xf32>
    %393 = arith.truncf %392 : vector<64x32xf32> to vector<64x32xbf16>
    %394 = vector.extract_strided_slice %280 {offsets = [64, 64], sizes = [64, 32], strides = [1, 1]} : vector<128x128xbf16> to vector<64x32xbf16>
    %395 = vector.extract_strided_slice %282 {offsets = [64, 64], sizes = [64, 32], strides = [1, 1]} : vector<128x128xbf16> to vector<64x32xbf16>
    %396 = vector.extract_strided_slice %284 {offsets = [64, 64], sizes = [64, 32], strides = [1, 1]} : vector<128x128xbf16> to vector<64x32xbf16>
    %cst_113 = arith.constant dense<0.000000e+00> : vector<64x64xf32>
    %397 = tpu.matmul %394, %395, %cst_113 {dimension_numbers = #tpu.dot_dimension_numbers<[1], [1], [0], [0], [0, 0, 1, 0], [], []>} : vector<64x32xbf16>, vector<64x32xbf16>, vector<64x64xf32> -> vector<64x64xf32>
    %398 = arith.addf %397, %8 : vector<64x64xf32>
    %cst_114 = arith.constant dense<0xFF800000> : vector<64xf32>
    %399 = vector.multi_reduction <maximumf>, %398, %cst_114 [1] : vector<64x64xf32> to vector<64xf32>
    %400 = vector.shape_cast %399 : vector<64xf32> to vector<64x1xf32>
    %401 = vector.broadcast %400 : vector<64x1xf32> to vector<64x64xf32>
    %402 = arith.subf %398, %401 : vector<64x64xf32>
    %403 = math.exp %402 : vector<64x64xf32>
    %cst_115 = arith.constant dense<0.000000e+00> : vector<64xf32>
    %404 = vector.multi_reduction <add>, %403, %cst_115 [1] : vector<64x64xf32> to vector<64xf32>
    %405 = vector.shape_cast %404 : vector<64xf32> to vector<64x1xf32>
    %406 = tpu.reciprocal %405 {approx = true} : vector<64x1xf32> -> vector<64x1xf32>
    %407 = vector.broadcast %406 : vector<64x1xf32> to vector<64x64xf32>
    %408 = arith.mulf %403, %407 : vector<64x64xf32>
    %409 = arith.truncf %408 : vector<64x64xf32> to vector<64x64xbf16>
    %cst_116 = arith.constant dense<0.000000e+00> : vector<64x32xf32>
    %410 = tpu.matmul %409, %396, %cst_116 {dimension_numbers = #tpu.dot_dimension_numbers<[1], [0], [0], [1], [0, 0, 1, 1], [], []>} : vector<64x64xbf16>, vector<64x32xbf16>, vector<64x32xf32> -> vector<64x32xf32>
    %411 = arith.truncf %410 : vector<64x32xf32> to vector<64x32xbf16>
    %412 = vector.extract_strided_slice %280 {offsets = [64, 96], sizes = [64, 32], strides = [1, 1]} : vector<128x128xbf16> to vector<64x32xbf16>
    %413 = vector.extract_strided_slice %282 {offsets = [64, 96], sizes = [64, 32], strides = [1, 1]} : vector<128x128xbf16> to vector<64x32xbf16>
    %414 = vector.extract_strided_slice %284 {offsets = [64, 96], sizes = [64, 32], strides = [1, 1]} : vector<128x128xbf16> to vector<64x32xbf16>
    %cst_117 = arith.constant dense<0.000000e+00> : vector<64x64xf32>
    %415 = tpu.matmul %412, %413, %cst_117 {dimension_numbers = #tpu.dot_dimension_numbers<[1], [1], [0], [0], [0, 0, 1, 0], [], []>} : vector<64x32xbf16>, vector<64x32xbf16>, vector<64x64xf32> -> vector<64x64xf32>
    %416 = arith.addf %415, %8 : vector<64x64xf32>
    %cst_118 = arith.constant dense<0xFF800000> : vector<64xf32>
    %417 = vector.multi_reduction <maximumf>, %416, %cst_118 [1] : vector<64x64xf32> to vector<64xf32>
    %418 = vector.shape_cast %417 : vector<64xf32> to vector<64x1xf32>
    %419 = vector.broadcast %418 : vector<64x1xf32> to vector<64x64xf32>
    %420 = arith.subf %416, %419 : vector<64x64xf32>
    %421 = math.exp %420 : vector<64x64xf32>
    %cst_119 = arith.constant dense<0.000000e+00> : vector<64xf32>
    %422 = vector.multi_reduction <add>, %421, %cst_119 [1] : vector<64x64xf32> to vector<64xf32>
    %423 = vector.shape_cast %422 : vector<64xf32> to vector<64x1xf32>
    %424 = tpu.reciprocal %423 {approx = true} : vector<64x1xf32> -> vector<64x1xf32>
    %425 = vector.broadcast %424 : vector<64x1xf32> to vector<64x64xf32>
    %426 = arith.mulf %421, %425 : vector<64x64xf32>
    %427 = arith.truncf %426 : vector<64x64xf32> to vector<64x64xbf16>
    %cst_120 = arith.constant dense<0.000000e+00> : vector<64x32xf32>
    %428 = tpu.matmul %427, %414, %cst_120 {dimension_numbers = #tpu.dot_dimension_numbers<[1], [0], [0], [1], [0, 0, 1, 1], [], []>} : vector<64x64xbf16>, vector<64x32xbf16>, vector<64x32xf32> -> vector<64x32xf32>
    %429 = arith.truncf %428 : vector<64x32xf32> to vector<64x32xbf16>
    %430 = tpu.concatenate %375, %393, %411, %429 in 1 : vector<64x32xbf16>, vector<64x32xbf16>, vector<64x32xbf16>, vector<64x32xbf16> -> vector<64x128xbf16>
    %431 = tpu.concatenate %357, %430 in 0 : vector<64x128xbf16>, vector<64x128xbf16> -> vector<128x128xbf16>
    %c1_121 = arith.constant 1 : index
    %c0_122 = arith.constant 0 : index
    %c0_123 = arith.constant 0 : index
    %432 = vector.load %arg4[%c1_121, %c0_122, %c0_123] : memref<2x128x128xbf16, #tpu.memory_space<vmem>>, vector<1x128x128xbf16>
    %433 = vector.shape_cast %432 : vector<1x128x128xbf16> to vector<128x128xbf16>
    %cst_124 = arith.constant dense<0.000000e+00> : vector<128x128xf32>
    %434 = tpu.matmul %431, %433, %cst_124 {dimension_numbers = #tpu.dot_dimension_numbers<[1], [0], [0], [1], [0, 0, 1, 1], [], []>} : vector<128x128xbf16>, vector<128x128xbf16>, vector<128x128xf32> -> vector<128x128xf32>
    %c1_125 = arith.constant 1 : index
    %c0_126 = arith.constant 0 : index
    %c0_127 = arith.constant 0 : index
    %435 = vector.load %arg5[%c1_125, %c0_126, %c0_127] : memref<2x1x128xf32, #tpu.memory_space<vmem>>, vector<1x1x128xf32>
    %436 = vector.shape_cast %435 : vector<1x1x128xf32> to vector<1x128xf32>
    %437 = vector.broadcast %436 : vector<1x128xf32> to vector<128x128xf32>
    %438 = arith.addf %434, %437 : vector<128x128xf32>
    %439 = arith.addf %246, %438 : vector<128x128xf32>
    %c1_128 = arith.constant 1 : index
    %c0_129 = arith.constant 0 : index
    %c0_130 = arith.constant 0 : index
    %440 = vector.load %arg6[%c1_128, %c0_129, %c0_130] : memref<2x2x128xf32, #tpu.memory_space<vmem>>, vector<1x2x128xf32>
    %441 = vector.shape_cast %440 : vector<1x2x128xf32> to vector<2x128xf32>
    %442 = vector.extract_strided_slice %441 {offsets = [0, 0], sizes = [1, 128], strides = [1, 1]} : vector<2x128xf32> to vector<1x128xf32>
    %443 = vector.extract_strided_slice %441 {offsets = [1, 0], sizes = [1, 128], strides = [1, 1]} : vector<2x128xf32> to vector<1x128xf32>
    %cst_131 = arith.constant dense<0.000000e+00> : vector<128xf32>
    %444 = vector.multi_reduction <add>, %439, %cst_131 [1] : vector<128x128xf32> to vector<128xf32>
    %445 = vector.shape_cast %444 : vector<128xf32> to vector<128x1xf32>
    %cst_132 = arith.constant 1.280000e+02 : f32
    %446 = vector.broadcast %cst_132 : f32 to vector<128x1xf32>
    %447 = arith.divf %445, %446 : vector<128x1xf32>
    %448 = vector.broadcast %447 : vector<128x1xf32> to vector<128x128xf32>
    %449 = arith.subf %439, %448 : vector<128x128xf32>
    %450 = arith.mulf %449, %449 : vector<128x128xf32>
    %cst_133 = arith.constant dense<0.000000e+00> : vector<128xf32>
    %451 = vector.multi_reduction <add>, %450, %cst_133 [1] : vector<128x128xf32> to vector<128xf32>
    %452 = vector.shape_cast %451 : vector<128xf32> to vector<128x1xf32>
    %cst_134 = arith.constant 1.280000e+02 : f32
    %453 = vector.broadcast %cst_134 : f32 to vector<128x1xf32>
    %454 = arith.divf %452, %453 : vector<128x1xf32>
    %455 = vector.broadcast %447 : vector<128x1xf32> to vector<128x128xf32>
    %456 = arith.subf %439, %455 : vector<128x128xf32>
    %cst_135 = arith.constant 9.99999974E-6 : f32
    %457 = vector.broadcast %cst_135 : f32 to vector<128x1xf32>
    %458 = arith.addf %454, %457 : vector<128x1xf32>
    %459 = math.rsqrt %458 : vector<128x1xf32>
    %460 = vector.broadcast %459 : vector<128x1xf32> to vector<128x128xf32>
    %461 = arith.mulf %456, %460 : vector<128x128xf32>
    %462 = vector.broadcast %442 : vector<1x128xf32> to vector<128x128xf32>
    %463 = arith.mulf %461, %462 : vector<128x128xf32>
    %464 = vector.broadcast %443 : vector<1x128xf32> to vector<128x128xf32>
    %465 = arith.addf %463, %464 : vector<128x128xf32>
    %466 = arith.truncf %465 : vector<128x128xf32> to vector<128x128xbf16>
    %c1_136 = arith.constant 1 : index
    %c0_137 = arith.constant 0 : index
    %c0_138 = arith.constant 0 : index
    %467 = vector.load %arg7[%c1_136, %c0_137, %c0_138] : memref<2x128x512xbf16, #tpu.memory_space<vmem>>, vector<1x128x512xbf16>
    %468 = vector.shape_cast %467 : vector<1x128x512xbf16> to vector<128x512xbf16>
    %cst_139 = arith.constant dense<0.000000e+00> : vector<128x512xf32>
    %469 = tpu.matmul %466, %468, %cst_139 {dimension_numbers = #tpu.dot_dimension_numbers<[1], [0], [0], [1], [0, 0, 1, 1], [], []>} : vector<128x128xbf16>, vector<128x512xbf16>, vector<128x512xf32> -> vector<128x512xf32>
    %c1_140 = arith.constant 1 : index
    %c0_141 = arith.constant 0 : index
    %c0_142 = arith.constant 0 : index
    %470 = vector.load %arg8[%c1_140, %c0_141, %c0_142] : memref<2x1x512xf32, #tpu.memory_space<vmem>>, vector<1x1x512xf32>
    %471 = vector.shape_cast %470 : vector<1x1x512xf32> to vector<1x512xf32>
    %472 = vector.broadcast %471 : vector<1x512xf32> to vector<128x512xf32>
    %473 = arith.addf %469, %472 : vector<128x512xf32>
    %cst_143 = arith.constant 0.000000e+00 : f32
    %474 = vector.broadcast %cst_143 : f32 to vector<128x512xf32>
    %475 = arith.maximumf %473, %474 : vector<128x512xf32>
    %476 = arith.truncf %475 : vector<128x512xf32> to vector<128x512xbf16>
    %c1_144 = arith.constant 1 : index
    %c0_145 = arith.constant 0 : index
    %c0_146 = arith.constant 0 : index
    %477 = vector.load %arg9[%c1_144, %c0_145, %c0_146] : memref<2x512x128xbf16, #tpu.memory_space<vmem>>, vector<1x512x128xbf16>
    %478 = vector.shape_cast %477 : vector<1x512x128xbf16> to vector<512x128xbf16>
    %cst_147 = arith.constant dense<0.000000e+00> : vector<128x128xf32>
    %479 = tpu.matmul %476, %478, %cst_147 {dimension_numbers = #tpu.dot_dimension_numbers<[1], [0], [0], [1], [0, 0, 1, 1], [], []>} : vector<128x512xbf16>, vector<512x128xbf16>, vector<128x128xf32> -> vector<128x128xf32>
    %c1_148 = arith.constant 1 : index
    %c0_149 = arith.constant 0 : index
    %c0_150 = arith.constant 0 : index
    %480 = vector.load %arg10[%c1_148, %c0_149, %c0_150] : memref<2x1x128xf32, #tpu.memory_space<vmem>>, vector<1x1x128xf32>
    %481 = vector.shape_cast %480 : vector<1x1x128xf32> to vector<1x128xf32>
    %482 = vector.broadcast %481 : vector<1x128xf32> to vector<128x128xf32>
    %483 = arith.addf %479, %482 : vector<128x128xf32>
    %484 = arith.addf %439, %483 : vector<128x128xf32>
    %c0_151 = arith.constant 0 : index
    %c0_152 = arith.constant 0 : index
    %485 = vector.load %arg11[%c0_151, %c0_152] : memref<2x128xf32, #tpu.memory_space<vmem>>, vector<2x128xf32>
    %486 = vector.extract_strided_slice %485 {offsets = [0, 0], sizes = [1, 128], strides = [1, 1]} : vector<2x128xf32> to vector<1x128xf32>
    %487 = vector.extract_strided_slice %485 {offsets = [1, 0], sizes = [1, 128], strides = [1, 1]} : vector<2x128xf32> to vector<1x128xf32>
    %cst_153 = arith.constant dense<0.000000e+00> : vector<128xf32>
    %488 = vector.multi_reduction <add>, %484, %cst_153 [1] : vector<128x128xf32> to vector<128xf32>
    %489 = vector.shape_cast %488 : vector<128xf32> to vector<128x1xf32>
    %cst_154 = arith.constant 1.280000e+02 : f32
    %490 = vector.broadcast %cst_154 : f32 to vector<128x1xf32>
    %491 = arith.divf %489, %490 : vector<128x1xf32>
    %492 = vector.broadcast %491 : vector<128x1xf32> to vector<128x128xf32>
    %493 = arith.subf %484, %492 : vector<128x128xf32>
    %494 = arith.mulf %493, %493 : vector<128x128xf32>
    %cst_155 = arith.constant dense<0.000000e+00> : vector<128xf32>
    %495 = vector.multi_reduction <add>, %494, %cst_155 [1] : vector<128x128xf32> to vector<128xf32>
    %496 = vector.shape_cast %495 : vector<128xf32> to vector<128x1xf32>
    %cst_156 = arith.constant 1.280000e+02 : f32
    %497 = vector.broadcast %cst_156 : f32 to vector<128x1xf32>
    %498 = arith.divf %496, %497 : vector<128x1xf32>
    %499 = vector.broadcast %491 : vector<128x1xf32> to vector<128x128xf32>
    %500 = arith.subf %484, %499 : vector<128x128xf32>
    %cst_157 = arith.constant 9.99999974E-6 : f32
    %501 = vector.broadcast %cst_157 : f32 to vector<128x1xf32>
    %502 = arith.addf %498, %501 : vector<128x1xf32>
    %503 = math.rsqrt %502 : vector<128x1xf32>
    %504 = vector.broadcast %503 : vector<128x1xf32> to vector<128x128xf32>
    %505 = arith.mulf %500, %504 : vector<128x128xf32>
    %506 = vector.broadcast %486 : vector<1x128xf32> to vector<128x128xf32>
    %507 = arith.mulf %505, %506 : vector<128x128xf32>
    %508 = vector.broadcast %487 : vector<1x128xf32> to vector<128x128xf32>
    %509 = arith.addf %507, %508 : vector<128x128xf32>
    %510 = arith.truncf %509 : vector<128x128xf32> to vector<128x128xbf16>
    %c0_158 = arith.constant 0 : index
    %c0_159 = arith.constant 0 : index
    %511 = vector.load %arg12[%c0_158, %c0_159] : memref<128x128xbf16, #tpu.memory_space<vmem>>, vector<128x128xbf16>
    %cst_160 = arith.constant dense<0.000000e+00> : vector<128x128xf32>
    %512 = tpu.matmul %510, %511, %cst_160 {dimension_numbers = #tpu.dot_dimension_numbers<[1], [0], [0], [1], [0, 0, 1, 1], [], []>} : vector<128x128xbf16>, vector<128x128xbf16>, vector<128x128xf32> -> vector<128x128xf32>
    %c0_161 = arith.constant 0 : index
    %c0_162 = arith.constant 0 : index
    %513 = vector.load %arg13[%c0_161, %c0_162] : memref<1x128xf32, #tpu.memory_space<vmem>>, vector<1x128xf32>
    %514 = vector.broadcast %513 : vector<1x128xf32> to vector<128x128xf32>
    %515 = arith.addf %512, %514 : vector<128x128xf32>
    %516 = vector.shape_cast %515 : vector<128x128xf32> to vector<2x64x128xf32>
    %c0_163 = arith.constant 0 : index
    %c0_164 = arith.constant 0 : index
    %c0_165 = arith.constant 0 : index
    %517 = vector.load %arg14[%c0_163, %c0_164, %c0_165] : memref<2x64x128xf32, #tpu.memory_space<vmem>>, vector<2x64x128xf32>
    tpu.vector_store %arg14[%c0_163, %c0_164, %c0_165], %516 {strides = array<i32>} : memref<2x64x128xf32, #tpu.memory_space<vmem>>, vector<2x64x128xf32>,
    return
  }
  func.func @transform_0(%arg0: i32) -> (i32, i32, i32) {
    %c0_i32 = arith.constant 0 : i32
    %c0_i32_0 = arith.constant 0 : i32
    %c0_i32_1 = arith.constant 0 : i32
    return %arg0, %c0_i32, %c0_i32_0 : i32, i32, i32
  }
  func.func @transform_1(%arg0: i32) -> (i32, i32, i32) {
    %c0_i32 = arith.constant 0 : i32
    %c0_i32_0 = arith.constant 0 : i32
    %c0_i32_1 = arith.constant 0 : i32
    %c0_i32_2 = arith.constant 0 : i32
    return %c0_i32, %c0_i32_0, %c0_i32_1 : i32, i32, i32
  }
  func.func @transform_2(%arg0: i32) -> (i32, i32, i32) {
    %c0_i32 = arith.constant 0 : i32
    %c0_i32_0 = arith.constant 0 : i32
    %c0_i32_1 = arith.constant 0 : i32
    %c0_i32_2 = arith.constant 0 : i32
    return %c0_i32, %c0_i32_0, %c0_i32_1 : i32, i32, i32
  }
  func.func @transform_3(%arg0: i32) -> (i32, i32, i32) {
    %c0_i32 = arith.constant 0 : i32
    %c0_i32_0 = arith.constant 0 : i32
    %c0_i32_1 = arith.constant 0 : i32
    %c0_i32_2 = arith.constant 0 : i32
    return %c0_i32, %c0_i32_0, %c0_i32_1 : i32, i32, i32
  }
  func.func @transform_4(%arg0: i32) -> (i32, i32, i32) {
    %c0_i32 = arith.constant 0 : i32
    %c0_i32_0 = arith.constant 0 : i32
    %c0_i32_1 = arith.constant 0 : i32
    %c0_i32_2 = arith.constant 0 : i32
    return %c0_i32, %c0_i32_0, %c0_i32_1 : i32, i32, i32
  }
  func.func @transform_5(%arg0: i32) -> (i32, i32, i32) {
    %c0_i32 = arith.constant 0 : i32
    %c0_i32_0 = arith.constant 0 : i32
    %c0_i32_1 = arith.constant 0 : i32
    %c0_i32_2 = arith.constant 0 : i32
    return %c0_i32, %c0_i32_0, %c0_i32_1 : i32, i32, i32
  }
  func.func @transform_6(%arg0: i32) -> (i32, i32, i32) {
    %c0_i32 = arith.constant 0 : i32
    %c0_i32_0 = arith.constant 0 : i32
    %c0_i32_1 = arith.constant 0 : i32
    %c0_i32_2 = arith.constant 0 : i32
    return %c0_i32, %c0_i32_0, %c0_i32_1 : i32, i32, i32
  }
  func.func @transform_7(%arg0: i32) -> (i32, i32, i32) {
    %c0_i32 = arith.constant 0 : i32
    %c0_i32_0 = arith.constant 0 : i32
    %c0_i32_1 = arith.constant 0 : i32
    %c0_i32_2 = arith.constant 0 : i32
    return %c0_i32, %c0_i32_0, %c0_i32_1 : i32, i32, i32
  }
  func.func @transform_8(%arg0: i32) -> (i32, i32, i32) {
    %c0_i32 = arith.constant 0 : i32
    %c0_i32_0 = arith.constant 0 : i32
    %c0_i32_1 = arith.constant 0 : i32
    %c0_i32_2 = arith.constant 0 : i32
    return %c0_i32, %c0_i32_0, %c0_i32_1 : i32, i32, i32
  }
  func.func @transform_9(%arg0: i32) -> (i32, i32, i32) {
    %c0_i32 = arith.constant 0 : i32
    %c0_i32_0 = arith.constant 0 : i32
    %c0_i32_1 = arith.constant 0 : i32
    %c0_i32_2 = arith.constant 0 : i32
    return %c0_i32, %c0_i32_0, %c0_i32_1 : i32, i32, i32
  }
  func.func @transform_10(%arg0: i32) -> (i32, i32) {
    %c0_i32 = arith.constant 0 : i32
    %c0_i32_0 = arith.constant 0 : i32
    %c0_i32_1 = arith.constant 0 : i32
    return %c0_i32, %c0_i32_0 : i32, i32
  }
  func.func @transform_11(%arg0: i32) -> (i32, i32) {
    %c0_i32 = arith.constant 0 : i32
    %c0_i32_0 = arith.constant 0 : i32
    %c0_i32_1 = arith.constant 0 : i32
    return %c0_i32, %c0_i32_0 : i32, i32
  }
  func.func @transform_12(%arg0: i32) -> (i32, i32) {
    %c0_i32 = arith.constant 0 : i32
    %c0_i32_0 = arith.constant 0 : i32
    %c0_i32_1 = arith.constant 0 : i32
    return %c0_i32, %c0_i32_0 : i32, i32
  }
  func.func @transform_13(%arg0: i32) -> (i32, i32, i32) {
    %c0_i32 = arith.constant 0 : i32
    %c0_i32_0 = arith.constant 0 : i32
    %c0_i32_1 = arith.constant 0 : i32
    return %arg0, %c0_i32, %c0_i32_0 : i32, i32, i32
  }
}

</mosaic_0001>

<llo_original>
// kernel: tpu_custom_call.1
$region0: #{tpu_custom_call.1}
  #allocation0 [shape = 'u32[]', space=smem, size = 0x4, offset = 0x4, fixed_abs, tag = 'smem constant byte address 0x4 - core index']
  #allocation1 [shape = 'u32[144,128]{1,0:T(1,128)}', space=vmem, size = 0x12000, scoped, tag = 'internal scratch']
  %s0 = inlined_call_operand.hbm [shape: f32[2,64,128], index: 0, kind: input, shape index: {}]
  %s1 = inlined_call_operand.hbm [shape: f32[2,2,128], index: 1, kind: input, shape index: {}]
  %s2 = inlined_call_operand.hbm [shape: bf16[2,128,384], index: 2, kind: input, shape index: {}]
  %s3 = inlined_call_operand.hbm [shape: bf16[2,128,128], index: 3, kind: input, shape index: {}]
  %s4 = inlined_call_operand.vmem [shape: f32[2,1,128], index: 4, kind: input, shape index: {}]
  %s5 = inlined_call_operand.vmem [shape: f32[2,2,128], index: 5, kind: input, shape index: {}]
  %s6 = inlined_call_operand.hbm [shape: bf16[2,128,512], index: 6, kind: input, shape index: {}]
  %s7 = inlined_call_operand.vmem [shape: f32[2,1,512], index: 7, kind: input, shape index: {}]
  %s8 = inlined_call_operand.hbm [shape: bf16[2,512,128], index: 8, kind: input, shape index: {}]
  %s9 = inlined_call_operand.vmem [shape: f32[2,1,128], index: 9, kind: input, shape index: {}]
  %s10 = inlined_call_operand.vmem [shape: f32[2,128], index: 10, kind: input, shape index: {}]
  %s11 = inlined_call_operand.hbm [shape: bf16[128,128], index: 11, kind: input, shape index: {}]
  %s12 = inlined_call_operand.vmem [shape: f32[1,128], index: 12, kind: input, shape index: {}]
  %s13 = inlined_call_operand.hbm [shape: f32[2,64,128], index: 13, kind: output, shape index: {}]
  %s14 = sld [smem:[#allocation0]]
  $region90: #{tpu_custom_call.1} parent=0
    _
  %s16 = ssub.s32 1, %s14
  %s17 = scalar_select 0, %s16, %s14
  $region1: #{tpu_custom_call.1} parent=0
    #allocation2 [shape = 'u8[65536]{0}', space=vmem, size = 0x10000, scoped, tag = 'input window, operand 0, single buffered']
    #allocation3 [shape = 's32[1]{0}', space=sflag, size = 0x4, scoped, tag = 'scoped memory for tpu_custom_call.1']
    #allocation4 [shape = 's32[1]{0}', space=sflag, size = 0x4, scoped, tag = 'scoped memory for tpu_custom_call.1']
    #allocation5 [shape = 'u8[2048]{0}', space=vmem, size = 0x800, scoped, tag = 'input window, operand 1, single buffered']
    #allocation6 [shape = 's32[1]{0}', space=sflag, size = 0x4, scoped, tag = 'scoped memory for tpu_custom_call.1']
    #allocation7 [shape = 'u8[196608]{0}', space=vmem, size = 0x30000, scoped, tag = 'input window, operand 2, single buffered']
    #allocation8 [shape = 'u8[65536]{0}', space=vmem, size = 0x10000, scoped, tag = 'input window, operand 3, single buffered']
    #allocation9 [shape = 's32[1]{0}', space=sflag, size = 0x4, scoped, tag = 'scoped memory for tpu_custom_call.1']
    #allocation10 [shape = 'u8[262144]{0}', space=vmem, size = 0x40000, scoped, tag = 'input window, operand 6, single buffered']
    #allocation11 [shape = 'u8[262144]{0}', space=vmem, size = 0x40000, scoped, tag = 'input window, operand 8, single buffered']
    #allocation12 [shape = 's32[1]{0}', space=sflag, size = 0x4, scoped, tag = 'scoped memory for tpu_custom_call.1']
    #allocation13 [shape = 'u8[32768]{0}', space=vmem, size = 0x8000, scoped, tag = 'input window, operand 11, single buffered']
    #allocation14 [shape = 'u8[65536]{0}', space=vmem, size = 0x10000, scoped, tag = 'output window, operand 0, single buffered']
    %18 = vsyncpa [#allocation3], 0
    %19 = vsyncpa [#allocation6], 0
    %20 = vsyncpa [#allocation9], 0
    %21 = vsyncpa [#allocation12], 0
    %22 = vsyncpa [#allocation4], 0
    // Predicated region
    $region2: #{tpu_custom_call.1} parent=1 // pred_check
      _
    $region3: #{tpu_custom_call.1} parent=1 // pred_check_branch
      %24 = sbr.rel (0) target = $region5
    $region4: #{tpu_custom_call.1} parent=1 // pred_region
      %s26 = ssub.s32 2048, 2048
      %27 = vsyncadd [#allocation3], %s26
      %s28 = sshll.u32 [#allocation2], 4
      %s29 = int_to_ptr.vmem [resolvable:$true] %s28
      %34 = dma.hbm_to_vmem [thread:$0]  %s0, 2048, %s29, [#allocation3], 128, 128, 8
    $region5: #{tpu_custom_call.1} parent=1 // pred_fallthru
      _
    // Predicated region
    $region6: #{tpu_custom_call.1} parent=1 // pred_check
      _
    $region7: #{tpu_custom_call.1} parent=1 // pred_check_branch
      %36 = sbr.rel (0) target = $region9
    $region8: #{tpu_custom_call.1} parent=1 // pred_region
      %s38 = ssub.s32 64, 64
      %39 = vsyncadd [#allocation6], %s38
      %s40 = sshll.u32 [#allocation5], 4
      %s41 = int_to_ptr.vmem [resolvable:$true] %s40
      %46 = dma.hbm_to_vmem [thread:$0]  %s1, 64, %s41, [#allocation6], 32, 32, 2
    $region9: #{tpu_custom_call.1} parent=1 // pred_fallthru
      _
    // Predicated region
    $region10: #{tpu_custom_call.1} parent=1 // pred_check
      _
    $region11: #{tpu_custom_call.1} parent=1 // pred_check_branch
      %48 = sbr.rel (0) target = $region13
    $region12: #{tpu_custom_call.1} parent=1 // pred_region
      %s50 = ssub.s32 6144, 6144
      %51 = vsyncadd [#allocation6], %s50
      %s52 = sshll.u32 [#allocation7], 4
      %s53 = int_to_ptr.vmem [resolvable:$true] %s52
      %58 = dma.hbm_to_vmem [thread:$0]  %s2, 6144, %s53, [#allocation6], 192, 192, 12
    $region13: #{tpu_custom_call.1} parent=1 // pred_fallthru
      _
    // Predicated region
    $region14: #{tpu_custom_call.1} parent=1 // pred_check
      _
    $region15: #{tpu_custom_call.1} parent=1 // pred_check_branch
      %60 = sbr.rel (0) target = $region17
    $region16: #{tpu_custom_call.1} parent=1 // pred_region
      %s62 = ssub.s32 2048, 2048
      %63 = vsyncadd [#allocation9], %s62
      %s64 = sshll.u32 [#allocation8], 4
      %s65 = int_to_ptr.vmem [resolvable:$true] %s64
      %70 = dma.hbm_to_vmem [thread:$0]  %s3, 2048, %s65, [#allocation9], 64, 64, 4
    $region17: #{tpu_custom_call.1} parent=1 // pred_fallthru
      _
    // Predicated region
    $region18: #{tpu_custom_call.1} parent=1 // pred_check
      _
    $region19: #{tpu_custom_call.1} parent=1 // pred_check_branch
      %72 = sbr.rel (0) target = $region21
    $region20: #{tpu_custom_call.1} parent=1 // pred_region
      _
    $region21: #{tpu_custom_call.1} parent=1 // pred_fallthru
      _
    // Predicated region
    $region22: #{tpu_custom_call.1} parent=1 // pred_check
      _
    $region23: #{tpu_custom_call.1} parent=1 // pred_check_branch
      %74 = sbr.rel (0) target = $region25
    $region24: #{tpu_custom_call.1} parent=1 // pred_region
      _
    $region25: #{tpu_custom_call.1} parent=1 // pred_fallthru
      _
    // Predicated region
    $region26: #{tpu_custom_call.1} parent=1 // pred_check
      _
    $region27: #{tpu_custom_call.1} parent=1 // pred_check_branch
      %76 = sbr.rel (0) target = $region29
    $region28: #{tpu_custom_call.1} parent=1 // pred_region
      %s78 = ssub.s32 8192, 8192
      %79 = vsyncadd [#allocation9], %s78
      %s80 = sshll.u32 [#allocation10], 4
      %s81 = int_to_ptr.vmem [resolvable:$true] %s80
      %86 = dma.hbm_to_vmem [thread:$0]  %s6, 8192, %s81, [#allocation9], 256, 256, 16
    $region29: #{tpu_custom_call.1} parent=1 // pred_fallthru
      _
    // Predicated region
    $region30: #{tpu_custom_call.1} parent=1 // pred_check
      _
    $region31: #{tpu_custom_call.1} parent=1 // pred_check_branch
      %88 = sbr.rel (0) target = $region33
    $region32: #{tpu_custom_call.1} parent=1 // pred_region
      _
    $region33: #{tpu_custom_call.1} parent=1 // pred_fallthru
      _
    // Predicated region
    $region34: #{tpu_custom_call.1} parent=1 // pred_check
      _
    $region35: #{tpu_custom_call.1} parent=1 // pred_check_branch
      %90 = sbr.rel (0) target = $region37
    $region36: #{tpu_custom_call.1} parent=1 // pred_region
      %s92 = ssub.s32 8192, 8192
      %93 = vsyncadd [#allocation12], %s92
      %s94 = sshll.u32 [#allocation11], 4
      %s95 = int_to_ptr.vmem [resolvable:$true] %s94
      %100 = dma.hbm_to_vmem [thread:$0]  %s8, 8192, %s95, [#allocation12], 64, 64, 4
    $region37: #{tpu_custom_call.1} parent=1 // pred_fallthru
      _
    // Predicated region
    $region38: #{tpu_custom_call.1} parent=1 // pred_check
      _
    $region39: #{tpu_custom_call.1} parent=1 // pred_check_branch
      %102 = sbr.rel (0) target = $region41
    $region40: #{tpu_custom_call.1} parent=1 // pred_region
      _
    $region41: #{tpu_custom_call.1} parent=1 // pred_fallthru
      _
    // Predicated region
    $region42: #{tpu_custom_call.1} parent=1 // pred_check
      _
    $region43: #{tpu_custom_call.1} parent=1 // pred_check_branch
      %104 = sbr.rel (0) target = $region45
    $region44: #{tpu_custom_call.1} parent=1 // pred_region
      _
    $region45: #{tpu_custom_call.1} parent=1 // pred_fallthru
      _
    // Predicated region
    $region46: #{tpu_custom_call.1} parent=1 // pred_check
      _
    $region47: #{tpu_custom_call.1} parent=1 // pred_check_branch
      %106 = sbr.rel (0) target = $region49
    $region48: #{tpu_custom_call.1} parent=1 // pred_region
      %s108 = ssub.s32 1024, 1024
      %109 = vsyncadd [#allocation12], %s108
      %s110 = sshll.u32 [#allocation13], 4
      %s111 = int_to_ptr.vmem [resolvable:$true] %s110
      %116 = dma.hbm_to_vmem [thread:$0]  %s11, 1024, %s111, [#allocation12], 64, 64, 4
    $region49: #{tpu_custom_call.1} parent=1 // pred_fallthru
      _
    // Predicated region
    $region50: #{tpu_custom_call.1} parent=1 // pred_check
      _
    $region51: #{tpu_custom_call.1} parent=1 // pred_check_branch
      %118 = sbr.rel (0) target = $region53
    $region52: #{tpu_custom_call.1} parent=1 // pred_region
      _
    $region53: #{tpu_custom_call.1} parent=1 // pred_fallthru
      _
    // Predicated region
    $region54: #{tpu_custom_call.1} parent=1 // pred_check
      _
    $region55: #{tpu_custom_call.1} parent=1 // pred_check_branch
      %120 = sbr.rel (0) target = $region57
    $region56: #{tpu_custom_call.1} parent=1 // pred_region
      %121 = dma.done [#allocation3], 2048
    $region57: #{tpu_custom_call.1} parent=1 // pred_fallthru
      _
    // Predicated region
    $region58: #{tpu_custom_call.1} parent=1 // pred_check
      _
    $region59: #{tpu_custom_call.1} parent=1 // pred_check_branch
      %123 = sbr.rel (0) target = $region61
    $region60: #{tpu_custom_call.1} parent=1 // pred_region
      %124 = dma.done [#allocation6], 64
    $region61: #{tpu_custom_call.1} parent=1 // pred_fallthru
      _
    // Predicated region
    $region62: #{tpu_custom_call.1} parent=1 // pred_check
      _
    $region63: #{tpu_custom_call.1} parent=1 // pred_check_branch
      %126 = sbr.rel (0) target = $region65
    $region64: #{tpu_custom_call.1} parent=1 // pred_region
      %127 = dma.done [#allocation6], 6144
    $region65: #{tpu_custom_call.1} parent=1 // pred_fallthru
      _
    // Predicated region
    $region66: #{tpu_custom_call.1} parent=1 // pred_check
      _
    $region67: #{tpu_custom_call.1} parent=1 // pred_check_branch
      %129 = sbr.rel (0) target = $region69
    $region68: #{tpu_custom_call.1} parent=1 // pred_region
      %130 = dma.done [#allocation9], 2048
    $region69: #{tpu_custom_call.1} parent=1 // pred_fallthru
      _
    // Predicated region
    $region70: #{tpu_custom_call.1} parent=1 // pred_check
      _
    $region71: #{tpu_custom_call.1} parent=1 // pred_check_branch
      %132 = sbr.rel (0) target = $region73
    $region72: #{tpu_custom_call.1} parent=1 // pred_region
      %133 = dma.done [#allocation9], 8192
    $region73: #{tpu_custom_call.1} parent=1 // pred_fallthru
      _
    // Predicated region
    $region74: #{tpu_custom_call.1} parent=1 // pred_check
      _
    $region75: #{tpu_custom_call.1} parent=1 // pred_check_branch
      %135 = sbr.rel (0) target = $region77
    $region76: #{tpu_custom_call.1} parent=1 // pred_region
      %136 = dma.done [#allocation12], 8192
    $region77: #{tpu_custom_call.1} parent=1 // pred_fallthru
      _
    // Predicated region
    $region78: #{tpu_custom_call.1} parent=1 // pred_check
      _
    $region79: #{tpu_custom_call.1} parent=1 // pred_check_branch
      %138 = sbr.rel (0) target = $region81
    $region80: #{tpu_custom_call.1} parent=1 // pred_region
      %139 = dma.done [#allocation12], 1024
    $region81: #{tpu_custom_call.1} parent=1 // pred_fallthru
      _
    %v141 = vld [vmem:[#allocation2] sm:$0xff]
    %v142 = vld [vmem:[#allocation2 + $0x8] sm:$0xff]
    %v143 = vld [vmem:[#allocation2 + $0x10] sm:$0xff]
    %v144 = vld [vmem:[#allocation2 + $0x18] sm:$0xff]
    %v145 = vld [vmem:[#allocation2 + $0x20] sm:$0xff]
    %v146 = vld [vmem:[#allocation2 + $0x28] sm:$0xff]
    %v147 = vld [vmem:[#allocation2 + $0x30] sm:$0xff]
    %v148 = vld [vmem:[#allocation2 + $0x38] sm:$0xff]
    %v149 = vld [vmem:[#allocation2 + $0x40] sm:$0xff]
    %v150 = vld [vmem:[#allocation2 + $0x48] sm:$0xff]
    %v151 = vld [vmem:[#allocation2 + $0x50] sm:$0xff]
    %v152 = vld [vmem:[#allocation2 + $0x58] sm:$0xff]
    %v153 = vld [vmem:[#allocation2 + $0x60] sm:$0xff]
    %v154 = vld [vmem:[#allocation2 + $0x68] sm:$0xff]
    %v155 = vld [vmem:[#allocation2 + $0x70] sm:$0xff]
    %v156 = vld [vmem:[#allocation2 + $0x78] sm:$0xff]
    %v157 = vlaneseq
    %v158 = vshrl.u32 %v157, 7
    %v159 = vadd.s32 %v158, 8
    %v160 = vadd.s32 %v158, 16
    %v161 = vadd.s32 %v158, 24
    %v162 = vadd.s32 %v158, 32
    %v163 = vadd.s32 %v158, 40
    %v164 = vadd.s32 %v158, 48
    %v165 = vadd.s32 %v158, 56
    %v166 = vlaneseq
    %v167 = vand.u32 %v166, 127
    %vm168 = vcmp.gt.s32.totalorder %v167, %v158
    %vm169 = vcmp.gt.s32.totalorder %v167, %v159
    %vm170 = vcmp.gt.s32.totalorder %v167, %v160
    %vm171 = vcmp.gt.s32.totalorder %v167, %v161
    %vm172 = vcmp.gt.s32.totalorder %v167, %v162
    %vm173 = vcmp.gt.s32.totalorder %v167, %v163
    %vm174 = vcmp.gt.s32.totalorder %v167, %v164
    %vm175 = vcmp.gt.s32.totalorder %v167, %v165
    %v176 = vsel %vm168, 1, 0
    %v177 = vsel %vm169, 1, 0
    %v178 = vsel %vm170, 1, 0
    %v179 = vsel %vm171, 1, 0
    %v180 = vsel %vm172, 1, 0
    %v181 = vsel %vm173, 1, 0
    %v182 = vsel %vm174, 1, 0
    %v183 = vsel %vm175, 1, 0
    %v184 = vcvt.s32.f32 %v176
    %v185 = vcvt.s32.f32 %v177
    %v186 = vcvt.s32.f32 %v178
    %v187 = vcvt.s32.f32 %v179
    %v188 = vcvt.s32.f32 %v180
    %v189 = vcvt.s32.f32 %v181
    %v190 = vcvt.s32.f32 %v182
    %v191 = vcvt.s32.f32 %v183
    %v192 = vmul.f32 %v184, -1e+30
    %v193 = vmul.f32 %v185, -1e+30
    %v194 = vmul.f32 %v186, -1e+30
    %v195 = vmul.f32 %v187, -1e+30
    %v196 = vmul.f32 %v188, -1e+30
    %v197 = vmul.f32 %v189, -1e+30
    %v198 = vmul.f32 %v190, -1e+30
    %v199 = vmul.f32 %v191, -1e+30
    %v200 = vld [vmem:[#allocation5] sm:$0x3]
    %201 = vadd.xlane.f32.xlu0 %v141
    %v202 = vpop.xlane.xlu0 %201
    %203 = vadd.xlane.f32.xlu0 %v142
    %v204 = vpop.xlane.xlu0 %203
    %205 = vadd.xlane.f32.xlu0 %v143
    %v206 = vpop.xlane.xlu0 %205
    %207 = vadd.xlane.f32.xlu0 %v144
    %v208 = vpop.xlane.xlu0 %207
    %209 = vadd.xlane.f32.xlu0 %v145
    %v210 = vpop.xlane.xlu0 %209
    %211 = vadd.xlane.f32.xlu0 %v146
    %v212 = vpop.xlane.xlu0 %211
    %213 = vadd.xlane.f32.xlu0 %v147
    %v214 = vpop.xlane.xlu0 %213
    %215 = vadd.xlane.f32.xlu0 %v148
    %v216 = vpop.xlane.xlu0 %215
    %217 = vadd.xlane.f32.xlu0 %v149
    %v218 = vpop.xlane.xlu0 %217
    %219 = vadd.xlane.f32.xlu0 %v150
    %v220 = vpop.xlane.xlu0 %219
    %221 = vadd.xlane.f32.xlu0 %v151
    %v222 = vpop.xlane.xlu0 %221
    %223 = vadd.xlane.f32.xlu0 %v152
    %v224 = vpop.xlane.xlu0 %223
    %225 = vadd.xlane.f32.xlu0 %v153
    %v226 = vpop.xlane.xlu0 %225
    %227 = vadd.xlane.f32.xlu0 %v154
    %v228 = vpop.xlane.xlu0 %227
    %229 = vadd.xlane.f32.xlu0 %v155
    %v230 = vpop.xlane.xlu0 %229
    %231 = vadd.xlane.f32.xlu0 %v156
    %v232 = vpop.xlane.xlu0 %231
    %v233 = vrcp.pop 128.0
    %v234 = vmul.f32 %v202, %v233
    %v235 = vmul.f32 %v204, %v233
    %v236 = vmul.f32 %v206, %v233
    %v237 = vmul.f32 %v208, %v233
    %v238 = vmul.f32 %v210, %v233
    %v239 = vmul.f32 %v212, %v233
    %v240 = vmul.f32 %v214, %v233
    %v241 = vmul.f32 %v216, %v233
    %v242 = vmul.f32 %v218, %v233
    %v243 = vmul.f32 %v220, %v233
    %v244 = vmul.f32 %v222, %v233
    %v245 = vmul.f32 %v224, %v233
    %v246 = vmul.f32 %v226, %v233
    %v247 = vmul.f32 %v228, %v233
    %v248 = vmul.f32 %v230, %v233
    %v249 = vmul.f32 %v232, %v233
    %v250 = vsub.f32 %v141, %v234
    %v251 = vsub.f32 %v142, %v235
    %v252 = vsub.f32 %v143, %v236
    %v253 = vsub.f32 %v144, %v237
    %v254 = vsub.f32 %v145, %v238
    %v255 = vsub.f32 %v146, %v239
    %v256 = vsub.f32 %v147, %v240
    %v257 = vsub.f32 %v148, %v241
    %v258 = vsub.f32 %v149, %v242
    %v259 = vsub.f32 %v150, %v243
    %v260 = vsub.f32 %v151, %v244
    %v261 = vsub.f32 %v152, %v245
    %v262 = vsub.f32 %v153, %v246
    %v263 = vsub.f32 %v154, %v247
    %v264 = vsub.f32 %v155, %v248
    %v265 = vsub.f32 %v156, %v249
    %v266 = vmul.f32 %v250, %v250
    %v267 = vmul.f32 %v251, %v251
    %v268 = vmul.f32 %v252, %v252
    %v269 = vmul.f32 %v253, %v253
    %v270 = vmul.f32 %v254, %v254
    %v271 = vmul.f32 %v255, %v255
    %v272 = vmul.f32 %v256, %v256
    %v273 = vmul.f32 %v257, %v257
    %v274 = vmul.f32 %v258, %v258
    %v275 = vmul.f32 %v259, %v259
    %v276 = vmul.f32 %v260, %v260
    %v277 = vmul.f32 %v261, %v261
    %v278 = vmul.f32 %v262, %v262
    %v279 = vmul.f32 %v263, %v263
    %v280 = vmul.f32 %v264, %v264
    %v281 = vmul.f32 %v265, %v265
    %282 = vadd.xlane.f32.xlu0 %v266
    %v283 = vpop.xlane.xlu0 %282
    %284 = vadd.xlane.f32.xlu0 %v267
    %v285 = vpop.xlane.xlu0 %284
    %286 = vadd.xlane.f32.xlu0 %v268
    %v287 = vpop.xlane.xlu0 %286
    %288 = vadd.xlane.f32.xlu0 %v269
    %v289 = vpop.xlane.xlu0 %288
    %290 = vadd.xlane.f32.xlu0 %v270
    %v291 = vpop.xlane.xlu0 %290
    %292 = vadd.xlane.f32.xlu0 %v271
    %v293 = vpop.xlane.xlu0 %292
    %294 = vadd.xlane.f32.xlu0 %v272
    %v295 = vpop.xlane.xlu0 %294
    %296 = vadd.xlane.f32.xlu0 %v273
    %v297 = vpop.xlane.xlu0 %296
    %298 = vadd.xlane.f32.xlu0 %v274
    %v299 = vpop.xlane.xlu0 %298
    %300 = vadd.xlane.f32.xlu0 %v275
    %v301 = vpop.xlane.xlu0 %300
    %302 = vadd.xlane.f32.xlu0 %v276
    %v303 = vpop.xlane.xlu0 %302
    %304 = vadd.xlane.f32.xlu0 %v277
    %v305 = vpop.xlane.xlu0 %304
    %306 = vadd.xlane.f32.xlu0 %v278
    %v307 = vpop.xlane.xlu0 %306
    %308 = vadd.xlane.f32.xlu0 %v279
    %v309 = vpop.xlane.xlu0 %308
    %310 = vadd.xlane.f32.xlu0 %v280
    %v311 = vpop.xlane.xlu0 %310
    %312 = vadd.xlane.f32.xlu0 %v281
    %v313 = vpop.xlane.xlu0 %312
    %v314 = vmul.f32 %v283, %v233
    %v315 = vmul.f32 %v285, %v233
    %v316 = vmul.f32 %v287, %v233
    %v317 = vmul.f32 %v289, %v233
    %v318 = vmul.f32 %v291, %v233
    %v319 = vmul.f32 %v293, %v233
    %v320 = vmul.f32 %v295, %v233
    %v321 = vmul.f32 %v297, %v233
    %v322 = vmul.f32 %v299, %v233
    %v323 = vmul.f32 %v301, %v233
    %v324 = vmul.f32 %v303, %v233
    %v325 = vmul.f32 %v305, %v233
    %v326 = vmul.f32 %v307, %v233
    %v327 = vmul.f32 %v309, %v233
    %v328 = vmul.f32 %v311, %v233
    %v329 = vmul.f32 %v313, %v233
    %v330 = vadd.f32 %v314, 1e-05
    %v331 = vadd.f32 %v315, 1e-05
    %v332 = vadd.f32 %v316, 1e-05
    %v333 = vadd.f32 %v317, 1e-05
    %v334 = vadd.f32 %v318, 1e-05
    %v335 = vadd.f32 %v319, 1e-05
    %v336 = vadd.f32 %v320, 1e-05
    %v337 = vadd.f32 %v321, 1e-05
    %v338 = vadd.f32 %v322, 1e-05
    %v339 = vadd.f32 %v323, 1e-05
    %v340 = vadd.f32 %v324, 1e-05
    %v341 = vadd.f32 %v325, 1e-05
    %v342 = vadd.f32 %v326, 1e-05
    %v343 = vadd.f32 %v327, 1e-05
    %v344 = vadd.f32 %v328, 1e-05
    %v345 = vadd.f32 %v329, 1e-05
    %v346 = vrsqrt.pop %v330
    %v347 = vrsqrt.pop %v331
    %v348 = vrsqrt.pop %v332
    %v349 = vrsqrt.pop %v333
    %v350 = vrsqrt.pop %v334
    %v351 = vrsqrt.pop %v335
    %v352 = vrsqrt.pop %v336
    %v353 = vrsqrt.pop %v337
    %v354 = vrsqrt.pop %v338
    %v355 = vrsqrt.pop %v339
    %v356 = vrsqrt.pop %v340
    %v357 = vrsqrt.pop %v341
    %v358 = vrsqrt.pop %v342
    %v359 = vrsqrt.pop %v343
    %v360 = vrsqrt.pop %v344
    %v361 = vrsqrt.pop %v345
    %v362 = vmul.f32 %v250, %v346
    %v363 = vmul.f32 %v251, %v347
    %v364 = vmul.f32 %v252, %v348
    %v365 = vmul.f32 %v253, %v349
    %v366 = vmul.f32 %v254, %v350
    %v367 = vmul.f32 %v255, %v351
    %v368 = vmul.f32 %v256, %v352
    %v369 = vmul.f32 %v257, %v353
    %v370 = vmul.f32 %v258, %v354
    %v371 = vmul.f32 %v259, %v355
    %v372 = vmul.f32 %v260, %v356
    %v373 = vmul.f32 %v261, %v357
    %v374 = vmul.f32 %v262, %v358
    %v375 = vmul.f32 %v263, %v359
    %v376 = vmul.f32 %v264, %v360
    %v377 = vmul.f32 %v265, %v361
    %v378 = vlaneseq
    %v379 = vshrl.u32 %v378, 7
    %v380 = vsub.s32 0, %v379
    %v381 = vrot.slane %v200, %v380
    %v382 = vmul.f32 %v362, %v381
    %v383 = vmul.f32 %v363, %v381
    %v384 = vmul.f32 %v364, %v381
    %v385 = vmul.f32 %v365, %v381
    %v386 = vmul.f32 %v366, %v381
    %v387 = vmul.f32 %v367, %v381
    %v388 = vmul.f32 %v368, %v381
    %v389 = vmul.f32 %v369, %v381
    %v390 = vmul.f32 %v370, %v381
    %v391 = vmul.f32 %v371, %v381
    %v392 = vmul.f32 %v372, %v381
    %v393 = vmul.f32 %v373, %v381
    %v394 = vmul.f32 %v374, %v381
    %v395 = vmul.f32 %v375, %v381
    %v396 = vmul.f32 %v376, %v381
    %v397 = vmul.f32 %v377, %v381
    %v398 = vlaneseq
    %v399 = vshrl.u32 %v398, 7
    %v400 = vsub.s32 1, %v399
    %v401 = vrot.slane %v200, %v400
    %v402 = vadd.f32 %v382, %v401
    %v403 = vadd.f32 %v383, %v401
    %v404 = vadd.f32 %v384, %v401
    %v405 = vadd.f32 %v385, %v401
    %v406 = vadd.f32 %v386, %v401
    %v407 = vadd.f32 %v387, %v401
    %v408 = vadd.f32 %v388, %v401
    %v409 = vadd.f32 %v389, %v401
    %v410 = vadd.f32 %v390, %v401
    %v411 = vadd.f32 %v391, %v401
    %v412 = vadd.f32 %v392, %v401
    %v413 = vadd.f32 %v393, %v401
    %v414 = vadd.f32 %v394, %v401
    %v415 = vadd.f32 %v395, %v401
    %v416 = vadd.f32 %v396, %v401
    %v417 = vadd.f32 %v397, %v401
    %v418 = vpack.c.bf16 %v403, %v402
    %v419 = vpack.c.bf16 %v405, %v404
    %v420 = vpack.c.bf16 %v407, %v406
    %v421 = vpack.c.bf16 %v409, %v408
    %v422 = vpack.c.bf16 %v411, %v410
    %v423 = vpack.c.bf16 %v413, %v412
    %v424 = vpack.c.bf16 %v415, %v414
    %v425 = vpack.c.bf16 %v417, %v416
    %v426 = vld [vmem:[#allocation7] sm:$0xff]
    %v427 = vld [vmem:[#allocation7 + $0x8] sm:$0xf]
    %v428 = vld [vmem:[#allocation7 + $0xc] sm:$0xff]
    %v429 = vld [vmem:[#allocation7 + $0x14] sm:$0xf]
    %v430 = vld [vmem:[#allocation7 + $0x18] sm:$0xff]
    %v431 = vld [vmem:[#allocation7 + $0x20] sm:$0xf]
    %v432 = vld [vmem:[#allocation7 + $0x24] sm:$0xff]
    %v433 = vld [vmem:[#allocation7 + $0x2c] sm:$0xf]
    %v434 = vld [vmem:[#allocation7 + $0x30] sm:$0xff]
    %v435 = vld [vmem:[#allocation7 + $0x38] sm:$0xf]
    %v436 = vld [vmem:[#allocation7 + $0x3c] sm:$0xff]
    %v437 = vld [vmem:[#allocation7 + $0x44] sm:$0xf]
    %v438 = vld [vmem:[#allocation7 + $0x48] sm:$0xff]
    %v439 = vld [vmem:[#allocation7 + $0x50] sm:$0xf]
    %v440 = vld [vmem:[#allocation7 + $0x54] sm:$0xff]
    %v441 = vld [vmem:[#allocation7 + $0x5c] sm:$0xf]
    %v442 = vld [vmem:[#allocation7 + $0x60] sm:$0xff]
    %v443 = vld [vmem:[#allocation7 + $0x68] sm:$0xf]
    %v444 = vld [vmem:[#allocation7 + $0x6c] sm:$0xff]
    %v445 = vld [vmem:[#allocation7 + $0x74] sm:$0xf]
    %v446 = vld [vmem:[#allocation7 + $0x78] sm:$0xff]
    %v447 = vld [vmem:[#allocation7 + $0x80] sm:$0xf]
    %v448 = vld [vmem:[#allocation7 + $0x84] sm:$0xff]
    %v449 = vld [vmem:[#allocation7 + $0x8c] sm:$0xf]
    %v450 = vld [vmem:[#allocation7 + $0x90] sm:$0xff]
    %v451 = vld [vmem:[#allocation7 + $0x98] sm:$0xf]
    %v452 = vld [vmem:[#allocation7 + $0x9c] sm:$0xff]
    %v453 = vld [vmem:[#allocation7 + $0xa4] sm:$0xf]
    %v454 = vld [vmem:[#allocation7 + $0xa8] sm:$0xff]
    %v455 = vld [vmem:[#allocation7 + $0xb0] sm:$0xf]
    %v456 = vld [vmem:[#allocation7 + $0xb4] sm:$0xff]
    %v457 = vld [vmem:[#allocation7 + $0xbc] sm:$0xf]
    %v490 = vunpack.c.l.b16 %v426
    %v491 = vunpack.c.h.b16 %v426
    %v492 = vunpack.c.l.b16 %v427
    %v493 = vunpack.c.l.b16 %v428
    %v494 = vunpack.c.h.b16 %v428
    %v495 = vunpack.c.l.b16 %v429
    %v496 = vunpack.c.l.b16 %v430
    %v497 = vunpack.c.h.b16 %v430
    %v498 = vunpack.c.l.b16 %v431
    %v499 = vunpack.c.l.b16 %v432
    %v500 = vunpack.c.h.b16 %v432
    %v501 = vunpack.c.l.b16 %v433
    %v502 = vunpack.c.l.b16 %v434
    %v503 = vunpack.c.h.b16 %v434
    %v504 = vunpack.c.l.b16 %v435
    %v505 = vunpack.c.l.b16 %v436
    %v506 = vunpack.c.h.b16 %v436
    %v507 = vunpack.c.l.b16 %v437
    %v508 = vunpack.c.l.b16 %v438
    %v509 = vunpack.c.h.b16 %v438
    %v510 = vunpack.c.l.b16 %v439
    %v511 = vunpack.c.l.b16 %v440
    %v512 = vunpack.c.h.b16 %v440
    %v513 = vunpack.c.l.b16 %v441
    %v514 = vunpack.c.l.b16 %v442
    %v515 = vunpack.c.h.b16 %v442
    %v516 = vunpack.c.l.b16 %v443
    %v517 = vunpack.c.l.b16 %v444
    %v518 = vunpack.c.h.b16 %v444
    %v519 = vunpack.c.l.b16 %v445
    %v520 = vunpack.c.l.b16 %v446
    %v521 = vunpack.c.h.b16 %v446
    %v522 = vunpack.c.l.b16 %v447
    %v523 = vunpack.c.l.b16 %v448
    %v524 = vunpack.c.h.b16 %v448
    %v525 = vunpack.c.l.b16 %v449
    %v526 = vunpack.c.l.b16 %v450
    %v527 = vunpack.c.h.b16 %v450
    %v528 = vunpack.c.l.b16 %v451
    %v529 = vunpack.c.l.b16 %v452
    %v530 = vunpack.c.h.b16 %v452
    %v531 = vunpack.c.l.b16 %v453
    %v532 = vunpack.c.l.b16 %v454
    %v533 = vunpack.c.h.b16 %v454
    %v534 = vunpack.c.l.b16 %v455
    %v535 = vunpack.c.l.b16 %v456
    %v536 = vunpack.c.h.b16 %v456
    %v537 = vunpack.c.l.b16 %v457
    %v538 = vpack.c.b16 %v493, %v490
    %v539 = vpack.c.b16 %v494, %v491
    %v540 = vpack.c.b16 %v495, %v492
    %v541 = vpack.c.b16 %v499, %v496
    %v542 = vpack.c.b16 %v500, %v497
    %v543 = vpack.c.b16 %v501, %v498
    %v544 = vpack.c.b16 %v505, %v502
    %v545 = vpack.c.b16 %v506, %v503
    %v546 = vpack.c.b16 %v507, %v504
    %v547 = vpack.c.b16 %v511, %v508
    %v548 = vpack.c.b16 %v512, %v509
    %v549 = vpack.c.b16 %v513, %v510
    %v550 = vpack.c.b16 %v517, %v514
    %v551 = vpack.c.b16 %v518, %v515
    %v552 = vpack.c.b16 %v519, %v516
    %v553 = vpack.c.b16 %v523, %v520
    %v554 = vpack.c.b16 %v524, %v521
    %v555 = vpack.c.b16 %v525, %v522
    %v556 = vpack.c.b16 %v529, %v526
    %v557 = vpack.c.b16 %v530, %v527
    %v558 = vpack.c.b16 %v531, %v528
    %v559 = vpack.c.b16 %v535, %v532
    %v560 = vpack.c.b16 %v536, %v533
    %v561 = vpack.c.b16 %v537, %v534
    %586 = vmatprep.subr.bf16.mxu0 %v539
    %587 = vmatpush1.bf16.msra.mxu0 %v538
    %588 = vmatprep.subr.bf16.mxu0 %v542
    %589 = vmatpush1.bf16.msra.mxu0 %v541
    %590 = vmatprep.subr.bf16.mxu0 %v545
    %591 = vmatpush1.bf16.msra.mxu0 %v544
    %592 = vmatprep.subr.bf16.mxu0 %v548
    %593 = vmatpush1.bf16.msra.mxu0 %v547
    %594 = vmatprep.subr.bf16.mxu0 %v551
    %595 = vmatpush1.bf16.msra.mxu0 %v550
    %596 = vmatprep.subr.bf16.mxu0 %v554
    %597 = vmatpush1.bf16.msra.mxu0 %v553
    %598 = vmatprep.subr.bf16.mxu0 %v557
    %599 = vmatpush1.bf16.msra.mxu0 %v556
    %600 = vmatprep.subr.bf16.mxu0 %v560
    %601 = vmatpush1.bf16.msra.mxu0 %v559
    %602 = vmatprep.subr.bf16.mxu0 0
    %603 = vmatpush1.bf16.msra.mxu0 0
    %604 = vmatprep.subr.bf16.mxu0 0
    %605 = vmatpush1.bf16.msra.mxu0 0
    %606 = vmatprep.subr.bf16.mxu0 0
    %607 = vmatpush1.bf16.msra.mxu0 0
    %608 = vmatprep.subr.bf16.mxu0 0
    %609 = vmatpush1.bf16.msra.mxu0 0
    %610 = vmatprep.subr.bf16.mxu0 0
    %611 = vmatpush1.bf16.msra.mxu0 0
    %612 = vmatprep.subr.bf16.mxu0 0
    %613 = vmatpush1.bf16.msra.mxu0 0
    %614 = vmatprep.subr.bf16.mxu0 0
    %615 = vmatpush1.bf16.msra.mxu0 0
    %616 = vmatprep.subr.bf16.mxu0 0
    %617 = vmatpush1.bf16.msra.mxu0 0
    %618 = vmatprep.mubr.bf16.mxu0 0
    %619 = vmatmul.mubr.bf16.gmra.mrb[0].mxu0 %v418
    %v620 = vpop.f32.mrb[0].mxu0
    %v621 = vadd.f32 0.0, %v620
    %v622 = vpop.f32.mrb[0].mxu0
    %v623 = vadd.f32 0.0, %v622
    %v624 = vpop.f32.mrb[0].mxu0
    %v625 = vadd.f32 0.0, %v624
    %v626 = vpop.f32.mrb[0].mxu0
    %v627 = vadd.f32 0.0, %v626
    %628 = vmatprep.mubr.bf16.mxu0 0
    %629 = vmatmul.mubr.bf16.gmra.mrb[0].mxu0 %v419
    %v630 = vpop.f32.mrb[0].mxu0
    %v631 = vadd.f32 0.0, %v630
    %v632 = vpop.f32.mrb[0].mxu0
    %v633 = vadd.f32 0.0, %v632
    %v634 = vpop.f32.mrb[0].mxu0
    %v635 = vadd.f32 0.0, %v634
    %v636 = vpop.f32.mrb[0].mxu0
    %v637 = vadd.f32 0.0, %v636
    %638 = vmatprep.mubr.bf16.mxu0 0
    %639 = vmatmul.mubr.bf16.gmra.mrb[0].mxu0 %v420
    %v640 = vpop.f32.mrb[0].mxu0
    %v641 = vadd.f32 0.0, %v640
    %v642 = vpop.f32.mrb[0].mxu0
    %v643 = vadd.f32 0.0, %v642
    %v644 = vpop.f32.mrb[0].mxu0
    %v645 = vadd.f32 0.0, %v644
    %v646 = vpop.f32.mrb[0].mxu0
    %v647 = vadd.f32 0.0, %v646
    %648 = vmatprep.mubr.bf16.mxu0 0
    %649 = vmatmul.mubr.bf16.gmra.mrb[0].mxu0 %v421
    %v650 = vpop.f32.mrb[0].mxu0
    %v651 = vadd.f32 0.0, %v650
    %v652 = vpop.f32.mrb[0].mxu0
    %v653 = vadd.f32 0.0, %v652
    %v654 = vpop.f32.mrb[0].mxu0
    %v655 = vadd.f32 0.0, %v654
    %v656 = vpop.f32.mrb[0].mxu0
    %v657 = vadd.f32 0.0, %v656
    %658 = vmatprep.mubr.bf16.mxu0 0
    %659 = vmatmul.mubr.bf16.gmra.mrb[0].mxu0 %v422
    %v660 = vpop.f32.mrb[0].mxu0
    %v661 = vadd.f32 0.0, %v660
    %v662 = vpop.f32.mrb[0].mxu0
    %v663 = vadd.f32 0.0, %v662
    %v664 = vpop.f32.mrb[0].mxu0
    %v665 = vadd.f32 0.0, %v664
    %v666 = vpop.f32.mrb[0].mxu0
    %v667 = vadd.f32 0.0, %v666
    %668 = vmatprep.mubr.bf16.mxu0 0
    %669 = vmatmul.mubr.bf16.gmra.mrb[0].mxu0 %v423
    %v670 = vpop.f32.mrb[0].mxu0
    %v671 = vadd.f32 0.0, %v670
    %v672 = vpop.f32.mrb[0].mxu0
    %v673 = vadd.f32 0.0, %v672
    %v674 = vpop.f32.mrb[0].mxu0
    %v675 = vadd.f32 0.0, %v674
    %v676 = vpop.f32.mrb[0].mxu0
    %v677 = vadd.f32 0.0, %v676
    %678 = vmatprep.mubr.bf16.mxu0 0
    %679 = vmatmul.mubr.bf16.gmra.mrb[0].mxu0 %v424
    %v680 = vpop.f32.mrb[0].mxu0
    %v681 = vadd.f32 0.0, %v680
    %v682 = vpop.f32.mrb[0].mxu0
    %v683 = vadd.f32 0.0, %v682
    %v684 = vpop.f32.mrb[0].mxu0
    %v685 = vadd.f32 0.0, %v684
    %v686 = vpop.f32.mrb[0].mxu0
    %v687 = vadd.f32 0.0, %v686
    %688 = vmatprep.mubr.bf16.mxu0 0
    %689 = vmatmul.mubr.bf16.gmra.mrb[0].mxu0 %v425
    %v690 = vpop.f32.mrb[0].mxu0
    %v691 = vadd.f32 0.0, %v690
    %v692 = vpop.f32.mrb[0].mxu0
    %v693 = vadd.f32 0.0, %v692
    %v694 = vpop.f32.mrb[0].mxu0
    %v695 = vadd.f32 0.0, %v694
    %v696 = vpop.f32.mrb[0].mxu0
    %v697 = vadd.f32 0.0, %v696
    %698 = vdwg.mxu0
    %699 = vmatprep.subr.bf16.mxu0 0
    %700 = vmatpush1.bf16.msra.mxu0 %v540
    %701 = vmatprep.subr.bf16.mxu0 0
    %702 = vmatpush1.bf16.msra.mxu0 %v543
    %703 = vmatprep.subr.bf16.mxu0 0
    %704 = vmatpush1.bf16.msra.mxu0 %v546
    %705 = vmatprep.subr.bf16.mxu0 0
    %706 = vmatpush1.bf16.msra.mxu0 %v549
    %707 = vmatprep.subr.bf16.mxu0 0
    %708 = vmatpush1.bf16.msra.mxu0 %v552
    %709 = vmatprep.subr.bf16.mxu0 0
    %710 = vmatpush1.bf16.msra.mxu0 %v555
    %711 = vmatprep.subr.bf16.mxu0 0
    %712 = vmatpush1.bf16.msra.mxu0 %v558
    %713 = vmatprep.subr.bf16.mxu0 0
    %714 = vmatpush1.bf16.msra.mxu0 %v561
    %715 = vmatprep.subr.bf16.mxu0 0
    %716 = vmatpush1.bf16.msra.mxu0 0
    %717 = vmatprep.subr.bf16.mxu0 0
    %718 = vmatpush1.bf16.msra.mxu0 0
    %719 = vmatprep.subr.bf16.mxu0 0
    %720 = vmatpush1.bf16.msra.mxu0 0
    %721 = vmatprep.subr.bf16.mxu0 0
    %722 = vmatpush1.bf16.msra.mxu0 0
    %723 = vmatprep.subr.bf16.mxu0 0
    %724 = vmatpush1.bf16.msra.mxu0 0
    %725 = vmatprep.subr.bf16.mxu0 0
    %726 = vmatpush1.bf16.msra.mxu0 0
    %727 = vmatprep.subr.bf16.mxu0 0
    %728 = vmatpush1.bf16.msra.mxu0 0
    %729 = vmatprep.subr.bf16.mxu0 0
    %730 = vmatpush1.bf16.msra.mxu0 0
    %731 = vmatprep.mubr.bf16.mxu0 0
    %732 = vmatmul.mubr.bf16.gmra.mrb[0].mxu0 %v418
    %v733 = vpop.f32.mrb[0].mxu0
    %v734 = vadd.f32 0.0, %v733
    %v735 = vpop.f32.mrb[0].mxu0
    %v736 = vpop.f32.mrb[0].mxu0
    %v737 = vadd.f32 0.0, %v736
    %v738 = vpop.f32.mrb[0].mxu0
    %739 = vmatprep.mubr.bf16.mxu0 0
    %740 = vmatmul.mubr.bf16.gmra.mrb[0].mxu0 %v419
    %v741 = vpop.f32.mrb[0].mxu0
    %v742 = vadd.f32 0.0, %v741
    %v743 = vpop.f32.mrb[0].mxu0
    %v744 = vpop.f32.mrb[0].mxu0
    %v745 = vadd.f32 0.0, %v744
    %v746 = vpop.f32.mrb[0].mxu0
    %747 = vmatprep.mubr.bf16.mxu0 0
    %748 = vmatmul.mubr.bf16.gmra.mrb[0].mxu0 %v420
    %v749 = vpop.f32.mrb[0].mxu0
    %v750 = vadd.f32 0.0, %v749
    %v751 = vpop.f32.mrb[0].mxu0
    %v752 = vpop.f32.mrb[0].mxu0
    %v753 = vadd.f32 0.0, %v752
    %v754 = vpop.f32.mrb[0].mxu0
    %755 = vmatprep.mubr.bf16.mxu0 0
    %756 = vmatmul.mubr.bf16.gmra.mrb[0].mxu0 %v421
    %v757 = vpop.f32.mrb[0].mxu0
    %v758 = vadd.f32 0.0, %v757
    %v759 = vpop.f32.mrb[0].mxu0
    %v760 = vpop.f32.mrb[0].mxu0
    %v761 = vadd.f32 0.0, %v760
    %v762 = vpop.f32.mrb[0].mxu0
    %763 = vmatprep.mubr.bf16.mxu0 0
    %764 = vmatmul.mubr.bf16.gmra.mrb[0].mxu0 %v422
    %v765 = vpop.f32.mrb[0].mxu0
    %v766 = vadd.f32 0.0, %v765
    %v767 = vpop.f32.mrb[0].mxu0
    %v768 = vpop.f32.mrb[0].mxu0
    %v769 = vadd.f32 0.0, %v768
    %v770 = vpop.f32.mrb[0].mxu0
    %771 = vmatprep.mubr.bf16.mxu0 0
    %772 = vmatmul.mubr.bf16.gmra.mrb[0].mxu0 %v423
    %v773 = vpop.f32.mrb[0].mxu0
    %v774 = vadd.f32 0.0, %v773
    %v775 = vpop.f32.mrb[0].mxu0
    %v776 = vpop.f32.mrb[0].mxu0
    %v777 = vadd.f32 0.0, %v776
    %v778 = vpop.f32.mrb[0].mxu0
    %779 = vmatprep.mubr.bf16.mxu0 0
    %780 = vmatmul.mubr.bf16.gmra.mrb[0].mxu0 %v424
    %v781 = vpop.f32.mrb[0].mxu0
    %v782 = vadd.f32 0.0, %v781
    %v783 = vpop.f32.mrb[0].mxu0
    %v784 = vpop.f32.mrb[0].mxu0
    %v785 = vadd.f32 0.0, %v784
    %v786 = vpop.f32.mrb[0].mxu0
    %787 = vmatprep.mubr.bf16.mxu0 0
    %788 = vmatmul.mubr.bf16.gmra.mrb[0].mxu0 %v425
    %v789 = vpop.f32.mrb[0].mxu0
    %v790 = vadd.f32 0.0, %v789
    %v791 = vpop.f32.mrb[0].mxu0
    %v792 = vpop.f32.mrb[0].mxu0
    %v793 = vadd.f32 0.0, %v792
    %v794 = vpop.f32.mrb[0].mxu0
    %795 = vdwg.mxu0
    %v796 = vmul.f32 %v621, 0.088388346
    %v797 = vmul.f32 %v625, 0.088388346
    %v798 = vmul.f32 %v631, 0.088388346
    %v799 = vmul.f32 %v635, 0.088388346
    %v800 = vmul.f32 %v641, 0.088388346
    %v801 = vmul.f32 %v645, 0.088388346
    %v802 = vmul.f32 %v651, 0.088388346
    %v803 = vmul.f32 %v655, 0.088388346
    %v804 = vmul.f32 %v661, 0.088388346
    %v805 = vmul.f32 %v665, 0.088388346
    %v806 = vmul.f32 %v671, 0.088388346
    %v807 = vmul.f32 %v675, 0.088388346
    %v808 = vmul.f32 %v681, 0.088388346
    %v809 = vmul.f32 %v685, 0.088388346
    %v810 = vmul.f32 %v691, 0.088388346
    %v811 = vmul.f32 %v695, 0.088388346
    %v812 = vpack.c.bf16 %v797, %v796
    %v813 = vpack.c.bf16 %v799, %v798
    %v814 = vpack.c.bf16 %v801, %v800
    %v815 = vpack.c.bf16 %v803, %v802
    %v816 = vpack.c.bf16 %v805, %v804
    %v817 = vpack.c.bf16 %v807, %v806
    %v818 = vpack.c.bf16 %v809, %v808
    %v819 = vpack.c.bf16 %v811, %v810
    %v820 = vpack.c.bf16 %v627, %v623
    %v821 = vpack.c.bf16 %v637, %v633
    %v822 = vpack.c.bf16 %v647, %v643
    %v823 = vpack.c.bf16 %v657, %v653
    %v824 = vpack.c.bf16 %v667, %v663
    %v825 = vpack.c.bf16 %v677, %v673
    %v826 = vpack.c.bf16 %v687, %v683
    %v827 = vpack.c.bf16 %v697, %v693
    %v828 = vpack.c.bf16 %v737, %v734
    %v829 = vpack.c.bf16 %v745, %v742
    %v830 = vpack.c.bf16 %v753, %v750
    %v831 = vpack.c.bf16 %v761, %v758
    %v832 = vpack.c.bf16 %v769, %v766
    %v833 = vpack.c.bf16 %v777, %v774
    %v834 = vpack.c.bf16 %v785, %v782
    %v835 = vpack.c.bf16 %v793, %v790
    %vm836 = vcmask 261120
    %v838 = vsel %vm836, %v812, 0
    %v841 = vsel %vm836, %v813, 0
    %v844 = vsel %vm836, %v814, 0
    %v847 = vsel %vm836, %v815, 0
    %v850 = vsel %vm836, %v820, 0
    %v853 = vsel %vm836, %v821, 0
    %v856 = vsel %vm836, %v822, 0
    %v859 = vsel %vm836, %v823, 0
    %861 = vmatprep.subr.bf16.mxu0 0
    %862 = vmatpush1.bf16.xpose.msra.mxu0 %v850
    %863 = vmatprep.subr.bf16.mxu0 0
    %864 = vmatpush1.bf16.xpose.msra.mxu0 %v853
    %865 = vmatprep.subr.bf16.mxu0 0
    %866 = vmatpush1.bf16.xpose.msra.mxu0 %v856
    %867 = vmatprep.subr.bf16.mxu0 0
    %868 = vmatpush1.bf16.xpose.msra.mxu0 %v859
    %869 = vmatprep.subr.bf16.mxu0 0
    %870 = vmatpush1.bf16.xpose.msra.mxu0 0
    %871 = vmatprep.subr.bf16.mxu0 0
    %872 = vmatpush1.bf16.xpose.msra.mxu0 0
    %873 = vmatprep.subr.bf16.mxu0 0
    %874 = vmatpush1.bf16.xpose.msra.mxu0 0
    %875 = vmatprep.subr.bf16.mxu0 0
    %876 = vmatpush1.bf16.xpose.msra.mxu0 0
    %877 = vmatprep.subr.bf16.mxu0 0
    %878 = vmatpush1.bf16.xpose.msra.mxu0 0
    %879 = vmatprep.subr.bf16.mxu0 0
    %880 = vmatpush1.bf16.xpose.msra.mxu0 0
    %881 = vmatprep.subr.bf16.mxu0 0
    %882 = vmatpush1.bf16.xpose.msra.mxu0 0
    %883 = vmatprep.subr.bf16.mxu0 0
    %884 = vmatpush1.bf16.xpose.msra.mxu0 0
    %885 = vmatprep.subr.bf16.mxu0 0
    %886 = vmatpush1.bf16.xpose.msra.mxu0 0
    %887 = vmatprep.subr.bf16.mxu0 0
    %888 = vmatpush1.bf16.xpose.msra.mxu0 0
    %889 = vmatprep.subr.bf16.mxu0 0
    %890 = vmatpush1.bf16.xpose.msra.mxu0 0
    %891 = vmatprep.subr.bf16.mxu0 0
    %892 = vmatpush1.bf16.xpose.msra.mxu0 0
    %893 = vmatprep.mubr.bf16.mxu0 0
    %894 = vmatmul.mubr.bf16.gmra.mrb[0].mxu0 %v838
    %v895 = vpop.f32.mrb[0].mxu0
    %v896 = vadd.f32 %v192, %v895
    %v897 = vpop.f32.mrb[0].mxu0
    %v898 = vpop.f32.mrb[0].mxu0
    %v899 = vadd.f32 %v193, %v898
    %v900 = vpop.f32.mrb[0].mxu0
    %901 = vmatprep.mubr.bf16.mxu0 0
    %902 = vmatmul.mubr.bf16.gmra.mrb[0].mxu0 %v841
    %v903 = vpop.f32.mrb[0].mxu0
    %v904 = vadd.f32 %v194, %v903
    %v905 = vpop.f32.mrb[0].mxu0
    %v906 = vpop.f32.mrb[0].mxu0
    %v907 = vadd.f32 %v195, %v906
    %v908 = vpop.f32.mrb[0].mxu0
    %909 = vmatprep.mubr.bf16.mxu0 0
    %910 = vmatmul.mubr.bf16.gmra.mrb[0].mxu0 %v844
    %v911 = vpop.f32.mrb[0].mxu0
    %v912 = vadd.f32 %v196, %v911
    %v913 = vpop.f32.mrb[0].mxu0
    %v914 = vpop.f32.mrb[0].mxu0
    %v915 = vadd.f32 %v197, %v914
    %v916 = vpop.f32.mrb[0].mxu0
    %917 = vmatprep.mubr.bf16.mxu0 0
    %918 = vmatmul.mubr.bf16.gmra.mrb[0].mxu0 %v847
    %v919 = vpop.f32.mrb[0].mxu0
    %v920 = vadd.f32 %v198, %v919
    %v921 = vpop.f32.mrb[0].mxu0
    %v922 = vpop.f32.mrb[0].mxu0
    %v923 = vadd.f32 %v199, %v922
    %v924 = vpop.f32.mrb[0].mxu0
    %925 = vdwg.mxu0
    %vm926 = vcmask 523264
    %v927 = vsel %vm926, %v896, -inf
    %928 = vmax.xlane.f32.xlu0 %v927
    %v929 = vpop.xlane.xlu0 %928
    %v930 = vsel %vm926, %v899, -inf
    %931 = vmax.xlane.f32.xlu0 %v930
    %v932 = vpop.xlane.xlu0 %931
    %v933 = vsel %vm926, %v904, -inf
    %934 = vmax.xlane.f32.xlu0 %v933
    %v935 = vpop.xlane.xlu0 %934
    %v936 = vsel %vm926, %v907, -inf
    %937 = vmax.xlane.f32.xlu0 %v936
    %v938 = vpop.xlane.xlu0 %937
    %v939 = vsel %vm926, %v912, -inf
    %940 = vmax.xlane.f32.xlu0 %v939
    %v941 = vpop.xlane.xlu0 %940
    %v942 = vsel %vm926, %v915, -inf
    %943 = vmax.xlane.f32.xlu0 %v942
    %v944 = vpop.xlane.xlu0 %943
    %v945 = vsel %vm926, %v920, -inf
    %946 = vmax.xlane.f32.xlu0 %v945
    %v947 = vpop.xlane.xlu0 %946
    %v948 = vsel %vm926, %v923, -inf
    %949 = vmax.xlane.f32.xlu0 %v948
    %v950 = vpop.xlane.xlu0 %949
    %v951 = vsub.f32 %v896, %v929
    %v952 = vsub.f32 %v899, %v932
    %v953 = vsub.f32 %v904, %v935
    %v954 = vsub.f32 %v907, %v938
    %v955 = vsub.f32 %v912, %v941
    %v956 = vsub.f32 %v915, %v944
    %v957 = vsub.f32 %v920, %v947
    %v958 = vsub.f32 %v923, %v950
    %v959 = vmul.f32 %v951, 1.442695
    %v960 = vpow.pop %v959
    %v961 = vmul.f32 %v952, 1.442695
    %v962 = vpow.pop %v961
    %v963 = vmul.f32 %v953, 1.442695
    %v964 = vpow.pop %v963
    %v965 = vmul.f32 %v954, 1.442695
    %v966 = vpow.pop %v965
    %v967 = vmul.f32 %v955, 1.442695
    %v968 = vpow.pop %v967
    %v969 = vmul.f32 %v956, 1.442695
    %v970 = vpow.pop %v969
    %v971 = vmul.f32 %v957, 1.442695
    %v972 = vpow.pop %v971
    %v973 = vmul.f32 %v958, 1.442695
    %v974 = vpow.pop %v973
    %v975 = vsel %vm926, %v960, 0.0
    %976 = vadd.xlane.f32.xlu0 %v975
    %v977 = vpop.xlane.xlu0 %976
    %v978 = vsel %vm926, %v962, 0.0
    %979 = vadd.xlane.f32.xlu0 %v978
    %v980 = vpop.xlane.xlu0 %979
    %v981 = vsel %vm926, %v964, 0.0
    %982 = vadd.xlane.f32.xlu0 %v981
    %v983 = vpop.xlane.xlu0 %982
    %v984 = vsel %vm926, %v966, 0.0
    %985 = vadd.xlane.f32.xlu0 %v984
    %v986 = vpop.xlane.xlu0 %985
    %v987 = vsel %vm926, %v968, 0.0
    %988 = vadd.xlane.f32.xlu0 %v987
    %v989 = vpop.xlane.xlu0 %988
    %v990 = vsel %vm926, %v970, 0.0
    %991 = vadd.xlane.f32.xlu0 %v990
    %v992 = vpop.xlane.xlu0 %991
    %v993 = vsel %vm926, %v972, 0.0
    %994 = vadd.xlane.f32.xlu0 %v993
    %v995 = vpop.xlane.xlu0 %994
    %v996 = vsel %vm926, %v974, 0.0
    %997 = vadd.xlane.f32.xlu0 %v996
    %v998 = vpop.xlane.xlu0 %997
    %v999 = vrcp.pop %v977
    %v1000 = vrcp.pop %v980
    %v1001 = vrcp.pop %v983
    %v1002 = vrcp.pop %v986
    %v1003 = vrcp.pop %v989
    %v1004 = vrcp.pop %v992
    %v1005 = vrcp.pop %v995
    %v1006 = vrcp.pop %v998
    %v1007 = vmul.f32 %v960, %v999
    %v1008 = vmul.f32 %v962, %v1000
    %v1009 = vmul.f32 %v964, %v1001
    %v1010 = vmul.f32 %v966, %v1002
    %v1011 = vmul.f32 %v968, %v1003
    %v1012 = vmul.f32 %v970, %v1004
    %v1013 = vmul.f32 %v972, %v1005
    %v1014 = vmul.f32 %v974, %v1006
    %v1015 = vpack.c.bf16 %v1008, %v1007
    %v1016 = vpack.c.bf16 %v1010, %v1009
    %v1017 = vpack.c.bf16 %v1012, %v1011
    %v1018 = vpack.c.bf16 %v1014, %v1013
    %v1020 = vsel %vm926, %v1015, 0
    %v1023 = vsel %vm926, %v1016, 0
    %v1026 = vsel %vm926, %v1017, 0
    %v1029 = vsel %vm926, %v1018, 0
    %1031 = vmatprep.subr.bf16.mxu0 0
    %1032 = vmatpush1.bf16.msra.mxu0 %v828
    %1033 = vmatprep.subr.bf16.mxu0 0
    %1034 = vmatpush1.bf16.msra.mxu0 %v829
    %1035 = vmatprep.subr.bf16.mxu0 0
    %1036 = vmatpush1.bf16.msra.mxu0 %v830
    %1037 = vmatprep.subr.bf16.mxu0 0
    %1038 = vmatpush1.bf16.msra.mxu0 %v831
    %1039 = vmatprep.subr.bf16.mxu0 0
    %1040 = vmatpush1.bf16.msra.mxu0 0
    %1041 = vmatprep.subr.bf16.mxu0 0
    %1042 = vmatpush1.bf16.msra.mxu0 0
    %1043 = vmatprep.subr.bf16.mxu0 0
    %1044 = vmatpush1.bf16.msra.mxu0 0
    %1045 = vmatprep.subr.bf16.mxu0 0
    %1046 = vmatpush1.bf16.msra.mxu0 0
    %1047 = vmatprep.subr.bf16.mxu0 0
    %1048 = vmatpush1.bf16.msra.mxu0 0
    %1049 = vmatprep.subr.bf16.mxu0 0
    %1050 = vmatpush1.bf16.msra.mxu0 0
    %1051 = vmatprep.subr.bf16.mxu0 0
    %1052 = vmatpush1.bf16.msra.mxu0 0
    %1053 = vmatprep.subr.bf16.mxu0 0
    %1054 = vmatpush1.bf16.msra.mxu0 0
    %1055 = vmatprep.subr.bf16.mxu0 0
    %1056 = vmatpush1.bf16.msra.mxu0 0
    %1057 = vmatprep.subr.bf16.mxu0 0
    %1058 = vmatpush1.bf16.msra.mxu0 0
    %1059 = vmatprep.subr.bf16.mxu0 0
    %1060 = vmatpush1.bf16.msra.mxu0 0
    %1061 = vmatprep.subr.bf16.mxu0 0
    %1062 = vmatpush1.bf16.msra.mxu0 0
    %1063 = vmatprep.mubr.bf16.mxu0 0
    %1064 = vmatmul.mubr.bf16.gmra.mrb[0].mxu0 %v1020
    %v1065 = vpop.f32.mrb[0].mxu0
    %v1066 = vadd.f32 0.0, %v1065
    %v1067 = vpop.f32.mrb[0].mxu0
    %v1068 = vpop.f32.mrb[0].mxu0
    %v1069 = vadd.f32 0.0, %v1068
    %v1070 = vpop.f32.mrb[0].mxu0
    %1071 = vmatprep.mubr.bf16.mxu0 0
    %1072 = vmatmul.mubr.bf16.gmra.mrb[0].mxu0 %v1023
    %v1073 = vpop.f32.mrb[0].mxu0
    %v1074 = vadd.f32 0.0, %v1073
    %v1075 = vpop.f32.mrb[0].mxu0
    %v1076 = vpop.f32.mrb[0].mxu0
    %v1077 = vadd.f32 0.0, %v1076
    %v1078 = vpop.f32.mrb[0].mxu0
    %1079 = vmatprep.mubr.bf16.mxu0 0
    %1080 = vmatmul.mubr.bf16.gmra.mrb[0].mxu0 %v1026
    %v1081 = vpop.f32.mrb[0].mxu0
    %v1082 = vadd.f32 0.0, %v1081
    %v1083 = vpop.f32.mrb[0].mxu0
    %v1084 = vpop.f32.mrb[0].mxu0
    %v1085 = vadd.f32 0.0, %v1084
    %v1086 = vpop.f32.mrb[0].mxu0
    %1087 = vmatprep.mubr.bf16.mxu0 0
    %1088 = vmatmul.mubr.bf16.gmra.mrb[0].mxu0 %v1029
    %v1089 = vpop.f32.mrb[0].mxu0
    %v1090 = vadd.f32 0.0, %v1089
    %v1091 = vpop.f32.mrb[0].mxu0
    %v1092 = vpop.f32.mrb[0].mxu0
    %v1093 = vadd.f32 0.0, %v1092
    %v1094 = vpop.f32.mrb[0].mxu0
    %1095 = vdwg.mxu0
    %v1096 = vpack.c.bf16 %v1069, %v1066
    %v1097 = vpack.c.bf16 %v1077, %v1074
    %v1098 = vpack.c.bf16 %v1085, %v1082
    %v1099 = vpack.c.bf16 %v1093, %v1090
    %1104 = vrot.lane.b32.xlu0 %v812, 96
    %v1105 = vpop.permute.xlu0 %1104
    %1106 = vrot.lane.b32.xlu0 %v813, 96
    %v1107 = vpop.permute.xlu0 %1106
    %1108 = vrot.lane.b32.xlu0 %v814, 96
    %v1109 = vpop.permute.xlu0 %1108
    %1110 = vrot.lane.b32.xlu0 %v815, 96
    %v1111 = vpop.permute.xlu0 %1110
    %1116 = vrot.lane.b32.xlu0 %v820, 96
    %v1117 = vpop.permute.xlu0 %1116
    %1118 = vrot.lane.b32.xlu0 %v821, 96
    %v1119 = vpop.permute.xlu0 %1118
    %1120 = vrot.lane.b32.xlu0 %v822, 96
    %v1121 = vpop.permute.xlu0 %1120
    %1122 = vrot.lane.b32.xlu0 %v823, 96
    %v1123 = vpop.permute.xlu0 %1122
    %v1125 = vsel %vm836, %v1105, 0
    %v1128 = vsel %vm836, %v1107, 0
    %v1131 = vsel %vm836, %v1109, 0
    %v1134 = vsel %vm836, %v1111, 0
    %v1137 = vsel %vm836, %v1117, 0
    %v1140 = vsel %vm836, %v1119, 0
    %v1143 = vsel %vm836, %v1121, 0
    %v1146 = vsel %vm836, %v1123, 0
    %1148 = vmatprep.subr.bf16.mxu0 0
    %1149 = vmatpush1.bf16.xpose.msra.mxu0 %v1137
    %1150 = vmatprep.subr.bf16.mxu0 0
    %1151 = vmatpush1.bf16.xpose.msra.mxu0 %v1140
    %1152 = vmatprep.subr.bf16.mxu0 0
    %1153 = vmatpush1.bf16.xpose.msra.mxu0 %v1143
    %1154 = vmatprep.subr.bf16.mxu0 0
    %1155 = vmatpush1.bf16.xpose.msra.mxu0 %v1146
    %1156 = vmatprep.subr.bf16.mxu0 0
    %1157 = vmatpush1.bf16.xpose.msra.mxu0 0
    %1158 = vmatprep.subr.bf16.mxu0 0
    %1159 = vmatpush1.bf16.xpose.msra.mxu0 0
    %1160 = vmatprep.subr.bf16.mxu0 0
    %1161 = vmatpush1.bf16.xpose.msra.mxu0 0
    %1162 = vmatprep.subr.bf16.mxu0 0
    %1163 = vmatpush1.bf16.xpose.msra.mxu0 0
    %1164 = vmatprep.subr.bf16.mxu0 0
    %1165 = vmatpush1.bf16.xpose.msra.mxu0 0
    %1166 = vmatprep.subr.bf16.mxu0 0
    %1167 = vmatpush1.bf16.xpose.msra.mxu0 0
    %1168 = vmatprep.subr.bf16.mxu0 0
    %1169 = vmatpush1.bf16.xpose.msra.mxu0 0
    %1170 = vmatprep.subr.bf16.mxu0 0
    %1171 = vmatpush1.bf16.xpose.msra.mxu0 0
    %1172 = vmatprep.subr.bf16.mxu0 0
    %1173 = vmatpush1.bf16.xpose.msra.mxu0 0
    %1174 = vmatprep.subr.bf16.mxu0 0
    %1175 = vmatpush1.bf16.xpose.msra.mxu0 0
    %1176 = vmatprep.subr.bf16.mxu0 0
    %1177 = vmatpush1.bf16.xpose.msra.mxu0 0
    %1178 = vmatprep.subr.bf16.mxu0 0
    %1179 = vmatpush1.bf16.xpose.msra.mxu0 0
    %1180 = vmatprep.mubr.bf16.mxu0 0
    %1181 = vmatmul.mubr.bf16.gmra.mrb[0].mxu0 %v1125
    %v1182 = vpop.f32.mrb[0].mxu0
    %v1183 = vadd.f32 %v192, %v1182
    %v1184 = vpop.f32.mrb[0].mxu0
    %v1185 = vpop.f32.mrb[0].mxu0
    %v1186 = vadd.f32 %v193, %v1185
    %v1187 = vpop.f32.mrb[0].mxu0
    %1188 = vmatprep.mubr.bf16.mxu0 0
    %1189 = vmatmul.mubr.bf16.gmra.mrb[0].mxu0 %v1128
    %v1190 = vpop.f32.mrb[0].mxu0
    %v1191 = vadd.f32 %v194, %v1190
    %v1192 = vpop.f32.mrb[0].mxu0
    %v1193 = vpop.f32.mrb[0].mxu0
    %v1194 = vadd.f32 %v195, %v1193
    %v1195 = vpop.f32.mrb[0].mxu0
    %1196 = vmatprep.mubr.bf16.mxu0 0
    %1197 = vmatmul.mubr.bf16.gmra.mrb[0].mxu0 %v1131
    %v1198 = vpop.f32.mrb[0].mxu0
    %v1199 = vadd.f32 %v196, %v1198
    %v1200 = vpop.f32.mrb[0].mxu0
    %v1201 = vpop.f32.mrb[0].mxu0
    %v1202 = vadd.f32 %v197, %v1201
    %v1203 = vpop.f32.mrb[0].mxu0
    %1204 = vmatprep.mubr.bf16.mxu0 0
    %1205 = vmatmul.mubr.bf16.gmra.mrb[0].mxu0 %v1134
    %v1206 = vpop.f32.mrb[0].mxu0
    %v1207 = vadd.f32 %v198, %v1206
    %v1208 = vpop.f32.mrb[0].mxu0
    %v1209 = vpop.f32.mrb[0].mxu0
    %v1210 = vadd.f32 %v199, %v1209
    %v1211 = vpop.f32.mrb[0].mxu0
    %1212 = vdwg.mxu0
    %v1213 = vsel %vm926, %v1183, -inf
    %1214 = vmax.xlane.f32.xlu0 %v1213
    %v1215 = vpop.xlane.xlu0 %1214
    %v1216 = vsel %vm926, %v1186, -inf
    %1217 = vmax.xlane.f32.xlu0 %v1216
    %v1218 = vpop.xlane.xlu0 %1217
    %v1219 = vsel %vm926, %v1191, -inf
    %1220 = vmax.xlane.f32.xlu0 %v1219
    %v1221 = vpop.xlane.xlu0 %1220
    %v1222 = vsel %vm926, %v1194, -inf
    %1223 = vmax.xlane.f32.xlu0 %v1222
    %v1224 = vpop.xlane.xlu0 %1223
    %v1225 = vsel %vm926, %v1199, -inf
    %1226 = vmax.xlane.f32.xlu0 %v1225
    %v1227 = vpop.xlane.xlu0 %1226
    %v1228 = vsel %vm926, %v1202, -inf
    %1229 = vmax.xlane.f32.xlu0 %v1228
    %v1230 = vpop.xlane.xlu0 %1229
    %v1231 = vsel %vm926, %v1207, -inf
    %1232 = vmax.xlane.f32.xlu0 %v1231
    %v1233 = vpop.xlane.xlu0 %1232
    %v1234 = vsel %vm926, %v1210, -inf
    %1235 = vmax.xlane.f32.xlu0 %v1234
    %v1236 = vpop.xlane.xlu0 %1235
    %v1237 = vsub.f32 %v1183, %v1215
    %v1238 = vsub.f32 %v1186, %v1218
    %v1239 = vsub.f32 %v1191, %v1221
    %v1240 = vsub.f32 %v1194, %v1224
    %v1241 = vsub.f32 %v1199, %v1227
    %v1242 = vsub.f32 %v1202, %v1230
    %v1243 = vsub.f32 %v1207, %v1233
    %v1244 = vsub.f32 %v1210, %v1236
    %v1245 = vmul.f32 %v1237, 1.442695
    %v1246 = vpow.pop %v1245
    %v1247 = vmul.f32 %v1238, 1.442695
    %v1248 = vpow.pop %v1247
    %v1249 = vmul.f32 %v1239, 1.442695
    %v1250 = vpow.pop %v1249
    %v1251 = vmul.f32 %v1240, 1.442695
    %v1252 = vpow.pop %v1251
    %v1253 = vmul.f32 %v1241, 1.442695
    %v1254 = vpow.pop %v1253
    %v1255 = vmul.f32 %v1242, 1.442695
    %v1256 = vpow.pop %v1255
    %v1257 = vmul.f32 %v1243, 1.442695
    %v1258 = vpow.pop %v1257
    %v1259 = vmul.f32 %v1244, 1.442695
    %v1260 = vpow.pop %v1259
    %v1261 = vsel %vm926, %v1246, 0.0
    %1262 = vadd.xlane.f32.xlu0 %v1261
    %v1263 = vpop.xlane.xlu0 %1262
    %v1264 = vsel %vm926, %v1248, 0.0
    %1265 = vadd.xlane.f32.xlu0 %v1264
    %v1266 = vpop.xlane.xlu0 %1265
    %v1267 = vsel %vm926, %v1250, 0.0
    %1268 = vadd.xlane.f32.xlu0 %v1267
    %v1269 = vpop.xlane.xlu0 %1268
    %v1270 = vsel %vm926, %v1252, 0.0
    %1271 = vadd.xlane.f32.xlu0 %v1270
    %v1272 = vpop.xlane.xlu0 %1271
    %v1273 = vsel %vm926, %v1254, 0.0
    %1274 = vadd.xlane.f32.xlu0 %v1273
    %v1275 = vpop.xlane.xlu0 %1274
    %v1276 = vsel %vm926, %v1256, 0.0
    %1277 = vadd.xlane.f32.xlu0 %v1276
    %v1278 = vpop.xlane.xlu0 %1277
    %v1279 = vsel %vm926, %v1258, 0.0
    %1280 = vadd.xlane.f32.xlu0 %v1279
    %v1281 = vpop.xlane.xlu0 %1280
    %v1282 = vsel %vm926, %v1260, 0.0
    %1283 = vadd.xlane.f32.xlu0 %v1282
    %v1284 = vpop.xlane.xlu0 %1283
    %v1285 = vrcp.pop %v1263
    %v1286 = vrcp.pop %v1266
    %v1287 = vrcp.pop %v1269
    %v1288 = vrcp.pop %v1272
    %v1289 = vrcp.pop %v1275
    %v1290 = vrcp.pop %v1278
    %v1291 = vrcp.pop %v1281
    %v1292 = vrcp.pop %v1284
    %v1293 = vmul.f32 %v1246, %v1285
    %v1294 = vmul.f32 %v1248, %v1286
    %v1295 = vmul.f32 %v1250, %v1287
    %v1296 = vmul.f32 %v1252, %v1288
    %v1297 = vmul.f32 %v1254, %v1289
    %v1298 = vmul.f32 %v1256, %v1290
    %v1299 = vmul.f32 %v1258, %v1291
    %v1300 = vmul.f32 %v1260, %v1292
    %v1301 = vpack.c.bf16 %v1294, %v1293
    %v1302 = vpack.c.bf16 %v1296, %v1295
    %v1303 = vpack.c.bf16 %v1298, %v1297
    %v1304 = vpack.c.bf16 %v1300, %v1299
    %1309 = vrot.lane.b32.xlu0 %v828, 96
    %v1310 = vpop.permute.xlu0 %1309
    %1311 = vrot.lane.b32.xlu0 %v829, 96
    %v1312 = vpop.permute.xlu0 %1311
    %1313 = vrot.lane.b32.xlu0 %v830, 96
    %v1314 = vpop.permute.xlu0 %1313
    %1315 = vrot.lane.b32.xlu0 %v831, 96
    %v1316 = vpop.permute.xlu0 %1315
    %v1322 = vsel %vm926, %v1301, 0
    %v1325 = vsel %vm926, %v1302, 0
    %v1328 = vsel %vm926, %v1303, 0
    %v1331 = vsel %vm926, %v1304, 0
    %1333 = vmatprep.subr.bf16.mxu0 0
    %1334 = vmatpush1.bf16.msra.mxu0 %v1310
    %1335 = vmatprep.subr.bf16.mxu0 0
    %1336 = vmatpush1.bf16.msra.mxu0 %v1312
    %1337 = vmatprep.subr.bf16.mxu0 0
    %1338 = vmatpush1.bf16.msra.mxu0 %v1314
    %1339 = vmatprep.subr.bf16.mxu0 0
    %1340 = vmatpush1.bf16.msra.mxu0 %v1316
    %1341 = vmatprep.subr.bf16.mxu0 0
    %1342 = vmatpush1.bf16.msra.mxu0 0
    %1343 = vmatprep.subr.bf16.mxu0 0
    %1344 = vmatpush1.bf16.msra.mxu0 0
    %1345 = vmatprep.subr.bf16.mxu0 0
    %1346 = vmatpush1.bf16.msra.mxu0 0
    %1347 = vmatprep.subr.bf16.mxu0 0
    %1348 = vmatpush1.bf16.msra.mxu0 0
    %1349 = vmatprep.subr.bf16.mxu0 0
    %1350 = vmatpush1.bf16.msra.mxu0 0
    %1351 = vmatprep.subr.bf16.mxu0 0
    %1352 = vmatpush1.bf16.msra.mxu0 0
    %1353 = vmatprep.subr.bf16.mxu0 0
    %1354 = vmatpush1.bf16.msra.mxu0 0
    %1355 = vmatprep.subr.bf16.mxu0 0
    %1356 = vmatpush1.bf16.msra.mxu0 0
    %1357 = vmatprep.subr.bf16.mxu0 0
    %1358 = vmatpush1.bf16.msra.mxu0 0
    %1359 = vmatprep.subr.bf16.mxu0 0
    %1360 = vmatpush1.bf16.msra.mxu0 0
    %1361 = vmatprep.subr.bf16.mxu0 0
    %1362 = vmatpush1.bf16.msra.mxu0 0
    %1363 = vmatprep.subr.bf16.mxu0 0
    %1364 = vmatpush1.bf16.msra.mxu0 0
    %1365 = vmatprep.mubr.bf16.mxu0 0
    %1366 = vmatmul.mubr.bf16.gmra.mrb[0].mxu0 %v1322
    %v1367 = vpop.f32.mrb[0].mxu0
    %v1368 = vadd.f32 0.0, %v1367
    %v1369 = vpop.f32.mrb[0].mxu0
    %v1370 = vpop.f32.mrb[0].mxu0
    %v1371 = vadd.f32 0.0, %v1370
    %v1372 = vpop.f32.mrb[0].mxu0
    %1373 = vmatprep.mubr.bf16.mxu0 0
    %1374 = vmatmul.mubr.bf16.gmra.mrb[0].mxu0 %v1325
    %v1375 = vpop.f32.mrb[0].mxu0
    %v1376 = vadd.f32 0.0, %v1375
    %v1377 = vpop.f32.mrb[0].mxu0
    %v1378 = vpop.f32.mrb[0].mxu0
    %v1379 = vadd.f32 0.0, %v1378
    %v1380 = vpop.f32.mrb[0].mxu0
    %1381 = vmatprep.mubr.bf16.mxu0 0
    %1382 = vmatmul.mubr.bf16.gmra.mrb[0].mxu0 %v1328
    %v1383 = vpop.f32.mrb[0].mxu0
    %v1384 = vadd.f32 0.0, %v1383
    %v1385 = vpop.f32.mrb[0].mxu0
    %v1386 = vpop.f32.mrb[0].mxu0
    %v1387 = vadd.f32 0.0, %v1386
    %v1388 = vpop.f32.mrb[0].mxu0
    %1389 = vmatprep.mubr.bf16.mxu0 0
    %1390 = vmatmul.mubr.bf16.gmra.mrb[0].mxu0 %v1331
    %v1391 = vpop.f32.mrb[0].mxu0
    %v1392 = vadd.f32 0.0, %v1391
    %v1393 = vpop.f32.mrb[0].mxu0
    %v1394 = vpop.f32.mrb[0].mxu0
    %v1395 = vadd.f32 0.0, %v1394
    %v1396 = vpop.f32.mrb[0].mxu0
    %1397 = vdwg.mxu0
    %v1398 = vpack.c.bf16 %v1371, %v1368
    %v1399 = vpack.c.bf16 %v1379, %v1376
    %v1400 = vpack.c.bf16 %v1387, %v1384
    %v1401 = vpack.c.bf16 %v1395, %v1392
    %1402 = vrot.lane.b32.xlu0 %v812, 64
    %v1403 = vpop.permute.xlu0 %1402
    %1404 = vrot.lane.b32.xlu0 %v813, 64
    %v1405 = vpop.permute.xlu0 %1404
    %1406 = vrot.lane.b32.xlu0 %v814, 64
    %v1407 = vpop.permute.xlu0 %1406
    %1408 = vrot.lane.b32.xlu0 %v815, 64
    %v1409 = vpop.permute.xlu0 %1408
    %1410 = vrot.lane.b32.xlu0 %v820, 64
    %v1411 = vpop.permute.xlu0 %1410
    %1412 = vrot.lane.b32.xlu0 %v821, 64
    %v1413 = vpop.permute.xlu0 %1412
    %1414 = vrot.lane.b32.xlu0 %v822, 64
    %v1415 = vpop.permute.xlu0 %1414
    %1416 = vrot.lane.b32.xlu0 %v823, 64
    %v1417 = vpop.permute.xlu0 %1416
    %v1419 = vsel %vm836, %v1403, 0
    %v1422 = vsel %vm836, %v1405, 0
    %v1425 = vsel %vm836, %v1407, 0
    %v1428 = vsel %vm836, %v1409, 0
    %v1431 = vsel %vm836, %v1411, 0
    %v1434 = vsel %vm836, %v1413, 0
    %v1437 = vsel %vm836, %v1415, 0
    %v1440 = vsel %vm836, %v1417, 0
    %1442 = vmatprep.subr.bf16.mxu0 0
    %1443 = vmatpush1.bf16.xpose.msra.mxu0 %v1431
    %1444 = vmatprep.subr.bf16.mxu0 0
    %1445 = vmatpush1.bf16.xpose.msra.mxu0 %v1434
    %1446 = vmatprep.subr.bf16.mxu0 0
    %1447 = vmatpush1.bf16.xpose.msra.mxu0 %v1437
    %1448 = vmatprep.subr.bf16.mxu0 0
    %1449 = vmatpush1.bf16.xpose.msra.mxu0 %v1440
    %1450 = vmatprep.subr.bf16.mxu0 0
    %1451 = vmatpush1.bf16.xpose.msra.mxu0 0
    %1452 = vmatprep.subr.bf16.mxu0 0
    %1453 = vmatpush1.bf16.xpose.msra.mxu0 0
    %1454 = vmatprep.subr.bf16.mxu0 0
    %1455 = vmatpush1.bf16.xpose.msra.mxu0 0
    %1456 = vmatprep.subr.bf16.mxu0 0
    %1457 = vmatpush1.bf16.xpose.msra.mxu0 0
    %1458 = vmatprep.subr.bf16.mxu0 0
    %1459 = vmatpush1.bf16.xpose.msra.mxu0 0
    %1460 = vmatprep.subr.bf16.mxu0 0
    %1461 = vmatpush1.bf16.xpose.msra.mxu0 0
    %1462 = vmatprep.subr.bf16.mxu0 0
    %1463 = vmatpush1.bf16.xpose.msra.mxu0 0
    %1464 = vmatprep.subr.bf16.mxu0 0
    %1465 = vmatpush1.bf16.xpose.msra.mxu0 0
    %1466 = vmatprep.subr.bf16.mxu0 0
    %1467 = vmatpush1.bf16.xpose.msra.mxu0 0
    %1468 = vmatprep.subr.bf16.mxu0 0
    %1469 = vmatpush1.bf16.xpose.msra.mxu0 0
    %1470 = vmatprep.subr.bf16.mxu0 0
    %1471 = vmatpush1.bf16.xpose.msra.mxu0 0
    %1472 = vmatprep.subr.bf16.mxu0 0
    %1473 = vmatpush1.bf16.xpose.msra.mxu0 0
    %1474 = vmatprep.mubr.bf16.mxu0 0
    %1475 = vmatmul.mubr.bf16.gmra.mrb[0].mxu0 %v1419
    %v1476 = vpop.f32.mrb[0].mxu0
    %v1477 = vadd.f32 %v192, %v1476
    %v1478 = vpop.f32.mrb[0].mxu0
    %v1479 = vpop.f32.mrb[0].mxu0
    %v1480 = vadd.f32 %v193, %v1479
    %v1481 = vpop.f32.mrb[0].mxu0
    %1482 = vmatprep.mubr.bf16.mxu0 0
    %1483 = vmatmul.mubr.bf16.gmra.mrb[0].mxu0 %v1422
    %v1484 = vpop.f32.mrb[0].mxu0
    %v1485 = vadd.f32 %v194, %v1484
    %v1486 = vpop.f32.mrb[0].mxu0
    %v1487 = vpop.f32.mrb[0].mxu0
    %v1488 = vadd.f32 %v195, %v1487
    %v1489 = vpop.f32.mrb[0].mxu0
    %1490 = vmatprep.mubr.bf16.mxu0 0
    %1491 = vmatmul.mubr.bf16.gmra.mrb[0].mxu0 %v1425
    %v1492 = vpop.f32.mrb[0].mxu0
    %v1493 = vadd.f32 %v196, %v1492
    %v1494 = vpop.f32.mrb[0].mxu0
    %v1495 = vpop.f32.mrb[0].mxu0
    %v1496 = vadd.f32 %v197, %v1495
    %v1497 = vpop.f32.mrb[0].mxu0
    %1498 = vmatprep.mubr.bf16.mxu0 0
    %1499 = vmatmul.mubr.bf16.gmra.mrb[0].mxu0 %v1428
    %v1500 = vpop.f32.mrb[0].mxu0
    %v1501 = vadd.f32 %v198, %v1500
    %v1502 = vpop.f32.mrb[0].mxu0
    %v1503 = vpop.f32.mrb[0].mxu0
    %v1504 = vadd.f32 %v199, %v1503
    %v1505 = vpop.f32.mrb[0].mxu0
    %1506 = vdwg.mxu0
    %v1507 = vsel %vm926, %v1477, -inf
    %1508 = vmax.xlane.f32.xlu0 %v1507
    %v1509 = vpop.xlane.xlu0 %1508
    %v1510 = vsel %vm926, %v1480, -inf
    %1511 = vmax.xlane.f32.xlu0 %v1510
    %v1512 = vpop.xlane.xlu0 %1511
    %v1513 = vsel %vm926, %v1485, -inf
    %1514 = vmax.xlane.f32.xlu0 %v1513
    %v1515 = vpop.xlane.xlu0 %1514
    %v1516 = vsel %vm926, %v1488, -inf
    %1517 = vmax.xlane.f32.xlu0 %v1516
    %v1518 = vpop.xlane.xlu0 %1517
    %v1519 = vsel %vm926, %v1493, -inf
    %1520 = vmax.xlane.f32.xlu0 %v1519
    %v1521 = vpop.xlane.xlu0 %1520
    %v1522 = vsel %vm926, %v1496, -inf
    %1523 = vmax.xlane.f32.xlu0 %v1522
    %v1524 = vpop.xlane.xlu0 %1523
    %v1525 = vsel %vm926, %v1501, -inf
    %1526 = vmax.xlane.f32.xlu0 %v1525
    %v1527 = vpop.xlane.xlu0 %1526
    %v1528 = vsel %vm926, %v1504, -inf
    %1529 = vmax.xlane.f32.xlu0 %v1528
    %v1530 = vpop.xlane.xlu0 %1529
    %v1531 = vsub.f32 %v1477, %v1509
    %v1532 = vsub.f32 %v1480, %v1512
    %v1533 = vsub.f32 %v1485, %v1515
    %v1534 = vsub.f32 %v1488, %v1518
    %v1535 = vsub.f32 %v1493, %v1521
    %v1536 = vsub.f32 %v1496, %v1524
    %v1537 = vsub.f32 %v1501, %v1527
    %v1538 = vsub.f32 %v1504, %v1530
    %v1539 = vmul.f32 %v1531, 1.442695
    %v1540 = vpow.pop %v1539
    %v1541 = vmul.f32 %v1532, 1.442695
    %v1542 = vpow.pop %v1541
    %v1543 = vmul.f32 %v1533, 1.442695
    %v1544 = vpow.pop %v1543
    %v1545 = vmul.f32 %v1534, 1.442695
    %v1546 = vpow.pop %v1545
    %v1547 = vmul.f32 %v1535, 1.442695
    %v1548 = vpow.pop %v1547
    %v1549 = vmul.f32 %v1536, 1.442695
    %v1550 = vpow.pop %v1549
    %v1551 = vmul.f32 %v1537, 1.442695
    %v1552 = vpow.pop %v1551
    %v1553 = vmul.f32 %v1538, 1.442695
    %v1554 = vpow.pop %v1553
    %v1555 = vsel %vm926, %v1540, 0.0
    %1556 = vadd.xlane.f32.xlu0 %v1555
    %v1557 = vpop.xlane.xlu0 %1556
    %v1558 = vsel %vm926, %v1542, 0.0
    %1559 = vadd.xlane.f32.xlu0 %v1558
    %v1560 = vpop.xlane.xlu0 %1559
    %v1561 = vsel %vm926, %v1544, 0.0
    %1562 = vadd.xlane.f32.xlu0 %v1561
    %v1563 = vpop.xlane.xlu0 %1562
    %v1564 = vsel %vm926, %v1546, 0.0
    %1565 = vadd.xlane.f32.xlu0 %v1564
    %v1566 = vpop.xlane.xlu0 %1565
    %v1567 = vsel %vm926, %v1548, 0.0
    %1568 = vadd.xlane.f32.xlu0 %v1567
    %v1569 = vpop.xlane.xlu0 %1568
    %v1570 = vsel %vm926, %v1550, 0.0
    %1571 = vadd.xlane.f32.xlu0 %v1570
    %v1572 = vpop.xlane.xlu0 %1571
    %v1573 = vsel %vm926, %v1552, 0.0
    %1574 = vadd.xlane.f32.xlu0 %v1573
    %v1575 = vpop.xlane.xlu0 %1574
    %v1576 = vsel %vm926, %v1554, 0.0
    %1577 = vadd.xlane.f32.xlu0 %v1576
    %v1578 = vpop.xlane.xlu0 %1577
    %v1579 = vrcp.pop %v1557
    %v1580 = vrcp.pop %v1560
    %v1581 = vrcp.pop %v1563
    %v1582 = vrcp.pop %v1566
    %v1583 = vrcp.pop %v1569
    %v1584 = vrcp.pop %v1572
    %v1585 = vrcp.pop %v1575
    %v1586 = vrcp.pop %v1578
    %v1587 = vmul.f32 %v1540, %v1579
    %v1588 = vmul.f32 %v1542, %v1580
    %v1589 = vmul.f32 %v1544, %v1581
    %v1590 = vmul.f32 %v1546, %v1582
    %v1591 = vmul.f32 %v1548, %v1583
    %v1592 = vmul.f32 %v1550, %v1584
    %v1593 = vmul.f32 %v1552, %v1585
    %v1594 = vmul.f32 %v1554, %v1586
    %v1595 = vpack.c.bf16 %v1588, %v1587
    %v1596 = vpack.c.bf16 %v1590, %v1589
    %v1597 = vpack.c.bf16 %v1592, %v1591
    %v1598 = vpack.c.bf16 %v1594, %v1593
    %1599 = vrot.lane.b32.xlu0 %v828, 64
    %v1600 = vpop.permute.xlu0 %1599
    %1601 = vrot.lane.b32.xlu0 %v829, 64
    %v1602 = vpop.permute.xlu0 %1601
    %1603 = vrot.lane.b32.xlu0 %v830, 64
    %v1604 = vpop.permute.xlu0 %1603
    %1605 = vrot.lane.b32.xlu0 %v831, 64
    %v1606 = vpop.permute.xlu0 %1605
    %v1612 = vsel %vm926, %v1595, 0
    %v1615 = vsel %vm926, %v1596, 0
    %v1618 = vsel %vm926, %v1597, 0
    %v1621 = vsel %vm926, %v1598, 0
    %1623 = vmatprep.subr.bf16.mxu0 0
    %1624 = vmatpush1.bf16.msra.mxu0 %v1600
    %1625 = vmatprep.subr.bf16.mxu0 0
    %1626 = vmatpush1.bf16.msra.mxu0 %v1602
    %1627 = vmatprep.subr.bf16.mxu0 0
    %1628 = vmatpush1.bf16.msra.mxu0 %v1604
    %1629 = vmatprep.subr.bf16.mxu0 0
    %1630 = vmatpush1.bf16.msra.mxu0 %v1606
    %1631 = vmatprep.subr.bf16.mxu0 0
    %1632 = vmatpush1.bf16.msra.mxu0 0
    %1633 = vmatprep.subr.bf16.mxu0 0
    %1634 = vmatpush1.bf16.msra.mxu0 0
    %1635 = vmatprep.subr.bf16.mxu0 0
    %1636 = vmatpush1.bf16.msra.mxu0 0
    %1637 = vmatprep.subr.bf16.mxu0 0
    %1638 = vmatpush1.bf16.msra.mxu0 0
    %1639 = vmatprep.subr.bf16.mxu0 0
    %1640 = vmatpush1.bf16.msra.mxu0 0
    %1641 = vmatprep.subr.bf16.mxu0 0
    %1642 = vmatpush1.bf16.msra.mxu0 0
    %1643 = vmatprep.subr.bf16.mxu0 0
    %1644 = vmatpush1.bf16.msra.mxu0 0
    %1645 = vmatprep.subr.bf16.mxu0 0
    %1646 = vmatpush1.bf16.msra.mxu0 0
    %1647 = vmatprep.subr.bf16.mxu0 0
    %1648 = vmatpush1.bf16.msra.mxu0 0
    %1649 = vmatprep.subr.bf16.mxu0 0
    %1650 = vmatpush1.bf16.msra.mxu0 0
    %1651 = vmatprep.subr.bf16.mxu0 0
    %1652 = vmatpush1.bf16.msra.mxu0 0
    %1653 = vmatprep.subr.bf16.mxu0 0
    %1654 = vmatpush1.bf16.msra.mxu0 0
    %1655 = vmatprep.mubr.bf16.mxu0 0
    %1656 = vmatmul.mubr.bf16.gmra.mrb[0].mxu0 %v1612
    %v1657 = vpop.f32.mrb[0].mxu0
    %v1658 = vadd.f32 0.0, %v1657
    %v1659 = vpop.f32.mrb[0].mxu0
    %v1660 = vpop.f32.mrb[0].mxu0
    %v1661 = vadd.f32 0.0, %v1660
    %v1662 = vpop.f32.mrb[0].mxu0
    %1663 = vmatprep.mubr.bf16.mxu0 0
    %1664 = vmatmul.mubr.bf16.gmra.mrb[0].mxu0 %v1615
    %v1665 = vpop.f32.mrb[0].mxu0
    %v1666 = vadd.f32 0.0, %v1665
    %v1667 = vpop.f32.mrb[0].mxu0
    %v1668 = vpop.f32.mrb[0].mxu0
    %v1669 = vadd.f32 0.0, %v1668
    %v1670 = vpop.f32.mrb[0].mxu0
    %1671 = vmatprep.mubr.bf16.mxu0 0
    %1672 = vmatmul.mubr.bf16.gmra.mrb[0].mxu0 %v1618
    %v1673 = vpop.f32.mrb[0].mxu0
    %v1674 = vadd.f32 0.0, %v1673
    %v1675 = vpop.f32.mrb[0].mxu0
    %v1676 = vpop.f32.mrb[0].mxu0
    %v1677 = vadd.f32 0.0, %v1676
    %v1678 = vpop.f32.mrb[0].mxu0
    %1679 = vmatprep.mubr.bf16.mxu0 0
    %1680 = vmatmul.mubr.bf16.gmra.mrb[0].mxu0 %v1621
    %v1681 = vpop.f32.mrb[0].mxu0
    %v1682 = vadd.f32 0.0, %v1681
    %v1683 = vpop.f32.mrb[0].mxu0
    %v1684 = vpop.f32.mrb[0].mxu0
    %v1685 = vadd.f32 0.0, %v1684
    %v1686 = vpop.f32.mrb[0].mxu0
    %1687 = vdwg.mxu0
    %v1688 = vpack.c.bf16 %v1661, %v1658
    %v1689 = vpack.c.bf16 %v1669, %v1666
    %v1690 = vpack.c.bf16 %v1677, %v1674
    %v1691 = vpack.c.bf16 %v1685, %v1682
    %1692 = vrot.lane.b32.xlu0 %v812, 32
    %v1693 = vpop.permute.xlu0 %1692
    %1694 = vrot.lane.b32.xlu0 %v813, 32
    %v1695 = vpop.permute.xlu0 %1694
    %1696 = vrot.lane.b32.xlu0 %v814, 32
    %v1697 = vpop.permute.xlu0 %1696
    %1698 = vrot.lane.b32.xlu0 %v815, 32
    %v1699 = vpop.permute.xlu0 %1698
    %1700 = vrot.lane.b32.xlu0 %v820, 32
    %v1701 = vpop.permute.xlu0 %1700
    %1702 = vrot.lane.b32.xlu0 %v821, 32
    %v1703 = vpop.permute.xlu0 %1702
    %1704 = vrot.lane.b32.xlu0 %v822, 32
    %v1705 = vpop.permute.xlu0 %1704
    %1706 = vrot.lane.b32.xlu0 %v823, 32
    %v1707 = vpop.permute.xlu0 %1706
    %v1709 = vsel %vm836, %v1693, 0
    %v1712 = vsel %vm836, %v1695, 0
    %v1715 = vsel %vm836, %v1697, 0
    %v1718 = vsel %vm836, %v1699, 0
    %v1721 = vsel %vm836, %v1701, 0
    %v1724 = vsel %vm836, %v1703, 0
    %v1727 = vsel %vm836, %v1705, 0
    %v1730 = vsel %vm836, %v1707, 0
    %1732 = vmatprep.subr.bf16.mxu0 0
    %1733 = vmatpush1.bf16.xpose.msra.mxu0 %v1721
    %1734 = vmatprep.subr.bf16.mxu0 0
    %1735 = vmatpush1.bf16.xpose.msra.mxu0 %v1724
    %1736 = vmatprep.subr.bf16.mxu0 0
    %1737 = vmatpush1.bf16.xpose.msra.mxu0 %v1727
    %1738 = vmatprep.subr.bf16.mxu0 0
    %1739 = vmatpush1.bf16.xpose.msra.mxu0 %v1730
    %1740 = vmatprep.subr.bf16.mxu0 0
    %1741 = vmatpush1.bf16.xpose.msra.mxu0 0
    %1742 = vmatprep.subr.bf16.mxu0 0
    %1743 = vmatpush1.bf16.xpose.msra.mxu0 0
    %1744 = vmatprep.subr.bf16.mxu0 0
    %1745 = vmatpush1.bf16.xpose.msra.mxu0 0
    %1746 = vmatprep.subr.bf16.mxu0 0
    %1747 = vmatpush1.bf16.xpose.msra.mxu0 0
    %1748 = vmatprep.subr.bf16.mxu0 0
    %1749 = vmatpush1.bf16.xpose.msra.mxu0 0
    %1750 = vmatprep.subr.bf16.mxu0 0
    %1751 = vmatpush1.bf16.xpose.msra.mxu0 0
    %1752 = vmatprep.subr.bf16.mxu0 0
    %1753 = vmatpush1.bf16.xpose.msra.mxu0 0
    %1754 = vmatprep.subr.bf16.mxu0 0
    %1755 = vmatpush1.bf16.xpose.msra.mxu0 0
    %1756 = vmatprep.subr.bf16.mxu0 0
    %1757 = vmatpush1.bf16.xpose.msra.mxu0 0
    %1758 = vmatprep.subr.bf16.mxu0 0
    %1759 = vmatpush1.bf16.xpose.msra.mxu0 0
    %1760 = vmatprep.subr.bf16.mxu0 0
    %1761 = vmatpush1.bf16.xpose.msra.mxu0 0
    %1762 = vmatprep.subr.bf16.mxu0 0
    %1763 = vmatpush1.bf16.xpose.msra.mxu0 0
    %1764 = vmatprep.mubr.bf16.mxu0 0
    %1765 = vmatmul.mubr.bf16.gmra.mrb[0].mxu0 %v1709
    %v1766 = vpop.f32.mrb[0].mxu0
    %v1767 = vadd.f32 %v192, %v1766
    %v1768 = vpop.f32.mrb[0].mxu0
    %v1769 = vpop.f32.mrb[0].mxu0
    %v1770 = vadd.f32 %v193, %v1769
    %v1771 = vpop.f32.mrb[0].mxu0
    %1772 = vmatprep.mubr.bf16.mxu0 0
    %1773 = vmatmul.mubr.bf16.gmra.mrb[0].mxu0 %v1712
    %v1774 = vpop.f32.mrb[0].mxu0
    %v1775 = vadd.f32 %v194, %v1774
    %v1776 = vpop.f32.mrb[0].mxu0
    %v1777 = vpop.f32.mrb[0].mxu0
    %v1778 = vadd.f32 %v195, %v1777
    %v1779 = vpop.f32.mrb[0].mxu0
    %1780 = vmatprep.mubr.bf16.mxu0 0
    %1781 = vmatmul.mubr.bf16.gmra.mrb[0].mxu0 %v1715
    %v1782 = vpop.f32.mrb[0].mxu0
    %v1783 = vadd.f32 %v196, %v1782
    %v1784 = vpop.f32.mrb[0].mxu0
    %v1785 = vpop.f32.mrb[0].mxu0
    %v1786 = vadd.f32 %v197, %v1785
    %v1787 = vpop.f32.mrb[0].mxu0
    %1788 = vmatprep.mubr.bf16.mxu0 0
    %1789 = vmatmul.mubr.bf16.gmra.mrb[0].mxu0 %v1718
    %v1790 = vpop.f32.mrb[0].mxu0
    %v1791 = vadd.f32 %v198, %v1790
    %v1792 = vpop.f32.mrb[0].mxu0
    %v1793 = vpop.f32.mrb[0].mxu0
    %v1794 = vadd.f32 %v199, %v1793
    %v1795 = vpop.f32.mrb[0].mxu0
    %1796 = vdwg.mxu0
    %v1797 = vsel %vm926, %v1767, -inf
    %1798 = vmax.xlane.f32.xlu0 %v1797
    %v1799 = vpop.xlane.xlu0 %1798
    %v1800 = vsel %vm926, %v1770, -inf
    %1801 = vmax.xlane.f32.xlu0 %v1800
    %v1802 = vpop.xlane.xlu0 %1801
    %v1803 = vsel %vm926, %v1775, -inf
    %1804 = vmax.xlane.f32.xlu0 %v1803
    %v1805 = vpop.xlane.xlu0 %1804
    %v1806 = vsel %vm926, %v1778, -inf
    %1807 = vmax.xlane.f32.xlu0 %v1806
    %v1808 = vpop.xlane.xlu0 %1807
    %v1809 = vsel %vm926, %v1783, -inf
    %1810 = vmax.xlane.f32.xlu0 %v1809
    %v1811 = vpop.xlane.xlu0 %1810
    %v1812 = vsel %vm926, %v1786, -inf
    %1813 = vmax.xlane.f32.xlu0 %v1812
    %v1814 = vpop.xlane.xlu0 %1813
    %v1815 = vsel %vm926, %v1791, -inf
    %1816 = vmax.xlane.f32.xlu0 %v1815
    %v1817 = vpop.xlane.xlu0 %1816
    %v1818 = vsel %vm926, %v1794, -inf
    %1819 = vmax.xlane.f32.xlu0 %v1818
    %v1820 = vpop.xlane.xlu0 %1819
    %v1821 = vsub.f32 %v1767, %v1799
    %v1822 = vsub.f32 %v1770, %v1802
    %v1823 = vsub.f32 %v1775, %v1805
    %v1824 = vsub.f32 %v1778, %v1808
    %v1825 = vsub.f32 %v1783, %v1811
    %v1826 = vsub.f32 %v1786, %v1814
    %v1827 = vsub.f32 %v1791, %v1817
    %v1828 = vsub.f32 %v1794, %v1820
    %v1829 = vmul.f32 %v1821, 1.442695
    %v1830 = vpow.pop %v1829
    %v1831 = vmul.f32 %v1822, 1.442695
    %v1832 = vpow.pop %v1831
    %v1833 = vmul.f32 %v1823, 1.442695
    %v1834 = vpow.pop %v1833
    %v1835 = vmul.f32 %v1824, 1.442695
    %v1836 = vpow.pop %v1835
    %v1837 = vmul.f32 %v1825, 1.442695
    %v1838 = vpow.pop %v1837
    %v1839 = vmul.f32 %v1826, 1.442695
    %v1840 = vpow.pop %v1839
    %v1841 = vmul.f32 %v1827, 1.442695
    %v1842 = vpow.pop %v1841
    %v1843 = vmul.f32 %v1828, 1.442695
    %v1844 = vpow.pop %v1843
    %v1845 = vsel %vm926, %v1830, 0.0
    %1846 = vadd.xlane.f32.xlu0 %v1845
    %v1847 = vpop.xlane.xlu0 %1846
    %v1848 = vsel %vm926, %v1832, 0.0
    %1849 = vadd.xlane.f32.xlu0 %v1848
    %v1850 = vpop.xlane.xlu0 %1849
    %v1851 = vsel %vm926, %v1834, 0.0
    %1852 = vadd.xlane.f32.xlu0 %v1851
    %v1853 = vpop.xlane.xlu0 %1852
    %v1854 = vsel %vm926, %v1836, 0.0
    %1855 = vadd.xlane.f32.xlu0 %v1854
    %v1856 = vpop.xlane.xlu0 %1855
    %v1857 = vsel %vm926, %v1838, 0.0
    %1858 = vadd.xlane.f32.xlu0 %v1857
    %v1859 = vpop.xlane.xlu0 %1858
    %v1860 = vsel %vm926, %v1840, 0.0
    %1861 = vadd.xlane.f32.xlu0 %v1860
    %v1862 = vpop.xlane.xlu0 %1861
    %v1863 = vsel %vm926, %v1842, 0.0
    %1864 = vadd.xlane.f32.xlu0 %v1863
    %v1865 = vpop.xlane.xlu0 %1864
    %v1866 = vsel %vm926, %v1844, 0.0
    %1867 = vadd.xlane.f32.xlu0 %v1866
    %v1868 = vpop.xlane.xlu0 %1867
    %v1869 = vrcp.pop %v1847
    %v1870 = vrcp.pop %v1850
    %v1871 = vrcp.pop %v1853
    %v1872 = vrcp.pop %v1856
    %v1873 = vrcp.pop %v1859
    %v1874 = vrcp.pop %v1862
    %v1875 = vrcp.pop %v1865
    %v1876 = vrcp.pop %v1868
    %v1877 = vmul.f32 %v1830, %v1869
    %v1878 = vmul.f32 %v1832, %v1870
    %v1879 = vmul.f32 %v1834, %v1871
    %v1880 = vmul.f32 %v1836, %v1872
    %v1881 = vmul.f32 %v1838, %v1873
    %v1882 = vmul.f32 %v1840, %v1874
    %v1883 = vmul.f32 %v1842, %v1875
    %v1884 = vmul.f32 %v1844, %v1876
    %v1885 = vpack.c.bf16 %v1878, %v1877
    %v1886 = vpack.c.bf16 %v1880, %v1879
    %v1887 = vpack.c.bf16 %v1882, %v1881
    %v1888 = vpack.c.bf16 %v1884, %v1883
    %1889 = vrot.lane.b32.xlu0 %v828, 32
    %v1890 = vpop.permute.xlu0 %1889
    %1891 = vrot.lane.b32.xlu0 %v829, 32
    %v1892 = vpop.permute.xlu0 %1891
    %1893 = vrot.lane.b32.xlu0 %v830, 32
    %v1894 = vpop.permute.xlu0 %1893
    %1895 = vrot.lane.b32.xlu0 %v831, 32
    %v1896 = vpop.permute.xlu0 %1895
    %v1902 = vsel %vm926, %v1885, 0
    %v1905 = vsel %vm926, %v1886, 0
    %v1908 = vsel %vm926, %v1887, 0
    %v1911 = vsel %vm926, %v1888, 0
    %1913 = vmatprep.subr.bf16.mxu0 0
    %1914 = vmatpush1.bf16.msra.mxu0 %v1890
    %1915 = vmatprep.subr.bf16.mxu0 0
    %1916 = vmatpush1.bf16.msra.mxu0 %v1892
    %1917 = vmatprep.subr.bf16.mxu0 0
    %1918 = vmatpush1.bf16.msra.mxu0 %v1894
    %1919 = vmatprep.subr.bf16.mxu0 0
    %1920 = vmatpush1.bf16.msra.mxu0 %v1896
    %1921 = vmatprep.subr.bf16.mxu0 0
    %1922 = vmatpush1.bf16.msra.mxu0 0
    %1923 = vmatprep.subr.bf16.mxu0 0
    %1924 = vmatpush1.bf16.msra.mxu0 0
    %1925 = vmatprep.subr.bf16.mxu0 0
    %1926 = vmatpush1.bf16.msra.mxu0 0
    %1927 = vmatprep.subr.bf16.mxu0 0
    %1928 = vmatpush1.bf16.msra.mxu0 0
    %1929 = vmatprep.subr.bf16.mxu0 0
    %1930 = vmatpush1.bf16.msra.mxu0 0
    %1931 = vmatprep.subr.bf16.mxu0 0
    %1932 = vmatpush1.bf16.msra.mxu0 0
    %1933 = vmatprep.subr.bf16.mxu0 0
    %1934 = vmatpush1.bf16.msra.mxu0 0
    %1935 = vmatprep.subr.bf16.mxu0 0
    %1936 = vmatpush1.bf16.msra.mxu0 0
    %1937 = vmatprep.subr.bf16.mxu0 0
    %1938 = vmatpush1.bf16.msra.mxu0 0
    %1939 = vmatprep.subr.bf16.mxu0 0
    %1940 = vmatpush1.bf16.msra.mxu0 0
    %1941 = vmatprep.subr.bf16.mxu0 0
    %1942 = vmatpush1.bf16.msra.mxu0 0
    %1943 = vmatprep.subr.bf16.mxu0 0
    %1944 = vmatpush1.bf16.msra.mxu0 0
    %1945 = vmatprep.mubr.bf16.mxu0 0
    %1946 = vmatmul.mubr.bf16.gmra.mrb[0].mxu0 %v1902
    %v1947 = vpop.f32.mrb[0].mxu0
    %v1948 = vadd.f32 0.0, %v1947
    %v1949 = vpop.f32.mrb[0].mxu0
    %v1950 = vpop.f32.mrb[0].mxu0
    %v1951 = vadd.f32 0.0, %v1950
    %v1952 = vpop.f32.mrb[0].mxu0
    %1953 = vmatprep.mubr.bf16.mxu0 0
    %1954 = vmatmul.mubr.bf16.gmra.mrb[0].mxu0 %v1905
    %v1955 = vpop.f32.mrb[0].mxu0
    %v1956 = vadd.f32 0.0, %v1955
    %v1957 = vpop.f32.mrb[0].mxu0
    %v1958 = vpop.f32.mrb[0].mxu0
    %v1959 = vadd.f32 0.0, %v1958
    %v1960 = vpop.f32.mrb[0].mxu0
    %1961 = vmatprep.mubr.bf16.mxu0 0
    %1962 = vmatmul.mubr.bf16.gmra.mrb[0].mxu0 %v1908
    %v1963 = vpop.f32.mrb[0].mxu0
    %v1964 = vadd.f32 0.0, %v1963
    %v1965 = vpop.f32.mrb[0].mxu0
    %v1966 = vpop.f32.mrb[0].mxu0
    %v1967 = vadd.f32 0.0, %v1966
    %v1968 = vpop.f32.mrb[0].mxu0
    %1969 = vmatprep.mubr.bf16.mxu0 0
    %1970 = vmatmul.mubr.bf16.gmra.mrb[0].mxu0 %v1911
    %v1971 = vpop.f32.mrb[0].mxu0
    %v1972 = vadd.f32 0.0, %v1971
    %v1973 = vpop.f32.mrb[0].mxu0
    %v1974 = vpop.f32.mrb[0].mxu0
    %v1975 = vadd.f32 0.0, %v1974
    %v1976 = vpop.f32.mrb[0].mxu0
    %1977 = vdwg.mxu0
    %v1978 = vpack.c.bf16 %v1951, %v1948
    %v1979 = vpack.c.bf16 %v1959, %v1956
    %v1980 = vpack.c.bf16 %v1967, %v1964
    %v1981 = vpack.c.bf16 %v1975, %v1972
    %1986 = vrot.lane.b32.xlu0 %v1398, 32
    %v1987 = vpop.permute.xlu0 %1986
    %1988 = vrot.lane.b32.xlu0 %v1399, 32
    %v1989 = vpop.permute.xlu0 %1988
    %1990 = vrot.lane.b32.xlu0 %v1400, 32
    %v1991 = vpop.permute.xlu0 %1990
    %1992 = vrot.lane.b32.xlu0 %v1401, 32
    %v1993 = vpop.permute.xlu0 %1992
    %1998 = vrot.lane.b32.xlu0 %v1688, 64
    %v1999 = vpop.permute.xlu0 %1998
    %2000 = vrot.lane.b32.xlu0 %v1689, 64
    %v2001 = vpop.permute.xlu0 %2000
    %2002 = vrot.lane.b32.xlu0 %v1690, 64
    %v2003 = vpop.permute.xlu0 %2002
    %2004 = vrot.lane.b32.xlu0 %v1691, 64
    %v2005 = vpop.permute.xlu0 %2004
    %2010 = vrot.lane.b32.xlu0 %v1978, 96
    %v2011 = vpop.permute.xlu0 %2010
    %2012 = vrot.lane.b32.xlu0 %v1979, 96
    %v2013 = vpop.permute.xlu0 %2012
    %2014 = vrot.lane.b32.xlu0 %v1980, 96
    %v2015 = vpop.permute.xlu0 %2014
    %2016 = vrot.lane.b32.xlu0 %v1981, 96
    %v2017 = vpop.permute.xlu0 %2016
    %v2020 = vsel %vm836, %v1096, %v1987
    %v2023 = vsel %vm836, %v1097, %v1989
    %v2026 = vsel %vm836, %v1098, %v1991
    %v2029 = vsel %vm836, %v1099, %v1993
    %v2031 = vsel %vm926, %v2020, %v1999
    %v2033 = vsel %vm926, %v2023, %v2001
    %v2035 = vsel %vm926, %v2026, %v2003
    %v2037 = vsel %vm926, %v2029, %v2005
    %vm2038 = vcmask 785408
    %v2040 = vsel %vm2038, %v2031, %v2011
    %v2043 = vsel %vm2038, %v2033, %v2013
    %v2046 = vsel %vm2038, %v2035, %v2015
    %v2049 = vsel %vm2038, %v2037, %v2017
    %v2052 = vsel %vm836, %v816, 0
    %v2055 = vsel %vm836, %v817, 0
    %v2058 = vsel %vm836, %v818, 0
    %v2061 = vsel %vm836, %v819, 0
    %v2064 = vsel %vm836, %v824, 0
    %v2067 = vsel %vm836, %v825, 0
    %v2070 = vsel %vm836, %v826, 0
    %v2073 = vsel %vm836, %v827, 0
    %2075 = vmatprep.subr.bf16.mxu0 0
    %2076 = vmatpush1.bf16.xpose.msra.mxu0 %v2064
    %2077 = vmatprep.subr.bf16.mxu0 0
    %2078 = vmatpush1.bf16.xpose.msra.mxu0 %v2067
    %2079 = vmatprep.subr.bf16.mxu0 0
    %2080 = vmatpush1.bf16.xpose.msra.mxu0 %v2070
    %2081 = vmatprep.subr.bf16.mxu0 0
    %2082 = vmatpush1.bf16.xpose.msra.mxu0 %v2073
    %2083 = vmatprep.subr.bf16.mxu0 0
    %2084 = vmatpush1.bf16.xpose.msra.mxu0 0
    %2085 = vmatprep.subr.bf16.mxu0 0
    %2086 = vmatpush1.bf16.xpose.msra.mxu0 0
    %2087 = vmatprep.subr.bf16.mxu0 0
    %2088 = vmatpush1.bf16.xpose.msra.mxu0 0
    %2089 = vmatprep.subr.bf16.mxu0 0
    %2090 = vmatpush1.bf16.xpose.msra.mxu0 0
    %2091 = vmatprep.subr.bf16.mxu0 0
    %2092 = vmatpush1.bf16.xpose.msra.mxu0 0
    %2093 = vmatprep.subr.bf16.mxu0 0
    %2094 = vmatpush1.bf16.xpose.msra.mxu0 0
    %2095 = vmatprep.subr.bf16.mxu0 0
    %2096 = vmatpush1.bf16.xpose.msra.mxu0 0
    %2097 = vmatprep.subr.bf16.mxu0 0
    %2098 = vmatpush1.bf16.xpose.msra.mxu0 0
    %2099 = vmatprep.subr.bf16.mxu0 0
    %2100 = vmatpush1.bf16.xpose.msra.mxu0 0
    %2101 = vmatprep.subr.bf16.mxu0 0
    %2102 = vmatpush1.bf16.xpose.msra.mxu0 0
    %2103 = vmatprep.subr.bf16.mxu0 0
    %2104 = vmatpush1.bf16.xpose.msra.mxu0 0
    %2105 = vmatprep.subr.bf16.mxu0 0
    %2106 = vmatpush1.bf16.xpose.msra.mxu0 0
    %2107 = vmatprep.mubr.bf16.mxu0 0
    %2108 = vmatmul.mubr.bf16.gmra.mrb[0].mxu0 %v2052
    %v2109 = vpop.f32.mrb[0].mxu0
    %v2110 = vadd.f32 %v192, %v2109
    %v2111 = vpop.f32.mrb[0].mxu0
    %v2112 = vpop.f32.mrb[0].mxu0
    %v2113 = vadd.f32 %v193, %v2112
    %v2114 = vpop.f32.mrb[0].mxu0
    %2115 = vmatprep.mubr.bf16.mxu0 0
    %2116 = vmatmul.mubr.bf16.gmra.mrb[0].mxu0 %v2055
    %v2117 = vpop.f32.mrb[0].mxu0
    %v2118 = vadd.f32 %v194, %v2117
    %v2119 = vpop.f32.mrb[0].mxu0
    %v2120 = vpop.f32.mrb[0].mxu0
    %v2121 = vadd.f32 %v195, %v2120
    %v2122 = vpop.f32.mrb[0].mxu0
    %2123 = vmatprep.mubr.bf16.mxu0 0
    %2124 = vmatmul.mubr.bf16.gmra.mrb[0].mxu0 %v2058
    %v2125 = vpop.f32.mrb[0].mxu0
    %v2126 = vadd.f32 %v196, %v2125
    %v2127 = vpop.f32.mrb[0].mxu0
    %v2128 = vpop.f32.mrb[0].mxu0
    %v2129 = vadd.f32 %v197, %v2128
    %v2130 = vpop.f32.mrb[0].mxu0
    %2131 = vmatprep.mubr.bf16.mxu0 0
    %2132 = vmatmul.mubr.bf16.gmra.mrb[0].mxu0 %v2061
    %v2133 = vpop.f32.mrb[0].mxu0
    %v2134 = vadd.f32 %v198, %v2133
    %v2135 = vpop.f32.mrb[0].mxu0
    %v2136 = vpop.f32.mrb[0].mxu0
    %v2137 = vadd.f32 %v199, %v2136
    %v2138 = vpop.f32.mrb[0].mxu0
    %2139 = vdwg.mxu0
    %v2140 = vsel %vm926, %v2110, -inf
    %2141 = vmax.xlane.f32.xlu0 %v2140
    %v2142 = vpop.xlane.xlu0 %2141
    %v2143 = vsel %vm926, %v2113, -inf
    %2144 = vmax.xlane.f32.xlu0 %v2143
    %v2145 = vpop.xlane.xlu0 %2144
    %v2146 = vsel %vm926, %v2118, -inf
    %2147 = vmax.xlane.f32.xlu0 %v2146
    %v2148 = vpop.xlane.xlu0 %2147
    %v2149 = vsel %vm926, %v2121, -inf
    %2150 = vmax.xlane.f32.xlu0 %v2149
    %v2151 = vpop.xlane.xlu0 %2150
    %v2152 = vsel %vm926, %v2126, -inf
    %2153 = vmax.xlane.f32.xlu0 %v2152
    %v2154 = vpop.xlane.xlu0 %2153
    %v2155 = vsel %vm926, %v2129, -inf
    %2156 = vmax.xlane.f32.xlu0 %v2155
    %v2157 = vpop.xlane.xlu0 %2156
    %v2158 = vsel %vm926, %v2134, -inf
    %2159 = vmax.xlane.f32.xlu0 %v2158
    %v2160 = vpop.xlane.xlu0 %2159
    %v2161 = vsel %vm926, %v2137, -inf
    %2162 = vmax.xlane.f32.xlu0 %v2161
    %v2163 = vpop.xlane.xlu0 %2162
    %v2164 = vsub.f32 %v2110, %v2142
    %v2165 = vsub.f32 %v2113, %v2145
    %v2166 = vsub.f32 %v2118, %v2148
    %v2167 = vsub.f32 %v2121, %v2151
    %v2168 = vsub.f32 %v2126, %v2154
    %v2169 = vsub.f32 %v2129, %v2157
    %v2170 = vsub.f32 %v2134, %v2160
    %v2171 = vsub.f32 %v2137, %v2163
    %v2172 = vmul.f32 %v2164, 1.442695
    %v2173 = vpow.pop %v2172
    %v2174 = vmul.f32 %v2165, 1.442695
    %v2175 = vpow.pop %v2174
    %v2176 = vmul.f32 %v2166, 1.442695
    %v2177 = vpow.pop %v2176
    %v2178 = vmul.f32 %v2167, 1.442695
    %v2179 = vpow.pop %v2178
    %v2180 = vmul.f32 %v2168, 1.442695
    %v2181 = vpow.pop %v2180
    %v2182 = vmul.f32 %v2169, 1.442695
    %v2183 = vpow.pop %v2182
    %v2184 = vmul.f32 %v2170, 1.442695
    %v2185 = vpow.pop %v2184
    %v2186 = vmul.f32 %v2171, 1.442695
    %v2187 = vpow.pop %v2186
    %v2188 = vsel %vm926, %v2173, 0.0
    %2189 = vadd.xlane.f32.xlu0 %v2188
    %v2190 = vpop.xlane.xlu0 %2189
    %v2191 = vsel %vm926, %v2175, 0.0
    %2192 = vadd.xlane.f32.xlu0 %v2191
    %v2193 = vpop.xlane.xlu0 %2192
    %v2194 = vsel %vm926, %v2177, 0.0
    %2195 = vadd.xlane.f32.xlu0 %v2194
    %v2196 = vpop.xlane.xlu0 %2195
    %v2197 = vsel %vm926, %v2179, 0.0
    %2198 = vadd.xlane.f32.xlu0 %v2197
    %v2199 = vpop.xlane.xlu0 %2198
    %v2200 = vsel %vm926, %v2181, 0.0
    %2201 = vadd.xlane.f32.xlu0 %v2200
    %v2202 = vpop.xlane.xlu0 %2201
    %v2203 = vsel %vm926, %v2183, 0.0
    %2204 = vadd.xlane.f32.xlu0 %v2203
    %v2205 = vpop.xlane.xlu0 %2204
    %v2206 = vsel %vm926, %v2185, 0.0
    %2207 = vadd.xlane.f32.xlu0 %v2206
    %v2208 = vpop.xlane.xlu0 %2207
    %v2209 = vsel %vm926, %v2187, 0.0
    %2210 = vadd.xlane.f32.xlu0 %v2209
    %v2211 = vpop.xlane.xlu0 %2210
    %v2212 = vrcp.pop %v2190
    %v2213 = vrcp.pop %v2193
    %v2214 = vrcp.pop %v2196
    %v2215 = vrcp.pop %v2199
    %v2216 = vrcp.pop %v2202
    %v2217 = vrcp.pop %v2205
    %v2218 = vrcp.pop %v2208
    %v2219 = vrcp.pop %v2211
    %v2220 = vmul.f32 %v2173, %v2212
    %v2221 = vmul.f32 %v2175, %v2213
    %v2222 = vmul.f32 %v2177, %v2214
    %v2223 = vmul.f32 %v2179, %v2215
    %v2224 = vmul.f32 %v2181, %v2216
    %v2225 = vmul.f32 %v2183, %v2217
    %v2226 = vmul.f32 %v2185, %v2218
    %v2227 = vmul.f32 %v2187, %v2219
    %v2228 = vpack.c.bf16 %v2221, %v2220
    %v2229 = vpack.c.bf16 %v2223, %v2222
    %v2230 = vpack.c.bf16 %v2225, %v2224
    %v2231 = vpack.c.bf16 %v2227, %v2226
    %v2233 = vsel %vm926, %v2228, 0
    %v2236 = vsel %vm926, %v2229, 0
    %v2239 = vsel %vm926, %v2230, 0
    %v2242 = vsel %vm926, %v2231, 0
    %2244 = vmatprep.subr.bf16.mxu0 0
    %2245 = vmatpush1.bf16.msra.mxu0 %v832
    %2246 = vmatprep.subr.bf16.mxu0 0
    %2247 = vmatpush1.bf16.msra.mxu0 %v833
    %2248 = vmatprep.subr.bf16.mxu0 0
    %2249 = vmatpush1.bf16.msra.mxu0 %v834
    %2250 = vmatprep.subr.bf16.mxu0 0
    %2251 = vmatpush1.bf16.msra.mxu0 %v835
    %2252 = vmatprep.subr.bf16.mxu0 0
    %2253 = vmatpush1.bf16.msra.mxu0 0
    %2254 = vmatprep.subr.bf16.mxu0 0
    %2255 = vmatpush1.bf16.msra.mxu0 0
    %2256 = vmatprep.subr.bf16.mxu0 0
    %2257 = vmatpush1.bf16.msra.mxu0 0
    %2258 = vmatprep.subr.bf16.mxu0 0
    %2259 = vmatpush1.bf16.msra.mxu0 0
    %2260 = vmatprep.subr.bf16.mxu0 0
    %2261 = vmatpush1.bf16.msra.mxu0 0
    %2262 = vmatprep.subr.bf16.mxu0 0
    %2263 = vmatpush1.bf16.msra.mxu0 0
    %2264 = vmatprep.subr.bf16.mxu0 0
    %2265 = vmatpush1.bf16.msra.mxu0 0
    %2266 = vmatprep.subr.bf16.mxu0 0
    %2267 = vmatpush1.bf16.msra.mxu0 0
    %2268 = vmatprep.subr.bf16.mxu0 0
    %2269 = vmatpush1.bf16.msra.mxu0 0
    %2270 = vmatprep.subr.bf16.mxu0 0
    %2271 = vmatpush1.bf16.msra.mxu0 0
    %2272 = vmatprep.subr.bf16.mxu0 0
    %2273 = vmatpush1.bf16.msra.mxu0 0
    %2274 = vmatprep.subr.bf16.mxu0 0
    %2275 = vmatpush1.bf16.msra.mxu0 0
    %2276 = vmatprep.mubr.bf16.mxu0 0
    %2277 = vmatmul.mubr.bf16.gmra.mrb[0].mxu0 %v2233
    %v2278 = vpop.f32.mrb[0].mxu0
    %v2279 = vadd.f32 0.0, %v2278
    %v2280 = vpop.f32.mrb[0].mxu0
    %v2281 = vpop.f32.mrb[0].mxu0
    %v2282 = vadd.f32 0.0, %v2281
    %v2283 = vpop.f32.mrb[0].mxu0
    %2284 = vmatprep.mubr.bf16.mxu0 0
    %2285 = vmatmul.mubr.bf16.gmra.mrb[0].mxu0 %v2236
    %v2286 = vpop.f32.mrb[0].mxu0
    %v2287 = vadd.f32 0.0, %v2286
    %v2288 = vpop.f32.mrb[0].mxu0
    %v2289 = vpop.f32.mrb[0].mxu0
    %v2290 = vadd.f32 0.0, %v2289
    %v2291 = vpop.f32.mrb[0].mxu0
    %2292 = vmatprep.mubr.bf16.mxu0 0
    %2293 = vmatmul.mubr.bf16.gmra.mrb[0].mxu0 %v2239
    %v2294 = vpop.f32.mrb[0].mxu0
    %v2295 = vadd.f32 0.0, %v2294
    %v2296 = vpop.f32.mrb[0].mxu0
    %v2297 = vpop.f32.mrb[0].mxu0
    %v2298 = vadd.f32 0.0, %v2297
    %v2299 = vpop.f32.mrb[0].mxu0
    %2300 = vmatprep.mubr.bf16.mxu0 0
    %2301 = vmatmul.mubr.bf16.gmra.mrb[0].mxu0 %v2242
    %v2302 = vpop.f32.mrb[0].mxu0
    %v2303 = vadd.f32 0.0, %v2302
    %v2304 = vpop.f32.mrb[0].mxu0
    %v2305 = vpop.f32.mrb[0].mxu0
    %v2306 = vadd.f32 0.0, %v2305
    %v2307 = vpop.f32.mrb[0].mxu0
    %2308 = vdwg.mxu0
    %v2309 = vpack.c.bf16 %v2282, %v2279
    %v2310 = vpack.c.bf16 %v2290, %v2287
    %v2311 = vpack.c.bf16 %v2298, %v2295
    %v2312 = vpack.c.bf16 %v2306, %v2303
    %2317 = vrot.lane.b32.xlu0 %v816, 96
    %v2318 = vpop.permute.xlu0 %2317
    %2319 = vrot.lane.b32.xlu0 %v817, 96
    %v2320 = vpop.permute.xlu0 %2319
    %2321 = vrot.lane.b32.xlu0 %v818, 96
    %v2322 = vpop.permute.xlu0 %2321
    %2323 = vrot.lane.b32.xlu0 %v819, 96
    %v2324 = vpop.permute.xlu0 %2323
    %2329 = vrot.lane.b32.xlu0 %v824, 96
    %v2330 = vpop.permute.xlu0 %2329
    %2331 = vrot.lane.b32.xlu0 %v825, 96
    %v2332 = vpop.permute.xlu0 %2331
    %2333 = vrot.lane.b32.xlu0 %v826, 96
    %v2334 = vpop.permute.xlu0 %2333
    %2335 = vrot.lane.b32.xlu0 %v827, 96
    %v2336 = vpop.permute.xlu0 %2335
    %v2338 = vsel %vm836, %v2318, 0
    %v2341 = vsel %vm836, %v2320, 0
    %v2344 = vsel %vm836, %v2322, 0
    %v2347 = vsel %vm836, %v2324, 0
    %v2350 = vsel %vm836, %v2330, 0
    %v2353 = vsel %vm836, %v2332, 0
    %v2356 = vsel %vm836, %v2334, 0
    %v2359 = vsel %vm836, %v2336, 0
    %2361 = vmatprep.subr.bf16.mxu0 0
    %2362 = vmatpush1.bf16.xpose.msra.mxu0 %v2350
    %2363 = vmatprep.subr.bf16.mxu0 0
    %2364 = vmatpush1.bf16.xpose.msra.mxu0 %v2353
    %2365 = vmatprep.subr.bf16.mxu0 0
    %2366 = vmatpush1.bf16.xpose.msra.mxu0 %v2356
    %2367 = vmatprep.subr.bf16.mxu0 0
    %2368 = vmatpush1.bf16.xpose.msra.mxu0 %v2359
    %2369 = vmatprep.subr.bf16.mxu0 0
    %2370 = vmatpush1.bf16.xpose.msra.mxu0 0
    %2371 = vmatprep.subr.bf16.mxu0 0
    %2372 = vmatpush1.bf16.xpose.msra.mxu0 0
    %2373 = vmatprep.subr.bf16.mxu0 0
    %2374 = vmatpush1.bf16.xpose.msra.mxu0 0
    %2375 = vmatprep.subr.bf16.mxu0 0
    %2376 = vmatpush1.bf16.xpose.msra.mxu0 0
    %2377 = vmatprep.subr.bf16.mxu0 0
    %2378 = vmatpush1.bf16.xpose.msra.mxu0 0
    %2379 = vmatprep.subr.bf16.mxu0 0
    %2380 = vmatpush1.bf16.xpose.msra.mxu0 0
    %2381 = vmatprep.subr.bf16.mxu0 0
    %2382 = vmatpush1.bf16.xpose.msra.mxu0 0
    %2383 = vmatprep.subr.bf16.mxu0 0
    %2384 = vmatpush1.bf16.xpose.msra.mxu0 0
    %2385 = vmatprep.subr.bf16.mxu0 0
    %2386 = vmatpush1.bf16.xpose.msra.mxu0 0
    %2387 = vmatprep.subr.bf16.mxu0 0
    %2388 = vmatpush1.bf16.xpose.msra.mxu0 0
    %2389 = vmatprep.subr.bf16.mxu0 0
    %2390 = vmatpush1.bf16.xpose.msra.mxu0 0
    %2391 = vmatprep.subr.bf16.mxu0 0
    %2392 = vmatpush1.bf16.xpose.msra.mxu0 0
    %2393 = vmatprep.mubr.bf16.mxu0 0
    %2394 = vmatmul.mubr.bf16.gmra.mrb[0].mxu0 %v2338
    %v2395 = vpop.f32.mrb[0].mxu0
    %v2396 = vadd.f32 %v192, %v2395
    %v2397 = vpop.f32.mrb[0].mxu0
    %v2398 = vpop.f32.mrb[0].mxu0
    %v2399 = vadd.f32 %v193, %v2398
    %v2400 = vpop.f32.mrb[0].mxu0
    %2401 = vmatprep.mubr.bf16.mxu0 0
    %2402 = vmatmul.mubr.bf16.gmra.mrb[0].mxu0 %v2341
    %v2403 = vpop.f32.mrb[0].mxu0
    %v2404 = vadd.f32 %v194, %v2403
    %v2405 = vpop.f32.mrb[0].mxu0
    %v2406 = vpop.f32.mrb[0].mxu0
    %v2407 = vadd.f32 %v195, %v2406
    %v2408 = vpop.f32.mrb[0].mxu0
    %2409 = vmatprep.mubr.bf16.mxu0 0
    %2410 = vmatmul.mubr.bf16.gmra.mrb[0].mxu0 %v2344
    %v2411 = vpop.f32.mrb[0].mxu0
    %v2412 = vadd.f32 %v196, %v2411
    %v2413 = vpop.f32.mrb[0].mxu0
    %v2414 = vpop.f32.mrb[0].mxu0
    %v2415 = vadd.f32 %v197, %v2414
    %v2416 = vpop.f32.mrb[0].mxu0
    %2417 = vmatprep.mubr.bf16.mxu0 0
    %2418 = vmatmul.mubr.bf16.gmra.mrb[0].mxu0 %v2347
    %v2419 = vpop.f32.mrb[0].mxu0
    %v2420 = vadd.f32 %v198, %v2419
    %v2421 = vpop.f32.mrb[0].mxu0
    %v2422 = vpop.f32.mrb[0].mxu0
    %v2423 = vadd.f32 %v199, %v2422
    %v2424 = vpop.f32.mrb[0].mxu0
    %2425 = vdwg.mxu0
    %v2426 = vsel %vm926, %v2396, -inf
    %2427 = vmax.xlane.f32.xlu0 %v2426
    %v2428 = vpop.xlane.xlu0 %2427
    %v2429 = vsel %vm926, %v2399, -inf
    %2430 = vmax.xlane.f32.xlu0 %v2429
    %v2431 = vpop.xlane.xlu0 %2430
    %v2432 = vsel %vm926, %v2404, -inf
    %2433 = vmax.xlane.f32.xlu0 %v2432
    %v2434 = vpop.xlane.xlu0 %2433
    %v2435 = vsel %vm926, %v2407, -inf
    %2436 = vmax.xlane.f32.xlu0 %v2435
    %v2437 = vpop.xlane.xlu0 %2436
    %v2438 = vsel %vm926, %v2412, -inf
    %2439 = vmax.xlane.f32.xlu0 %v2438
    %v2440 = vpop.xlane.xlu0 %2439
    %v2441 = vsel %vm926, %v2415, -inf
    %2442 = vmax.xlane.f32.xlu0 %v2441
    %v2443 = vpop.xlane.xlu0 %2442
    %v2444 = vsel %vm926, %v2420, -inf
    %2445 = vmax.xlane.f32.xlu0 %v2444
    %v2446 = vpop.xlane.xlu0 %2445
    %v2447 = vsel %vm926, %v2423, -inf
    %2448 = vmax.xlane.f32.xlu0 %v2447
    %v2449 = vpop.xlane.xlu0 %2448
    %v2450 = vsub.f32 %v2396, %v2428
    %v2451 = vsub.f32 %v2399, %v2431
    %v2452 = vsub.f32 %v2404, %v2434
    %v2453 = vsub.f32 %v2407, %v2437
    %v2454 = vsub.f32 %v2412, %v2440
    %v2455 = vsub.f32 %v2415, %v2443
    %v2456 = vsub.f32 %v2420, %v2446
    %v2457 = vsub.f32 %v2423, %v2449
    %v2458 = vmul.f32 %v2450, 1.442695
    %v2459 = vpow.pop %v2458
    %v2460 = vmul.f32 %v2451, 1.442695
    %v2461 = vpow.pop %v2460
    %v2462 = vmul.f32 %v2452, 1.442695
    %v2463 = vpow.pop %v2462
    %v2464 = vmul.f32 %v2453, 1.442695
    %v2465 = vpow.pop %v2464
    %v2466 = vmul.f32 %v2454, 1.442695
    %v2467 = vpow.pop %v2466
    %v2468 = vmul.f32 %v2455, 1.442695
    %v2469 = vpow.pop %v2468
    %v2470 = vmul.f32 %v2456, 1.442695
    %v2471 = vpow.pop %v2470
    %v2472 = vmul.f32 %v2457, 1.442695
    %v2473 = vpow.pop %v2472
    %v2474 = vsel %vm926, %v2459, 0.0
    %2475 = vadd.xlane.f32.xlu0 %v2474
    %v2476 = vpop.xlane.xlu0 %2475
    %v2477 = vsel %vm926, %v2461, 0.0
    %2478 = vadd.xlane.f32.xlu0 %v2477
    %v2479 = vpop.xlane.xlu0 %2478
    %v2480 = vsel %vm926, %v2463, 0.0
    %2481 = vadd.xlane.f32.xlu0 %v2480
    %v2482 = vpop.xlane.xlu0 %2481
    %v2483 = vsel %vm926, %v2465, 0.0
    %2484 = vadd.xlane.f32.xlu0 %v2483
    %v2485 = vpop.xlane.xlu0 %2484
    %v2486 = vsel %vm926, %v2467, 0.0
    %2487 = vadd.xlane.f32.xlu0 %v2486
    %v2488 = vpop.xlane.xlu0 %2487
    %v2489 = vsel %vm926, %v2469, 0.0
    %2490 = vadd.xlane.f32.xlu0 %v2489
    %v2491 = vpop.xlane.xlu0 %2490
    %v2492 = vsel %vm926, %v2471, 0.0
    %2493 = vadd.xlane.f32.xlu0 %v2492
    %v2494 = vpop.xlane.xlu0 %2493
    %v2495 = vsel %vm926, %v2473, 0.0
    %2496 = vadd.xlane.f32.xlu0 %v2495
    %v2497 = vpop.xlane.xlu0 %2496
    %v2498 = vrcp.pop %v2476
    %v2499 = vrcp.pop %v2479
    %v2500 = vrcp.pop %v2482
    %v2501 = vrcp.pop %v2485
    %v2502 = vrcp.pop %v2488
    %v2503 = vrcp.pop %v2491
    %v2504 = vrcp.pop %v2494
    %v2505 = vrcp.pop %v2497
    %v2506 = vmul.f32 %v2459, %v2498
    %v2507 = vmul.f32 %v2461, %v2499
    %v2508 = vmul.f32 %v2463, %v2500
    %v2509 = vmul.f32 %v2465, %v2501
    %v2510 = vmul.f32 %v2467, %v2502
    %v2511 = vmul.f32 %v2469, %v2503
    %v2512 = vmul.f32 %v2471, %v2504
    %v2513 = vmul.f32 %v2473, %v2505
    %v2514 = vpack.c.bf16 %v2507, %v2506
    %v2515 = vpack.c.bf16 %v2509, %v2508
    %v2516 = vpack.c.bf16 %v2511, %v2510
    %v2517 = vpack.c.bf16 %v2513, %v2512
    %2522 = vrot.lane.b32.xlu0 %v832, 96
    %v2523 = vpop.permute.xlu0 %2522
    %2524 = vrot.lane.b32.xlu0 %v833, 96
    %v2525 = vpop.permute.xlu0 %2524
    %2526 = vrot.lane.b32.xlu0 %v834, 96
    %v2527 = vpop.permute.xlu0 %2526
    %2528 = vrot.lane.b32.xlu0 %v835, 96
    %v2529 = vpop.permute.xlu0 %2528
    %v2535 = vsel %vm926, %v2514, 0
    %v2538 = vsel %vm926, %v2515, 0
    %v2541 = vsel %vm926, %v2516, 0
    %v2544 = vsel %vm926, %v2517, 0
    %2546 = vmatprep.subr.bf16.mxu0 0
    %2547 = vmatpush1.bf16.msra.mxu0 %v2523
    %2548 = vmatprep.subr.bf16.mxu0 0
    %2549 = vmatpush1.bf16.msra.mxu0 %v2525
    %2550 = vmatprep.subr.bf16.mxu0 0
    %2551 = vmatpush1.bf16.msra.mxu0 %v2527
    %2552 = vmatprep.subr.bf16.mxu0 0
    %2553 = vmatpush1.bf16.msra.mxu0 %v2529
    %2554 = vmatprep.subr.bf16.mxu0 0
    %2555 = vmatpush1.bf16.msra.mxu0 0
    %2556 = vmatprep.subr.bf16.mxu0 0
    %2557 = vmatpush1.bf16.msra.mxu0 0
    %2558 = vmatprep.subr.bf16.mxu0 0
    %2559 = vmatpush1.bf16.msra.mxu0 0
    %2560 = vmatprep.subr.bf16.mxu0 0
    %2561 = vmatpush1.bf16.msra.mxu0 0
    %2562 = vmatprep.subr.bf16.mxu0 0
    %2563 = vmatpush1.bf16.msra.mxu0 0
    %2564 = vmatprep.subr.bf16.mxu0 0
    %2565 = vmatpush1.bf16.msra.mxu0 0
    %2566 = vmatprep.subr.bf16.mxu0 0
    %2567 = vmatpush1.bf16.msra.mxu0 0
    %2568 = vmatprep.subr.bf16.mxu0 0
    %2569 = vmatpush1.bf16.msra.mxu0 0
    %2570 = vmatprep.subr.bf16.mxu0 0
    %2571 = vmatpush1.bf16.msra.mxu0 0
    %2572 = vmatprep.subr.bf16.mxu0 0
    %2573 = vmatpush1.bf16.msra.mxu0 0
    %2574 = vmatprep.subr.bf16.mxu0 0
    %2575 = vmatpush1.bf16.msra.mxu0 0
    %2576 = vmatprep.subr.bf16.mxu0 0
    %2577 = vmatpush1.bf16.msra.mxu0 0
    %2578 = vmatprep.mubr.bf16.mxu0 0
    %2579 = vmatmul.mubr.bf16.gmra.mrb[0].mxu0 %v2535
    %v2580 = vpop.f32.mrb[0].mxu0
    %v2581 = vadd.f32 0.0, %v2580
    %v2582 = vpop.f32.mrb[0].mxu0
    %v2583 = vpop.f32.mrb[0].mxu0
    %v2584 = vadd.f32 0.0, %v2583
    %v2585 = vpop.f32.mrb[0].mxu0
    %2586 = vmatprep.mubr.bf16.mxu0 0
    %2587 = vmatmul.mubr.bf16.gmra.mrb[0].mxu0 %v2538
    %v2588 = vpop.f32.mrb[0].mxu0
    %v2589 = vadd.f32 0.0, %v2588
    %v2590 = vpop.f32.mrb[0].mxu0
    %v2591 = vpop.f32.mrb[0].mxu0
    %v2592 = vadd.f32 0.0, %v2591
    %v2593 = vpop.f32.mrb[0].mxu0
    %2594 = vmatprep.mubr.bf16.mxu0 0
    %2595 = vmatmul.mubr.bf16.gmra.mrb[0].mxu0 %v2541
    %v2596 = vpop.f32.mrb[0].mxu0
    %v2597 = vadd.f32 0.0, %v2596
    %v2598 = vpop.f32.mrb[0].mxu0
    %v2599 = vpop.f32.mrb[0].mxu0
    %v2600 = vadd.f32 0.0, %v2599
    %v2601 = vpop.f32.mrb[0].mxu0
    %2602 = vmatprep.mubr.bf16.mxu0 0
    %2603 = vmatmul.mubr.bf16.gmra.mrb[0].mxu0 %v2544
    %v2604 = vpop.f32.mrb[0].mxu0
    %v2605 = vadd.f32 0.0, %v2604
    %v2606 = vpop.f32.mrb[0].mxu0
    %v2607 = vpop.f32.mrb[0].mxu0
    %v2608 = vadd.f32 0.0, %v2607
    %v2609 = vpop.f32.mrb[0].mxu0
    %2610 = vdwg.mxu0
    %v2611 = vpack.c.bf16 %v2584, %v2581
    %v2612 = vpack.c.bf16 %v2592, %v2589
    %v2613 = vpack.c.bf16 %v2600, %v2597
    %v2614 = vpack.c.bf16 %v2608, %v2605
    %2615 = vrot.lane.b32.xlu0 %v816, 64
    %v2616 = vpop.permute.xlu0 %2615
    %2617 = vrot.lane.b32.xlu0 %v817, 64
    %v2618 = vpop.permute.xlu0 %2617
    %2619 = vrot.lane.b32.xlu0 %v818, 64
    %v2620 = vpop.permute.xlu0 %2619
    %2621 = vrot.lane.b32.xlu0 %v819, 64
    %v2622 = vpop.permute.xlu0 %2621
    %2623 = vrot.lane.b32.xlu0 %v824, 64
    %v2624 = vpop.permute.xlu0 %2623
    %2625 = vrot.lane.b32.xlu0 %v825, 64
    %v2626 = vpop.permute.xlu0 %2625
    %2627 = vrot.lane.b32.xlu0 %v826, 64
    %v2628 = vpop.permute.xlu0 %2627
    %2629 = vrot.lane.b32.xlu0 %v827, 64
    %v2630 = vpop.permute.xlu0 %2629
    %v2632 = vsel %vm836, %v2616, 0
    %v2635 = vsel %vm836, %v2618, 0
    %v2638 = vsel %vm836, %v2620, 0
    %v2641 = vsel %vm836, %v2622, 0
    %v2644 = vsel %vm836, %v2624, 0
    %v2647 = vsel %vm836, %v2626, 0
    %v2650 = vsel %vm836, %v2628, 0
    %v2653 = vsel %vm836, %v2630, 0
    %2655 = vmatprep.subr.bf16.mxu0 0
    %2656 = vmatpush1.bf16.xpose.msra.mxu0 %v2644
    %2657 = vmatprep.subr.bf16.mxu0 0
    %2658 = vmatpush1.bf16.xpose.msra.mxu0 %v2647
    %2659 = vmatprep.subr.bf16.mxu0 0
    %2660 = vmatpush1.bf16.xpose.msra.mxu0 %v2650
    %2661 = vmatprep.subr.bf16.mxu0 0
    %2662 = vmatpush1.bf16.xpose.msra.mxu0 %v2653
    %2663 = vmatprep.subr.bf16.mxu0 0
    %2664 = vmatpush1.bf16.xpose.msra.mxu0 0
    %2665 = vmatprep.subr.bf16.mxu0 0
    %2666 = vmatpush1.bf16.xpose.msra.mxu0 0
    %2667 = vmatprep.subr.bf16.mxu0 0
    %2668 = vmatpush1.bf16.xpose.msra.mxu0 0
    %2669 = vmatprep.subr.bf16.mxu0 0
    %2670 = vmatpush1.bf16.xpose.msra.mxu0 0
    %2671 = vmatprep.subr.bf16.mxu0 0
    %2672 = vmatpush1.bf16.xpose.msra.mxu0 0
    %2673 = vmatprep.subr.bf16.mxu0 0
    %2674 = vmatpush1.bf16.xpose.msra.mxu0 0
    %2675 = vmatprep.subr.bf16.mxu0 0
    %2676 = vmatpush1.bf16.xpose.msra.mxu0 0
    %2677 = vmatprep.subr.bf16.mxu0 0
    %2678 = vmatpush1.bf16.xpose.msra.mxu0 0
    %2679 = vmatprep.subr.bf16.mxu0 0
    %2680 = vmatpush1.bf16.xpose.msra.mxu0 0
    %2681 = vmatprep.subr.bf16.mxu0 0
    %2682 = vmatpush1.bf16.xpose.msra.mxu0 0
    %2683 = vmatprep.subr.bf16.mxu0 0
    %2684 = vmatpush1.bf16.xpose.msra.mxu0 0
    %2685 = vmatprep.subr.bf16.mxu0 0
    %2686 = vmatpush1.bf16.xpose.msra.mxu0 0
    %2687 = vmatprep.mubr.bf16.mxu0 0
    %2688 = vmatmul.mubr.bf16.gmra.mrb[0].mxu0 %v2632
    %v2689 = vpop.f32.mrb[0].mxu0
    %v2690 = vadd.f32 %v192, %v2689
    %v2691 = vpop.f32.mrb[0].mxu0
    %v2692 = vpop.f32.mrb[0].mxu0
    %v2693 = vadd.f32 %v193, %v2692
    %v2694 = vpop.f32.mrb[0].mxu0
    %2695 = vmatprep.mubr.bf16.mxu0 0
    %2696 = vmatmul.mubr.bf16.gmra.mrb[0].mxu0 %v2635
    %v2697 = vpop.f32.mrb[0].mxu0
    %v2698 = vadd.f32 %v194, %v2697
    %v2699 = vpop.f32.mrb[0].mxu0
    %v2700 = vpop.f32.mrb[0].mxu0
    %v2701 = vadd.f32 %v195, %v2700
    %v2702 = vpop.f32.mrb[0].mxu0
    %2703 = vmatprep.mubr.bf16.mxu0 0
    %2704 = vmatmul.mubr.bf16.gmra.mrb[0].mxu0 %v2638
    %v2705 = vpop.f32.mrb[0].mxu0
    %v2706 = vadd.f32 %v196, %v2705
    %v2707 = vpop.f32.mrb[0].mxu0
    %v2708 = vpop.f32.mrb[0].mxu0
    %v2709 = vadd.f32 %v197, %v2708
    %v2710 = vpop.f32.mrb[0].mxu0
    %2711 = vmatprep.mubr.bf16.mxu0 0
    %2712 = vmatmul.mubr.bf16.gmra.mrb[0].mxu0 %v2641
    %v2713 = vpop.f32.mrb[0].mxu0
    %v2714 = vadd.f32 %v198, %v2713
    %v2715 = vpop.f32.mrb[0].mxu0
    %v2716 = vpop.f32.mrb[0].mxu0
    %v2717 = vadd.f32 %v199, %v2716
    %v2718 = vpop.f32.mrb[0].mxu0
    %2719 = vdwg.mxu0
    %v2720 = vsel %vm926, %v2690, -inf
    %2721 = vmax.xlane.f32.xlu0 %v2720
    %v2722 = vpop.xlane.xlu0 %2721
    %v2723 = vsel %vm926, %v2693, -inf
    %2724 = vmax.xlane.f32.xlu0 %v2723
    %v2725 = vpop.xlane.xlu0 %2724
    %v2726 = vsel %vm926, %v2698, -inf
    %2727 = vmax.xlane.f32.xlu0 %v2726
    %v2728 = vpop.xlane.xlu0 %2727
    %v2729 = vsel %vm926, %v2701, -inf
    %2730 = vmax.xlane.f32.xlu0 %v2729
    %v2731 = vpop.xlane.xlu0 %2730
    %v2732 = vsel %vm926, %v2706, -inf
    %2733 = vmax.xlane.f32.xlu0 %v2732
    %v2734 = vpop.xlane.xlu0 %2733
    %v2735 = vsel %vm926, %v2709, -inf
    %2736 = vmax.xlane.f32.xlu0 %v2735
    %v2737 = vpop.xlane.xlu0 %2736
    %v2738 = vsel %vm926, %v2714, -inf
    %2739 = vmax.xlane.f32.xlu0 %v2738
    %v2740 = vpop.xlane.xlu0 %2739
    %v2741 = vsel %vm926, %v2717, -inf
    %2742 = vmax.xlane.f32.xlu0 %v2741
    %v2743 = vpop.xlane.xlu0 %2742
    %v2744 = vsub.f32 %v2690, %v2722
    %v2745 = vsub.f32 %v2693, %v2725
    %v2746 = vsub.f32 %v2698, %v2728
    %v2747 = vsub.f32 %v2701, %v2731
    %v2748 = vsub.f32 %v2706, %v2734
    %v2749 = vsub.f32 %v2709, %v2737
    %v2750 = vsub.f32 %v2714, %v2740
    %v2751 = vsub.f32 %v2717, %v2743
    %v2752 = vmul.f32 %v2744, 1.442695
    %v2753 = vpow.pop %v2752
    %v2754 = vmul.f32 %v2745, 1.442695
    %v2755 = vpow.pop %v2754
    %v2756 = vmul.f32 %v2746, 1.442695
    %v2757 = vpow.pop %v2756
    %v2758 = vmul.f32 %v2747, 1.442695
    %v2759 = vpow.pop %v2758
    %v2760 = vmul.f32 %v2748, 1.442695
    %v2761 = vpow.pop %v2760
    %v2762 = vmul.f32 %v2749, 1.442695
    %v2763 = vpow.pop %v2762
    %v2764 = vmul.f32 %v2750, 1.442695
    %v2765 = vpow.pop %v2764
    %v2766 = vmul.f32 %v2751, 1.442695
    %v2767 = vpow.pop %v2766
    %v2768 = vsel %vm926, %v2753, 0.0
    %2769 = vadd.xlane.f32.xlu0 %v2768
    %v2770 = vpop.xlane.xlu0 %2769
    %v2771 = vsel %vm926, %v2755, 0.0
    %2772 = vadd.xlane.f32.xlu0 %v2771
    %v2773 = vpop.xlane.xlu0 %2772
    %v2774 = vsel %vm926, %v2757, 0.0
    %2775 = vadd.xlane.f32.xlu0 %v2774
    %v2776 = vpop.xlane.xlu0 %2775
    %v2777 = vsel %vm926, %v2759, 0.0
    %2778 = vadd.xlane.f32.xlu0 %v2777
    %v2779 = vpop.xlane.xlu0 %2778
    %v2780 = vsel %vm926, %v2761, 0.0
    %2781 = vadd.xlane.f32.xlu0 %v2780
    %v2782 = vpop.xlane.xlu0 %2781
    %v2783 = vsel %vm926, %v2763, 0.0
    %2784 = vadd.xlane.f32.xlu0 %v2783
    %v2785 = vpop.xlane.xlu0 %2784
    %v2786 = vsel %vm926, %v2765, 0.0
    %2787 = vadd.xlane.f32.xlu0 %v2786
    %v2788 = vpop.xlane.xlu0 %2787
    %v2789 = vsel %vm926, %v2767, 0.0
    %2790 = vadd.xlane.f32.xlu0 %v2789
    %v2791 = vpop.xlane.xlu0 %2790
    %v2792 = vrcp.pop %v2770
    %v2793 = vrcp.pop %v2773
    %v2794 = vrcp.pop %v2776
    %v2795 = vrcp.pop %v2779
    %v2796 = vrcp.pop %v2782
    %v2797 = vrcp.pop %v2785
    %v2798 = vrcp.pop %v2788
    %v2799 = vrcp.pop %v2791
    %v2800 = vmul.f32 %v2753, %v2792
    %v2801 = vmul.f32 %v2755, %v2793
    %v2802 = vmul.f32 %v2757, %v2794
    %v2803 = vmul.f32 %v2759, %v2795
    %v2804 = vmul.f32 %v2761, %v2796
    %v2805 = vmul.f32 %v2763, %v2797
    %v2806 = vmul.f32 %v2765, %v2798
    %v2807 = vmul.f32 %v2767, %v2799
    %v2808 = vpack.c.bf16 %v2801, %v2800
    %v2809 = vpack.c.bf16 %v2803, %v2802
    %v2810 = vpack.c.bf16 %v2805, %v2804
    %v2811 = vpack.c.bf16 %v2807, %v2806
    %2812 = vrot.lane.b32.xlu0 %v832, 64
    %v2813 = vpop.permute.xlu0 %2812
    %2814 = vrot.lane.b32.xlu0 %v833, 64
    %v2815 = vpop.permute.xlu0 %2814
    %2816 = vrot.lane.b32.xlu0 %v834, 64
    %v2817 = vpop.permute.xlu0 %2816
    %2818 = vrot.lane.b32.xlu0 %v835, 64
    %v2819 = vpop.permute.xlu0 %2818
    %v2825 = vsel %vm926, %v2808, 0
    %v2828 = vsel %vm926, %v2809, 0
    %v2831 = vsel %vm926, %v2810, 0
    %v2834 = vsel %vm926, %v2811, 0
    %2836 = vmatprep.subr.bf16.mxu0 0
    %2837 = vmatpush1.bf16.msra.mxu0 %v2813
    %2838 = vmatprep.subr.bf16.mxu0 0
    %2839 = vmatpush1.bf16.msra.mxu0 %v2815
    %2840 = vmatprep.subr.bf16.mxu0 0
    %2841 = vmatpush1.bf16.msra.mxu0 %v2817
    %2842 = vmatprep.subr.bf16.mxu0 0
    %2843 = vmatpush1.bf16.msra.mxu0 %v2819
    %2844 = vmatprep.subr.bf16.mxu0 0
    %2845 = vmatpush1.bf16.msra.mxu0 0
    %2846 = vmatprep.subr.bf16.mxu0 0
    %2847 = vmatpush1.bf16.msra.mxu0 0
    %2848 = vmatprep.subr.bf16.mxu0 0
    %2849 = vmatpush1.bf16.msra.mxu0 0
    %2850 = vmatprep.subr.bf16.mxu0 0
    %2851 = vmatpush1.bf16.msra.mxu0 0
    %2852 = vmatprep.subr.bf16.mxu0 0
    %2853 = vmatpush1.bf16.msra.mxu0 0
    %2854 = vmatprep.subr.bf16.mxu0 0
    %2855 = vmatpush1.bf16.msra.mxu0 0
    %2856 = vmatprep.subr.bf16.mxu0 0
    %2857 = vmatpush1.bf16.msra.mxu0 0
    %2858 = vmatprep.subr.bf16.mxu0 0
    %2859 = vmatpush1.bf16.msra.mxu0 0
    %2860 = vmatprep.subr.bf16.mxu0 0
    %2861 = vmatpush1.bf16.msra.mxu0 0
    %2862 = vmatprep.subr.bf16.mxu0 0
    %2863 = vmatpush1.bf16.msra.mxu0 0
    %2864 = vmatprep.subr.bf16.mxu0 0
    %2865 = vmatpush1.bf16.msra.mxu0 0
    %2866 = vmatprep.subr.bf16.mxu0 0
    %2867 = vmatpush1.bf16.msra.mxu0 0
    %2868 = vmatprep.mubr.bf16.mxu0 0
    %2869 = vmatmul.mubr.bf16.gmra.mrb[0].mxu0 %v2825
    %v2870 = vpop.f32.mrb[0].mxu0
    %v2871 = vadd.f32 0.0, %v2870
    %v2872 = vpop.f32.mrb[0].mxu0
    %v2873 = vpop.f32.mrb[0].mxu0
    %v2874 = vadd.f32 0.0, %v2873
    %v2875 = vpop.f32.mrb[0].mxu0
    %2876 = vmatprep.mubr.bf16.mxu0 0
    %2877 = vmatmul.mubr.bf16.gmra.mrb[0].mxu0 %v2828
    %v2878 = vpop.f32.mrb[0].mxu0
    %v2879 = vadd.f32 0.0, %v2878
    %v2880 = vpop.f32.mrb[0].mxu0
    %v2881 = vpop.f32.mrb[0].mxu0
    %v2882 = vadd.f32 0.0, %v2881
    %v2883 = vpop.f32.mrb[0].mxu0
    %2884 = vmatprep.mubr.bf16.mxu0 0
    %2885 = vmatmul.mubr.bf16.gmra.mrb[0].mxu0 %v2831
    %v2886 = vpop.f32.mrb[0].mxu0
    %v2887 = vadd.f32 0.0, %v2886
    %v2888 = vpop.f32.mrb[0].mxu0
    %v2889 = vpop.f32.mrb[0].mxu0
    %v2890 = vadd.f32 0.0, %v2889
    %v2891 = vpop.f32.mrb[0].mxu0
    %2892 = vmatprep.mubr.bf16.mxu0 0
    %2893 = vmatmul.mubr.bf16.gmra.mrb[0].mxu0 %v2834
    %v2894 = vpop.f32.mrb[0].mxu0
    %v2895 = vadd.f32 0.0, %v2894
    %v2896 = vpop.f32.mrb[0].mxu0
    %v2897 = vpop.f32.mrb[0].mxu0
    %v2898 = vadd.f32 0.0, %v2897
    %v2899 = vpop.f32.mrb[0].mxu0
    %2900 = vdwg.mxu0
    %v2901 = vpack.c.bf16 %v2874, %v2871
    %v2902 = vpack.c.bf16 %v2882, %v2879
    %v2903 = vpack.c.bf16 %v2890, %v2887
    %v2904 = vpack.c.bf16 %v2898, %v2895
    %2905 = vrot.lane.b32.xlu0 %v816, 32
    %v2906 = vpop.permute.xlu0 %2905
    %2907 = vrot.lane.b32.xlu0 %v817, 32
    %v2908 = vpop.permute.xlu0 %2907
    %2909 = vrot.lane.b32.xlu0 %v818, 32
    %v2910 = vpop.permute.xlu0 %2909
    %2911 = vrot.lane.b32.xlu0 %v819, 32
    %v2912 = vpop.permute.xlu0 %2911
    %2913 = vrot.lane.b32.xlu0 %v824, 32
    %v2914 = vpop.permute.xlu0 %2913
    %2915 = vrot.lane.b32.xlu0 %v825, 32
    %v2916 = vpop.permute.xlu0 %2915
    %2917 = vrot.lane.b32.xlu0 %v826, 32
    %v2918 = vpop.permute.xlu0 %2917
    %2919 = vrot.lane.b32.xlu0 %v827, 32
    %v2920 = vpop.permute.xlu0 %2919
    %v2922 = vsel %vm836, %v2906, 0
    %v2925 = vsel %vm836, %v2908, 0
    %v2928 = vsel %vm836, %v2910, 0
    %v2931 = vsel %vm836, %v2912, 0
    %v2934 = vsel %vm836, %v2914, 0
    %v2937 = vsel %vm836, %v2916, 0
    %v2940 = vsel %vm836, %v2918, 0
    %v2943 = vsel %vm836, %v2920, 0
    %2945 = vmatprep.subr.bf16.mxu0 0
    %2946 = vmatpush1.bf16.xpose.msra.mxu0 %v2934
    %2947 = vmatprep.subr.bf16.mxu0 0
    %2948 = vmatpush1.bf16.xpose.msra.mxu0 %v2937
    %2949 = vmatprep.subr.bf16.mxu0 0
    %2950 = vmatpush1.bf16.xpose.msra.mxu0 %v2940
    %2951 = vmatprep.subr.bf16.mxu0 0
    %2952 = vmatpush1.bf16.xpose.msra.mxu0 %v2943
    %2953 = vmatprep.subr.bf16.mxu0 0
    %2954 = vmatpush1.bf16.xpose.msra.mxu0 0
    %2955 = vmatprep.subr.bf16.mxu0 0
    %2956 = vmatpush1.bf16.xpose.msra.mxu0 0
    %2957 = vmatprep.subr.bf16.mxu0 0
    %2958 = vmatpush1.bf16.xpose.msra.mxu0 0
    %2959 = vmatprep.subr.bf16.mxu0 0
    %2960 = vmatpush1.bf16.xpose.msra.mxu0 0
    %2961 = vmatprep.subr.bf16.mxu0 0
    %2962 = vmatpush1.bf16.xpose.msra.mxu0 0
    %2963 = vmatprep.subr.bf16.mxu0 0
    %2964 = vmatpush1.bf16.xpose.msra.mxu0 0
    %2965 = vmatprep.subr.bf16.mxu0 0
    %2966 = vmatpush1.bf16.xpose.msra.mxu0 0
    %2967 = vmatprep.subr.bf16.mxu0 0
    %2968 = vmatpush1.bf16.xpose.msra.mxu0 0
    %2969 = vmatprep.subr.bf16.mxu0 0
    %2970 = vmatpush1.bf16.xpose.msra.mxu0 0
    %2971 = vmatprep.subr.bf16.mxu0 0
    %2972 = vmatpush1.bf16.xpose.msra.mxu0 0
    %2973 = vmatprep.subr.bf16.mxu0 0
    %2974 = vmatpush1.bf16.xpose.msra.mxu0 0
    %2975 = vmatprep.subr.bf16.mxu0 0
    %2976 = vmatpush1.bf16.xpose.msra.mxu0 0
    %2977 = vmatprep.mubr.bf16.mxu0 0
    %2978 = vmatmul.mubr.bf16.gmra.mrb[0].mxu0 %v2922
    %v2979 = vpop.f32.mrb[0].mxu0
    %v2980 = vadd.f32 %v192, %v2979
    %v2981 = vpop.f32.mrb[0].mxu0
    %v2982 = vpop.f32.mrb[0].mxu0
    %v2983 = vadd.f32 %v193, %v2982
    %v2984 = vpop.f32.mrb[0].mxu0
    %2985 = vmatprep.mubr.bf16.mxu0 0
    %2986 = vmatmul.mubr.bf16.gmra.mrb[0].mxu0 %v2925
    %v2987 = vpop.f32.mrb[0].mxu0
    %v2988 = vadd.f32 %v194, %v2987
    %v2989 = vpop.f32.mrb[0].mxu0
    %v2990 = vpop.f32.mrb[0].mxu0
    %v2991 = vadd.f32 %v195, %v2990
    %v2992 = vpop.f32.mrb[0].mxu0
    %2993 = vmatprep.mubr.bf16.mxu0 0
    %2994 = vmatmul.mubr.bf16.gmra.mrb[0].mxu0 %v2928
    %v2995 = vpop.f32.mrb[0].mxu0
    %v2996 = vadd.f32 %v196, %v2995
    %v2997 = vpop.f32.mrb[0].mxu0
    %v2998 = vpop.f32.mrb[0].mxu0
    %v2999 = vadd.f32 %v197, %v2998
    %v3000 = vpop.f32.mrb[0].mxu0
    %3001 = vmatprep.mubr.bf16.mxu0 0
    %3002 = vmatmul.mubr.bf16.gmra.mrb[0].mxu0 %v2931
    %v3003 = vpop.f32.mrb[0].mxu0
    %v3004 = vadd.f32 %v198, %v3003
    %v3005 = vpop.f32.mrb[0].mxu0
    %v3006 = vpop.f32.mrb[0].mxu0
    %v3007 = vadd.f32 %v199, %v3006
    %v3008 = vpop.f32.mrb[0].mxu0
    %3009 = vdwg.mxu0
    %v3010 = vsel %vm926, %v2980, -inf
    %3011 = vmax.xlane.f32.xlu0 %v3010
    %v3012 = vpop.xlane.xlu0 %3011
    %v3013 = vsel %vm926, %v2983, -inf
    %3014 = vmax.xlane.f32.xlu0 %v3013
    %v3015 = vpop.xlane.xlu0 %3014
    %v3016 = vsel %vm926, %v2988, -inf
    %3017 = vmax.xlane.f32.xlu0 %v3016
    %v3018 = vpop.xlane.xlu0 %3017
    %v3019 = vsel %vm926, %v2991, -inf
    %3020 = vmax.xlane.f32.xlu0 %v3019
    %v3021 = vpop.xlane.xlu0 %3020
    %v3022 = vsel %vm926, %v2996, -inf
    %3023 = vmax.xlane.f32.xlu0 %v3022
    %v3024 = vpop.xlane.xlu0 %3023
    %v3025 = vsel %vm926, %v2999, -inf
    %3026 = vmax.xlane.f32.xlu0 %v3025
    %v3027 = vpop.xlane.xlu0 %3026
    %v3028 = vsel %vm926, %v3004, -inf
    %3029 = vmax.xlane.f32.xlu0 %v3028
    %v3030 = vpop.xlane.xlu0 %3029
    %v3031 = vsel %vm926, %v3007, -inf
    %3032 = vmax.xlane.f32.xlu0 %v3031
    %v3033 = vpop.xlane.xlu0 %3032
    %v3034 = vsub.f32 %v2980, %v3012
    %v3035 = vsub.f32 %v2983, %v3015
    %v3036 = vsub.f32 %v2988, %v3018
    %v3037 = vsub.f32 %v2991, %v3021
    %v3038 = vsub.f32 %v2996, %v3024
    %v3039 = vsub.f32 %v2999, %v3027
    %v3040 = vsub.f32 %v3004, %v3030
    %v3041 = vsub.f32 %v3007, %v3033
    %v3042 = vmul.f32 %v3034, 1.442695
    %v3043 = vpow.pop %v3042
    %v3044 = vmul.f32 %v3035, 1.442695
    %v3045 = vpow.pop %v3044
    %v3046 = vmul.f32 %v3036, 1.442695
    %v3047 = vpow.pop %v3046
    %v3048 = vmul.f32 %v3037, 1.442695
    %v3049 = vpow.pop %v3048
    %v3050 = vmul.f32 %v3038, 1.442695
    %v3051 = vpow.pop %v3050
    %v3052 = vmul.f32 %v3039, 1.442695
    %v3053 = vpow.pop %v3052
    %v3054 = vmul.f32 %v3040, 1.442695
    %v3055 = vpow.pop %v3054
    %v3056 = vmul.f32 %v3041, 1.442695
    %v3057 = vpow.pop %v3056
    %v3058 = vsel %vm926, %v3043, 0.0
    %3059 = vadd.xlane.f32.xlu0 %v3058
    %v3060 = vpop.xlane.xlu0 %3059
    %v3061 = vsel %vm926, %v3045, 0.0
    %3062 = vadd.xlane.f32.xlu0 %v3061
    %v3063 = vpop.xlane.xlu0 %3062
    %v3064 = vsel %vm926, %v3047, 0.0
    %3065 = vadd.xlane.f32.xlu0 %v3064
    %v3066 = vpop.xlane.xlu0 %3065
    %v3067 = vsel %vm926, %v3049, 0.0
    %3068 = vadd.xlane.f32.xlu0 %v3067
    %v3069 = vpop.xlane.xlu0 %3068
    %v3070 = vsel %vm926, %v3051, 0.0
    %3071 = vadd.xlane.f32.xlu0 %v3070
    %v3072 = vpop.xlane.xlu0 %3071
    %v3073 = vsel %vm926, %v3053, 0.0
    %3074 = vadd.xlane.f32.xlu0 %v3073
    %v3075 = vpop.xlane.xlu0 %3074
    %v3076 = vsel %vm926, %v3055, 0.0
    %3077 = vadd.xlane.f32.xlu0 %v3076
    %v3078 = vpop.xlane.xlu0 %3077
    %v3079 = vsel %vm926, %v3057, 0.0
    %3080 = vadd.xlane.f32.xlu0 %v3079
    %v3081 = vpop.xlane.xlu0 %3080
    %v3082 = vrcp.pop %v3060
    %v3083 = vrcp.pop %v3063
    %v3084 = vrcp.pop %v3066
    %v3085 = vrcp.pop %v3069
    %v3086 = vrcp.pop %v3072
    %v3087 = vrcp.pop %v3075
    %v3088 = vrcp.pop %v3078
    %v3089 = vrcp.pop %v3081
    %v3090 = vmul.f32 %v3043, %v3082
    %v3091 = vmul.f32 %v3045, %v3083
    %v3092 = vmul.f32 %v3047, %v3084
    %v3093 = vmul.f32 %v3049, %v3085
    %v3094 = vmul.f32 %v3051, %v3086
    %v3095 = vmul.f32 %v3053, %v3087
    %v3096 = vmul.f32 %v3055, %v3088
    %v3097 = vmul.f32 %v3057, %v3089
    %v3098 = vpack.c.bf16 %v3091, %v3090
    %v3099 = vpack.c.bf16 %v3093, %v3092
    %v3100 = vpack.c.bf16 %v3095, %v3094
    %v3101 = vpack.c.bf16 %v3097, %v3096
    %3102 = vrot.lane.b32.xlu0 %v832, 32
    %v3103 = vpop.permute.xlu0 %3102
    %3104 = vrot.lane.b32.xlu0 %v833, 32
    %v3105 = vpop.permute.xlu0 %3104
    %3106 = vrot.lane.b32.xlu0 %v834, 32
    %v3107 = vpop.permute.xlu0 %3106
    %3108 = vrot.lane.b32.xlu0 %v835, 32
    %v3109 = vpop.permute.xlu0 %3108
    %v3115 = vsel %vm926, %v3098, 0
    %v3118 = vsel %vm926, %v3099, 0
    %v3121 = vsel %vm926, %v3100, 0
    %v3124 = vsel %vm926, %v3101, 0
    %3126 = vmatprep.subr.bf16.mxu0 0
    %3127 = vmatpush1.bf16.msra.mxu0 %v3103
    %3128 = vmatprep.subr.bf16.mxu0 0
    %3129 = vmatpush1.bf16.msra.mxu0 %v3105
    %3130 = vmatprep.subr.bf16.mxu0 0
    %3131 = vmatpush1.bf16.msra.mxu0 %v3107
    %3132 = vmatprep.subr.bf16.mxu0 0
    %3133 = vmatpush1.bf16.msra.mxu0 %v3109
    %3134 = vmatprep.subr.bf16.mxu0 0
    %3135 = vmatpush1.bf16.msra.mxu0 0
    %3136 = vmatprep.subr.bf16.mxu0 0
    %3137 = vmatpush1.bf16.msra.mxu0 0
    %3138 = vmatprep.subr.bf16.mxu0 0
    %3139 = vmatpush1.bf16.msra.mxu0 0
    %3140 = vmatprep.subr.bf16.mxu0 0
    %3141 = vmatpush1.bf16.msra.mxu0 0
    %3142 = vmatprep.subr.bf16.mxu0 0
    %3143 = vmatpush1.bf16.msra.mxu0 0
    %3144 = vmatprep.subr.bf16.mxu0 0
    %3145 = vmatpush1.bf16.msra.mxu0 0
    %3146 = vmatprep.subr.bf16.mxu0 0
    %3147 = vmatpush1.bf16.msra.mxu0 0
    %3148 = vmatprep.subr.bf16.mxu0 0
    %3149 = vmatpush1.bf16.msra.mxu0 0
    %3150 = vmatprep.subr.bf16.mxu0 0
    %3151 = vmatpush1.bf16.msra.mxu0 0
    %3152 = vmatprep.subr.bf16.mxu0 0
    %3153 = vmatpush1.bf16.msra.mxu0 0
    %3154 = vmatprep.subr.bf16.mxu0 0
    %3155 = vmatpush1.bf16.msra.mxu0 0
    %3156 = vmatprep.subr.bf16.mxu0 0
    %3157 = vmatpush1.bf16.msra.mxu0 0
    %3158 = vmatprep.mubr.bf16.mxu0 0
    %3159 = vmatmul.mubr.bf16.gmra.mrb[0].mxu0 %v3115
    %v3160 = vpop.f32.mrb[0].mxu0
    %v3161 = vadd.f32 0.0, %v3160
    %v3162 = vpop.f32.mrb[0].mxu0
    %v3163 = vpop.f32.mrb[0].mxu0
    %v3164 = vadd.f32 0.0, %v3163
    %v3165 = vpop.f32.mrb[0].mxu0
    %3166 = vmatprep.mubr.bf16.mxu0 0
    %3167 = vmatmul.mubr.bf16.gmra.mrb[0].mxu0 %v3118
    %v3168 = vpop.f32.mrb[0].mxu0
    %v3169 = vadd.f32 0.0, %v3168
    %v3170 = vpop.f32.mrb[0].mxu0
    %v3171 = vpop.f32.mrb[0].mxu0
    %v3172 = vadd.f32 0.0, %v3171
    %v3173 = vpop.f32.mrb[0].mxu0
    %3174 = vmatprep.mubr.bf16.mxu0 0
    %3175 = vmatmul.mubr.bf16.gmra.mrb[0].mxu0 %v3121
    %v3176 = vpop.f32.mrb[0].mxu0
    %v3177 = vadd.f32 0.0, %v3176
    %v3178 = vpop.f32.mrb[0].mxu0
    %v3179 = vpop.f32.mrb[0].mxu0
    %v3180 = vadd.f32 0.0, %v3179
    %v3181 = vpop.f32.mrb[0].mxu0
    %3182 = vmatprep.mubr.bf16.mxu0 0
    %3183 = vmatmul.mubr.bf16.gmra.mrb[0].mxu0 %v3124
    %v3184 = vpop.f32.mrb[0].mxu0
    %v3185 = vadd.f32 0.0, %v3184
    %v3186 = vpop.f32.mrb[0].mxu0
    %v3187 = vpop.f32.mrb[0].mxu0
    %v3188 = vadd.f32 0.0, %v3187
    %v3189 = vpop.f32.mrb[0].mxu0
    %3190 = vdwg.mxu0
    %v3191 = vpack.c.bf16 %v3164, %v3161
    %v3192 = vpack.c.bf16 %v3172, %v3169
    %v3193 = vpack.c.bf16 %v3180, %v3177
    %v3194 = vpack.c.bf16 %v3188, %v3185
    %3199 = vrot.lane.b32.xlu0 %v2611, 32
    %v3200 = vpop.permute.xlu0 %3199
    %3201 = vrot.lane.b32.xlu0 %v2612, 32
    %v3202 = vpop.permute.xlu0 %3201
    %3203 = vrot.lane.b32.xlu0 %v2613, 32
    %v3204 = vpop.permute.xlu0 %3203
    %3205 = vrot.lane.b32.xlu0 %v2614, 32
    %v3206 = vpop.permute.xlu0 %3205
    %3211 = vrot.lane.b32.xlu0 %v2901, 64
    %v3212 = vpop.permute.xlu0 %3211
    %3213 = vrot.lane.b32.xlu0 %v2902, 64
    %v3214 = vpop.permute.xlu0 %3213
    %3215 = vrot.lane.b32.xlu0 %v2903, 64
    %v3216 = vpop.permute.xlu0 %3215
    %3217 = vrot.lane.b32.xlu0 %v2904, 64
    %v3218 = vpop.permute.xlu0 %3217
    %3223 = vrot.lane.b32.xlu0 %v3191, 96
    %v3224 = vpop.permute.xlu0 %3223
    %3225 = vrot.lane.b32.xlu0 %v3192, 96
    %v3226 = vpop.permute.xlu0 %3225
    %3227 = vrot.lane.b32.xlu0 %v3193, 96
    %v3228 = vpop.permute.xlu0 %3227
    %3229 = vrot.lane.b32.xlu0 %v3194, 96
    %v3230 = vpop.permute.xlu0 %3229
    %v3233 = vsel %vm836, %v2309, %v3200
    %v3236 = vsel %vm836, %v2310, %v3202
    %v3239 = vsel %vm836, %v2311, %v3204
    %v3242 = vsel %vm836, %v2312, %v3206
    %v3244 = vsel %vm926, %v3233, %v3212
    %v3246 = vsel %vm926, %v3236, %v3214
    %v3248 = vsel %vm926, %v3239, %v3216
    %v3250 = vsel %vm926, %v3242, %v3218
    %v3252 = vsel %vm2038, %v3244, %v3224
    %v3255 = vsel %vm2038, %v3246, %v3226
    %v3258 = vsel %vm2038, %v3248, %v3228
    %v3261 = vsel %vm2038, %v3250, %v3230
    %v3263 = vld [vmem:[#allocation8] sm:$0xf]
    %v3264 = vld [vmem:[#allocation8 + $0x4] sm:$0xf]
    %v3265 = vld [vmem:[#allocation8 + $0x8] sm:$0xf]
    %v3266 = vld [vmem:[#allocation8 + $0xc] sm:$0xf]
    %v3267 = vld [vmem:[#allocation8 + $0x10] sm:$0xf]
    %v3268 = vld [vmem:[#allocation8 + $0x14] sm:$0xf]
    %v3269 = vld [vmem:[#allocation8 + $0x18] sm:$0xf]
    %v3270 = vld [vmem:[#allocation8 + $0x1c] sm:$0xf]
    %v3271 = vld [vmem:[#allocation8 + $0x20] sm:$0xf]
    %v3272 = vld [vmem:[#allocation8 + $0x24] sm:$0xf]
    %v3273 = vld [vmem:[#allocation8 + $0x28] sm:$0xf]
    %v3274 = vld [vmem:[#allocation8 + $0x2c] sm:$0xf]
    %v3275 = vld [vmem:[#allocation8 + $0x30] sm:$0xf]
    %v3276 = vld [vmem:[#allocation8 + $0x34] sm:$0xf]
    %v3277 = vld [vmem:[#allocation8 + $0x38] sm:$0xf]
    %v3278 = vld [vmem:[#allocation8 + $0x3c] sm:$0xf]
    %v3279 = vld [vmem:[%s4] sm:$0x1]
    %v3281 = vlaneseq
    %v3282 = vshrl.u32 %v3281, 7
    %v3283 = vsub.s32 0, %v3282
    %v3284 = vrot.slane %v3279, %v3283
    %v3302 = vunpack.c.l.b16 %v3263
    %v3303 = vunpack.c.l.b16 %v3264
    %v3304 = vunpack.c.l.b16 %v3265
    %v3305 = vunpack.c.l.b16 %v3266
    %v3306 = vunpack.c.l.b16 %v3267
    %v3307 = vunpack.c.l.b16 %v3268
    %v3308 = vunpack.c.l.b16 %v3269
    %v3309 = vunpack.c.l.b16 %v3270
    %v3310 = vunpack.c.l.b16 %v3271
    %v3311 = vunpack.c.l.b16 %v3272
    %v3312 = vunpack.c.l.b16 %v3273
    %v3313 = vunpack.c.l.b16 %v3274
    %v3314 = vunpack.c.l.b16 %v3275
    %v3315 = vunpack.c.l.b16 %v3276
    %v3316 = vunpack.c.l.b16 %v3277
    %v3317 = vunpack.c.l.b16 %v3278
    %v3318 = vpack.c.b16 %v3303, %v3302
    %v3319 = vpack.c.b16 %v3305, %v3304
    %v3320 = vpack.c.b16 %v3307, %v3306
    %v3321 = vpack.c.b16 %v3309, %v3308
    %v3322 = vpack.c.b16 %v3311, %v3310
    %v3323 = vpack.c.b16 %v3313, %v3312
    %v3324 = vpack.c.b16 %v3315, %v3314
    %v3325 = vpack.c.b16 %v3317, %v3316
    %3334 = vmatprep.subr.bf16.mxu0 0
    %3335 = vmatpush1.bf16.msra.mxu0 %v3318
    %3336 = vmatprep.subr.bf16.mxu0 0
    %3337 = vmatpush1.bf16.msra.mxu0 %v3319
    %3338 = vmatprep.subr.bf16.mxu0 0
    %3339 = vmatpush1.bf16.msra.mxu0 %v3320
    %3340 = vmatprep.subr.bf16.mxu0 0
    %3341 = vmatpush1.bf16.msra.mxu0 %v3321
    %3342 = vmatprep.subr.bf16.mxu0 0
    %3343 = vmatpush1.bf16.msra.mxu0 %v3322
    %3344 = vmatprep.subr.bf16.mxu0 0
    %3345 = vmatpush1.bf16.msra.mxu0 %v3323
    %3346 = vmatprep.subr.bf16.mxu0 0
    %3347 = vmatpush1.bf16.msra.mxu0 %v3324
    %3348 = vmatprep.subr.bf16.mxu0 0
    %3349 = vmatpush1.bf16.msra.mxu0 %v3325
    %3350 = vmatprep.subr.bf16.mxu0 0
    %3351 = vmatpush1.bf16.msra.mxu0 0
    %3352 = vmatprep.subr.bf16.mxu0 0
    %3353 = vmatpush1.bf16.msra.mxu0 0
    %3354 = vmatprep.subr.bf16.mxu0 0
    %3355 = vmatpush1.bf16.msra.mxu0 0
    %3356 = vmatprep.subr.bf16.mxu0 0
    %3357 = vmatpush1.bf16.msra.mxu0 0
    %3358 = vmatprep.subr.bf16.mxu0 0
    %3359 = vmatpush1.bf16.msra.mxu0 0
    %3360 = vmatprep.subr.bf16.mxu0 0
    %3361 = vmatpush1.bf16.msra.mxu0 0
    %3362 = vmatprep.subr.bf16.mxu0 0
    %3363 = vmatpush1.bf16.msra.mxu0 0
    %3364 = vmatprep.subr.bf16.mxu0 0
    %3365 = vmatpush1.bf16.msra.mxu0 0
    %3366 = vmatprep.mubr.bf16.mxu0 0
    %3367 = vmatmul.mubr.bf16.gmra.mrb[0].mxu0 %v2040
    %v3368 = vpop.f32.mrb[0].mxu0
    %v3369 = vadd.f32 %v3284, %v3368
    %v3370 = vpop.f32.mrb[0].mxu0
    %v3371 = vpop.f32.mrb[0].mxu0
    %v3372 = vadd.f32 %v3284, %v3371
    %v3373 = vpop.f32.mrb[0].mxu0
    %3374 = vmatprep.mubr.bf16.mxu0 0
    %3375 = vmatmul.mubr.bf16.gmra.mrb[0].mxu0 %v2043
    %v3376 = vpop.f32.mrb[0].mxu0
    %v3377 = vadd.f32 %v3284, %v3376
    %v3378 = vpop.f32.mrb[0].mxu0
    %v3379 = vpop.f32.mrb[0].mxu0
    %v3380 = vadd.f32 %v3284, %v3379
    %v3381 = vpop.f32.mrb[0].mxu0
    %3382 = vmatprep.mubr.bf16.mxu0 0
    %3383 = vmatmul.mubr.bf16.gmra.mrb[0].mxu0 %v2046
    %v3384 = vpop.f32.mrb[0].mxu0
    %v3385 = vadd.f32 %v3284, %v3384
    %v3386 = vpop.f32.mrb[0].mxu0
    %v3387 = vpop.f32.mrb[0].mxu0
    %v3388 = vadd.f32 %v3284, %v3387
    %v3389 = vpop.f32.mrb[0].mxu0
    %3390 = vmatprep.mubr.bf16.mxu0 0
    %3391 = vmatmul.mubr.bf16.gmra.mrb[0].mxu0 %v2049
    %v3392 = vpop.f32.mrb[0].mxu0
    %v3393 = vadd.f32 %v3284, %v3392
    %v3394 = vpop.f32.mrb[0].mxu0
    %v3395 = vpop.f32.mrb[0].mxu0
    %v3396 = vadd.f32 %v3284, %v3395
    %v3397 = vpop.f32.mrb[0].mxu0
    %3398 = vmatprep.mubr.bf16.mxu0 0
    %3399 = vmatmul.mubr.bf16.gmra.mrb[0].mxu0 %v3252
    %v3400 = vpop.f32.mrb[0].mxu0
    %v3401 = vadd.f32 %v3284, %v3400
    %v3402 = vpop.f32.mrb[0].mxu0
    %v3403 = vpop.f32.mrb[0].mxu0
    %v3404 = vadd.f32 %v3284, %v3403
    %v3405 = vpop.f32.mrb[0].mxu0
    %3406 = vmatprep.mubr.bf16.mxu0 0
    %3407 = vmatmul.mubr.bf16.gmra.mrb[0].mxu0 %v3255
    %v3408 = vpop.f32.mrb[0].mxu0
    %v3409 = vadd.f32 %v3284, %v3408
    %v3410 = vpop.f32.mrb[0].mxu0
    %v3411 = vpop.f32.mrb[0].mxu0
    %v3412 = vadd.f32 %v3284, %v3411
    %v3413 = vpop.f32.mrb[0].mxu0
    %3414 = vmatprep.mubr.bf16.mxu0 0
    %3415 = vmatmul.mubr.bf16.gmra.mrb[0].mxu0 %v3258
    %v3416 = vpop.f32.mrb[0].mxu0
    %v3417 = vadd.f32 %v3284, %v3416
    %v3418 = vpop.f32.mrb[0].mxu0
    %v3419 = vpop.f32.mrb[0].mxu0
    %v3420 = vadd.f32 %v3284, %v3419
    %v3421 = vpop.f32.mrb[0].mxu0
    %3422 = vmatprep.mubr.bf16.mxu0 0
    %3423 = vmatmul.mubr.bf16.gmra.mrb[0].mxu0 %v3261
    %v3424 = vpop.f32.mrb[0].mxu0
    %v3425 = vadd.f32 %v3284, %v3424
    %v3426 = vpop.f32.mrb[0].mxu0
    %v3427 = vpop.f32.mrb[0].mxu0
    %v3428 = vadd.f32 %v3284, %v3427
    %v3429 = vpop.f32.mrb[0].mxu0
    %3430 = vdwg.mxu0
    %v3431 = vadd.f32 %v141, %v3369
    %v3432 = vadd.f32 %v142, %v3372
    %v3433 = vadd.f32 %v143, %v3377
    %v3434 = vadd.f32 %v144, %v3380
    %v3435 = vadd.f32 %v145, %v3385
    %v3436 = vadd.f32 %v146, %v3388
    %v3437 = vadd.f32 %v147, %v3393
    %v3438 = vadd.f32 %v148, %v3396
    %v3439 = vadd.f32 %v149, %v3401
    %v3440 = vadd.f32 %v150, %v3404
    %v3441 = vadd.f32 %v151, %v3409
    %v3442 = vadd.f32 %v152, %v3412
    %v3443 = vadd.f32 %v153, %v3417
    %v3444 = vadd.f32 %v154, %v3420
    %v3445 = vadd.f32 %v155, %v3425
    %v3446 = vadd.f32 %v156, %v3428
    %v3447 = vld [vmem:[%s5] sm:$0x3]
    %3448 = vadd.xlane.f32.xlu0 %v3431
    %v3449 = vpop.xlane.xlu0 %3448
    %3450 = vadd.xlane.f32.xlu0 %v3432
    %v3451 = vpop.xlane.xlu0 %3450
    %3452 = vadd.xlane.f32.xlu0 %v3433
    %v3453 = vpop.xlane.xlu0 %3452
    %3454 = vadd.xlane.f32.xlu0 %v3434
    %v3455 = vpop.xlane.xlu0 %3454
    %3456 = vadd.xlane.f32.xlu0 %v3435
    %v3457 = vpop.xlane.xlu0 %3456
    %3458 = vadd.xlane.f32.xlu0 %v3436
    %v3459 = vpop.xlane.xlu0 %3458
    %3460 = vadd.xlane.f32.xlu0 %v3437
    %v3461 = vpop.xlane.xlu0 %3460
    %3462 = vadd.xlane.f32.xlu0 %v3438
    %v3463 = vpop.xlane.xlu0 %3462
    %3464 = vadd.xlane.f32.xlu0 %v3439
    %v3465 = vpop.xlane.xlu0 %3464
    %3466 = vadd.xlane.f32.xlu0 %v3440
    %v3467 = vpop.xlane.xlu0 %3466
    %3468 = vadd.xlane.f32.xlu0 %v3441
    %v3469 = vpop.xlane.xlu0 %3468
    %3470 = vadd.xlane.f32.xlu0 %v3442
    %v3471 = vpop.xlane.xlu0 %3470
    %3472 = vadd.xlane.f32.xlu0 %v3443
    %v3473 = vpop.xlane.xlu0 %3472
    %3474 = vadd.xlane.f32.xlu0 %v3444
    %v3475 = vpop.xlane.xlu0 %3474
    %3476 = vadd.xlane.f32.xlu0 %v3445
    %v3477 = vpop.xlane.xlu0 %3476
    %3478 = vadd.xlane.f32.xlu0 %v3446
    %v3479 = vpop.xlane.xlu0 %3478
    %v3480 = vmul.f32 %v3449, %v233
    %v3481 = vmul.f32 %v3451, %v233
    %v3482 = vmul.f32 %v3453, %v233
    %v3483 = vmul.f32 %v3455, %v233
    %v3484 = vmul.f32 %v3457, %v233
    %v3485 = vmul.f32 %v3459, %v233
    %v3486 = vmul.f32 %v3461, %v233
    %v3487 = vmul.f32 %v3463, %v233
    %v3488 = vmul.f32 %v3465, %v233
    %v3489 = vmul.f32 %v3467, %v233
    %v3490 = vmul.f32 %v3469, %v233
    %v3491 = vmul.f32 %v3471, %v233
    %v3492 = vmul.f32 %v3473, %v233
    %v3493 = vmul.f32 %v3475, %v233
    %v3494 = vmul.f32 %v3477, %v233
    %v3495 = vmul.f32 %v3479, %v233
    %v3496 = vsub.f32 %v3431, %v3480
    %v3497 = vsub.f32 %v3432, %v3481
    %v3498 = vsub.f32 %v3433, %v3482
    %v3499 = vsub.f32 %v3434, %v3483
    %v3500 = vsub.f32 %v3435, %v3484
    %v3501 = vsub.f32 %v3436, %v3485
    %v3502 = vsub.f32 %v3437, %v3486
    %v3503 = vsub.f32 %v3438, %v3487
    %v3504 = vsub.f32 %v3439, %v3488
    %v3505 = vsub.f32 %v3440, %v3489
    %v3506 = vsub.f32 %v3441, %v3490
    %v3507 = vsub.f32 %v3442, %v3491
    %v3508 = vsub.f32 %v3443, %v3492
    %v3509 = vsub.f32 %v3444, %v3493
    %v3510 = vsub.f32 %v3445, %v3494
    %v3511 = vsub.f32 %v3446, %v3495
    %v3512 = vmul.f32 %v3496, %v3496
    %v3513 = vmul.f32 %v3497, %v3497
    %v3514 = vmul.f32 %v3498, %v3498
    %v3515 = vmul.f32 %v3499, %v3499
    %v3516 = vmul.f32 %v3500, %v3500
    %v3517 = vmul.f32 %v3501, %v3501
    %v3518 = vmul.f32 %v3502, %v3502
    %v3519 = vmul.f32 %v3503, %v3503
    %v3520 = vmul.f32 %v3504, %v3504
    %v3521 = vmul.f32 %v3505, %v3505
    %v3522 = vmul.f32 %v3506, %v3506
    %v3523 = vmul.f32 %v3507, %v3507
    %v3524 = vmul.f32 %v3508, %v3508
    %v3525 = vmul.f32 %v3509, %v3509
    %v3526 = vmul.f32 %v3510, %v3510
    %v3527 = vmul.f32 %v3511, %v3511
    %3528 = vadd.xlane.f32.xlu0 %v3512
    %v3529 = vpop.xlane.xlu0 %3528
    %3530 = vadd.xlane.f32.xlu0 %v3513
    %v3531 = vpop.xlane.xlu0 %3530
    %3532 = vadd.xlane.f32.xlu0 %v3514
    %v3533 = vpop.xlane.xlu0 %3532
    %3534 = vadd.xlane.f32.xlu0 %v3515
    %v3535 = vpop.xlane.xlu0 %3534
    %3536 = vadd.xlane.f32.xlu0 %v3516
    %v3537 = vpop.xlane.xlu0 %3536
    %3538 = vadd.xlane.f32.xlu0 %v3517
    %v3539 = vpop.xlane.xlu0 %3538
    %3540 = vadd.xlane.f32.xlu0 %v3518
    %v3541 = vpop.xlane.xlu0 %3540
    %3542 = vadd.xlane.f32.xlu0 %v3519
    %v3543 = vpop.xlane.xlu0 %3542
    %3544 = vadd.xlane.f32.xlu0 %v3520
    %v3545 = vpop.xlane.xlu0 %3544
    %3546 = vadd.xlane.f32.xlu0 %v3521
    %v3547 = vpop.xlane.xlu0 %3546
    %3548 = vadd.xlane.f32.xlu0 %v3522
    %v3549 = vpop.xlane.xlu0 %3548
    %3550 = vadd.xlane.f32.xlu0 %v3523
    %v3551 = vpop.xlane.xlu0 %3550
    %3552 = vadd.xlane.f32.xlu0 %v3524
    %v3553 = vpop.xlane.xlu0 %3552
    %3554 = vadd.xlane.f32.xlu0 %v3525
    %v3555 = vpop.xlane.xlu0 %3554
    %3556 = vadd.xlane.f32.xlu0 %v3526
    %v3557 = vpop.xlane.xlu0 %3556
    %3558 = vadd.xlane.f32.xlu0 %v3527
    %v3559 = vpop.xlane.xlu0 %3558
    %v3560 = vmul.f32 %v3529, %v233
    %v3561 = vmul.f32 %v3531, %v233
    %v3562 = vmul.f32 %v3533, %v233
    %v3563 = vmul.f32 %v3535, %v233
    %v3564 = vmul.f32 %v3537, %v233
    %v3565 = vmul.f32 %v3539, %v233
    %v3566 = vmul.f32 %v3541, %v233
    %v3567 = vmul.f32 %v3543, %v233
    %v3568 = vmul.f32 %v3545, %v233
    %v3569 = vmul.f32 %v3547, %v233
    %v3570 = vmul.f32 %v3549, %v233
    %v3571 = vmul.f32 %v3551, %v233
    %v3572 = vmul.f32 %v3553, %v233
    %v3573 = vmul.f32 %v3555, %v233
    %v3574 = vmul.f32 %v3557, %v233
    %v3575 = vmul.f32 %v3559, %v233
    %v3576 = vadd.f32 %v3560, 1e-05
    %v3577 = vadd.f32 %v3561, 1e-05
    %v3578 = vadd.f32 %v3562, 1e-05
    %v3579 = vadd.f32 %v3563, 1e-05
    %v3580 = vadd.f32 %v3564, 1e-05
    %v3581 = vadd.f32 %v3565, 1e-05
    %v3582 = vadd.f32 %v3566, 1e-05
    %v3583 = vadd.f32 %v3567, 1e-05
    %v3584 = vadd.f32 %v3568, 1e-05
    %v3585 = vadd.f32 %v3569, 1e-05
    %v3586 = vadd.f32 %v3570, 1e-05
    %v3587 = vadd.f32 %v3571, 1e-05
    %v3588 = vadd.f32 %v3572, 1e-05
    %v3589 = vadd.f32 %v3573, 1e-05
    %v3590 = vadd.f32 %v3574, 1e-05
    %v3591 = vadd.f32 %v3575, 1e-05
    %v3592 = vrsqrt.pop %v3576
    %v3593 = vrsqrt.pop %v3577
    %v3594 = vrsqrt.pop %v3578
    %v3595 = vrsqrt.pop %v3579
    %v3596 = vrsqrt.pop %v3580
    %v3597 = vrsqrt.pop %v3581
    %v3598 = vrsqrt.pop %v3582
    %v3599 = vrsqrt.pop %v3583
    %v3600 = vrsqrt.pop %v3584
    %v3601 = vrsqrt.pop %v3585
    %v3602 = vrsqrt.pop %v3586
    %v3603 = vrsqrt.pop %v3587
    %v3604 = vrsqrt.pop %v3588
    %v3605 = vrsqrt.pop %v3589
    %v3606 = vrsqrt.pop %v3590
    %v3607 = vrsqrt.pop %v3591
    %v3608 = vmul.f32 %v3496, %v3592
    %v3609 = vmul.f32 %v3497, %v3593
    %v3610 = vmul.f32 %v3498, %v3594
    %v3611 = vmul.f32 %v3499, %v3595
    %v3612 = vmul.f32 %v3500, %v3596
    %v3613 = vmul.f32 %v3501, %v3597
    %v3614 = vmul.f32 %v3502, %v3598
    %v3615 = vmul.f32 %v3503, %v3599
    %v3616 = vmul.f32 %v3504, %v3600
    %v3617 = vmul.f32 %v3505, %v3601
    %v3618 = vmul.f32 %v3506, %v3602
    %v3619 = vmul.f32 %v3507, %v3603
    %v3620 = vmul.f32 %v3508, %v3604
    %v3621 = vmul.f32 %v3509, %v3605
    %v3622 = vmul.f32 %v3510, %v3606
    %v3623 = vmul.f32 %v3511, %v3607
    %v3624 = vlaneseq
    %v3625 = vshrl.u32 %v3624, 7
    %v3626 = vsub.s32 0, %v3625
    %v3627 = vrot.slane %v3447, %v3626
    %v3628 = vmul.f32 %v3608, %v3627
    %v3629 = vmul.f32 %v3609, %v3627
    %v3630 = vmul.f32 %v3610, %v3627
    %v3631 = vmul.f32 %v3611, %v3627
    %v3632 = vmul.f32 %v3612, %v3627
    %v3633 = vmul.f32 %v3613, %v3627
    %v3634 = vmul.f32 %v3614, %v3627
    %v3635 = vmul.f32 %v3615, %v3627
    %v3636 = vmul.f32 %v3616, %v3627
    %v3637 = vmul.f32 %v3617, %v3627
    %v3638 = vmul.f32 %v3618, %v3627
    %v3639 = vmul.f32 %v3619, %v3627
    %v3640 = vmul.f32 %v3620, %v3627
    %v3641 = vmul.f32 %v3621, %v3627
    %v3642 = vmul.f32 %v3622, %v3627
    %v3643 = vmul.f32 %v3623, %v3627
    %v3644 = vlaneseq
    %v3645 = vshrl.u32 %v3644, 7
    %v3646 = vsub.s32 1, %v3645
    %v3647 = vrot.slane %v3447, %v3646
    %v3648 = vadd.f32 %v3628, %v3647
    %v3649 = vadd.f32 %v3629, %v3647
    %v3650 = vadd.f32 %v3630, %v3647
    %v3651 = vadd.f32 %v3631, %v3647
    %v3652 = vadd.f32 %v3632, %v3647
    %v3653 = vadd.f32 %v3633, %v3647
    %v3654 = vadd.f32 %v3634, %v3647
    %v3655 = vadd.f32 %v3635, %v3647
    %v3656 = vadd.f32 %v3636, %v3647
    %v3657 = vadd.f32 %v3637, %v3647
    %v3658 = vadd.f32 %v3638, %v3647
    %v3659 = vadd.f32 %v3639, %v3647
    %v3660 = vadd.f32 %v3640, %v3647
    %v3661 = vadd.f32 %v3641, %v3647
    %v3662 = vadd.f32 %v3642, %v3647
    %v3663 = vadd.f32 %v3643, %v3647
    %v3664 = vpack.c.bf16 %v3649, %v3648
    %v3665 = vpack.c.bf16 %v3651, %v3650
    %v3666 = vpack.c.bf16 %v3653, %v3652
    %v3667 = vpack.c.bf16 %v3655, %v3654
    %v3668 = vpack.c.bf16 %v3657, %v3656
    %v3669 = vpack.c.bf16 %v3659, %v3658
    %v3670 = vpack.c.bf16 %v3661, %v3660
    %v3671 = vpack.c.bf16 %v3663, %v3662
    %v3672 = vld [vmem:[#allocation10] sm:$0xff]
    %v3673 = vld [vmem:[#allocation10 + $0x8] sm:$0xff]
    %v3674 = vld [vmem:[#allocation10 + $0x10] sm:$0xff]
    %v3675 = vld [vmem:[#allocation10 + $0x18] sm:$0xff]
    %v3676 = vld [vmem:[#allocation10 + $0x20] sm:$0xff]
    %v3677 = vld [vmem:[#allocation10 + $0x28] sm:$0xff]
    %v3678 = vld [vmem:[#allocation10 + $0x30] sm:$0xff]
    %v3679 = vld [vmem:[#allocation10 + $0x38] sm:$0xff]
    %v3680 = vld [vmem:[#allocation10 + $0x40] sm:$0xff]
    %v3681 = vld [vmem:[#allocation10 + $0x48] sm:$0xff]
    %v3682 = vld [vmem:[#allocation10 + $0x50] sm:$0xff]
    %v3683 = vld [vmem:[#allocation10 + $0x58] sm:$0xff]
    %v3684 = vld [vmem:[#allocation10 + $0x60] sm:$0xff]
    %v3685 = vld [vmem:[#allocation10 + $0x68] sm:$0xff]
    %v3686 = vld [vmem:[#allocation10 + $0x70] sm:$0xff]
    %v3687 = vld [vmem:[#allocation10 + $0x78] sm:$0xff]
    %v3688 = vld [vmem:[#allocation10 + $0x80] sm:$0xff]
    %v3689 = vld [vmem:[#allocation10 + $0x88] sm:$0xff]
    %v3690 = vld [vmem:[#allocation10 + $0x90] sm:$0xff]
    %v3691 = vld [vmem:[#allocation10 + $0x98] sm:$0xff]
    %v3692 = vld [vmem:[#allocation10 + $0xa0] sm:$0xff]
    %v3693 = vld [vmem:[#allocation10 + $0xa8] sm:$0xff]
    %v3694 = vld [vmem:[#allocation10 + $0xb0] sm:$0xff]
    %v3695 = vld [vmem:[#allocation10 + $0xb8] sm:$0xff]
    %v3696 = vld [vmem:[#allocation10 + $0xc0] sm:$0xff]
    %v3697 = vld [vmem:[#allocation10 + $0xc8] sm:$0xff]
    %v3698 = vld [vmem:[#allocation10 + $0xd0] sm:$0xff]
    %v3699 = vld [vmem:[#allocation10 + $0xd8] sm:$0xff]
    %v3700 = vld [vmem:[#allocation10 + $0xe0] sm:$0xff]
    %v3701 = vld [vmem:[#allocation10 + $0xe8] sm:$0xff]
    %v3702 = vld [vmem:[#allocation10 + $0xf0] sm:$0xff]
    %v3703 = vld [vmem:[#allocation10 + $0xf8] sm:$0xff]
    %v3704 = vld [vmem:[%s7] sm:$0xf]
    %v3706 = vlaneseq
    %v3707 = vshrl.u32 %v3706, 7
    %v3708 = vsub.s32 0, %v3707
    %v3709 = vrot.slane %v3704, %v3708
    %v3710 = vlaneseq
    %v3711 = vshrl.u32 %v3710, 7
    %v3712 = vsub.s32 1, %v3711
    %v3713 = vrot.slane %v3704, %v3712
    %v3714 = vlaneseq
    %v3715 = vshrl.u32 %v3714, 7
    %v3716 = vsub.s32 2, %v3715
    %v3717 = vrot.slane %v3704, %v3716
    %v3718 = vlaneseq
    %v3719 = vshrl.u32 %v3718, 7
    %v3720 = vsub.s32 3, %v3719
    %v3721 = vrot.slane %v3704, %v3720
    %v3758 = vunpack.c.l.b16 %v3672
    %v3759 = vunpack.c.h.b16 %v3672
    %v3760 = vunpack.c.l.b16 %v3673
    %v3761 = vunpack.c.h.b16 %v3673
    %v3762 = vunpack.c.l.b16 %v3674
    %v3763 = vunpack.c.h.b16 %v3674
    %v3764 = vunpack.c.l.b16 %v3675
    %v3765 = vunpack.c.h.b16 %v3675
    %v3766 = vunpack.c.l.b16 %v3676
    %v3767 = vunpack.c.h.b16 %v3676
    %v3768 = vunpack.c.l.b16 %v3677
    %v3769 = vunpack.c.h.b16 %v3677
    %v3770 = vunpack.c.l.b16 %v3678
    %v3771 = vunpack.c.h.b16 %v3678
    %v3772 = vunpack.c.l.b16 %v3679
    %v3773 = vunpack.c.h.b16 %v3679
    %v3774 = vunpack.c.l.b16 %v3680
    %v3775 = vunpack.c.h.b16 %v3680
    %v3776 = vunpack.c.l.b16 %v3681
    %v3777 = vunpack.c.h.b16 %v3681
    %v3778 = vunpack.c.l.b16 %v3682
    %v3779 = vunpack.c.h.b16 %v3682
    %v3780 = vunpack.c.l.b16 %v3683
    %v3781 = vunpack.c.h.b16 %v3683
    %v3782 = vunpack.c.l.b16 %v3684
    %v3783 = vunpack.c.h.b16 %v3684
    %v3784 = vunpack.c.l.b16 %v3685
    %v3785 = vunpack.c.h.b16 %v3685
    %v3786 = vunpack.c.l.b16 %v3686
    %v3787 = vunpack.c.h.b16 %v3686
    %v3788 = vunpack.c.l.b16 %v3687
    %v3789 = vunpack.c.h.b16 %v3687
    %v3790 = vunpack.c.l.b16 %v3688
    %v3791 = vunpack.c.h.b16 %v3688
    %v3792 = vunpack.c.l.b16 %v3689
    %v3793 = vunpack.c.h.b16 %v3689
    %v3794 = vunpack.c.l.b16 %v3690
    %v3795 = vunpack.c.h.b16 %v3690
    %v3796 = vunpack.c.l.b16 %v3691
    %v3797 = vunpack.c.h.b16 %v3691
    %v3798 = vunpack.c.l.b16 %v3692
    %v3799 = vunpack.c.h.b16 %v3692
    %v3800 = vunpack.c.l.b16 %v3693
    %v3801 = vunpack.c.h.b16 %v3693
    %v3802 = vunpack.c.l.b16 %v3694
    %v3803 = vunpack.c.h.b16 %v3694
    %v3804 = vunpack.c.l.b16 %v3695
    %v3805 = vunpack.c.h.b16 %v3695
    %v3806 = vunpack.c.l.b16 %v3696
    %v3807 = vunpack.c.h.b16 %v3696
    %v3808 = vunpack.c.l.b16 %v3697
    %v3809 = vunpack.c.h.b16 %v3697
    %v3810 = vunpack.c.l.b16 %v3698
    %v3811 = vunpack.c.h.b16 %v3698
    %v3812 = vunpack.c.l.b16 %v3699
    %v3813 = vunpack.c.h.b16 %v3699
    %v3814 = vunpack.c.l.b16 %v3700
    %v3815 = vunpack.c.h.b16 %v3700
    %v3816 = vunpack.c.l.b16 %v3701
    %v3817 = vunpack.c.h.b16 %v3701
    %v3818 = vunpack.c.l.b16 %v3702
    %v3819 = vunpack.c.h.b16 %v3702
    %v3820 = vunpack.c.l.b16 %v3703
    %v3821 = vunpack.c.h.b16 %v3703
    %v3822 = vpack.c.b16 %v3762, %v3758
    %v3823 = vpack.c.b16 %v3763, %v3759
    %v3824 = vpack.c.b16 %v3764, %v3760
    %v3825 = vpack.c.b16 %v3765, %v3761
    %v3826 = vpack.c.b16 %v3770, %v3766
    %v3827 = vpack.c.b16 %v3771, %v3767
    %v3828 = vpack.c.b16 %v3772, %v3768
    %v3829 = vpack.c.b16 %v3773, %v3769
    %v3830 = vpack.c.b16 %v3778, %v3774
    %v3831 = vpack.c.b16 %v3779, %v3775
    %v3832 = vpack.c.b16 %v3780, %v3776
    %v3833 = vpack.c.b16 %v3781, %v3777
    %v3834 = vpack.c.b16 %v3786, %v3782
    %v3835 = vpack.c.b16 %v3787, %v3783
    %v3836 = vpack.c.b16 %v3788, %v3784
    %v3837 = vpack.c.b16 %v3789, %v3785
    %v3838 = vpack.c.b16 %v3794, %v3790
    %v3839 = vpack.c.b16 %v3795, %v3791
    %v3840 = vpack.c.b16 %v3796, %v3792
    %v3841 = vpack.c.b16 %v3797, %v3793
    %v3842 = vpack.c.b16 %v3802, %v3798
    %v3843 = vpack.c.b16 %v3803, %v3799
    %v3844 = vpack.c.b16 %v3804, %v3800
    %v3845 = vpack.c.b16 %v3805, %v3801
    %v3846 = vpack.c.b16 %v3810, %v3806
    %v3847 = vpack.c.b16 %v3811, %v3807
    %v3848 = vpack.c.b16 %v3812, %v3808
    %v3849 = vpack.c.b16 %v3813, %v3809
    %v3850 = vpack.c.b16 %v3818, %v3814
    %v3851 = vpack.c.b16 %v3819, %v3815
    %v3852 = vpack.c.b16 %v3820, %v3816
    %v3853 = vpack.c.b16 %v3821, %v3817
    %3886 = vmatprep.subr.bf16.mxu0 %v3823
    %3887 = vmatpush1.bf16.msra.mxu0 %v3822
    %3888 = vmatprep.subr.bf16.mxu0 %v3827
    %3889 = vmatpush1.bf16.msra.mxu0 %v3826
    %3890 = vmatprep.subr.bf16.mxu0 %v3831
    %3891 = vmatpush1.bf16.msra.mxu0 %v3830
    %3892 = vmatprep.subr.bf16.mxu0 %v3835
    %3893 = vmatpush1.bf16.msra.mxu0 %v3834
    %3894 = vmatprep.subr.bf16.mxu0 %v3839
    %3895 = vmatpush1.bf16.msra.mxu0 %v3838
    %3896 = vmatprep.subr.bf16.mxu0 %v3843
    %3897 = vmatpush1.bf16.msra.mxu0 %v3842
    %3898 = vmatprep.subr.bf16.mxu0 %v3847
    %3899 = vmatpush1.bf16.msra.mxu0 %v3846
    %3900 = vmatprep.subr.bf16.mxu0 %v3851
    %3901 = vmatpush1.bf16.msra.mxu0 %v3850
    %3902 = vmatprep.subr.bf16.mxu0 0
    %3903 = vmatpush1.bf16.msra.mxu0 0
    %3904 = vmatprep.subr.bf16.mxu0 0
    %3905 = vmatpush1.bf16.msra.mxu0 0
    %3906 = vmatprep.subr.bf16.mxu0 0
    %3907 = vmatpush1.bf16.msra.mxu0 0
    %3908 = vmatprep.subr.bf16.mxu0 0
    %3909 = vmatpush1.bf16.msra.mxu0 0
    %3910 = vmatprep.subr.bf16.mxu0 0
    %3911 = vmatpush1.bf16.msra.mxu0 0
    %3912 = vmatprep.subr.bf16.mxu0 0
    %3913 = vmatpush1.bf16.msra.mxu0 0
    %3914 = vmatprep.subr.bf16.mxu0 0
    %3915 = vmatpush1.bf16.msra.mxu0 0
    %3916 = vmatprep.subr.bf16.mxu0 0
    %3917 = vmatpush1.bf16.msra.mxu0 0
    %3918 = vmatprep.mubr.bf16.mxu0 0
    %3919 = vmatmul.mubr.bf16.gmra.mrb[0].mxu0 %v3664
    %v3920 = vpop.f32.mrb[0].mxu0
    %v3921 = vadd.f32 %v3709, %v3920
    %v3922 = vpop.f32.mrb[0].mxu0
    %v3923 = vadd.f32 %v3713, %v3922
    %v3924 = vpop.f32.mrb[0].mxu0
    %v3925 = vadd.f32 %v3709, %v3924
    %v3926 = vpop.f32.mrb[0].mxu0
    %v3927 = vadd.f32 %v3713, %v3926
    %3928 = vmatprep.mubr.bf16.mxu0 0
    %3929 = vmatmul.mubr.bf16.gmra.mrb[0].mxu0 %v3665
    %v3930 = vpop.f32.mrb[0].mxu0
    %v3931 = vadd.f32 %v3709, %v3930
    %v3932 = vpop.f32.mrb[0].mxu0
    %v3933 = vadd.f32 %v3713, %v3932
    %v3934 = vpop.f32.mrb[0].mxu0
    %v3935 = vadd.f32 %v3709, %v3934
    %v3936 = vpop.f32.mrb[0].mxu0
    %v3937 = vadd.f32 %v3713, %v3936
    %3938 = vmatprep.mubr.bf16.mxu0 0
    %3939 = vmatmul.mubr.bf16.gmra.mrb[0].mxu0 %v3666
    %v3940 = vpop.f32.mrb[0].mxu0
    %v3941 = vadd.f32 %v3709, %v3940
    %v3942 = vpop.f32.mrb[0].mxu0
    %v3943 = vadd.f32 %v3713, %v3942
    %v3944 = vpop.f32.mrb[0].mxu0
    %v3945 = vadd.f32 %v3709, %v3944
    %v3946 = vpop.f32.mrb[0].mxu0
    %v3947 = vadd.f32 %v3713, %v3946
    %3948 = vmatprep.mubr.bf16.mxu0 0
    %3949 = vmatmul.mubr.bf16.gmra.mrb[0].mxu0 %v3667
    %v3950 = vpop.f32.mrb[0].mxu0
    %v3951 = vadd.f32 %v3709, %v3950
    %v3952 = vpop.f32.mrb[0].mxu0
    %v3953 = vadd.f32 %v3713, %v3952
    %v3954 = vpop.f32.mrb[0].mxu0
    %v3955 = vadd.f32 %v3709, %v3954
    %v3956 = vpop.f32.mrb[0].mxu0
    %v3957 = vadd.f32 %v3713, %v3956
    %3958 = vmatprep.mubr.bf16.mxu0 0
    %3959 = vmatmul.mubr.bf16.gmra.mrb[0].mxu0 %v3668
    %v3960 = vpop.f32.mrb[0].mxu0
    %v3961 = vadd.f32 %v3709, %v3960
    %v3962 = vpop.f32.mrb[0].mxu0
    %v3963 = vadd.f32 %v3713, %v3962
    %v3964 = vpop.f32.mrb[0].mxu0
    %v3965 = vadd.f32 %v3709, %v3964
    %v3966 = vpop.f32.mrb[0].mxu0
    %v3967 = vadd.f32 %v3713, %v3966
    %3968 = vmatprep.mubr.bf16.mxu0 0
    %3969 = vmatmul.mubr.bf16.gmra.mrb[0].mxu0 %v3669
    %v3970 = vpop.f32.mrb[0].mxu0
    %v3971 = vadd.f32 %v3709, %v3970
    %v3972 = vpop.f32.mrb[0].mxu0
    %v3973 = vadd.f32 %v3713, %v3972
    %v3974 = vpop.f32.mrb[0].mxu0
    %v3975 = vadd.f32 %v3709, %v3974
    %v3976 = vpop.f32.mrb[0].mxu0
    %v3977 = vadd.f32 %v3713, %v3976
    %3978 = vmatprep.mubr.bf16.mxu0 0
    %3979 = vmatmul.mubr.bf16.gmra.mrb[0].mxu0 %v3670
    %v3980 = vpop.f32.mrb[0].mxu0
    %v3981 = vadd.f32 %v3709, %v3980
    %v3982 = vpop.f32.mrb[0].mxu0
    %v3983 = vadd.f32 %v3713, %v3982
    %v3984 = vpop.f32.mrb[0].mxu0
    %v3985 = vadd.f32 %v3709, %v3984
    %v3986 = vpop.f32.mrb[0].mxu0
    %v3987 = vadd.f32 %v3713, %v3986
    %3988 = vmatprep.mubr.bf16.mxu0 0
    %3989 = vmatmul.mubr.bf16.gmra.mrb[0].mxu0 %v3671
    %v3990 = vpop.f32.mrb[0].mxu0
    %v3991 = vadd.f32 %v3709, %v3990
    %v3992 = vpop.f32.mrb[0].mxu0
    %v3993 = vadd.f32 %v3713, %v3992
    %v3994 = vpop.f32.mrb[0].mxu0
    %v3995 = vadd.f32 %v3709, %v3994
    %v3996 = vpop.f32.mrb[0].mxu0
    %v3997 = vadd.f32 %v3713, %v3996
    %3998 = vdwg.mxu0
    %3999 = vmatprep.subr.bf16.mxu0 %v3825
    %4000 = vmatpush1.bf16.msra.mxu0 %v3824
    %4001 = vmatprep.subr.bf16.mxu0 %v3829
    %4002 = vmatpush1.bf16.msra.mxu0 %v3828
    %4003 = vmatprep.subr.bf16.mxu0 %v3833
    %4004 = vmatpush1.bf16.msra.mxu0 %v3832
    %4005 = vmatprep.subr.bf16.mxu0 %v3837
    %4006 = vmatpush1.bf16.msra.mxu0 %v3836
    %4007 = vmatprep.subr.bf16.mxu0 %v3841
    %4008 = vmatpush1.bf16.msra.mxu0 %v3840
    %4009 = vmatprep.subr.bf16.mxu0 %v3845
    %4010 = vmatpush1.bf16.msra.mxu0 %v3844
    %4011 = vmatprep.subr.bf16.mxu0 %v3849
    %4012 = vmatpush1.bf16.msra.mxu0 %v3848
    %4013 = vmatprep.subr.bf16.mxu0 %v3853
    %4014 = vmatpush1.bf16.msra.mxu0 %v3852
    %4015 = vmatprep.subr.bf16.mxu0 0
    %4016 = vmatpush1.bf16.msra.mxu0 0
    %4017 = vmatprep.subr.bf16.mxu0 0
    %4018 = vmatpush1.bf16.msra.mxu0 0
    %4019 = vmatprep.subr.bf16.mxu0 0
    %4020 = vmatpush1.bf16.msra.mxu0 0
    %4021 = vmatprep.subr.bf16.mxu0 0
    %4022 = vmatpush1.bf16.msra.mxu0 0
    %4023 = vmatprep.subr.bf16.mxu0 0
    %4024 = vmatpush1.bf16.msra.mxu0 0
    %4025 = vmatprep.subr.bf16.mxu0 0
    %4026 = vmatpush1.bf16.msra.mxu0 0
    %4027 = vmatprep.subr.bf16.mxu0 0
    %4028 = vmatpush1.bf16.msra.mxu0 0
    %4029 = vmatprep.subr.bf16.mxu0 0
    %4030 = vmatpush1.bf16.msra.mxu0 0
    %4031 = vmatprep.mubr.bf16.mxu0 0
    %4032 = vmatmul.mubr.bf16.gmra.mrb[0].mxu0 %v3664
    %v4033 = vpop.f32.mrb[0].mxu0
    %v4034 = vadd.f32 %v3717, %v4033
    %v4035 = vpop.f32.mrb[0].mxu0
    %v4036 = vadd.f32 %v3721, %v4035
    %v4037 = vpop.f32.mrb[0].mxu0
    %v4038 = vadd.f32 %v3717, %v4037
    %v4039 = vpop.f32.mrb[0].mxu0
    %v4040 = vadd.f32 %v3721, %v4039
    %4041 = vmatprep.mubr.bf16.mxu0 0
    %4042 = vmatmul.mubr.bf16.gmra.mrb[0].mxu0 %v3665
    %v4043 = vpop.f32.mrb[0].mxu0
    %v4044 = vadd.f32 %v3717, %v4043
    %v4045 = vpop.f32.mrb[0].mxu0
    %v4046 = vadd.f32 %v3721, %v4045
    %v4047 = vpop.f32.mrb[0].mxu0
    %v4048 = vadd.f32 %v3717, %v4047
    %v4049 = vpop.f32.mrb[0].mxu0
    %v4050 = vadd.f32 %v3721, %v4049
    %4051 = vmatprep.mubr.bf16.mxu0 0
    %4052 = vmatmul.mubr.bf16.gmra.mrb[0].mxu0 %v3666
    %v4053 = vpop.f32.mrb[0].mxu0
    %v4054 = vadd.f32 %v3717, %v4053
    %v4055 = vpop.f32.mrb[0].mxu0
    %v4056 = vadd.f32 %v3721, %v4055
    %v4057 = vpop.f32.mrb[0].mxu0
    %v4058 = vadd.f32 %v3717, %v4057
    %v4059 = vpop.f32.mrb[0].mxu0
    %v4060 = vadd.f32 %v3721, %v4059
    %4061 = vmatprep.mubr.bf16.mxu0 0
    %4062 = vmatmul.mubr.bf16.gmra.mrb[0].mxu0 %v3667
    %v4063 = vpop.f32.mrb[0].mxu0
    %v4064 = vadd.f32 %v3717, %v4063
    %v4065 = vpop.f32.mrb[0].mxu0
    %v4066 = vadd.f32 %v3721, %v4065
    %v4067 = vpop.f32.mrb[0].mxu0
    %v4068 = vadd.f32 %v3717, %v4067
    %v4069 = vpop.f32.mrb[0].mxu0
    %v4070 = vadd.f32 %v3721, %v4069
    %4071 = vmatprep.mubr.bf16.mxu0 0
    %4072 = vmatmul.mubr.bf16.gmra.mrb[0].mxu0 %v3668
    %v4073 = vpop.f32.mrb[0].mxu0
    %v4074 = vadd.f32 %v3717, %v4073
    %v4075 = vpop.f32.mrb[0].mxu0
    %v4076 = vadd.f32 %v3721, %v4075
    %v4077 = vpop.f32.mrb[0].mxu0
    %v4078 = vadd.f32 %v3717, %v4077
    %v4079 = vpop.f32.mrb[0].mxu0
    %v4080 = vadd.f32 %v3721, %v4079
    %4081 = vmatprep.mubr.bf16.mxu0 0
    %4082 = vmatmul.mubr.bf16.gmra.mrb[0].mxu0 %v3669
    %v4083 = vpop.f32.mrb[0].mxu0
    %v4084 = vadd.f32 %v3717, %v4083
    %v4085 = vpop.f32.mrb[0].mxu0
    %v4086 = vadd.f32 %v3721, %v4085
    %v4087 = vpop.f32.mrb[0].mxu0
    %v4088 = vadd.f32 %v3717, %v4087
    %v4089 = vpop.f32.mrb[0].mxu0
    %v4090 = vadd.f32 %v3721, %v4089
    %4091 = vmatprep.mubr.bf16.mxu0 0
    %4092 = vmatmul.mubr.bf16.gmra.mrb[0].mxu0 %v3670
    %v4093 = vpop.f32.mrb[0].mxu0
    %v4094 = vadd.f32 %v3717, %v4093
    %v4095 = vpop.f32.mrb[0].mxu0
    %v4096 = vadd.f32 %v3721, %v4095
    %v4097 = vpop.f32.mrb[0].mxu0
    %v4098 = vadd.f32 %v3717, %v4097
    %v4099 = vpop.f32.mrb[0].mxu0
    %v4100 = vadd.f32 %v3721, %v4099
    %4101 = vmatprep.mubr.bf16.mxu0 0
    %4102 = vmatmul.mubr.bf16.gmra.mrb[0].mxu0 %v3671
    %v4103 = vpop.f32.mrb[0].mxu0
    %v4104 = vadd.f32 %v3717, %v4103
    %v4105 = vpop.f32.mrb[0].mxu0
    %v4106 = vadd.f32 %v3721, %v4105
    %v4107 = vpop.f32.mrb[0].mxu0
    %v4108 = vadd.f32 %v3717, %v4107
    %v4109 = vpop.f32.mrb[0].mxu0
    %v4110 = vadd.f32 %v3721, %v4109
    %4111 = vdwg.mxu0
    %v4112 = vmax.f32 %v3921, 0.0
    %v4113 = vmax.f32 %v3923, 0.0
    %v4114 = vmax.f32 %v4034, 0.0
    %v4115 = vmax.f32 %v4036, 0.0
    %v4116 = vmax.f32 %v3925, 0.0
    %v4117 = vmax.f32 %v3927, 0.0
    %v4118 = vmax.f32 %v4038, 0.0
    %v4119 = vmax.f32 %v4040, 0.0
    %v4120 = vmax.f32 %v3931, 0.0
    %v4121 = vmax.f32 %v3933, 0.0
    %v4122 = vmax.f32 %v4044, 0.0
    %v4123 = vmax.f32 %v4046, 0.0
    %v4124 = vmax.f32 %v3935, 0.0
    %v4125 = vmax.f32 %v3937, 0.0
    %v4126 = vmax.f32 %v4048, 0.0
    %v4127 = vmax.f32 %v4050, 0.0
    %v4128 = vmax.f32 %v3941, 0.0
    %v4129 = vmax.f32 %v3943, 0.0
    %v4130 = vmax.f32 %v4054, 0.0
    %v4131 = vmax.f32 %v4056, 0.0
    %v4132 = vmax.f32 %v3945, 0.0
    %v4133 = vmax.f32 %v3947, 0.0
    %v4134 = vmax.f32 %v4058, 0.0
    %v4135 = vmax.f32 %v4060, 0.0
    %v4136 = vmax.f32 %v3951, 0.0
    %v4137 = vmax.f32 %v3953, 0.0
    %v4138 = vmax.f32 %v4064, 0.0
    %v4139 = vmax.f32 %v4066, 0.0
    %v4140 = vmax.f32 %v3955, 0.0
    %v4141 = vmax.f32 %v3957, 0.0
    %v4142 = vmax.f32 %v4068, 0.0
    %v4143 = vmax.f32 %v4070, 0.0
    %v4144 = vmax.f32 %v3961, 0.0
    %v4145 = vmax.f32 %v3963, 0.0
    %v4146 = vmax.f32 %v4074, 0.0
    %v4147 = vmax.f32 %v4076, 0.0
    %v4148 = vmax.f32 %v3965, 0.0
    %v4149 = vmax.f32 %v3967, 0.0
    %v4150 = vmax.f32 %v4078, 0.0
    %v4151 = vmax.f32 %v4080, 0.0
    %v4152 = vmax.f32 %v3971, 0.0
    %v4153 = vmax.f32 %v3973, 0.0
    %v4154 = vmax.f32 %v4084, 0.0
    %v4155 = vmax.f32 %v4086, 0.0
    %v4156 = vmax.f32 %v3975, 0.0
    %v4157 = vmax.f32 %v3977, 0.0
    %v4158 = vmax.f32 %v4088, 0.0
    %v4159 = vmax.f32 %v4090, 0.0
    %v4160 = vmax.f32 %v3981, 0.0
    %v4161 = vmax.f32 %v3983, 0.0
    %v4162 = vmax.f32 %v4094, 0.0
    %v4163 = vmax.f32 %v4096, 0.0
    %v4164 = vmax.f32 %v3985, 0.0
    %v4165 = vmax.f32 %v3987, 0.0
    %v4166 = vmax.f32 %v4098, 0.0
    %v4167 = vmax.f32 %v4100, 0.0
    %v4168 = vmax.f32 %v3991, 0.0
    %v4169 = vmax.f32 %v3993, 0.0
    %v4170 = vmax.f32 %v4104, 0.0
    %v4171 = vmax.f32 %v4106, 0.0
    %v4172 = vmax.f32 %v3995, 0.0
    %v4173 = vmax.f32 %v3997, 0.0
    %v4174 = vmax.f32 %v4108, 0.0
    %v4175 = vmax.f32 %v4110, 0.0
    %v4176 = vpack.c.bf16 %v4116, %v4112
    %v4177 = vpack.c.bf16 %v4117, %v4113
    %v4178 = vpack.c.bf16 %v4118, %v4114
    %v4179 = vpack.c.bf16 %v4119, %v4115
    %v4180 = vpack.c.bf16 %v4124, %v4120
    %v4181 = vpack.c.bf16 %v4125, %v4121
    %v4182 = vpack.c.bf16 %v4126, %v4122
    %v4183 = vpack.c.bf16 %v4127, %v4123
    %v4184 = vpack.c.bf16 %v4132, %v4128
    %v4185 = vpack.c.bf16 %v4133, %v4129
    %v4186 = vpack.c.bf16 %v4134, %v4130
    %v4187 = vpack.c.bf16 %v4135, %v4131
    %v4188 = vpack.c.bf16 %v4140, %v4136
    %v4189 = vpack.c.bf16 %v4141, %v4137
    %v4190 = vpack.c.bf16 %v4142, %v4138
    %v4191 = vpack.c.bf16 %v4143, %v4139
    %v4192 = vpack.c.bf16 %v4148, %v4144
    %v4193 = vpack.c.bf16 %v4149, %v4145
    %v4194 = vpack.c.bf16 %v4150, %v4146
    %v4195 = vpack.c.bf16 %v4151, %v4147
    %v4196 = vpack.c.bf16 %v4156, %v4152
    %v4197 = vpack.c.bf16 %v4157, %v4153
    %v4198 = vpack.c.bf16 %v4158, %v4154
    %v4199 = vpack.c.bf16 %v4159, %v4155
    %v4200 = vpack.c.bf16 %v4164, %v4160
    %v4201 = vpack.c.bf16 %v4165, %v4161
    %v4202 = vpack.c.bf16 %v4166, %v4162
    %v4203 = vpack.c.bf16 %v4167, %v4163
    %v4204 = vpack.c.bf16 %v4172, %v4168
    %v4205 = vpack.c.bf16 %v4173, %v4169
    %v4206 = vpack.c.bf16 %v4174, %v4170
    %v4207 = vpack.c.bf16 %v4175, %v4171
    %v4208 = vld [vmem:[#allocation11] sm:$0xf]
    %v4209 = vld [vmem:[#allocation11 + $0x4] sm:$0xf]
    %v4210 = vld [vmem:[#allocation11 + $0x8] sm:$0xf]
    %v4211 = vld [vmem:[#allocation11 + $0xc] sm:$0xf]
    %v4212 = vld [vmem:[#allocation11 + $0x10] sm:$0xf]
    %v4213 = vld [vmem:[#allocation11 + $0x14] sm:$0xf]
    %v4214 = vld [vmem:[#allocation11 + $0x18] sm:$0xf]
    %v4215 = vld [vmem:[#allocation11 + $0x1c] sm:$0xf]
    %v4216 = vld [vmem:[#allocation11 + $0x20] sm:$0xf]
    %v4217 = vld [vmem:[#allocation11 + $0x24] sm:$0xf]
    %v4218 = vld [vmem:[#allocation11 + $0x28] sm:$0xf]
    %v4219 = vld [vmem:[#allocation11 + $0x2c] sm:$0xf]
    %v4220 = vld [vmem:[#allocation11 + $0x30] sm:$0xf]
    %v4221 = vld [vmem:[#allocation11 + $0x34] sm:$0xf]
    %v4222 = vld [vmem:[#allocation11 + $0x38] sm:$0xf]
    %v4223 = vld [vmem:[#allocation11 + $0x3c] sm:$0xf]
    %v4224 = vld [vmem:[#allocation11 + $0x40] sm:$0xf]
    %v4225 = vld [vmem:[#allocation11 + $0x44] sm:$0xf]
    %v4226 = vld [vmem:[#allocation11 + $0x48] sm:$0xf]
    %v4227 = vld [vmem:[#allocation11 + $0x4c] sm:$0xf]
    %v4228 = vld [vmem:[#allocation11 + $0x50] sm:$0xf]
    %v4229 = vld [vmem:[#allocation11 + $0x54] sm:$0xf]
    %v4230 = vld [vmem:[#allocation11 + $0x58] sm:$0xf]
    %v4231 = vld [vmem:[#allocation11 + $0x5c] sm:$0xf]
    %v4232 = vld [vmem:[#allocation11 + $0x60] sm:$0xf]
    %v4233 = vld [vmem:[#allocation11 + $0x64] sm:$0xf]
    %v4234 = vld [vmem:[#allocation11 + $0x68] sm:$0xf]
    %v4235 = vld [vmem:[#allocation11 + $0x6c] sm:$0xf]
    %v4236 = vld [vmem:[#allocation11 + $0x70] sm:$0xf]
    %v4237 = vld [vmem:[#allocation11 + $0x74] sm:$0xf]
    %v4238 = vld [vmem:[#allocation11 + $0x78] sm:$0xf]
    %v4239 = vld [vmem:[#allocation11 + $0x7c] sm:$0xf]
    %v4240 = vld [vmem:[#allocation11 + $0x80] sm:$0xf]
    %v4241 = vld [vmem:[#allocation11 + $0x84] sm:$0xf]
    %v4242 = vld [vmem:[#allocation11 + $0x88] sm:$0xf]
    %v4243 = vld [vmem:[#allocation11 + $0x8c] sm:$0xf]
    %v4244 = vld [vmem:[#allocation11 + $0x90] sm:$0xf]
    %v4245 = vld [vmem:[#allocation11 + $0x94] sm:$0xf]
    %v4246 = vld [vmem:[#allocation11 + $0x98] sm:$0xf]
    %v4247 = vld [vmem:[#allocation11 + $0x9c] sm:$0xf]
    %v4248 = vld [vmem:[#allocation11 + $0xa0] sm:$0xf]
    %v4249 = vld [vmem:[#allocation11 + $0xa4] sm:$0xf]
    %v4250 = vld [vmem:[#allocation11 + $0xa8] sm:$0xf]
    %v4251 = vld [vmem:[#allocation11 + $0xac] sm:$0xf]
    %v4252 = vld [vmem:[#allocation11 + $0xb0] sm:$0xf]
    %v4253 = vld [vmem:[#allocation11 + $0xb4] sm:$0xf]
    %v4254 = vld [vmem:[#allocation11 + $0xb8] sm:$0xf]
    %v4255 = vld [vmem:[#allocation11 + $0xbc] sm:$0xf]
    %v4256 = vld [vmem:[#allocation11 + $0xc0] sm:$0xf]
    %v4257 = vld [vmem:[#allocation11 + $0xc4] sm:$0xf]
    %v4258 = vld [vmem:[#allocation11 + $0xc8] sm:$0xf]
    %v4259 = vld [vmem:[#allocation11 + $0xcc] sm:$0xf]
    %v4260 = vld [vmem:[#allocation11 + $0xd0] sm:$0xf]
    %v4261 = vld [vmem:[#allocation11 + $0xd4] sm:$0xf]
    %v4262 = vld [vmem:[#allocation11 + $0xd8] sm:$0xf]
    %v4263 = vld [vmem:[#allocation11 + $0xdc] sm:$0xf]
    %v4264 = vld [vmem:[#allocation11 + $0xe0] sm:$0xf]
    %v4265 = vld [vmem:[#allocation11 + $0xe4] sm:$0xf]
    %v4266 = vld [vmem:[#allocation11 + $0xe8] sm:$0xf]
    %v4267 = vld [vmem:[#allocation11 + $0xec] sm:$0xf]
    %v4268 = vld [vmem:[#allocation11 + $0xf0] sm:$0xf]
    %v4269 = vld [vmem:[#allocation11 + $0xf4] sm:$0xf]
    %v4270 = vld [vmem:[#allocation11 + $0xf8] sm:$0xf]
    %v4271 = vld [vmem:[#allocation11 + $0xfc] sm:$0xf]
    %v4272 = vld [vmem:[%s9] sm:$0x1]
    %v4274 = vlaneseq
    %v4275 = vshrl.u32 %v4274, 7
    %v4276 = vsub.s32 0, %v4275
    %v4277 = vrot.slane %v4272, %v4276
    %v4343 = vunpack.c.l.b16 %v4208
    %v4344 = vunpack.c.l.b16 %v4209
    %v4345 = vunpack.c.l.b16 %v4210
    %v4346 = vunpack.c.l.b16 %v4211
    %v4347 = vunpack.c.l.b16 %v4212
    %v4348 = vunpack.c.l.b16 %v4213
    %v4349 = vunpack.c.l.b16 %v4214
    %v4350 = vunpack.c.l.b16 %v4215
    %v4351 = vunpack.c.l.b16 %v4216
    %v4352 = vunpack.c.l.b16 %v4217
    %v4353 = vunpack.c.l.b16 %v4218
    %v4354 = vunpack.c.l.b16 %v4219
    %v4355 = vunpack.c.l.b16 %v4220
    %v4356 = vunpack.c.l.b16 %v4221
    %v4357 = vunpack.c.l.b16 %v4222
    %v4358 = vunpack.c.l.b16 %v4223
    %v4359 = vunpack.c.l.b16 %v4224
    %v4360 = vunpack.c.l.b16 %v4225
    %v4361 = vunpack.c.l.b16 %v4226
    %v4362 = vunpack.c.l.b16 %v4227
    %v4363 = vunpack.c.l.b16 %v4228
    %v4364 = vunpack.c.l.b16 %v4229
    %v4365 = vunpack.c.l.b16 %v4230
    %v4366 = vunpack.c.l.b16 %v4231
    %v4367 = vunpack.c.l.b16 %v4232
    %v4368 = vunpack.c.l.b16 %v4233
    %v4369 = vunpack.c.l.b16 %v4234
    %v4370 = vunpack.c.l.b16 %v4235
    %v4371 = vunpack.c.l.b16 %v4236
    %v4372 = vunpack.c.l.b16 %v4237
    %v4373 = vunpack.c.l.b16 %v4238
    %v4374 = vunpack.c.l.b16 %v4239
    %v4375 = vunpack.c.l.b16 %v4240
    %v4376 = vunpack.c.l.b16 %v4241
    %v4377 = vunpack.c.l.b16 %v4242
    %v4378 = vunpack.c.l.b16 %v4243
    %v4379 = vunpack.c.l.b16 %v4244
    %v4380 = vunpack.c.l.b16 %v4245
    %v4381 = vunpack.c.l.b16 %v4246
    %v4382 = vunpack.c.l.b16 %v4247
    %v4383 = vunpack.c.l.b16 %v4248
    %v4384 = vunpack.c.l.b16 %v4249
    %v4385 = vunpack.c.l.b16 %v4250
    %v4386 = vunpack.c.l.b16 %v4251
    %v4387 = vunpack.c.l.b16 %v4252
    %v4388 = vunpack.c.l.b16 %v4253
    %v4389 = vunpack.c.l.b16 %v4254
    %v4390 = vunpack.c.l.b16 %v4255
    %v4391 = vunpack.c.l.b16 %v4256
    %v4392 = vunpack.c.l.b16 %v4257
    %v4393 = vunpack.c.l.b16 %v4258
    %v4394 = vunpack.c.l.b16 %v4259
    %v4395 = vunpack.c.l.b16 %v4260
    %v4396 = vunpack.c.l.b16 %v4261
    %v4397 = vunpack.c.l.b16 %v4262
    %v4398 = vunpack.c.l.b16 %v4263
    %v4399 = vunpack.c.l.b16 %v4264
    %v4400 = vunpack.c.l.b16 %v4265
    %v4401 = vunpack.c.l.b16 %v4266
    %v4402 = vunpack.c.l.b16 %v4267
    %v4403 = vunpack.c.l.b16 %v4268
    %v4404 = vunpack.c.l.b16 %v4269
    %v4405 = vunpack.c.l.b16 %v4270
    %v4406 = vunpack.c.l.b16 %v4271
    %v4407 = vpack.c.b16 %v4344, %v4343
    %v4408 = vpack.c.b16 %v4346, %v4345
    %v4409 = vpack.c.b16 %v4348, %v4347
    %v4410 = vpack.c.b16 %v4350, %v4349
    %v4411 = vpack.c.b16 %v4352, %v4351
    %v4412 = vpack.c.b16 %v4354, %v4353
    %v4413 = vpack.c.b16 %v4356, %v4355
    %v4414 = vpack.c.b16 %v4358, %v4357
    %v4415 = vpack.c.b16 %v4360, %v4359
    %v4416 = vpack.c.b16 %v4362, %v4361
    %v4417 = vpack.c.b16 %v4364, %v4363
    %v4418 = vpack.c.b16 %v4366, %v4365
    %v4419 = vpack.c.b16 %v4368, %v4367
    %v4420 = vpack.c.b16 %v4370, %v4369
    %v4421 = vpack.c.b16 %v4372, %v4371
    %v4422 = vpack.c.b16 %v4374, %v4373
    %v4423 = vpack.c.b16 %v4376, %v4375
    %v4424 = vpack.c.b16 %v4378, %v4377
    %v4425 = vpack.c.b16 %v4380, %v4379
    %v4426 = vpack.c.b16 %v4382, %v4381
    %v4427 = vpack.c.b16 %v4384, %v4383
    %v4428 = vpack.c.b16 %v4386, %v4385
    %v4429 = vpack.c.b16 %v4388, %v4387
    %v4430 = vpack.c.b16 %v4390, %v4389
    %v4431 = vpack.c.b16 %v4392, %v4391
    %v4432 = vpack.c.b16 %v4394, %v4393
    %v4433 = vpack.c.b16 %v4396, %v4395
    %v4434 = vpack.c.b16 %v4398, %v4397
    %v4435 = vpack.c.b16 %v4400, %v4399
    %v4436 = vpack.c.b16 %v4402, %v4401
    %v4437 = vpack.c.b16 %v4404, %v4403
    %v4438 = vpack.c.b16 %v4406, %v4405
    %4471 = vmatprep.subr.bf16.mxu0 0
    %4472 = vmatpush1.bf16.msra.mxu0 %v4407
    %4473 = vmatprep.subr.bf16.mxu0 0
    %4474 = vmatpush1.bf16.msra.mxu0 %v4408
    %4475 = vmatprep.subr.bf16.mxu0 0
    %4476 = vmatpush1.bf16.msra.mxu0 %v4409
    %4477 = vmatprep.subr.bf16.mxu0 0
    %4478 = vmatpush1.bf16.msra.mxu0 %v4410
    %4479 = vmatprep.subr.bf16.mxu0 0
    %4480 = vmatpush1.bf16.msra.mxu0 %v4411
    %4481 = vmatprep.subr.bf16.mxu0 0
    %4482 = vmatpush1.bf16.msra.mxu0 %v4412
    %4483 = vmatprep.subr.bf16.mxu0 0
    %4484 = vmatpush1.bf16.msra.mxu0 %v4413
    %4485 = vmatprep.subr.bf16.mxu0 0
    %4486 = vmatpush1.bf16.msra.mxu0 %v4414
    %4487 = vmatprep.subr.bf16.mxu0 0
    %4488 = vmatpush1.bf16.msra.mxu0 %v4415
    %4489 = vmatprep.subr.bf16.mxu0 0
    %4490 = vmatpush1.bf16.msra.mxu0 %v4416
    %4491 = vmatprep.subr.bf16.mxu0 0
    %4492 = vmatpush1.bf16.msra.mxu0 %v4417
    %4493 = vmatprep.subr.bf16.mxu0 0
    %4494 = vmatpush1.bf16.msra.mxu0 %v4418
    %4495 = vmatprep.subr.bf16.mxu0 0
    %4496 = vmatpush1.bf16.msra.mxu0 %v4419
    %4497 = vmatprep.subr.bf16.mxu0 0
    %4498 = vmatpush1.bf16.msra.mxu0 %v4420
    %4499 = vmatprep.subr.bf16.mxu0 0
    %4500 = vmatpush1.bf16.msra.mxu0 %v4421
    %4501 = vmatprep.subr.bf16.mxu0 0
    %4502 = vmatpush1.bf16.msra.mxu0 %v4422
    %4503 = vmatprep.mubr.bf16.mxu0 %v4177
    %4504 = vmatmul.mubr.bf16.gmra.mrb[0].mxu0 %v4176
    %v4505 = vpop.f32.mrb[0].mxu0
    %v4506 = vadd.f32 %v4277, %v4505
    %v4507 = vpop.f32.mrb[0].mxu0
    %v4508 = vpop.f32.mrb[0].mxu0
    %v4509 = vadd.f32 %v4277, %v4508
    %v4510 = vpop.f32.mrb[0].mxu0
    %4511 = vmatprep.mubr.bf16.mxu0 %v4181
    %4512 = vmatmul.mubr.bf16.gmra.mrb[0].mxu0 %v4180
    %v4513 = vpop.f32.mrb[0].mxu0
    %v4514 = vadd.f32 %v4277, %v4513
    %v4515 = vpop.f32.mrb[0].mxu0
    %v4516 = vpop.f32.mrb[0].mxu0
    %v4517 = vadd.f32 %v4277, %v4516
    %v4518 = vpop.f32.mrb[0].mxu0
    %4519 = vmatprep.mubr.bf16.mxu0 %v4185
    %4520 = vmatmul.mubr.bf16.gmra.mrb[0].mxu0 %v4184
    %v4521 = vpop.f32.mrb[0].mxu0
    %v4522 = vadd.f32 %v4277, %v4521
    %v4523 = vpop.f32.mrb[0].mxu0
    %v4524 = vpop.f32.mrb[0].mxu0
    %v4525 = vadd.f32 %v4277, %v4524
    %v4526 = vpop.f32.mrb[0].mxu0
    %4527 = vmatprep.mubr.bf16.mxu0 %v4189
    %4528 = vmatmul.mubr.bf16.gmra.mrb[0].mxu0 %v4188
    %v4529 = vpop.f32.mrb[0].mxu0
    %v4530 = vadd.f32 %v4277, %v4529
    %v4531 = vpop.f32.mrb[0].mxu0
    %v4532 = vpop.f32.mrb[0].mxu0
    %v4533 = vadd.f32 %v4277, %v4532
    %v4534 = vpop.f32.mrb[0].mxu0
    %4535 = vmatprep.mubr.bf16.mxu0 %v4193
    %4536 = vmatmul.mubr.bf16.gmra.mrb[0].mxu0 %v4192
    %v4537 = vpop.f32.mrb[0].mxu0
    %v4538 = vadd.f32 %v4277, %v4537
    %v4539 = vpop.f32.mrb[0].mxu0
    %v4540 = vpop.f32.mrb[0].mxu0
    %v4541 = vadd.f32 %v4277, %v4540
    %v4542 = vpop.f32.mrb[0].mxu0
    %4543 = vmatprep.mubr.bf16.mxu0 %v4197
    %4544 = vmatmul.mubr.bf16.gmra.mrb[0].mxu0 %v4196
    %v4545 = vpop.f32.mrb[0].mxu0
    %v4546 = vadd.f32 %v4277, %v4545
    %v4547 = vpop.f32.mrb[0].mxu0
    %v4548 = vpop.f32.mrb[0].mxu0
    %v4549 = vadd.f32 %v4277, %v4548
    %v4550 = vpop.f32.mrb[0].mxu0
    %4551 = vmatprep.mubr.bf16.mxu0 %v4201
    %4552 = vmatmul.mubr.bf16.gmra.mrb[0].mxu0 %v4200
    %v4553 = vpop.f32.mrb[0].mxu0
    %v4554 = vadd.f32 %v4277, %v4553
    %v4555 = vpop.f32.mrb[0].mxu0
    %v4556 = vpop.f32.mrb[0].mxu0
    %v4557 = vadd.f32 %v4277, %v4556
    %v4558 = vpop.f32.mrb[0].mxu0
    %4559 = vmatprep.mubr.bf16.mxu0 %v4205
    %4560 = vmatmul.mubr.bf16.gmra.mrb[0].mxu0 %v4204
    %v4561 = vpop.f32.mrb[0].mxu0
    %v4562 = vadd.f32 %v4277, %v4561
    %v4563 = vpop.f32.mrb[0].mxu0
    %v4564 = vpop.f32.mrb[0].mxu0
    %v4565 = vadd.f32 %v4277, %v4564
    %v4566 = vpop.f32.mrb[0].mxu0
    %4567 = vdwg.mxu0
    %4568 = vmatprep.subr.bf16.mxu0 0
    %4569 = vmatpush1.bf16.msra.mxu0 %v4423
    %4570 = vmatprep.subr.bf16.mxu0 0
    %4571 = vmatpush1.bf16.msra.mxu0 %v4424
    %4572 = vmatprep.subr.bf16.mxu0 0
    %4573 = vmatpush1.bf16.msra.mxu0 %v4425
    %4574 = vmatprep.subr.bf16.mxu0 0
    %4575 = vmatpush1.bf16.msra.mxu0 %v4426
    %4576 = vmatprep.subr.bf16.mxu0 0
    %4577 = vmatpush1.bf16.msra.mxu0 %v4427
    %4578 = vmatprep.subr.bf16.mxu0 0
    %4579 = vmatpush1.bf16.msra.mxu0 %v4428
    %4580 = vmatprep.subr.bf16.mxu0 0
    %4581 = vmatpush1.bf16.msra.mxu0 %v4429
    %4582 = vmatprep.subr.bf16.mxu0 0
    %4583 = vmatpush1.bf16.msra.mxu0 %v4430
    %4584 = vmatprep.subr.bf16.mxu0 0
    %4585 = vmatpush1.bf16.msra.mxu0 %v4431
    %4586 = vmatprep.subr.bf16.mxu0 0
    %4587 = vmatpush1.bf16.msra.mxu0 %v4432
    %4588 = vmatprep.subr.bf16.mxu0 0
    %4589 = vmatpush1.bf16.msra.mxu0 %v4433
    %4590 = vmatprep.subr.bf16.mxu0 0
    %4591 = vmatpush1.bf16.msra.mxu0 %v4434
    %4592 = vmatprep.subr.bf16.mxu0 0
    %4593 = vmatpush1.bf16.msra.mxu0 %v4435
    %4594 = vmatprep.subr.bf16.mxu0 0
    %4595 = vmatpush1.bf16.msra.mxu0 %v4436
    %4596 = vmatprep.subr.bf16.mxu0 0
    %4597 = vmatpush1.bf16.msra.mxu0 %v4437
    %4598 = vmatprep.subr.bf16.mxu0 0
    %4599 = vmatpush1.bf16.msra.mxu0 %v4438
    %4600 = vmatprep.mubr.bf16.mxu0 %v4179
    %4601 = vmatmul.mubr.bf16.gmra.mrb[0].mxu0 %v4178
    %v4602 = vpop.f32.mrb[0].mxu0
    %v4603 = vadd.f32 %v4506, %v4602
    %v4604 = vpop.f32.mrb[0].mxu0
    %v4605 = vpop.f32.mrb[0].mxu0
    %v4606 = vadd.f32 %v4509, %v4605
    %v4607 = vpop.f32.mrb[0].mxu0
    %4608 = vmatprep.mubr.bf16.mxu0 %v4183
    %4609 = vmatmul.mubr.bf16.gmra.mrb[0].mxu0 %v4182
    %v4610 = vpop.f32.mrb[0].mxu0
    %v4611 = vadd.f32 %v4514, %v4610
    %v4612 = vpop.f32.mrb[0].mxu0
    %v4613 = vpop.f32.mrb[0].mxu0
    %v4614 = vadd.f32 %v4517, %v4613
    %v4615 = vpop.f32.mrb[0].mxu0
    %4616 = vmatprep.mubr.bf16.mxu0 %v4187
    %4617 = vmatmul.mubr.bf16.gmra.mrb[0].mxu0 %v4186
    %v4618 = vpop.f32.mrb[0].mxu0
    %v4619 = vadd.f32 %v4522, %v4618
    %v4620 = vpop.f32.mrb[0].mxu0
    %v4621 = vpop.f32.mrb[0].mxu0
    %v4622 = vadd.f32 %v4525, %v4621
    %v4623 = vpop.f32.mrb[0].mxu0
    %4624 = vmatprep.mubr.bf16.mxu0 %v4191
    %4625 = vmatmul.mubr.bf16.gmra.mrb[0].mxu0 %v4190
    %v4626 = vpop.f32.mrb[0].mxu0
    %v4627 = vadd.f32 %v4530, %v4626
    %v4628 = vpop.f32.mrb[0].mxu0
    %v4629 = vpop.f32.mrb[0].mxu0
    %v4630 = vadd.f32 %v4533, %v4629
    %v4631 = vpop.f32.mrb[0].mxu0
    %4632 = vmatprep.mubr.bf16.mxu0 %v4195
    %4633 = vmatmul.mubr.bf16.gmra.mrb[0].mxu0 %v4194
    %v4634 = vpop.f32.mrb[0].mxu0
    %v4635 = vadd.f32 %v4538, %v4634
    %v4636 = vpop.f32.mrb[0].mxu0
    %v4637 = vpop.f32.mrb[0].mxu0
    %v4638 = vadd.f32 %v4541, %v4637
    %v4639 = vpop.f32.mrb[0].mxu0
    %4640 = vmatprep.mubr.bf16.mxu0 %v4199
    %4641 = vmatmul.mubr.bf16.gmra.mrb[0].mxu0 %v4198
    %v4642 = vpop.f32.mrb[0].mxu0
    %v4643 = vadd.f32 %v4546, %v4642
    %v4644 = vpop.f32.mrb[0].mxu0
    %v4645 = vpop.f32.mrb[0].mxu0
    %v4646 = vadd.f32 %v4549, %v4645
    %v4647 = vpop.f32.mrb[0].mxu0
    %4648 = vmatprep.mubr.bf16.mxu0 %v4203
    %4649 = vmatmul.mubr.bf16.gmra.mrb[0].mxu0 %v4202
    %v4650 = vpop.f32.mrb[0].mxu0
    %v4651 = vadd.f32 %v4554, %v4650
    %v4652 = vpop.f32.mrb[0].mxu0
    %v4653 = vpop.f32.mrb[0].mxu0
    %v4654 = vadd.f32 %v4557, %v4653
    %v4655 = vpop.f32.mrb[0].mxu0
    %4656 = vmatprep.mubr.bf16.mxu0 %v4207
    %4657 = vmatmul.mubr.bf16.gmra.mrb[0].mxu0 %v4206
    %v4658 = vpop.f32.mrb[0].mxu0
    %v4659 = vadd.f32 %v4562, %v4658
    %v4660 = vpop.f32.mrb[0].mxu0
    %v4661 = vpop.f32.mrb[0].mxu0
    %v4662 = vadd.f32 %v4565, %v4661
    %v4663 = vpop.f32.mrb[0].mxu0
    %4664 = vdwg.mxu0
    %v4665 = vadd.f32 %v3431, %v4603
    %v4666 = vadd.f32 %v3432, %v4606
    %v4667 = vadd.f32 %v3433, %v4611
    %v4668 = vadd.f32 %v3434, %v4614
    %v4669 = vadd.f32 %v3435, %v4619
    %v4670 = vadd.f32 %v3436, %v4622
    %v4671 = vadd.f32 %v3437, %v4627
    %v4672 = vadd.f32 %v3438, %v4630
    %v4673 = vadd.f32 %v3439, %v4635
    %v4674 = vadd.f32 %v3440, %v4638
    %v4675 = vadd.f32 %v3441, %v4643
    %v4676 = vadd.f32 %v3442, %v4646
    %v4677 = vadd.f32 %v3443, %v4651
    %v4678 = vadd.f32 %v3444, %v4654
    %v4679 = vadd.f32 %v3445, %v4659
    %v4680 = vadd.f32 %v3446, %v4662
    %s4681 = scalar_lea.vmem [#allocation5], 2
    %v4682 = vld [vmem:[%s4681] sm:$0x3]
    %4683 = vadd.xlane.f32.xlu0 %v4665
    %v4684 = vpop.xlane.xlu0 %4683
    %4685 = vadd.xlane.f32.xlu0 %v4666
    %v4686 = vpop.xlane.xlu0 %4685
    %4687 = vadd.xlane.f32.xlu0 %v4667
    %v4688 = vpop.xlane.xlu0 %4687
    %4689 = vadd.xlane.f32.xlu0 %v4668
    %v4690 = vpop.xlane.xlu0 %4689
    %4691 = vadd.xlane.f32.xlu0 %v4669
    %v4692 = vpop.xlane.xlu0 %4691
    %4693 = vadd.xlane.f32.xlu0 %v4670
    %v4694 = vpop.xlane.xlu0 %4693
    %4695 = vadd.xlane.f32.xlu0 %v4671
    %v4696 = vpop.xlane.xlu0 %4695
    %4697 = vadd.xlane.f32.xlu0 %v4672
    %v4698 = vpop.xlane.xlu0 %4697
    %4699 = vadd.xlane.f32.xlu0 %v4673
    %v4700 = vpop.xlane.xlu0 %4699
    %4701 = vadd.xlane.f32.xlu0 %v4674
    %v4702 = vpop.xlane.xlu0 %4701
    %4703 = vadd.xlane.f32.xlu0 %v4675
    %v4704 = vpop.xlane.xlu0 %4703
    %4705 = vadd.xlane.f32.xlu0 %v4676
    %v4706 = vpop.xlane.xlu0 %4705
    %4707 = vadd.xlane.f32.xlu0 %v4677
    %v4708 = vpop.xlane.xlu0 %4707
    %4709 = vadd.xlane.f32.xlu0 %v4678
    %v4710 = vpop.xlane.xlu0 %4709
    %4711 = vadd.xlane.f32.xlu0 %v4679
    %v4712 = vpop.xlane.xlu0 %4711
    %4713 = vadd.xlane.f32.xlu0 %v4680
    %v4714 = vpop.xlane.xlu0 %4713
    %v4715 = vmul.f32 %v4684, %v233
    %v4716 = vmul.f32 %v4686, %v233
    %v4717 = vmul.f32 %v4688, %v233
    %v4718 = vmul.f32 %v4690, %v233
    %v4719 = vmul.f32 %v4692, %v233
    %v4720 = vmul.f32 %v4694, %v233
    %v4721 = vmul.f32 %v4696, %v233
    %v4722 = vmul.f32 %v4698, %v233
    %v4723 = vmul.f32 %v4700, %v233
    %v4724 = vmul.f32 %v4702, %v233
    %v4725 = vmul.f32 %v4704, %v233
    %v4726 = vmul.f32 %v4706, %v233
    %v4727 = vmul.f32 %v4708, %v233
    %v4728 = vmul.f32 %v4710, %v233
    %v4729 = vmul.f32 %v4712, %v233
    %v4730 = vmul.f32 %v4714, %v233
    %v4731 = vsub.f32 %v4665, %v4715
    %v4732 = vsub.f32 %v4666, %v4716
    %v4733 = vsub.f32 %v4667, %v4717
    %v4734 = vsub.f32 %v4668, %v4718
    %v4735 = vsub.f32 %v4669, %v4719
    %v4736 = vsub.f32 %v4670, %v4720
    %v4737 = vsub.f32 %v4671, %v4721
    %v4738 = vsub.f32 %v4672, %v4722
    %v4739 = vsub.f32 %v4673, %v4723
    %v4740 = vsub.f32 %v4674, %v4724
    %v4741 = vsub.f32 %v4675, %v4725
    %v4742 = vsub.f32 %v4676, %v4726
    %v4743 = vsub.f32 %v4677, %v4727
    %v4744 = vsub.f32 %v4678, %v4728
    %v4745 = vsub.f32 %v4679, %v4729
    %v4746 = vsub.f32 %v4680, %v4730
    %v4747 = vmul.f32 %v4731, %v4731
    %v4748 = vmul.f32 %v4732, %v4732
    %v4749 = vmul.f32 %v4733, %v4733
    %v4750 = vmul.f32 %v4734, %v4734
    %v4751 = vmul.f32 %v4735, %v4735
    %v4752 = vmul.f32 %v4736, %v4736
    %v4753 = vmul.f32 %v4737, %v4737
    %v4754 = vmul.f32 %v4738, %v4738
    %v4755 = vmul.f32 %v4739, %v4739
    %v4756 = vmul.f32 %v4740, %v4740
    %v4757 = vmul.f32 %v4741, %v4741
    %v4758 = vmul.f32 %v4742, %v4742
    %v4759 = vmul.f32 %v4743, %v4743
    %v4760 = vmul.f32 %v4744, %v4744
    %v4761 = vmul.f32 %v4745, %v4745
    %v4762 = vmul.f32 %v4746, %v4746
    %4763 = vadd.xlane.f32.xlu0 %v4747
    %v4764 = vpop.xlane.xlu0 %4763
    %4765 = vadd.xlane.f32.xlu0 %v4748
    %v4766 = vpop.xlane.xlu0 %4765
    %4767 = vadd.xlane.f32.xlu0 %v4749
    %v4768 = vpop.xlane.xlu0 %4767
    %4769 = vadd.xlane.f32.xlu0 %v4750
    %v4770 = vpop.xlane.xlu0 %4769
    %4771 = vadd.xlane.f32.xlu0 %v4751
    %v4772 = vpop.xlane.xlu0 %4771
    %4773 = vadd.xlane.f32.xlu0 %v4752
    %v4774 = vpop.xlane.xlu0 %4773
    %4775 = vadd.xlane.f32.xlu0 %v4753
    %v4776 = vpop.xlane.xlu0 %4775
    %4777 = vadd.xlane.f32.xlu0 %v4754
    %v4778 = vpop.xlane.xlu0 %4777
    %4779 = vadd.xlane.f32.xlu0 %v4755
    %v4780 = vpop.xlane.xlu0 %4779
    %4781 = vadd.xlane.f32.xlu0 %v4756
    %v4782 = vpop.xlane.xlu0 %4781
    %4783 = vadd.xlane.f32.xlu0 %v4757
    %v4784 = vpop.xlane.xlu0 %4783
    %4785 = vadd.xlane.f32.xlu0 %v4758
    %v4786 = vpop.xlane.xlu0 %4785
    %4787 = vadd.xlane.f32.xlu0 %v4759
    %v4788 = vpop.xlane.xlu0 %4787
    %4789 = vadd.xlane.f32.xlu0 %v4760
    %v4790 = vpop.xlane.xlu0 %4789
    %4791 = vadd.xlane.f32.xlu0 %v4761
    %v4792 = vpop.xlane.xlu0 %4791
    %4793 = vadd.xlane.f32.xlu0 %v4762
    %v4794 = vpop.xlane.xlu0 %4793
    %v4795 = vmul.f32 %v4764, %v233
    %v4796 = vmul.f32 %v4766, %v233
    %v4797 = vmul.f32 %v4768, %v233
    %v4798 = vmul.f32 %v4770, %v233
    %v4799 = vmul.f32 %v4772, %v233
    %v4800 = vmul.f32 %v4774, %v233
    %v4801 = vmul.f32 %v4776, %v233
    %v4802 = vmul.f32 %v4778, %v233
    %v4803 = vmul.f32 %v4780, %v233
    %v4804 = vmul.f32 %v4782, %v233
    %v4805 = vmul.f32 %v4784, %v233
    %v4806 = vmul.f32 %v4786, %v233
    %v4807 = vmul.f32 %v4788, %v233
    %v4808 = vmul.f32 %v4790, %v233
    %v4809 = vmul.f32 %v4792, %v233
    %v4810 = vmul.f32 %v4794, %v233
    %v4811 = vadd.f32 %v4795, 1e-05
    %v4812 = vadd.f32 %v4796, 1e-05
    %v4813 = vadd.f32 %v4797, 1e-05
    %v4814 = vadd.f32 %v4798, 1e-05
    %v4815 = vadd.f32 %v4799, 1e-05
    %v4816 = vadd.f32 %v4800, 1e-05
    %v4817 = vadd.f32 %v4801, 1e-05
    %v4818 = vadd.f32 %v4802, 1e-05
    %v4819 = vadd.f32 %v4803, 1e-05
    %v4820 = vadd.f32 %v4804, 1e-05
    %v4821 = vadd.f32 %v4805, 1e-05
    %v4822 = vadd.f32 %v4806, 1e-05
    %v4823 = vadd.f32 %v4807, 1e-05
    %v4824 = vadd.f32 %v4808, 1e-05
    %v4825 = vadd.f32 %v4809, 1e-05
    %v4826 = vadd.f32 %v4810, 1e-05
    %v4827 = vrsqrt.pop %v4811
    %v4828 = vrsqrt.pop %v4812
    %v4829 = vrsqrt.pop %v4813
    %v4830 = vrsqrt.pop %v4814
    %v4831 = vrsqrt.pop %v4815
    %v4832 = vrsqrt.pop %v4816
    %v4833 = vrsqrt.pop %v4817
    %v4834 = vrsqrt.pop %v4818
    %v4835 = vrsqrt.pop %v4819
    %v4836 = vrsqrt.pop %v4820
    %v4837 = vrsqrt.pop %v4821
    %v4838 = vrsqrt.pop %v4822
    %v4839 = vrsqrt.pop %v4823
    %v4840 = vrsqrt.pop %v4824
    %v4841 = vrsqrt.pop %v4825
    %v4842 = vrsqrt.pop %v4826
    %v4843 = vmul.f32 %v4731, %v4827
    %v4844 = vmul.f32 %v4732, %v4828
    %v4845 = vmul.f32 %v4733, %v4829
    %v4846 = vmul.f32 %v4734, %v4830
    %v4847 = vmul.f32 %v4735, %v4831
    %v4848 = vmul.f32 %v4736, %v4832
    %v4849 = vmul.f32 %v4737, %v4833
    %v4850 = vmul.f32 %v4738, %v4834
    %v4851 = vmul.f32 %v4739, %v4835
    %v4852 = vmul.f32 %v4740, %v4836
    %v4853 = vmul.f32 %v4741, %v4837
    %v4854 = vmul.f32 %v4742, %v4838
    %v4855 = vmul.f32 %v4743, %v4839
    %v4856 = vmul.f32 %v4744, %v4840
    %v4857 = vmul.f32 %v4745, %v4841
    %v4858 = vmul.f32 %v4746, %v4842
    %v4859 = vlaneseq
    %v4860 = vshrl.u32 %v4859, 7
    %v4861 = vsub.s32 0, %v4860
    %v4862 = vrot.slane %v4682, %v4861
    %v4863 = vmul.f32 %v4843, %v4862
    %v4864 = vmul.f32 %v4844, %v4862
    %v4865 = vmul.f32 %v4845, %v4862
    %v4866 = vmul.f32 %v4846, %v4862
    %v4867 = vmul.f32 %v4847, %v4862
    %v4868 = vmul.f32 %v4848, %v4862
    %v4869 = vmul.f32 %v4849, %v4862
    %v4870 = vmul.f32 %v4850, %v4862
    %v4871 = vmul.f32 %v4851, %v4862
    %v4872 = vmul.f32 %v4852, %v4862
    %v4873 = vmul.f32 %v4853, %v4862
    %v4874 = vmul.f32 %v4854, %v4862
    %v4875 = vmul.f32 %v4855, %v4862
    %v4876 = vmul.f32 %v4856, %v4862
    %v4877 = vmul.f32 %v4857, %v4862
    %v4878 = vmul.f32 %v4858, %v4862
    %v4879 = vlaneseq
    %v4880 = vshrl.u32 %v4879, 7
    %v4881 = vsub.s32 1, %v4880
    %v4882 = vrot.slane %v4682, %v4881
    %v4883 = vadd.f32 %v4863, %v4882
    %v4884 = vadd.f32 %v4864, %v4882
    %v4885 = vadd.f32 %v4865, %v4882
    %v4886 = vadd.f32 %v4866, %v4882
    %v4887 = vadd.f32 %v4867, %v4882
    %v4888 = vadd.f32 %v4868, %v4882
    %v4889 = vadd.f32 %v4869, %v4882
    %v4890 = vadd.f32 %v4870, %v4882
    %v4891 = vadd.f32 %v4871, %v4882
    %v4892 = vadd.f32 %v4872, %v4882
    %v4893 = vadd.f32 %v4873, %v4882
    %v4894 = vadd.f32 %v4874, %v4882
    %v4895 = vadd.f32 %v4875, %v4882
    %v4896 = vadd.f32 %v4876, %v4882
    %v4897 = vadd.f32 %v4877, %v4882
    %v4898 = vadd.f32 %v4878, %v4882
    %v4899 = vpack.c.bf16 %v4884, %v4883
    %v4900 = vpack.c.bf16 %v4886, %v4885
    %v4901 = vpack.c.bf16 %v4888, %v4887
    %v4902 = vpack.c.bf16 %v4890, %v4889
    %v4903 = vpack.c.bf16 %v4892, %v4891
    %v4904 = vpack.c.bf16 %v4894, %v4893
    %v4905 = vpack.c.bf16 %v4896, %v4895
    %v4906 = vpack.c.bf16 %v4898, %v4897
    %s4907 = scalar_lea.vmem [#allocation7], 192
    %v4908 = vld [vmem:[%s4907] sm:$0xff]
    %v4909 = vld [vmem:[%s4907 + $0x8] sm:$0xf]
    %v4910 = vld [vmem:[%s4907 + $0xc] sm:$0xff]
    %v4911 = vld [vmem:[%s4907 + $0x14] sm:$0xf]
    %v4912 = vld [vmem:[%s4907 + $0x18] sm:$0xff]
    %v4913 = vld [vmem:[%s4907 + $0x20] sm:$0xf]
    %v4914 = vld [vmem:[%s4907 + $0x24] sm:$0xff]
    %v4915 = vld [vmem:[%s4907 + $0x2c] sm:$0xf]
    %v4916 = vld [vmem:[%s4907 + $0x30] sm:$0xff]
    %v4917 = vld [vmem:[%s4907 + $0x38] sm:$0xf]
    %v4918 = vld [vmem:[%s4907 + $0x3c] sm:$0xff]
    %v4919 = vld [vmem:[%s4907 + $0x44] sm:$0xf]
    %v4920 = vld [vmem:[%s4907 + $0x48] sm:$0xff]
    %v4921 = vld [vmem:[%s4907 + $0x50] sm:$0xf]
    %v4922 = vld [vmem:[%s4907 + $0x54] sm:$0xff]
    %v4923 = vld [vmem:[%s4907 + $0x5c] sm:$0xf]
    %v4924 = vld [vmem:[%s4907 + $0x60] sm:$0xff]
    %v4925 = vld [vmem:[%s4907 + $0x68] sm:$0xf]
    %v4926 = vld [vmem:[%s4907 + $0x6c] sm:$0xff]
    %v4927 = vld [vmem:[%s4907 + $0x74] sm:$0xf]
    %v4928 = vld [vmem:[%s4907 + $0x78] sm:$0xff]
    %v4929 = vld [vmem:[%s4907 + $0x80] sm:$0xf]
    %v4930 = vld [vmem:[%s4907 + $0x84] sm:$0xff]
    %v4931 = vld [vmem:[%s4907 + $0x8c] sm:$0xf]
    %v4932 = vld [vmem:[%s4907 + $0x90] sm:$0xff]
    %v4933 = vld [vmem:[%s4907 + $0x98] sm:$0xf]
    %v4934 = vld [vmem:[%s4907 + $0x9c] sm:$0xff]
    %v4935 = vld [vmem:[%s4907 + $0xa4] sm:$0xf]
    %v4936 = vld [vmem:[%s4907 + $0xa8] sm:$0xff]
    %v4937 = vld [vmem:[%s4907 + $0xb0] sm:$0xf]
    %v4938 = vld [vmem:[%s4907 + $0xb4] sm:$0xff]
    %v4939 = vld [vmem:[%s4907 + $0xbc] sm:$0xf]
    %v4972 = vunpack.c.l.b16 %v4908
    %v4973 = vunpack.c.h.b16 %v4908
    %v4974 = vunpack.c.l.b16 %v4909
    %v4975 = vunpack.c.l.b16 %v4910
    %v4976 = vunpack.c.h.b16 %v4910
    %v4977 = vunpack.c.l.b16 %v4911
    %v4978 = vunpack.c.l.b16 %v4912
    %v4979 = vunpack.c.h.b16 %v4912
    %v4980 = vunpack.c.l.b16 %v4913
    %v4981 = vunpack.c.l.b16 %v4914
    %v4982 = vunpack.c.h.b16 %v4914
    %v4983 = vunpack.c.l.b16 %v4915
    %v4984 = vunpack.c.l.b16 %v4916
    %v4985 = vunpack.c.h.b16 %v4916
    %v4986 = vunpack.c.l.b16 %v4917
    %v4987 = vunpack.c.l.b16 %v4918
    %v4988 = vunpack.c.h.b16 %v4918
    %v4989 = vunpack.c.l.b16 %v4919
    %v4990 = vunpack.c.l.b16 %v4920
    %v4991 = vunpack.c.h.b16 %v4920
    %v4992 = vunpack.c.l.b16 %v4921
    %v4993 = vunpack.c.l.b16 %v4922
    %v4994 = vunpack.c.h.b16 %v4922
    %v4995 = vunpack.c.l.b16 %v4923
    %v4996 = vunpack.c.l.b16 %v4924
    %v4997 = vunpack.c.h.b16 %v4924
    %v4998 = vunpack.c.l.b16 %v4925
    %v4999 = vunpack.c.l.b16 %v4926
    %v5000 = vunpack.c.h.b16 %v4926
    %v5001 = vunpack.c.l.b16 %v4927
    %v5002 = vunpack.c.l.b16 %v4928
    %v5003 = vunpack.c.h.b16 %v4928
    %v5004 = vunpack.c.l.b16 %v4929
    %v5005 = vunpack.c.l.b16 %v4930
    %v5006 = vunpack.c.h.b16 %v4930
    %v5007 = vunpack.c.l.b16 %v4931
    %v5008 = vunpack.c.l.b16 %v4932
    %v5009 = vunpack.c.h.b16 %v4932
    %v5010 = vunpack.c.l.b16 %v4933
    %v5011 = vunpack.c.l.b16 %v4934
    %v5012 = vunpack.c.h.b16 %v4934
    %v5013 = vunpack.c.l.b16 %v4935
    %v5014 = vunpack.c.l.b16 %v4936
    %v5015 = vunpack.c.h.b16 %v4936
    %v5016 = vunpack.c.l.b16 %v4937
    %v5017 = vunpack.c.l.b16 %v4938
    %v5018 = vunpack.c.h.b16 %v4938
    %v5019 = vunpack.c.l.b16 %v4939
    %v5020 = vpack.c.b16 %v4975, %v4972
    %v5021 = vpack.c.b16 %v4976, %v4973
    %v5022 = vpack.c.b16 %v4977, %v4974
    %v5023 = vpack.c.b16 %v4981, %v4978
    %v5024 = vpack.c.b16 %v4982, %v4979
    %v5025 = vpack.c.b16 %v4983, %v4980
    %v5026 = vpack.c.b16 %v4987, %v4984
    %v5027 = vpack.c.b16 %v4988, %v4985
    %v5028 = vpack.c.b16 %v4989, %v4986
    %v5029 = vpack.c.b16 %v4993, %v4990
    %v5030 = vpack.c.b16 %v4994, %v4991
    %v5031 = vpack.c.b16 %v4995, %v4992
    %v5032 = vpack.c.b16 %v4999, %v4996
    %v5033 = vpack.c.b16 %v5000, %v4997
    %v5034 = vpack.c.b16 %v5001, %v4998
    %v5035 = vpack.c.b16 %v5005, %v5002
    %v5036 = vpack.c.b16 %v5006, %v5003
    %v5037 = vpack.c.b16 %v5007, %v5004
    %v5038 = vpack.c.b16 %v5011, %v5008
    %v5039 = vpack.c.b16 %v5012, %v5009
    %v5040 = vpack.c.b16 %v5013, %v5010
    %v5041 = vpack.c.b16 %v5017, %v5014
    %v5042 = vpack.c.b16 %v5018, %v5015
    %v5043 = vpack.c.b16 %v5019, %v5016
    %5068 = vmatprep.subr.bf16.mxu0 %v5021
    %5069 = vmatpush1.bf16.msra.mxu0 %v5020
    %5070 = vmatprep.subr.bf16.mxu0 %v5024
    %5071 = vmatpush1.bf16.msra.mxu0 %v5023
    %5072 = vmatprep.subr.bf16.mxu0 %v5027
    %5073 = vmatpush1.bf16.msra.mxu0 %v5026
    %5074 = vmatprep.subr.bf16.mxu0 %v5030
    %5075 = vmatpush1.bf16.msra.mxu0 %v5029
    %5076 = vmatprep.subr.bf16.mxu0 %v5033
    %5077 = vmatpush1.bf16.msra.mxu0 %v5032
    %5078 = vmatprep.subr.bf16.mxu0 %v5036
    %5079 = vmatpush1.bf16.msra.mxu0 %v5035
    %5080 = vmatprep.subr.bf16.mxu0 %v5039
    %5081 = vmatpush1.bf16.msra.mxu0 %v5038
    %5082 = vmatprep.subr.bf16.mxu0 %v5042
    %5083 = vmatpush1.bf16.msra.mxu0 %v5041
    %5084 = vmatprep.subr.bf16.mxu0 0
    %5085 = vmatpush1.bf16.msra.mxu0 0
    %5086 = vmatprep.subr.bf16.mxu0 0
    %5087 = vmatpush1.bf16.msra.mxu0 0
    %5088 = vmatprep.subr.bf16.mxu0 0
    %5089 = vmatpush1.bf16.msra.mxu0 0
    %5090 = vmatprep.subr.bf16.mxu0 0
    %5091 = vmatpush1.bf16.msra.mxu0 0
    %5092 = vmatprep.subr.bf16.mxu0 0
    %5093 = vmatpush1.bf16.msra.mxu0 0
    %5094 = vmatprep.subr.bf16.mxu0 0
    %5095 = vmatpush1.bf16.msra.mxu0 0
    %5096 = vmatprep.subr.bf16.mxu0 0
    %5097 = vmatpush1.bf16.msra.mxu0 0
    %5098 = vmatprep.subr.bf16.mxu0 0
    %5099 = vmatpush1.bf16.msra.mxu0 0
    %5100 = vmatprep.mubr.bf16.mxu0 0
    %5101 = vmatmul.mubr.bf16.gmra.mrb[0].mxu0 %v4899
    %v5102 = vpop.f32.mrb[0].mxu0
    %v5103 = vadd.f32 0.0, %v5102
    %v5104 = vpop.f32.mrb[0].mxu0
    %v5105 = vadd.f32 0.0, %v5104
    %v5106 = vpop.f32.mrb[0].mxu0
    %v5107 = vadd.f32 0.0, %v5106
    %v5108 = vpop.f32.mrb[0].mxu0
    %v5109 = vadd.f32 0.0, %v5108
    %5110 = vmatprep.mubr.bf16.mxu0 0
    %5111 = vmatmul.mubr.bf16.gmra.mrb[0].mxu0 %v4900
    %v5112 = vpop.f32.mrb[0].mxu0
    %v5113 = vadd.f32 0.0, %v5112
    %v5114 = vpop.f32.mrb[0].mxu0
    %v5115 = vadd.f32 0.0, %v5114
    %v5116 = vpop.f32.mrb[0].mxu0
    %v5117 = vadd.f32 0.0, %v5116
    %v5118 = vpop.f32.mrb[0].mxu0
    %v5119 = vadd.f32 0.0, %v5118
    %5120 = vmatprep.mubr.bf16.mxu0 0
    %5121 = vmatmul.mubr.bf16.gmra.mrb[0].mxu0 %v4901
    %v5122 = vpop.f32.mrb[0].mxu0
    %v5123 = vadd.f32 0.0, %v5122
    %v5124 = vpop.f32.mrb[0].mxu0
    %v5125 = vadd.f32 0.0, %v5124
    %v5126 = vpop.f32.mrb[0].mxu0
    %v5127 = vadd.f32 0.0, %v5126
    %v5128 = vpop.f32.mrb[0].mxu0
    %v5129 = vadd.f32 0.0, %v5128
    %5130 = vmatprep.mubr.bf16.mxu0 0
    %5131 = vmatmul.mubr.bf16.gmra.mrb[0].mxu0 %v4902
    %v5132 = vpop.f32.mrb[0].mxu0
    %v5133 = vadd.f32 0.0, %v5132
    %v5134 = vpop.f32.mrb[0].mxu0
    %v5135 = vadd.f32 0.0, %v5134
    %v5136 = vpop.f32.mrb[0].mxu0
    %v5137 = vadd.f32 0.0, %v5136
    %v5138 = vpop.f32.mrb[0].mxu0
    %v5139 = vadd.f32 0.0, %v5138
    %5140 = vmatprep.mubr.bf16.mxu0 0
    %5141 = vmatmul.mubr.bf16.gmra.mrb[0].mxu0 %v4903
    %v5142 = vpop.f32.mrb[0].mxu0
    %v5143 = vadd.f32 0.0, %v5142
    %v5144 = vpop.f32.mrb[0].mxu0
    %v5145 = vadd.f32 0.0, %v5144
    %v5146 = vpop.f32.mrb[0].mxu0
    %v5147 = vadd.f32 0.0, %v5146
    %v5148 = vpop.f32.mrb[0].mxu0
    %v5149 = vadd.f32 0.0, %v5148
    %5150 = vmatprep.mubr.bf16.mxu0 0
    %5151 = vmatmul.mubr.bf16.gmra.mrb[0].mxu0 %v4904
    %v5152 = vpop.f32.mrb[0].mxu0
    %v5153 = vadd.f32 0.0, %v5152
    %v5154 = vpop.f32.mrb[0].mxu0
    %v5155 = vadd.f32 0.0, %v5154
    %v5156 = vpop.f32.mrb[0].mxu0
    %v5157 = vadd.f32 0.0, %v5156
    %v5158 = vpop.f32.mrb[0].mxu0
    %v5159 = vadd.f32 0.0, %v5158
    %5160 = vmatprep.mubr.bf16.mxu0 0
    %5161 = vmatmul.mubr.bf16.gmra.mrb[0].mxu0 %v4905
    %v5162 = vpop.f32.mrb[0].mxu0
    %v5163 = vadd.f32 0.0, %v5162
    %v5164 = vpop.f32.mrb[0].mxu0
    %v5165 = vadd.f32 0.0, %v5164
    %v5166 = vpop.f32.mrb[0].mxu0
    %v5167 = vadd.f32 0.0, %v5166
    %v5168 = vpop.f32.mrb[0].mxu0
    %v5169 = vadd.f32 0.0, %v5168
    %5170 = vmatprep.mubr.bf16.mxu0 0
    %5171 = vmatmul.mubr.bf16.gmra.mrb[0].mxu0 %v4906
    %v5172 = vpop.f32.mrb[0].mxu0
    %v5173 = vadd.f32 0.0, %v5172
    %v5174 = vpop.f32.mrb[0].mxu0
    %v5175 = vadd.f32 0.0, %v5174
    %v5176 = vpop.f32.mrb[0].mxu0
    %v5177 = vadd.f32 0.0, %v5176
    %v5178 = vpop.f32.mrb[0].mxu0
    %v5179 = vadd.f32 0.0, %v5178
    %5180 = vdwg.mxu0
    %5181 = vmatprep.subr.bf16.mxu0 0
    %5182 = vmatpush1.bf16.msra.mxu0 %v5022
    %5183 = vmatprep.subr.bf16.mxu0 0
    %5184 = vmatpush1.bf16.msra.mxu0 %v5025
    %5185 = vmatprep.subr.bf16.mxu0 0
    %5186 = vmatpush1.bf16.msra.mxu0 %v5028
    %5187 = vmatprep.subr.bf16.mxu0 0
    %5188 = vmatpush1.bf16.msra.mxu0 %v5031
    %5189 = vmatprep.subr.bf16.mxu0 0
    %5190 = vmatpush1.bf16.msra.mxu0 %v5034
    %5191 = vmatprep.subr.bf16.mxu0 0
    %5192 = vmatpush1.bf16.msra.mxu0 %v5037
    %5193 = vmatprep.subr.bf16.mxu0 0
    %5194 = vmatpush1.bf16.msra.mxu0 %v5040
    %5195 = vmatprep.subr.bf16.mxu0 0
    %5196 = vmatpush1.bf16.msra.mxu0 %v5043
    %5197 = vmatprep.subr.bf16.mxu0 0
    %5198 = vmatpush1.bf16.msra.mxu0 0
    %5199 = vmatprep.subr.bf16.mxu0 0
    %5200 = vmatpush1.bf16.msra.mxu0 0
    %5201 = vmatprep.subr.bf16.mxu0 0
    %5202 = vmatpush1.bf16.msra.mxu0 0
    %5203 = vmatprep.subr.bf16.mxu0 0
    %5204 = vmatpush1.bf16.msra.mxu0 0
    %5205 = vmatprep.subr.bf16.mxu0 0
    %5206 = vmatpush1.bf16.msra.mxu0 0
    %5207 = vmatprep.subr.bf16.mxu0 0
    %5208 = vmatpush1.bf16.msra.mxu0 0
    %5209 = vmatprep.subr.bf16.mxu0 0
    %5210 = vmatpush1.bf16.msra.mxu0 0
    %5211 = vmatprep.subr.bf16.mxu0 0
    %5212 = vmatpush1.bf16.msra.mxu0 0
    %5213 = vmatprep.mubr.bf16.mxu0 0
    %5214 = vmatmul.mubr.bf16.gmra.mrb[0].mxu0 %v4899
    %v5215 = vpop.f32.mrb[0].mxu0
    %v5216 = vadd.f32 0.0, %v5215
    %v5217 = vpop.f32.mrb[0].mxu0
    %v5218 = vpop.f32.mrb[0].mxu0
    %v5219 = vadd.f32 0.0, %v5218
    %v5220 = vpop.f32.mrb[0].mxu0
    %5221 = vmatprep.mubr.bf16.mxu0 0
    %5222 = vmatmul.mubr.bf16.gmra.mrb[0].mxu0 %v4900
    %v5223 = vpop.f32.mrb[0].mxu0
    %v5224 = vadd.f32 0.0, %v5223
    %v5225 = vpop.f32.mrb[0].mxu0
    %v5226 = vpop.f32.mrb[0].mxu0
    %v5227 = vadd.f32 0.0, %v5226
    %v5228 = vpop.f32.mrb[0].mxu0
    %5229 = vmatprep.mubr.bf16.mxu0 0
    %5230 = vmatmul.mubr.bf16.gmra.mrb[0].mxu0 %v4901
    %v5231 = vpop.f32.mrb[0].mxu0
    %v5232 = vadd.f32 0.0, %v5231
    %v5233 = vpop.f32.mrb[0].mxu0
    %v5234 = vpop.f32.mrb[0].mxu0
    %v5235 = vadd.f32 0.0, %v5234
    %v5236 = vpop.f32.mrb[0].mxu0
    %5237 = vmatprep.mubr.bf16.mxu0 0
    %5238 = vmatmul.mubr.bf16.gmra.mrb[0].mxu0 %v4902
    %v5239 = vpop.f32.mrb[0].mxu0
    %v5240 = vadd.f32 0.0, %v5239
    %v5241 = vpop.f32.mrb[0].mxu0
    %v5242 = vpop.f32.mrb[0].mxu0
    %v5243 = vadd.f32 0.0, %v5242
    %v5244 = vpop.f32.mrb[0].mxu0
    %5245 = vmatprep.mubr.bf16.mxu0 0
    %5246 = vmatmul.mubr.bf16.gmra.mrb[0].mxu0 %v4903
    %v5247 = vpop.f32.mrb[0].mxu0
    %v5248 = vadd.f32 0.0, %v5247
    %v5249 = vpop.f32.mrb[0].mxu0
    %v5250 = vpop.f32.mrb[0].mxu0
    %v5251 = vadd.f32 0.0, %v5250
    %v5252 = vpop.f32.mrb[0].mxu0
    %5253 = vmatprep.mubr.bf16.mxu0 0
    %5254 = vmatmul.mubr.bf16.gmra.mrb[0].mxu0 %v4904
    %v5255 = vpop.f32.mrb[0].mxu0
    %v5256 = vadd.f32 0.0, %v5255
    %v5257 = vpop.f32.mrb[0].mxu0
    %v5258 = vpop.f32.mrb[0].mxu0
    %v5259 = vadd.f32 0.0, %v5258
    %v5260 = vpop.f32.mrb[0].mxu0
    %5261 = vmatprep.mubr.bf16.mxu0 0
    %5262 = vmatmul.mubr.bf16.gmra.mrb[0].mxu0 %v4905
    %v5263 = vpop.f32.mrb[0].mxu0
    %v5264 = vadd.f32 0.0, %v5263
    %v5265 = vpop.f32.mrb[0].mxu0
    %v5266 = vpop.f32.mrb[0].mxu0
    %v5267 = vadd.f32 0.0, %v5266
    %v5268 = vpop.f32.mrb[0].mxu0
    %5269 = vmatprep.mubr.bf16.mxu0 0
    %5270 = vmatmul.mubr.bf16.gmra.mrb[0].mxu0 %v4906
    %v5271 = vpop.f32.mrb[0].mxu0
    %v5272 = vadd.f32 0.0, %v5271
    %v5273 = vpop.f32.mrb[0].mxu0
    %v5274 = vpop.f32.mrb[0].mxu0
    %v5275 = vadd.f32 0.0, %v5274
    %v5276 = vpop.f32.mrb[0].mxu0
    %5277 = vdwg.mxu0
    %v5278 = vmul.f32 %v5103, 0.088388346
    %v5279 = vmul.f32 %v5107, 0.088388346
    %v5280 = vmul.f32 %v5113, 0.088388346
    %v5281 = vmul.f32 %v5117, 0.088388346
    %v5282 = vmul.f32 %v5123, 0.088388346
    %v5283 = vmul.f32 %v5127, 0.088388346
    %v5284 = vmul.f32 %v5133, 0.088388346
    %v5285 = vmul.f32 %v5137, 0.088388346
    %v5286 = vmul.f32 %v5143, 0.088388346
    %v5287 = vmul.f32 %v5147, 0.088388346
    %v5288 = vmul.f32 %v5153, 0.088388346
    %v5289 = vmul.f32 %v5157, 0.088388346
    %v5290 = vmul.f32 %v5163, 0.088388346
    %v5291 = vmul.f32 %v5167, 0.088388346
    %v5292 = vmul.f32 %v5173, 0.088388346
    %v5293 = vmul.f32 %v5177, 0.088388346
    %v5294 = vpack.c.bf16 %v5279, %v5278
    %v5295 = vpack.c.bf16 %v5281, %v5280
    %v5296 = vpack.c.bf16 %v5283, %v5282
    %v5297 = vpack.c.bf16 %v5285, %v5284
    %v5298 = vpack.c.bf16 %v5287, %v5286
    %v5299 = vpack.c.bf16 %v5289, %v5288
    %v5300 = vpack.c.bf16 %v5291, %v5290
    %v5301 = vpack.c.bf16 %v5293, %v5292
    %v5302 = vpack.c.bf16 %v5109, %v5105
    %v5303 = vpack.c.bf16 %v5119, %v5115
    %v5304 = vpack.c.bf16 %v5129, %v5125
    %v5305 = vpack.c.bf16 %v5139, %v5135
    %v5306 = vpack.c.bf16 %v5149, %v5145
    %v5307 = vpack.c.bf16 %v5159, %v5155
    %v5308 = vpack.c.bf16 %v5169, %v5165
    %v5309 = vpack.c.bf16 %v5179, %v5175
    %v5310 = vpack.c.bf16 %v5219, %v5216
    %v5311 = vpack.c.bf16 %v5227, %v5224
    %v5312 = vpack.c.bf16 %v5235, %v5232
    %v5313 = vpack.c.bf16 %v5243, %v5240
    %v5314 = vpack.c.bf16 %v5251, %v5248
    %v5315 = vpack.c.bf16 %v5259, %v5256
    %v5316 = vpack.c.bf16 %v5267, %v5264
    %v5317 = vpack.c.bf16 %v5275, %v5272
    %v5319 = vsel %vm836, %v5294, 0
    %v5322 = vsel %vm836, %v5295, 0
    %v5325 = vsel %vm836, %v5296, 0
    %v5328 = vsel %vm836, %v5297, 0
    %v5331 = vsel %vm836, %v5302, 0
    %v5334 = vsel %vm836, %v5303, 0
    %v5337 = vsel %vm836, %v5304, 0
    %v5340 = vsel %vm836, %v5305, 0
    %5342 = vmatprep.subr.bf16.mxu0 0
    %5343 = vmatpush1.bf16.xpose.msra.mxu0 %v5331
    %5344 = vmatprep.subr.bf16.mxu0 0
    %5345 = vmatpush1.bf16.xpose.msra.mxu0 %v5334
    %5346 = vmatprep.subr.bf16.mxu0 0
    %5347 = vmatpush1.bf16.xpose.msra.mxu0 %v5337
    %5348 = vmatprep.subr.bf16.mxu0 0
    %5349 = vmatpush1.bf16.xpose.msra.mxu0 %v5340
    %5350 = vmatprep.subr.bf16.mxu0 0
    %5351 = vmatpush1.bf16.xpose.msra.mxu0 0
    %5352 = vmatprep.subr.bf16.mxu0 0
    %5353 = vmatpush1.bf16.xpose.msra.mxu0 0
    %5354 = vmatprep.subr.bf16.mxu0 0
    %5355 = vmatpush1.bf16.xpose.msra.mxu0 0
    %5356 = vmatprep.subr.bf16.mxu0 0
    %5357 = vmatpush1.bf16.xpose.msra.mxu0 0
    %5358 = vmatprep.subr.bf16.mxu0 0
    %5359 = vmatpush1.bf16.xpose.msra.mxu0 0
    %5360 = vmatprep.subr.bf16.mxu0 0
    %5361 = vmatpush1.bf16.xpose.msra.mxu0 0
    %5362 = vmatprep.subr.bf16.mxu0 0
    %5363 = vmatpush1.bf16.xpose.msra.mxu0 0
    %5364 = vmatprep.subr.bf16.mxu0 0
    %5365 = vmatpush1.bf16.xpose.msra.mxu0 0
    %5366 = vmatprep.subr.bf16.mxu0 0
    %5367 = vmatpush1.bf16.xpose.msra.mxu0 0
    %5368 = vmatprep.subr.bf16.mxu0 0
    %5369 = vmatpush1.bf16.xpose.msra.mxu0 0
    %5370 = vmatprep.subr.bf16.mxu0 0
    %5371 = vmatpush1.bf16.xpose.msra.mxu0 0
    %5372 = vmatprep.subr.bf16.mxu0 0
    %5373 = vmatpush1.bf16.xpose.msra.mxu0 0
    %5374 = vmatprep.mubr.bf16.mxu0 0
    %5375 = vmatmul.mubr.bf16.gmra.mrb[0].mxu0 %v5319
    %v5376 = vpop.f32.mrb[0].mxu0
    %v5377 = vadd.f32 %v192, %v5376
    %v5378 = vpop.f32.mrb[0].mxu0
    %v5379 = vpop.f32.mrb[0].mxu0
    %v5380 = vadd.f32 %v193, %v5379
    %v5381 = vpop.f32.mrb[0].mxu0
    %5382 = vmatprep.mubr.bf16.mxu0 0
    %5383 = vmatmul.mubr.bf16.gmra.mrb[0].mxu0 %v5322
    %v5384 = vpop.f32.mrb[0].mxu0
    %v5385 = vadd.f32 %v194, %v5384
    %v5386 = vpop.f32.mrb[0].mxu0
    %v5387 = vpop.f32.mrb[0].mxu0
    %v5388 = vadd.f32 %v195, %v5387
    %v5389 = vpop.f32.mrb[0].mxu0
    %5390 = vmatprep.mubr.bf16.mxu0 0
    %5391 = vmatmul.mubr.bf16.gmra.mrb[0].mxu0 %v5325
    %v5392 = vpop.f32.mrb[0].mxu0
    %v5393 = vadd.f32 %v196, %v5392
    %v5394 = vpop.f32.mrb[0].mxu0
    %v5395 = vpop.f32.mrb[0].mxu0
    %v5396 = vadd.f32 %v197, %v5395
    %v5397 = vpop.f32.mrb[0].mxu0
    %5398 = vmatprep.mubr.bf16.mxu0 0
    %5399 = vmatmul.mubr.bf16.gmra.mrb[0].mxu0 %v5328
    %v5400 = vpop.f32.mrb[0].mxu0
    %v5401 = vadd.f32 %v198, %v5400
    %v5402 = vpop.f32.mrb[0].mxu0
    %v5403 = vpop.f32.mrb[0].mxu0
    %v5404 = vadd.f32 %v199, %v5403
    %v5405 = vpop.f32.mrb[0].mxu0
    %5406 = vdwg.mxu0
    %v5407 = vsel %vm926, %v5377, -inf
    %5408 = vmax.xlane.f32.xlu0 %v5407
    %v5409 = vpop.xlane.xlu0 %5408
    %v5410 = vsel %vm926, %v5380, -inf
    %5411 = vmax.xlane.f32.xlu0 %v5410
    %v5412 = vpop.xlane.xlu0 %5411
    %v5413 = vsel %vm926, %v5385, -inf
    %5414 = vmax.xlane.f32.xlu0 %v5413
    %v5415 = vpop.xlane.xlu0 %5414
    %v5416 = vsel %vm926, %v5388, -inf
    %5417 = vmax.xlane.f32.xlu0 %v5416
    %v5418 = vpop.xlane.xlu0 %5417
    %v5419 = vsel %vm926, %v5393, -inf
    %5420 = vmax.xlane.f32.xlu0 %v5419
    %v5421 = vpop.xlane.xlu0 %5420
    %v5422 = vsel %vm926, %v5396, -inf
    %5423 = vmax.xlane.f32.xlu0 %v5422
    %v5424 = vpop.xlane.xlu0 %5423
    %v5425 = vsel %vm926, %v5401, -inf
    %5426 = vmax.xlane.f32.xlu0 %v5425
    %v5427 = vpop.xlane.xlu0 %5426
    %v5428 = vsel %vm926, %v5404, -inf
    %5429 = vmax.xlane.f32.xlu0 %v5428
    %v5430 = vpop.xlane.xlu0 %5429
    %v5431 = vsub.f32 %v5377, %v5409
    %v5432 = vsub.f32 %v5380, %v5412
    %v5433 = vsub.f32 %v5385, %v5415
    %v5434 = vsub.f32 %v5388, %v5418
    %v5435 = vsub.f32 %v5393, %v5421
    %v5436 = vsub.f32 %v5396, %v5424
    %v5437 = vsub.f32 %v5401, %v5427
    %v5438 = vsub.f32 %v5404, %v5430
    %v5439 = vmul.f32 %v5431, 1.442695
    %v5440 = vpow.pop %v5439
    %v5441 = vmul.f32 %v5432, 1.442695
    %v5442 = vpow.pop %v5441
    %v5443 = vmul.f32 %v5433, 1.442695
    %v5444 = vpow.pop %v5443
    %v5445 = vmul.f32 %v5434, 1.442695
    %v5446 = vpow.pop %v5445
    %v5447 = vmul.f32 %v5435, 1.442695
    %v5448 = vpow.pop %v5447
    %v5449 = vmul.f32 %v5436, 1.442695
    %v5450 = vpow.pop %v5449
    %v5451 = vmul.f32 %v5437, 1.442695
    %v5452 = vpow.pop %v5451
    %v5453 = vmul.f32 %v5438, 1.442695
    %v5454 = vpow.pop %v5453
    %v5455 = vsel %vm926, %v5440, 0.0
    %5456 = vadd.xlane.f32.xlu0 %v5455
    %v5457 = vpop.xlane.xlu0 %5456
    %v5458 = vsel %vm926, %v5442, 0.0
    %5459 = vadd.xlane.f32.xlu0 %v5458
    %v5460 = vpop.xlane.xlu0 %5459
    %v5461 = vsel %vm926, %v5444, 0.0
    %5462 = vadd.xlane.f32.xlu0 %v5461
    %v5463 = vpop.xlane.xlu0 %5462
    %v5464 = vsel %vm926, %v5446, 0.0
    %5465 = vadd.xlane.f32.xlu0 %v5464
    %v5466 = vpop.xlane.xlu0 %5465
    %v5467 = vsel %vm926, %v5448, 0.0
    %5468 = vadd.xlane.f32.xlu0 %v5467
    %v5469 = vpop.xlane.xlu0 %5468
    %v5470 = vsel %vm926, %v5450, 0.0
    %5471 = vadd.xlane.f32.xlu0 %v5470
    %v5472 = vpop.xlane.xlu0 %5471
    %v5473 = vsel %vm926, %v5452, 0.0
    %5474 = vadd.xlane.f32.xlu0 %v5473
    %v5475 = vpop.xlane.xlu0 %5474
    %v5476 = vsel %vm926, %v5454, 0.0
    %5477 = vadd.xlane.f32.xlu0 %v5476
    %v5478 = vpop.xlane.xlu0 %5477
    %v5479 = vrcp.pop %v5457
    %v5480 = vrcp.pop %v5460
    %v5481 = vrcp.pop %v5463
    %v5482 = vrcp.pop %v5466
    %v5483 = vrcp.pop %v5469
    %v5484 = vrcp.pop %v5472
    %v5485 = vrcp.pop %v5475
    %v5486 = vrcp.pop %v5478
    %v5487 = vmul.f32 %v5440, %v5479
    %v5488 = vmul.f32 %v5442, %v5480
    %v5489 = vmul.f32 %v5444, %v5481
    %v5490 = vmul.f32 %v5446, %v5482
    %v5491 = vmul.f32 %v5448, %v5483
    %v5492 = vmul.f32 %v5450, %v5484
    %v5493 = vmul.f32 %v5452, %v5485
    %v5494 = vmul.f32 %v5454, %v5486
    %v5495 = vpack.c.bf16 %v5488, %v5487
    %v5496 = vpack.c.bf16 %v5490, %v5489
    %v5497 = vpack.c.bf16 %v5492, %v5491
    %v5498 = vpack.c.bf16 %v5494, %v5493
    %v5500 = vsel %vm926, %v5495, 0
    %v5503 = vsel %vm926, %v5496, 0
    %v5506 = vsel %vm926, %v5497, 0
    %v5509 = vsel %vm926, %v5498, 0
    %5511 = vmatprep.subr.bf16.mxu0 0
    %5512 = vmatpush1.bf16.msra.mxu0 %v5310
    %5513 = vmatprep.subr.bf16.mxu0 0
    %5514 = vmatpush1.bf16.msra.mxu0 %v5311
    %5515 = vmatprep.subr.bf16.mxu0 0
    %5516 = vmatpush1.bf16.msra.mxu0 %v5312
    %5517 = vmatprep.subr.bf16.mxu0 0
    %5518 = vmatpush1.bf16.msra.mxu0 %v5313
    %5519 = vmatprep.subr.bf16.mxu0 0
    %5520 = vmatpush1.bf16.msra.mxu0 0
    %5521 = vmatprep.subr.bf16.mxu0 0
    %5522 = vmatpush1.bf16.msra.mxu0 0
    %5523 = vmatprep.subr.bf16.mxu0 0
    %5524 = vmatpush1.bf16.msra.mxu0 0
    %5525 = vmatprep.subr.bf16.mxu0 0
    %5526 = vmatpush1.bf16.msra.mxu0 0
    %5527 = vmatprep.subr.bf16.mxu0 0
    %5528 = vmatpush1.bf16.msra.mxu0 0
    %5529 = vmatprep.subr.bf16.mxu0 0
    %5530 = vmatpush1.bf16.msra.mxu0 0
    %5531 = vmatprep.subr.bf16.mxu0 0
    %5532 = vmatpush1.bf16.msra.mxu0 0
    %5533 = vmatprep.subr.bf16.mxu0 0
    %5534 = vmatpush1.bf16.msra.mxu0 0
    %5535 = vmatprep.subr.bf16.mxu0 0
    %5536 = vmatpush1.bf16.msra.mxu0 0
    %5537 = vmatprep.subr.bf16.mxu0 0
    %5538 = vmatpush1.bf16.msra.mxu0 0
    %5539 = vmatprep.subr.bf16.mxu0 0
    %5540 = vmatpush1.bf16.msra.mxu0 0
    %5541 = vmatprep.subr.bf16.mxu0 0
    %5542 = vmatpush1.bf16.msra.mxu0 0
    %5543 = vmatprep.mubr.bf16.mxu0 0
    %5544 = vmatmul.mubr.bf16.gmra.mrb[0].mxu0 %v5500
    %v5545 = vpop.f32.mrb[0].mxu0
    %v5546 = vadd.f32 0.0, %v5545
    %v5547 = vpop.f32.mrb[0].mxu0
    %v5548 = vpop.f32.mrb[0].mxu0
    %v5549 = vadd.f32 0.0, %v5548
    %v5550 = vpop.f32.mrb[0].mxu0
    %5551 = vmatprep.mubr.bf16.mxu0 0
    %5552 = vmatmul.mubr.bf16.gmra.mrb[0].mxu0 %v5503
    %v5553 = vpop.f32.mrb[0].mxu0
    %v5554 = vadd.f32 0.0, %v5553
    %v5555 = vpop.f32.mrb[0].mxu0
    %v5556 = vpop.f32.mrb[0].mxu0
    %v5557 = vadd.f32 0.0, %v5556
    %v5558 = vpop.f32.mrb[0].mxu0
    %5559 = vmatprep.mubr.bf16.mxu0 0
    %5560 = vmatmul.mubr.bf16.gmra.mrb[0].mxu0 %v5506
    %v5561 = vpop.f32.mrb[0].mxu0
    %v5562 = vadd.f32 0.0, %v5561
    %v5563 = vpop.f32.mrb[0].mxu0
    %v5564 = vpop.f32.mrb[0].mxu0
    %v5565 = vadd.f32 0.0, %v5564
    %v5566 = vpop.f32.mrb[0].mxu0
    %5567 = vmatprep.mubr.bf16.mxu0 0
    %5568 = vmatmul.mubr.bf16.gmra.mrb[0].mxu0 %v5509
    %v5569 = vpop.f32.mrb[0].mxu0
    %v5570 = vadd.f32 0.0, %v5569
    %v5571 = vpop.f32.mrb[0].mxu0
    %v5572 = vpop.f32.mrb[0].mxu0
    %v5573 = vadd.f32 0.0, %v5572
    %v5574 = vpop.f32.mrb[0].mxu0
    %5575 = vdwg.mxu0
    %v5576 = vpack.c.bf16 %v5549, %v5546
    %v5577 = vpack.c.bf16 %v5557, %v5554
    %v5578 = vpack.c.bf16 %v5565, %v5562
    %v5579 = vpack.c.bf16 %v5573, %v5570
    %5584 = vrot.lane.b32.xlu0 %v5294, 96
    %v5585 = vpop.permute.xlu0 %5584
    %5586 = vrot.lane.b32.xlu0 %v5295, 96
    %v5587 = vpop.permute.xlu0 %5586
    %5588 = vrot.lane.b32.xlu0 %v5296, 96
    %v5589 = vpop.permute.xlu0 %5588
    %5590 = vrot.lane.b32.xlu0 %v5297, 96
    %v5591 = vpop.permute.xlu0 %5590
    %5596 = vrot.lane.b32.xlu0 %v5302, 96
    %v5597 = vpop.permute.xlu0 %5596
    %5598 = vrot.lane.b32.xlu0 %v5303, 96
    %v5599 = vpop.permute.xlu0 %5598
    %5600 = vrot.lane.b32.xlu0 %v5304, 96
    %v5601 = vpop.permute.xlu0 %5600
    %5602 = vrot.lane.b32.xlu0 %v5305, 96
    %v5603 = vpop.permute.xlu0 %5602
    %v5605 = vsel %vm836, %v5585, 0
    %v5608 = vsel %vm836, %v5587, 0
    %v5611 = vsel %vm836, %v5589, 0
    %v5614 = vsel %vm836, %v5591, 0
    %v5617 = vsel %vm836, %v5597, 0
    %v5620 = vsel %vm836, %v5599, 0
    %v5623 = vsel %vm836, %v5601, 0
    %v5626 = vsel %vm836, %v5603, 0
    %5628 = vmatprep.subr.bf16.mxu0 0
    %5629 = vmatpush1.bf16.xpose.msra.mxu0 %v5617
    %5630 = vmatprep.subr.bf16.mxu0 0
    %5631 = vmatpush1.bf16.xpose.msra.mxu0 %v5620
    %5632 = vmatprep.subr.bf16.mxu0 0
    %5633 = vmatpush1.bf16.xpose.msra.mxu0 %v5623
    %5634 = vmatprep.subr.bf16.mxu0 0
    %5635 = vmatpush1.bf16.xpose.msra.mxu0 %v5626
    %5636 = vmatprep.subr.bf16.mxu0 0
    %5637 = vmatpush1.bf16.xpose.msra.mxu0 0
    %5638 = vmatprep.subr.bf16.mxu0 0
    %5639 = vmatpush1.bf16.xpose.msra.mxu0 0
    %5640 = vmatprep.subr.bf16.mxu0 0
    %5641 = vmatpush1.bf16.xpose.msra.mxu0 0
    %5642 = vmatprep.subr.bf16.mxu0 0
    %5643 = vmatpush1.bf16.xpose.msra.mxu0 0
    %5644 = vmatprep.subr.bf16.mxu0 0
    %5645 = vmatpush1.bf16.xpose.msra.mxu0 0
    %5646 = vmatprep.subr.bf16.mxu0 0
    %5647 = vmatpush1.bf16.xpose.msra.mxu0 0
    %5648 = vmatprep.subr.bf16.mxu0 0
    %5649 = vmatpush1.bf16.xpose.msra.mxu0 0
    %5650 = vmatprep.subr.bf16.mxu0 0
    %5651 = vmatpush1.bf16.xpose.msra.mxu0 0
    %5652 = vmatprep.subr.bf16.mxu0 0
    %5653 = vmatpush1.bf16.xpose.msra.mxu0 0
    %5654 = vmatprep.subr.bf16.mxu0 0
    %5655 = vmatpush1.bf16.xpose.msra.mxu0 0
    %5656 = vmatprep.subr.bf16.mxu0 0
    %5657 = vmatpush1.bf16.xpose.msra.mxu0 0
    %5658 = vmatprep.subr.bf16.mxu0 0
    %5659 = vmatpush1.bf16.xpose.msra.mxu0 0
    %5660 = vmatprep.mubr.bf16.mxu0 0
    %5661 = vmatmul.mubr.bf16.gmra.mrb[0].mxu0 %v5605
    %v5662 = vpop.f32.mrb[0].mxu0
    %v5663 = vadd.f32 %v192, %v5662
    %v5664 = vpop.f32.mrb[0].mxu0
    %v5665 = vpop.f32.mrb[0].mxu0
    %v5666 = vadd.f32 %v193, %v5665
    %v5667 = vpop.f32.mrb[0].mxu0
    %5668 = vmatprep.mubr.bf16.mxu0 0
    %5669 = vmatmul.mubr.bf16.gmra.mrb[0].mxu0 %v5608
    %v5670 = vpop.f32.mrb[0].mxu0
    %v5671 = vadd.f32 %v194, %v5670
    %v5672 = vpop.f32.mrb[0].mxu0
    %v5673 = vpop.f32.mrb[0].mxu0
    %v5674 = vadd.f32 %v195, %v5673
    %v5675 = vpop.f32.mrb[0].mxu0
    %5676 = vmatprep.mubr.bf16.mxu0 0
    %5677 = vmatmul.mubr.bf16.gmra.mrb[0].mxu0 %v5611
    %v5678 = vpop.f32.mrb[0].mxu0
    %v5679 = vadd.f32 %v196, %v5678
    %v5680 = vpop.f32.mrb[0].mxu0
    %v5681 = vpop.f32.mrb[0].mxu0
    %v5682 = vadd.f32 %v197, %v5681
    %v5683 = vpop.f32.mrb[0].mxu0
    %5684 = vmatprep.mubr.bf16.mxu0 0
    %5685 = vmatmul.mubr.bf16.gmra.mrb[0].mxu0 %v5614
    %v5686 = vpop.f32.mrb[0].mxu0
    %v5687 = vadd.f32 %v198, %v5686
    %v5688 = vpop.f32.mrb[0].mxu0
    %v5689 = vpop.f32.mrb[0].mxu0
    %v5690 = vadd.f32 %v199, %v5689
    %v5691 = vpop.f32.mrb[0].mxu0
    %5692 = vdwg.mxu0
    %v5693 = vsel %vm926, %v5663, -inf
    %5694 = vmax.xlane.f32.xlu0 %v5693
    %v5695 = vpop.xlane.xlu0 %5694
    %v5696 = vsel %vm926, %v5666, -inf
    %5697 = vmax.xlane.f32.xlu0 %v5696
    %v5698 = vpop.xlane.xlu0 %5697
    %v5699 = vsel %vm926, %v5671, -inf
    %5700 = vmax.xlane.f32.xlu0 %v5699
    %v5701 = vpop.xlane.xlu0 %5700
    %v5702 = vsel %vm926, %v5674, -inf
    %5703 = vmax.xlane.f32.xlu0 %v5702
    %v5704 = vpop.xlane.xlu0 %5703
    %v5705 = vsel %vm926, %v5679, -inf
    %5706 = vmax.xlane.f32.xlu0 %v5705
    %v5707 = vpop.xlane.xlu0 %5706
    %v5708 = vsel %vm926, %v5682, -inf
    %5709 = vmax.xlane.f32.xlu0 %v5708
    %v5710 = vpop.xlane.xlu0 %5709
    %v5711 = vsel %vm926, %v5687, -inf
    %5712 = vmax.xlane.f32.xlu0 %v5711
    %v5713 = vpop.xlane.xlu0 %5712
    %v5714 = vsel %vm926, %v5690, -inf
    %5715 = vmax.xlane.f32.xlu0 %v5714
    %v5716 = vpop.xlane.xlu0 %5715
    %v5717 = vsub.f32 %v5663, %v5695
    %v5718 = vsub.f32 %v5666, %v5698
    %v5719 = vsub.f32 %v5671, %v5701
    %v5720 = vsub.f32 %v5674, %v5704
    %v5721 = vsub.f32 %v5679, %v5707
    %v5722 = vsub.f32 %v5682, %v5710
    %v5723 = vsub.f32 %v5687, %v5713
    %v5724 = vsub.f32 %v5690, %v5716
    %v5725 = vmul.f32 %v5717, 1.442695
    %v5726 = vpow.pop %v5725
    %v5727 = vmul.f32 %v5718, 1.442695
    %v5728 = vpow.pop %v5727
    %v5729 = vmul.f32 %v5719, 1.442695
    %v5730 = vpow.pop %v5729
    %v5731 = vmul.f32 %v5720, 1.442695
    %v5732 = vpow.pop %v5731
    %v5733 = vmul.f32 %v5721, 1.442695
    %v5734 = vpow.pop %v5733
    %v5735 = vmul.f32 %v5722, 1.442695
    %v5736 = vpow.pop %v5735
    %v5737 = vmul.f32 %v5723, 1.442695
    %v5738 = vpow.pop %v5737
    %v5739 = vmul.f32 %v5724, 1.442695
    %v5740 = vpow.pop %v5739
    %v5741 = vsel %vm926, %v5726, 0.0
    %5742 = vadd.xlane.f32.xlu0 %v5741
    %v5743 = vpop.xlane.xlu0 %5742
    %v5744 = vsel %vm926, %v5728, 0.0
    %5745 = vadd.xlane.f32.xlu0 %v5744
    %v5746 = vpop.xlane.xlu0 %5745
    %v5747 = vsel %vm926, %v5730, 0.0
    %5748 = vadd.xlane.f32.xlu0 %v5747
    %v5749 = vpop.xlane.xlu0 %5748
    %v5750 = vsel %vm926, %v5732, 0.0
    %5751 = vadd.xlane.f32.xlu0 %v5750
    %v5752 = vpop.xlane.xlu0 %5751
    %v5753 = vsel %vm926, %v5734, 0.0
    %5754 = vadd.xlane.f32.xlu0 %v5753
    %v5755 = vpop.xlane.xlu0 %5754
    %v5756 = vsel %vm926, %v5736, 0.0
    %5757 = vadd.xlane.f32.xlu0 %v5756
    %v5758 = vpop.xlane.xlu0 %5757
    %v5759 = vsel %vm926, %v5738, 0.0
    %5760 = vadd.xlane.f32.xlu0 %v5759
    %v5761 = vpop.xlane.xlu0 %5760
    %v5762 = vsel %vm926, %v5740, 0.0
    %5763 = vadd.xlane.f32.xlu0 %v5762
    %v5764 = vpop.xlane.xlu0 %5763
    %v5765 = vrcp.pop %v5743
    %v5766 = vrcp.pop %v5746
    %v5767 = vrcp.pop %v5749
    %v5768 = vrcp.pop %v5752
    %v5769 = vrcp.pop %v5755
    %v5770 = vrcp.pop %v5758
    %v5771 = vrcp.pop %v5761
    %v5772 = vrcp.pop %v5764
    %v5773 = vmul.f32 %v5726, %v5765
    %v5774 = vmul.f32 %v5728, %v5766
    %v5775 = vmul.f32 %v5730, %v5767
    %v5776 = vmul.f32 %v5732, %v5768
    %v5777 = vmul.f32 %v5734, %v5769
    %v5778 = vmul.f32 %v5736, %v5770
    %v5779 = vmul.f32 %v5738, %v5771
    %v5780 = vmul.f32 %v5740, %v5772
    %v5781 = vpack.c.bf16 %v5774, %v5773
    %v5782 = vpack.c.bf16 %v5776, %v5775
    %v5783 = vpack.c.bf16 %v5778, %v5777
    %v5784 = vpack.c.bf16 %v5780, %v5779
    %5789 = vrot.lane.b32.xlu0 %v5310, 96
    %v5790 = vpop.permute.xlu0 %5789
    %5791 = vrot.lane.b32.xlu0 %v5311, 96
    %v5792 = vpop.permute.xlu0 %5791
    %5793 = vrot.lane.b32.xlu0 %v5312, 96
    %v5794 = vpop.permute.xlu0 %5793
    %5795 = vrot.lane.b32.xlu0 %v5313, 96
    %v5796 = vpop.permute.xlu0 %5795
    %v5802 = vsel %vm926, %v5781, 0
    %v5805 = vsel %vm926, %v5782, 0
    %v5808 = vsel %vm926, %v5783, 0
    %v5811 = vsel %vm926, %v5784, 0
    %5813 = vmatprep.subr.bf16.mxu0 0
    %5814 = vmatpush1.bf16.msra.mxu0 %v5790
    %5815 = vmatprep.subr.bf16.mxu0 0
    %5816 = vmatpush1.bf16.msra.mxu0 %v5792
    %5817 = vmatprep.subr.bf16.mxu0 0
    %5818 = vmatpush1.bf16.msra.mxu0 %v5794
    %5819 = vmatprep.subr.bf16.mxu0 0
    %5820 = vmatpush1.bf16.msra.mxu0 %v5796
    %5821 = vmatprep.subr.bf16.mxu0 0
    %5822 = vmatpush1.bf16.msra.mxu0 0
    %5823 = vmatprep.subr.bf16.mxu0 0
    %5824 = vmatpush1.bf16.msra.mxu0 0
    %5825 = vmatprep.subr.bf16.mxu0 0
    %5826 = vmatpush1.bf16.msra.mxu0 0
    %5827 = vmatprep.subr.bf16.mxu0 0
    %5828 = vmatpush1.bf16.msra.mxu0 0
    %5829 = vmatprep.subr.bf16.mxu0 0
    %5830 = vmatpush1.bf16.msra.mxu0 0
    %5831 = vmatprep.subr.bf16.mxu0 0
    %5832 = vmatpush1.bf16.msra.mxu0 0
    %5833 = vmatprep.subr.bf16.mxu0 0
    %5834 = vmatpush1.bf16.msra.mxu0 0
    %5835 = vmatprep.subr.bf16.mxu0 0
    %5836 = vmatpush1.bf16.msra.mxu0 0
    %5837 = vmatprep.subr.bf16.mxu0 0
    %5838 = vmatpush1.bf16.msra.mxu0 0
    %5839 = vmatprep.subr.bf16.mxu0 0
    %5840 = vmatpush1.bf16.msra.mxu0 0
    %5841 = vmatprep.subr.bf16.mxu0 0
    %5842 = vmatpush1.bf16.msra.mxu0 0
    %5843 = vmatprep.subr.bf16.mxu0 0
    %5844 = vmatpush1.bf16.msra.mxu0 0
    %5845 = vmatprep.mubr.bf16.mxu0 0
    %5846 = vmatmul.mubr.bf16.gmra.mrb[0].mxu0 %v5802
    %v5847 = vpop.f32.mrb[0].mxu0
    %v5848 = vadd.f32 0.0, %v5847
    %v5849 = vpop.f32.mrb[0].mxu0
    %v5850 = vpop.f32.mrb[0].mxu0
    %v5851 = vadd.f32 0.0, %v5850
    %v5852 = vpop.f32.mrb[0].mxu0
    %5853 = vmatprep.mubr.bf16.mxu0 0
    %5854 = vmatmul.mubr.bf16.gmra.mrb[0].mxu0 %v5805
    %v5855 = vpop.f32.mrb[0].mxu0
    %v5856 = vadd.f32 0.0, %v5855
    %v5857 = vpop.f32.mrb[0].mxu0
    %v5858 = vpop.f32.mrb[0].mxu0
    %v5859 = vadd.f32 0.0, %v5858
    %v5860 = vpop.f32.mrb[0].mxu0
    %5861 = vmatprep.mubr.bf16.mxu0 0
    %5862 = vmatmul.mubr.bf16.gmra.mrb[0].mxu0 %v5808
    %v5863 = vpop.f32.mrb[0].mxu0
    %v5864 = vadd.f32 0.0, %v5863
    %v5865 = vpop.f32.mrb[0].mxu0
    %v5866 = vpop.f32.mrb[0].mxu0
    %v5867 = vadd.f32 0.0, %v5866
    %v5868 = vpop.f32.mrb[0].mxu0
    %5869 = vmatprep.mubr.bf16.mxu0 0
    %5870 = vmatmul.mubr.bf16.gmra.mrb[0].mxu0 %v5811
    %v5871 = vpop.f32.mrb[0].mxu0
    %v5872 = vadd.f32 0.0, %v5871
    %v5873 = vpop.f32.mrb[0].mxu0
    %v5874 = vpop.f32.mrb[0].mxu0
    %v5875 = vadd.f32 0.0, %v5874
    %v5876 = vpop.f32.mrb[0].mxu0
    %5877 = vdwg.mxu0
    %v5878 = vpack.c.bf16 %v5851, %v5848
    %v5879 = vpack.c.bf16 %v5859, %v5856
    %v5880 = vpack.c.bf16 %v5867, %v5864
    %v5881 = vpack.c.bf16 %v5875, %v5872
    %5882 = vrot.lane.b32.xlu0 %v5294, 64
    %v5883 = vpop.permute.xlu0 %5882
    %5884 = vrot.lane.b32.xlu0 %v5295, 64
    %v5885 = vpop.permute.xlu0 %5884
    %5886 = vrot.lane.b32.xlu0 %v5296, 64
    %v5887 = vpop.permute.xlu0 %5886
    %5888 = vrot.lane.b32.xlu0 %v5297, 64
    %v5889 = vpop.permute.xlu0 %5888
    %5890 = vrot.lane.b32.xlu0 %v5302, 64
    %v5891 = vpop.permute.xlu0 %5890
    %5892 = vrot.lane.b32.xlu0 %v5303, 64
    %v5893 = vpop.permute.xlu0 %5892
    %5894 = vrot.lane.b32.xlu0 %v5304, 64
    %v5895 = vpop.permute.xlu0 %5894
    %5896 = vrot.lane.b32.xlu0 %v5305, 64
    %v5897 = vpop.permute.xlu0 %5896
    %v5899 = vsel %vm836, %v5883, 0
    %v5902 = vsel %vm836, %v5885, 0
    %v5905 = vsel %vm836, %v5887, 0
    %v5908 = vsel %vm836, %v5889, 0
    %v5911 = vsel %vm836, %v5891, 0
    %v5914 = vsel %vm836, %v5893, 0
    %v5917 = vsel %vm836, %v5895, 0
    %v5920 = vsel %vm836, %v5897, 0
    %5922 = vmatprep.subr.bf16.mxu0 0
    %5923 = vmatpush1.bf16.xpose.msra.mxu0 %v5911
    %5924 = vmatprep.subr.bf16.mxu0 0
    %5925 = vmatpush1.bf16.xpose.msra.mxu0 %v5914
    %5926 = vmatprep.subr.bf16.mxu0 0
    %5927 = vmatpush1.bf16.xpose.msra.mxu0 %v5917
    %5928 = vmatprep.subr.bf16.mxu0 0
    %5929 = vmatpush1.bf16.xpose.msra.mxu0 %v5920
    %5930 = vmatprep.subr.bf16.mxu0 0
    %5931 = vmatpush1.bf16.xpose.msra.mxu0 0
    %5932 = vmatprep.subr.bf16.mxu0 0
    %5933 = vmatpush1.bf16.xpose.msra.mxu0 0
    %5934 = vmatprep.subr.bf16.mxu0 0
    %5935 = vmatpush1.bf16.xpose.msra.mxu0 0
    %5936 = vmatprep.subr.bf16.mxu0 0
    %5937 = vmatpush1.bf16.xpose.msra.mxu0 0
    %5938 = vmatprep.subr.bf16.mxu0 0
    %5939 = vmatpush1.bf16.xpose.msra.mxu0 0
    %5940 = vmatprep.subr.bf16.mxu0 0
    %5941 = vmatpush1.bf16.xpose.msra.mxu0 0
    %5942 = vmatprep.subr.bf16.mxu0 0
    %5943 = vmatpush1.bf16.xpose.msra.mxu0 0
    %5944 = vmatprep.subr.bf16.mxu0 0
    %5945 = vmatpush1.bf16.xpose.msra.mxu0 0
    %5946 = vmatprep.subr.bf16.mxu0 0
    %5947 = vmatpush1.bf16.xpose.msra.mxu0 0
    %5948 = vmatprep.subr.bf16.mxu0 0
    %5949 = vmatpush1.bf16.xpose.msra.mxu0 0
    %5950 = vmatprep.subr.bf16.mxu0 0
    %5951 = vmatpush1.bf16.xpose.msra.mxu0 0
    %5952 = vmatprep.subr.bf16.mxu0 0
    %5953 = vmatpush1.bf16.xpose.msra.mxu0 0
    %5954 = vmatprep.mubr.bf16.mxu0 0
    %5955 = vmatmul.mubr.bf16.gmra.mrb[0].mxu0 %v5899
    %v5956 = vpop.f32.mrb[0].mxu0
    %v5957 = vadd.f32 %v192, %v5956
    %v5958 = vpop.f32.mrb[0].mxu0
    %v5959 = vpop.f32.mrb[0].mxu0
    %v5960 = vadd.f32 %v193, %v5959
    %v5961 = vpop.f32.mrb[0].mxu0
    %5962 = vmatprep.mubr.bf16.mxu0 0
    %5963 = vmatmul.mubr.bf16.gmra.mrb[0].mxu0 %v5902
    %v5964 = vpop.f32.mrb[0].mxu0
    %v5965 = vadd.f32 %v194, %v5964
    %v5966 = vpop.f32.mrb[0].mxu0
    %v5967 = vpop.f32.mrb[0].mxu0
    %v5968 = vadd.f32 %v195, %v5967
    %v5969 = vpop.f32.mrb[0].mxu0
    %5970 = vmatprep.mubr.bf16.mxu0 0
    %5971 = vmatmul.mubr.bf16.gmra.mrb[0].mxu0 %v5905
    %v5972 = vpop.f32.mrb[0].mxu0
    %v5973 = vadd.f32 %v196, %v5972
    %v5974 = vpop.f32.mrb[0].mxu0
    %v5975 = vpop.f32.mrb[0].mxu0
    %v5976 = vadd.f32 %v197, %v5975
    %v5977 = vpop.f32.mrb[0].mxu0
    %5978 = vmatprep.mubr.bf16.mxu0 0
    %5979 = vmatmul.mubr.bf16.gmra.mrb[0].mxu0 %v5908
    %v5980 = vpop.f32.mrb[0].mxu0
    %v5981 = vadd.f32 %v198, %v5980
    %v5982 = vpop.f32.mrb[0].mxu0
    %v5983 = vpop.f32.mrb[0].mxu0
    %v5984 = vadd.f32 %v199, %v5983
    %v5985 = vpop.f32.mrb[0].mxu0
    %5986 = vdwg.mxu0
    %v5987 = vsel %vm926, %v5957, -inf
    %5988 = vmax.xlane.f32.xlu0 %v5987
    %v5989 = vpop.xlane.xlu0 %5988
    %v5990 = vsel %vm926, %v5960, -inf
    %5991 = vmax.xlane.f32.xlu0 %v5990
    %v5992 = vpop.xlane.xlu0 %5991
    %v5993 = vsel %vm926, %v5965, -inf
    %5994 = vmax.xlane.f32.xlu0 %v5993
    %v5995 = vpop.xlane.xlu0 %5994
    %v5996 = vsel %vm926, %v5968, -inf
    %5997 = vmax.xlane.f32.xlu0 %v5996
    %v5998 = vpop.xlane.xlu0 %5997
    %v5999 = vsel %vm926, %v5973, -inf
    %6000 = vmax.xlane.f32.xlu0 %v5999
    %v6001 = vpop.xlane.xlu0 %6000
    %v6002 = vsel %vm926, %v5976, -inf
    %6003 = vmax.xlane.f32.xlu0 %v6002
    %v6004 = vpop.xlane.xlu0 %6003
    %v6005 = vsel %vm926, %v5981, -inf
    %6006 = vmax.xlane.f32.xlu0 %v6005
    %v6007 = vpop.xlane.xlu0 %6006
    %v6008 = vsel %vm926, %v5984, -inf
    %6009 = vmax.xlane.f32.xlu0 %v6008
    %v6010 = vpop.xlane.xlu0 %6009
    %v6011 = vsub.f32 %v5957, %v5989
    %v6012 = vsub.f32 %v5960, %v5992
    %v6013 = vsub.f32 %v5965, %v5995
    %v6014 = vsub.f32 %v5968, %v5998
    %v6015 = vsub.f32 %v5973, %v6001
    %v6016 = vsub.f32 %v5976, %v6004
    %v6017 = vsub.f32 %v5981, %v6007
    %v6018 = vsub.f32 %v5984, %v6010
    %v6019 = vmul.f32 %v6011, 1.442695
    %v6020 = vpow.pop %v6019
    %v6021 = vmul.f32 %v6012, 1.442695
    %v6022 = vpow.pop %v6021
    %v6023 = vmul.f32 %v6013, 1.442695
    %v6024 = vpow.pop %v6023
    %v6025 = vmul.f32 %v6014, 1.442695
    %v6026 = vpow.pop %v6025
    %v6027 = vmul.f32 %v6015, 1.442695
    %v6028 = vpow.pop %v6027
    %v6029 = vmul.f32 %v6016, 1.442695
    %v6030 = vpow.pop %v6029
    %v6031 = vmul.f32 %v6017, 1.442695
    %v6032 = vpow.pop %v6031
    %v6033 = vmul.f32 %v6018, 1.442695
    %v6034 = vpow.pop %v6033
    %v6035 = vsel %vm926, %v6020, 0.0
    %6036 = vadd.xlane.f32.xlu0 %v6035
    %v6037 = vpop.xlane.xlu0 %6036
    %v6038 = vsel %vm926, %v6022, 0.0
    %6039 = vadd.xlane.f32.xlu0 %v6038
    %v6040 = vpop.xlane.xlu0 %6039
    %v6041 = vsel %vm926, %v6024, 0.0
    %6042 = vadd.xlane.f32.xlu0 %v6041
    %v6043 = vpop.xlane.xlu0 %6042
    %v6044 = vsel %vm926, %v6026, 0.0
    %6045 = vadd.xlane.f32.xlu0 %v6044
    %v6046 = vpop.xlane.xlu0 %6045
    %v6047 = vsel %vm926, %v6028, 0.0
    %6048 = vadd.xlane.f32.xlu0 %v6047
    %v6049 = vpop.xlane.xlu0 %6048
    %v6050 = vsel %vm926, %v6030, 0.0
    %6051 = vadd.xlane.f32.xlu0 %v6050
    %v6052 = vpop.xlane.xlu0 %6051
    %v6053 = vsel %vm926, %v6032, 0.0
    %6054 = vadd.xlane.f32.xlu0 %v6053
    %v6055 = vpop.xlane.xlu0 %6054
    %v6056 = vsel %vm926, %v6034, 0.0
    %6057 = vadd.xlane.f32.xlu0 %v6056
    %v6058 = vpop.xlane.xlu0 %6057
    %v6059 = vrcp.pop %v6037
    %v6060 = vrcp.pop %v6040
    %v6061 = vrcp.pop %v6043
    %v6062 = vrcp.pop %v6046
    %v6063 = vrcp.pop %v6049
    %v6064 = vrcp.pop %v6052
    %v6065 = vrcp.pop %v6055
    %v6066 = vrcp.pop %v6058
    %v6067 = vmul.f32 %v6020, %v6059
    %v6068 = vmul.f32 %v6022, %v6060
    %v6069 = vmul.f32 %v6024, %v6061
    %v6070 = vmul.f32 %v6026, %v6062
    %v6071 = vmul.f32 %v6028, %v6063
    %v6072 = vmul.f32 %v6030, %v6064
    %v6073 = vmul.f32 %v6032, %v6065
    %v6074 = vmul.f32 %v6034, %v6066
    %v6075 = vpack.c.bf16 %v6068, %v6067
    %v6076 = vpack.c.bf16 %v6070, %v6069
    %v6077 = vpack.c.bf16 %v6072, %v6071
    %v6078 = vpack.c.bf16 %v6074, %v6073
    %6079 = vrot.lane.b32.xlu0 %v5310, 64
    %v6080 = vpop.permute.xlu0 %6079
    %6081 = vrot.lane.b32.xlu0 %v5311, 64
    %v6082 = vpop.permute.xlu0 %6081
    %6083 = vrot.lane.b32.xlu0 %v5312, 64
    %v6084 = vpop.permute.xlu0 %6083
    %6085 = vrot.lane.b32.xlu0 %v5313, 64
    %v6086 = vpop.permute.xlu0 %6085
    %v6092 = vsel %vm926, %v6075, 0
    %v6095 = vsel %vm926, %v6076, 0
    %v6098 = vsel %vm926, %v6077, 0
    %v6101 = vsel %vm926, %v6078, 0
    %6103 = vmatprep.subr.bf16.mxu0 0
    %6104 = vmatpush1.bf16.msra.mxu0 %v6080
    %6105 = vmatprep.subr.bf16.mxu0 0
    %6106 = vmatpush1.bf16.msra.mxu0 %v6082
    %6107 = vmatprep.subr.bf16.mxu0 0
    %6108 = vmatpush1.bf16.msra.mxu0 %v6084
    %6109 = vmatprep.subr.bf16.mxu0 0
    %6110 = vmatpush1.bf16.msra.mxu0 %v6086
    %6111 = vmatprep.subr.bf16.mxu0 0
    %6112 = vmatpush1.bf16.msra.mxu0 0
    %6113 = vmatprep.subr.bf16.mxu0 0
    %6114 = vmatpush1.bf16.msra.mxu0 0
    %6115 = vmatprep.subr.bf16.mxu0 0
    %6116 = vmatpush1.bf16.msra.mxu0 0
    %6117 = vmatprep.subr.bf16.mxu0 0
    %6118 = vmatpush1.bf16.msra.mxu0 0
    %6119 = vmatprep.subr.bf16.mxu0 0
    %6120 = vmatpush1.bf16.msra.mxu0 0
    %6121 = vmatprep.subr.bf16.mxu0 0
    %6122 = vmatpush1.bf16.msra.mxu0 0
    %6123 = vmatprep.subr.bf16.mxu0 0
    %6124 = vmatpush1.bf16.msra.mxu0 0
    %6125 = vmatprep.subr.bf16.mxu0 0
    %6126 = vmatpush1.bf16.msra.mxu0 0
    %6127 = vmatprep.subr.bf16.mxu0 0
    %6128 = vmatpush1.bf16.msra.mxu0 0
    %6129 = vmatprep.subr.bf16.mxu0 0
    %6130 = vmatpush1.bf16.msra.mxu0 0
    %6131 = vmatprep.subr.bf16.mxu0 0
    %6132 = vmatpush1.bf16.msra.mxu0 0
    %6133 = vmatprep.subr.bf16.mxu0 0
    %6134 = vmatpush1.bf16.msra.mxu0 0
    %6135 = vmatprep.mubr.bf16.mxu0 0
    %6136 = vmatmul.mubr.bf16.gmra.mrb[0].mxu0 %v6092
    %v6137 = vpop.f32.mrb[0].mxu0
    %v6138 = vadd.f32 0.0, %v6137
    %v6139 = vpop.f32.mrb[0].mxu0
    %v6140 = vpop.f32.mrb[0].mxu0
    %v6141 = vadd.f32 0.0, %v6140
    %v6142 = vpop.f32.mrb[0].mxu0
    %6143 = vmatprep.mubr.bf16.mxu0 0
    %6144 = vmatmul.mubr.bf16.gmra.mrb[0].mxu0 %v6095
    %v6145 = vpop.f32.mrb[0].mxu0
    %v6146 = vadd.f32 0.0, %v6145
    %v6147 = vpop.f32.mrb[0].mxu0
    %v6148 = vpop.f32.mrb[0].mxu0
    %v6149 = vadd.f32 0.0, %v6148
    %v6150 = vpop.f32.mrb[0].mxu0
    %6151 = vmatprep.mubr.bf16.mxu0 0
    %6152 = vmatmul.mubr.bf16.gmra.mrb[0].mxu0 %v6098
    %v6153 = vpop.f32.mrb[0].mxu0
    %v6154 = vadd.f32 0.0, %v6153
    %v6155 = vpop.f32.mrb[0].mxu0
    %v6156 = vpop.f32.mrb[0].mxu0
    %v6157 = vadd.f32 0.0, %v6156
    %v6158 = vpop.f32.mrb[0].mxu0
    %6159 = vmatprep.mubr.bf16.mxu0 0
    %6160 = vmatmul.mubr.bf16.gmra.mrb[0].mxu0 %v6101
    %v6161 = vpop.f32.mrb[0].mxu0
    %v6162 = vadd.f32 0.0, %v6161
    %v6163 = vpop.f32.mrb[0].mxu0
    %v6164 = vpop.f32.mrb[0].mxu0
    %v6165 = vadd.f32 0.0, %v6164
    %v6166 = vpop.f32.mrb[0].mxu0
    %6167 = vdwg.mxu0
    %v6168 = vpack.c.bf16 %v6141, %v6138
    %v6169 = vpack.c.bf16 %v6149, %v6146
    %v6170 = vpack.c.bf16 %v6157, %v6154
    %v6171 = vpack.c.bf16 %v6165, %v6162
    %6172 = vrot.lane.b32.xlu0 %v5294, 32
    %v6173 = vpop.permute.xlu0 %6172
    %6174 = vrot.lane.b32.xlu0 %v5295, 32
    %v6175 = vpop.permute.xlu0 %6174
    %6176 = vrot.lane.b32.xlu0 %v5296, 32
    %v6177 = vpop.permute.xlu0 %6176
    %6178 = vrot.lane.b32.xlu0 %v5297, 32
    %v6179 = vpop.permute.xlu0 %6178
    %6180 = vrot.lane.b32.xlu0 %v5302, 32
    %v6181 = vpop.permute.xlu0 %6180
    %6182 = vrot.lane.b32.xlu0 %v5303, 32
    %v6183 = vpop.permute.xlu0 %6182
    %6184 = vrot.lane.b32.xlu0 %v5304, 32
    %v6185 = vpop.permute.xlu0 %6184
    %6186 = vrot.lane.b32.xlu0 %v5305, 32
    %v6187 = vpop.permute.xlu0 %6186
    %v6189 = vsel %vm836, %v6173, 0
    %v6192 = vsel %vm836, %v6175, 0
    %v6195 = vsel %vm836, %v6177, 0
    %v6198 = vsel %vm836, %v6179, 0
    %v6201 = vsel %vm836, %v6181, 0
    %v6204 = vsel %vm836, %v6183, 0
    %v6207 = vsel %vm836, %v6185, 0
    %v6210 = vsel %vm836, %v6187, 0
    %6212 = vmatprep.subr.bf16.mxu0 0
    %6213 = vmatpush1.bf16.xpose.msra.mxu0 %v6201
    %6214 = vmatprep.subr.bf16.mxu0 0
    %6215 = vmatpush1.bf16.xpose.msra.mxu0 %v6204
    %6216 = vmatprep.subr.bf16.mxu0 0
    %6217 = vmatpush1.bf16.xpose.msra.mxu0 %v6207
    %6218 = vmatprep.subr.bf16.mxu0 0
    %6219 = vmatpush1.bf16.xpose.msra.mxu0 %v6210
    %6220 = vmatprep.subr.bf16.mxu0 0
    %6221 = vmatpush1.bf16.xpose.msra.mxu0 0
    %6222 = vmatprep.subr.bf16.mxu0 0
    %6223 = vmatpush1.bf16.xpose.msra.mxu0 0
    %6224 = vmatprep.subr.bf16.mxu0 0
    %6225 = vmatpush1.bf16.xpose.msra.mxu0 0
    %6226 = vmatprep.subr.bf16.mxu0 0
    %6227 = vmatpush1.bf16.xpose.msra.mxu0 0
    %6228 = vmatprep.subr.bf16.mxu0 0
    %6229 = vmatpush1.bf16.xpose.msra.mxu0 0
    %6230 = vmatprep.subr.bf16.mxu0 0
    %6231 = vmatpush1.bf16.xpose.msra.mxu0 0
    %6232 = vmatprep.subr.bf16.mxu0 0
    %6233 = vmatpush1.bf16.xpose.msra.mxu0 0
    %6234 = vmatprep.subr.bf16.mxu0 0
    %6235 = vmatpush1.bf16.xpose.msra.mxu0 0
    %6236 = vmatprep.subr.bf16.mxu0 0
    %6237 = vmatpush1.bf16.xpose.msra.mxu0 0
    %6238 = vmatprep.subr.bf16.mxu0 0
    %6239 = vmatpush1.bf16.xpose.msra.mxu0 0
    %6240 = vmatprep.subr.bf16.mxu0 0
    %6241 = vmatpush1.bf16.xpose.msra.mxu0 0
    %6242 = vmatprep.subr.bf16.mxu0 0
    %6243 = vmatpush1.bf16.xpose.msra.mxu0 0
    %6244 = vmatprep.mubr.bf16.mxu0 0
    %6245 = vmatmul.mubr.bf16.gmra.mrb[0].mxu0 %v6189
    %v6246 = vpop.f32.mrb[0].mxu0
    %v6247 = vadd.f32 %v192, %v6246
    %v6248 = vpop.f32.mrb[0].mxu0
    %v6249 = vpop.f32.mrb[0].mxu0
    %v6250 = vadd.f32 %v193, %v6249
    %v6251 = vpop.f32.mrb[0].mxu0
    %6252 = vmatprep.mubr.bf16.mxu0 0
    %6253 = vmatmul.mubr.bf16.gmra.mrb[0].mxu0 %v6192
    %v6254 = vpop.f32.mrb[0].mxu0
    %v6255 = vadd.f32 %v194, %v6254
    %v6256 = vpop.f32.mrb[0].mxu0
    %v6257 = vpop.f32.mrb[0].mxu0
    %v6258 = vadd.f32 %v195, %v6257
    %v6259 = vpop.f32.mrb[0].mxu0
    %6260 = vmatprep.mubr.bf16.mxu0 0
    %6261 = vmatmul.mubr.bf16.gmra.mrb[0].mxu0 %v6195
    %v6262 = vpop.f32.mrb[0].mxu0
    %v6263 = vadd.f32 %v196, %v6262
    %v6264 = vpop.f32.mrb[0].mxu0
    %v6265 = vpop.f32.mrb[0].mxu0
    %v6266 = vadd.f32 %v197, %v6265
    %v6267 = vpop.f32.mrb[0].mxu0
    %6268 = vmatprep.mubr.bf16.mxu0 0
    %6269 = vmatmul.mubr.bf16.gmra.mrb[0].mxu0 %v6198
    %v6270 = vpop.f32.mrb[0].mxu0
    %v6271 = vadd.f32 %v198, %v6270
    %v6272 = vpop.f32.mrb[0].mxu0
    %v6273 = vpop.f32.mrb[0].mxu0
    %v6274 = vadd.f32 %v199, %v6273
    %v6275 = vpop.f32.mrb[0].mxu0
    %6276 = vdwg.mxu0
    %v6277 = vsel %vm926, %v6247, -inf
    %6278 = vmax.xlane.f32.xlu0 %v6277
    %v6279 = vpop.xlane.xlu0 %6278
    %v6280 = vsel %vm926, %v6250, -inf
    %6281 = vmax.xlane.f32.xlu0 %v6280
    %v6282 = vpop.xlane.xlu0 %6281
    %v6283 = vsel %vm926, %v6255, -inf
    %6284 = vmax.xlane.f32.xlu0 %v6283
    %v6285 = vpop.xlane.xlu0 %6284
    %v6286 = vsel %vm926, %v6258, -inf
    %6287 = vmax.xlane.f32.xlu0 %v6286
    %v6288 = vpop.xlane.xlu0 %6287
    %v6289 = vsel %vm926, %v6263, -inf
    %6290 = vmax.xlane.f32.xlu0 %v6289
    %v6291 = vpop.xlane.xlu0 %6290
    %v6292 = vsel %vm926, %v6266, -inf
    %6293 = vmax.xlane.f32.xlu0 %v6292
    %v6294 = vpop.xlane.xlu0 %6293
    %v6295 = vsel %vm926, %v6271, -inf
    %6296 = vmax.xlane.f32.xlu0 %v6295
    %v6297 = vpop.xlane.xlu0 %6296
    %v6298 = vsel %vm926, %v6274, -inf
    %6299 = vmax.xlane.f32.xlu0 %v6298
    %v6300 = vpop.xlane.xlu0 %6299
    %v6301 = vsub.f32 %v6247, %v6279
    %v6302 = vsub.f32 %v6250, %v6282
    %v6303 = vsub.f32 %v6255, %v6285
    %v6304 = vsub.f32 %v6258, %v6288
    %v6305 = vsub.f32 %v6263, %v6291
    %v6306 = vsub.f32 %v6266, %v6294
    %v6307 = vsub.f32 %v6271, %v6297
    %v6308 = vsub.f32 %v6274, %v6300
    %v6309 = vmul.f32 %v6301, 1.442695
    %v6310 = vpow.pop %v6309
    %v6311 = vmul.f32 %v6302, 1.442695
    %v6312 = vpow.pop %v6311
    %v6313 = vmul.f32 %v6303, 1.442695
    %v6314 = vpow.pop %v6313
    %v6315 = vmul.f32 %v6304, 1.442695
    %v6316 = vpow.pop %v6315
    %v6317 = vmul.f32 %v6305, 1.442695
    %v6318 = vpow.pop %v6317
    %v6319 = vmul.f32 %v6306, 1.442695
    %v6320 = vpow.pop %v6319
    %v6321 = vmul.f32 %v6307, 1.442695
    %v6322 = vpow.pop %v6321
    %v6323 = vmul.f32 %v6308, 1.442695
    %v6324 = vpow.pop %v6323
    %v6325 = vsel %vm926, %v6310, 0.0
    %6326 = vadd.xlane.f32.xlu0 %v6325
    %v6327 = vpop.xlane.xlu0 %6326
    %v6328 = vsel %vm926, %v6312, 0.0
    %6329 = vadd.xlane.f32.xlu0 %v6328
    %v6330 = vpop.xlane.xlu0 %6329
    %v6331 = vsel %vm926, %v6314, 0.0
    %6332 = vadd.xlane.f32.xlu0 %v6331
    %v6333 = vpop.xlane.xlu0 %6332
    %v6334 = vsel %vm926, %v6316, 0.0
    %6335 = vadd.xlane.f32.xlu0 %v6334
    %v6336 = vpop.xlane.xlu0 %6335
    %v6337 = vsel %vm926, %v6318, 0.0
    %6338 = vadd.xlane.f32.xlu0 %v6337
    %v6339 = vpop.xlane.xlu0 %6338
    %v6340 = vsel %vm926, %v6320, 0.0
    %6341 = vadd.xlane.f32.xlu0 %v6340
    %v6342 = vpop.xlane.xlu0 %6341
    %v6343 = vsel %vm926, %v6322, 0.0
    %6344 = vadd.xlane.f32.xlu0 %v6343
    %v6345 = vpop.xlane.xlu0 %6344
    %v6346 = vsel %vm926, %v6324, 0.0
    %6347 = vadd.xlane.f32.xlu0 %v6346
    %v6348 = vpop.xlane.xlu0 %6347
    %v6349 = vrcp.pop %v6327
    %v6350 = vrcp.pop %v6330
    %v6351 = vrcp.pop %v6333
    %v6352 = vrcp.pop %v6336
    %v6353 = vrcp.pop %v6339
    %v6354 = vrcp.pop %v6342
    %v6355 = vrcp.pop %v6345
    %v6356 = vrcp.pop %v6348
    %v6357 = vmul.f32 %v6310, %v6349
    %v6358 = vmul.f32 %v6312, %v6350
    %v6359 = vmul.f32 %v6314, %v6351
    %v6360 = vmul.f32 %v6316, %v6352
    %v6361 = vmul.f32 %v6318, %v6353
    %v6362 = vmul.f32 %v6320, %v6354
    %v6363 = vmul.f32 %v6322, %v6355
    %v6364 = vmul.f32 %v6324, %v6356
    %v6365 = vpack.c.bf16 %v6358, %v6357
    %v6366 = vpack.c.bf16 %v6360, %v6359
    %v6367 = vpack.c.bf16 %v6362, %v6361
    %v6368 = vpack.c.bf16 %v6364, %v6363
    %6369 = vrot.lane.b32.xlu0 %v5310, 32
    %v6370 = vpop.permute.xlu0 %6369
    %6371 = vrot.lane.b32.xlu0 %v5311, 32
    %v6372 = vpop.permute.xlu0 %6371
    %6373 = vrot.lane.b32.xlu0 %v5312, 32
    %v6374 = vpop.permute.xlu0 %6373
    %6375 = vrot.lane.b32.xlu0 %v5313, 32
    %v6376 = vpop.permute.xlu0 %6375
    %v6382 = vsel %vm926, %v6365, 0
    %v6385 = vsel %vm926, %v6366, 0
    %v6388 = vsel %vm926, %v6367, 0
    %v6391 = vsel %vm926, %v6368, 0
    %6393 = vmatprep.subr.bf16.mxu0 0
    %6394 = vmatpush1.bf16.msra.mxu0 %v6370
    %6395 = vmatprep.subr.bf16.mxu0 0
    %6396 = vmatpush1.bf16.msra.mxu0 %v6372
    %6397 = vmatprep.subr.bf16.mxu0 0
    %6398 = vmatpush1.bf16.msra.mxu0 %v6374
    %6399 = vmatprep.subr.bf16.mxu0 0
    %6400 = vmatpush1.bf16.msra.mxu0 %v6376
    %6401 = vmatprep.subr.bf16.mxu0 0
    %6402 = vmatpush1.bf16.msra.mxu0 0
    %6403 = vmatprep.subr.bf16.mxu0 0
    %6404 = vmatpush1.bf16.msra.mxu0 0
    %6405 = vmatprep.subr.bf16.mxu0 0
    %6406 = vmatpush1.bf16.msra.mxu0 0
    %6407 = vmatprep.subr.bf16.mxu0 0
    %6408 = vmatpush1.bf16.msra.mxu0 0
    %6409 = vmatprep.subr.bf16.mxu0 0
    %6410 = vmatpush1.bf16.msra.mxu0 0
    %6411 = vmatprep.subr.bf16.mxu0 0
    %6412 = vmatpush1.bf16.msra.mxu0 0
    %6413 = vmatprep.subr.bf16.mxu0 0
    %6414 = vmatpush1.bf16.msra.mxu0 0
    %6415 = vmatprep.subr.bf16.mxu0 0
    %6416 = vmatpush1.bf16.msra.mxu0 0
    %6417 = vmatprep.subr.bf16.mxu0 0
    %6418 = vmatpush1.bf16.msra.mxu0 0
    %6419 = vmatprep.subr.bf16.mxu0 0
    %6420 = vmatpush1.bf16.msra.mxu0 0
    %6421 = vmatprep.subr.bf16.mxu0 0
    %6422 = vmatpush1.bf16.msra.mxu0 0
    %6423 = vmatprep.subr.bf16.mxu0 0
    %6424 = vmatpush1.bf16.msra.mxu0 0
    %6425 = vmatprep.mubr.bf16.mxu0 0
    %6426 = vmatmul.mubr.bf16.gmra.mrb[0].mxu0 %v6382
    %v6427 = vpop.f32.mrb[0].mxu0
    %v6428 = vadd.f32 0.0, %v6427
    %v6429 = vpop.f32.mrb[0].mxu0
    %v6430 = vpop.f32.mrb[0].mxu0
    %v6431 = vadd.f32 0.0, %v6430
    %v6432 = vpop.f32.mrb[0].mxu0
    %6433 = vmatprep.mubr.bf16.mxu0 0
    %6434 = vmatmul.mubr.bf16.gmra.mrb[0].mxu0 %v6385
    %v6435 = vpop.f32.mrb[0].mxu0
    %v6436 = vadd.f32 0.0, %v6435
    %v6437 = vpop.f32.mrb[0].mxu0
    %v6438 = vpop.f32.mrb[0].mxu0
    %v6439 = vadd.f32 0.0, %v6438
    %v6440 = vpop.f32.mrb[0].mxu0
    %6441 = vmatprep.mubr.bf16.mxu0 0
    %6442 = vmatmul.mubr.bf16.gmra.mrb[0].mxu0 %v6388
    %v6443 = vpop.f32.mrb[0].mxu0
    %v6444 = vadd.f32 0.0, %v6443
    %v6445 = vpop.f32.mrb[0].mxu0
    %v6446 = vpop.f32.mrb[0].mxu0
    %v6447 = vadd.f32 0.0, %v6446
    %v6448 = vpop.f32.mrb[0].mxu0
    %6449 = vmatprep.mubr.bf16.mxu0 0
    %6450 = vmatmul.mubr.bf16.gmra.mrb[0].mxu0 %v6391
    %v6451 = vpop.f32.mrb[0].mxu0
    %v6452 = vadd.f32 0.0, %v6451
    %v6453 = vpop.f32.mrb[0].mxu0
    %v6454 = vpop.f32.mrb[0].mxu0
    %v6455 = vadd.f32 0.0, %v6454
    %v6456 = vpop.f32.mrb[0].mxu0
    %6457 = vdwg.mxu0
    %v6458 = vpack.c.bf16 %v6431, %v6428
    %v6459 = vpack.c.bf16 %v6439, %v6436
    %v6460 = vpack.c.bf16 %v6447, %v6444
    %v6461 = vpack.c.bf16 %v6455, %v6452
    %6466 = vrot.lane.b32.xlu0 %v5878, 32
    %v6467 = vpop.permute.xlu0 %6466
    %6468 = vrot.lane.b32.xlu0 %v5879, 32
    %v6469 = vpop.permute.xlu0 %6468
    %6470 = vrot.lane.b32.xlu0 %v5880, 32
    %v6471 = vpop.permute.xlu0 %6470
    %6472 = vrot.lane.b32.xlu0 %v5881, 32
    %v6473 = vpop.permute.xlu0 %6472
    %6478 = vrot.lane.b32.xlu0 %v6168, 64
    %v6479 = vpop.permute.xlu0 %6478
    %6480 = vrot.lane.b32.xlu0 %v6169, 64
    %v6481 = vpop.permute.xlu0 %6480
    %6482 = vrot.lane.b32.xlu0 %v6170, 64
    %v6483 = vpop.permute.xlu0 %6482
    %6484 = vrot.lane.b32.xlu0 %v6171, 64
    %v6485 = vpop.permute.xlu0 %6484
    %6490 = vrot.lane.b32.xlu0 %v6458, 96
    %v6491 = vpop.permute.xlu0 %6490
    %6492 = vrot.lane.b32.xlu0 %v6459, 96
    %v6493 = vpop.permute.xlu0 %6492
    %6494 = vrot.lane.b32.xlu0 %v6460, 96
    %v6495 = vpop.permute.xlu0 %6494
    %6496 = vrot.lane.b32.xlu0 %v6461, 96
    %v6497 = vpop.permute.xlu0 %6496
    %v6500 = vsel %vm836, %v5576, %v6467
    %v6503 = vsel %vm836, %v5577, %v6469
    %v6506 = vsel %vm836, %v5578, %v6471
    %v6509 = vsel %vm836, %v5579, %v6473
    %v6511 = vsel %vm926, %v6500, %v6479
    %v6513 = vsel %vm926, %v6503, %v6481
    %v6515 = vsel %vm926, %v6506, %v6483
    %v6517 = vsel %vm926, %v6509, %v6485
    %v6519 = vsel %vm2038, %v6511, %v6491
    %v6522 = vsel %vm2038, %v6513, %v6493
    %v6525 = vsel %vm2038, %v6515, %v6495
    %v6528 = vsel %vm2038, %v6517, %v6497
    %v6531 = vsel %vm836, %v5298, 0
    %v6534 = vsel %vm836, %v5299, 0
    %v6537 = vsel %vm836, %v5300, 0
    %v6540 = vsel %vm836, %v5301, 0
    %v6543 = vsel %vm836, %v5306, 0
    %v6546 = vsel %vm836, %v5307, 0
    %v6549 = vsel %vm836, %v5308, 0
    %v6552 = vsel %vm836, %v5309, 0
    %6554 = vmatprep.subr.bf16.mxu0 0
    %6555 = vmatpush1.bf16.xpose.msra.mxu0 %v6543
    %6556 = vmatprep.subr.bf16.mxu0 0
    %6557 = vmatpush1.bf16.xpose.msra.mxu0 %v6546
    %6558 = vmatprep.subr.bf16.mxu0 0
    %6559 = vmatpush1.bf16.xpose.msra.mxu0 %v6549
    %6560 = vmatprep.subr.bf16.mxu0 0
    %6561 = vmatpush1.bf16.xpose.msra.mxu0 %v6552
    %6562 = vmatprep.subr.bf16.mxu0 0
    %6563 = vmatpush1.bf16.xpose.msra.mxu0 0
    %6564 = vmatprep.subr.bf16.mxu0 0
    %6565 = vmatpush1.bf16.xpose.msra.mxu0 0
    %6566 = vmatprep.subr.bf16.mxu0 0
    %6567 = vmatpush1.bf16.xpose.msra.mxu0 0
    %6568 = vmatprep.subr.bf16.mxu0 0
    %6569 = vmatpush1.bf16.xpose.msra.mxu0 0
    %6570 = vmatprep.subr.bf16.mxu0 0
    %6571 = vmatpush1.bf16.xpose.msra.mxu0 0
    %6572 = vmatprep.subr.bf16.mxu0 0
    %6573 = vmatpush1.bf16.xpose.msra.mxu0 0
    %6574 = vmatprep.subr.bf16.mxu0 0
    %6575 = vmatpush1.bf16.xpose.msra.mxu0 0
    %6576 = vmatprep.subr.bf16.mxu0 0
    %6577 = vmatpush1.bf16.xpose.msra.mxu0 0
    %6578 = vmatprep.subr.bf16.mxu0 0
    %6579 = vmatpush1.bf16.xpose.msra.mxu0 0
    %6580 = vmatprep.subr.bf16.mxu0 0
    %6581 = vmatpush1.bf16.xpose.msra.mxu0 0
    %6582 = vmatprep.subr.bf16.mxu0 0
    %6583 = vmatpush1.bf16.xpose.msra.mxu0 0
    %6584 = vmatprep.subr.bf16.mxu0 0
    %6585 = vmatpush1.bf16.xpose.msra.mxu0 0
    %6586 = vmatprep.mubr.bf16.mxu0 0
    %6587 = vmatmul.mubr.bf16.gmra.mrb[0].mxu0 %v6531
    %v6588 = vpop.f32.mrb[0].mxu0
    %v6589 = vadd.f32 %v192, %v6588
    %v6590 = vpop.f32.mrb[0].mxu0
    %v6591 = vpop.f32.mrb[0].mxu0
    %v6592 = vadd.f32 %v193, %v6591
    %v6593 = vpop.f32.mrb[0].mxu0
    %6594 = vmatprep.mubr.bf16.mxu0 0
    %6595 = vmatmul.mubr.bf16.gmra.mrb[0].mxu0 %v6534
    %v6596 = vpop.f32.mrb[0].mxu0
    %v6597 = vadd.f32 %v194, %v6596
    %v6598 = vpop.f32.mrb[0].mxu0
    %v6599 = vpop.f32.mrb[0].mxu0
    %v6600 = vadd.f32 %v195, %v6599
    %v6601 = vpop.f32.mrb[0].mxu0
    %6602 = vmatprep.mubr.bf16.mxu0 0
    %6603 = vmatmul.mubr.bf16.gmra.mrb[0].mxu0 %v6537
    %v6604 = vpop.f32.mrb[0].mxu0
    %v6605 = vadd.f32 %v196, %v6604
    %v6606 = vpop.f32.mrb[0].mxu0
    %v6607 = vpop.f32.mrb[0].mxu0
    %v6608 = vadd.f32 %v197, %v6607
    %v6609 = vpop.f32.mrb[0].mxu0
    %6610 = vmatprep.mubr.bf16.mxu0 0
    %6611 = vmatmul.mubr.bf16.gmra.mrb[0].mxu0 %v6540
    %v6612 = vpop.f32.mrb[0].mxu0
    %v6613 = vadd.f32 %v198, %v6612
    %v6614 = vpop.f32.mrb[0].mxu0
    %v6615 = vpop.f32.mrb[0].mxu0
    %v6616 = vadd.f32 %v199, %v6615
    %v6617 = vpop.f32.mrb[0].mxu0
    %6618 = vdwg.mxu0
    %v6619 = vsel %vm926, %v6589, -inf
    %6620 = vmax.xlane.f32.xlu0 %v6619
    %v6621 = vpop.xlane.xlu0 %6620
    %v6622 = vsel %vm926, %v6592, -inf
    %6623 = vmax.xlane.f32.xlu0 %v6622
    %v6624 = vpop.xlane.xlu0 %6623
    %v6625 = vsel %vm926, %v6597, -inf
    %6626 = vmax.xlane.f32.xlu0 %v6625
    %v6627 = vpop.xlane.xlu0 %6626
    %v6628 = vsel %vm926, %v6600, -inf
    %6629 = vmax.xlane.f32.xlu0 %v6628
    %v6630 = vpop.xlane.xlu0 %6629
    %v6631 = vsel %vm926, %v6605, -inf
    %6632 = vmax.xlane.f32.xlu0 %v6631
    %v6633 = vpop.xlane.xlu0 %6632
    %v6634 = vsel %vm926, %v6608, -inf
    %6635 = vmax.xlane.f32.xlu0 %v6634
    %v6636 = vpop.xlane.xlu0 %6635
    %v6637 = vsel %vm926, %v6613, -inf
    %6638 = vmax.xlane.f32.xlu0 %v6637
    %v6639 = vpop.xlane.xlu0 %6638
    %v6640 = vsel %vm926, %v6616, -inf
    %6641 = vmax.xlane.f32.xlu0 %v6640
    %v6642 = vpop.xlane.xlu0 %6641
    %v6643 = vsub.f32 %v6589, %v6621
    %v6644 = vsub.f32 %v6592, %v6624
    %v6645 = vsub.f32 %v6597, %v6627
    %v6646 = vsub.f32 %v6600, %v6630
    %v6647 = vsub.f32 %v6605, %v6633
    %v6648 = vsub.f32 %v6608, %v6636
    %v6649 = vsub.f32 %v6613, %v6639
    %v6650 = vsub.f32 %v6616, %v6642
    %v6651 = vmul.f32 %v6643, 1.442695
    %v6652 = vpow.pop %v6651
    %v6653 = vmul.f32 %v6644, 1.442695
    %v6654 = vpow.pop %v6653
    %v6655 = vmul.f32 %v6645, 1.442695
    %v6656 = vpow.pop %v6655
    %v6657 = vmul.f32 %v6646, 1.442695
    %v6658 = vpow.pop %v6657
    %v6659 = vmul.f32 %v6647, 1.442695
    %v6660 = vpow.pop %v6659
    %v6661 = vmul.f32 %v6648, 1.442695
    %v6662 = vpow.pop %v6661
    %v6663 = vmul.f32 %v6649, 1.442695
    %v6664 = vpow.pop %v6663
    %v6665 = vmul.f32 %v6650, 1.442695
    %v6666 = vpow.pop %v6665
    %v6667 = vsel %vm926, %v6652, 0.0
    %6668 = vadd.xlane.f32.xlu0 %v6667
    %v6669 = vpop.xlane.xlu0 %6668
    %v6670 = vsel %vm926, %v6654, 0.0
    %6671 = vadd.xlane.f32.xlu0 %v6670
    %v6672 = vpop.xlane.xlu0 %6671
    %v6673 = vsel %vm926, %v6656, 0.0
    %6674 = vadd.xlane.f32.xlu0 %v6673
    %v6675 = vpop.xlane.xlu0 %6674
    %v6676 = vsel %vm926, %v6658, 0.0
    %6677 = vadd.xlane.f32.xlu0 %v6676
    %v6678 = vpop.xlane.xlu0 %6677
    %v6679 = vsel %vm926, %v6660, 0.0
    %6680 = vadd.xlane.f32.xlu0 %v6679
    %v6681 = vpop.xlane.xlu0 %6680
    %v6682 = vsel %vm926, %v6662, 0.0
    %6683 = vadd.xlane.f32.xlu0 %v6682
    %v6684 = vpop.xlane.xlu0 %6683
    %v6685 = vsel %vm926, %v6664, 0.0
    %6686 = vadd.xlane.f32.xlu0 %v6685
    %v6687 = vpop.xlane.xlu0 %6686
    %v6688 = vsel %vm926, %v6666, 0.0
    %6689 = vadd.xlane.f32.xlu0 %v6688
    %v6690 = vpop.xlane.xlu0 %6689
    %v6691 = vrcp.pop %v6669
    %v6692 = vrcp.pop %v6672
    %v6693 = vrcp.pop %v6675
    %v6694 = vrcp.pop %v6678
    %v6695 = vrcp.pop %v6681
    %v6696 = vrcp.pop %v6684
    %v6697 = vrcp.pop %v6687
    %v6698 = vrcp.pop %v6690
    %v6699 = vmul.f32 %v6652, %v6691
    %v6700 = vmul.f32 %v6654, %v6692
    %v6701 = vmul.f32 %v6656, %v6693
    %v6702 = vmul.f32 %v6658, %v6694
    %v6703 = vmul.f32 %v6660, %v6695
    %v6704 = vmul.f32 %v6662, %v6696
    %v6705 = vmul.f32 %v6664, %v6697
    %v6706 = vmul.f32 %v6666, %v6698
    %v6707 = vpack.c.bf16 %v6700, %v6699
    %v6708 = vpack.c.bf16 %v6702, %v6701
    %v6709 = vpack.c.bf16 %v6704, %v6703
    %v6710 = vpack.c.bf16 %v6706, %v6705
    %v6712 = vsel %vm926, %v6707, 0
    %v6715 = vsel %vm926, %v6708, 0
    %v6718 = vsel %vm926, %v6709, 0
    %v6721 = vsel %vm926, %v6710, 0
    %6723 = vmatprep.subr.bf16.mxu0 0
    %6724 = vmatpush1.bf16.msra.mxu0 %v5314
    %6725 = vmatprep.subr.bf16.mxu0 0
    %6726 = vmatpush1.bf16.msra.mxu0 %v5315
    %6727 = vmatprep.subr.bf16.mxu0 0
    %6728 = vmatpush1.bf16.msra.mxu0 %v5316
    %6729 = vmatprep.subr.bf16.mxu0 0
    %6730 = vmatpush1.bf16.msra.mxu0 %v5317
    %6731 = vmatprep.subr.bf16.mxu0 0
    %6732 = vmatpush1.bf16.msra.mxu0 0
    %6733 = vmatprep.subr.bf16.mxu0 0
    %6734 = vmatpush1.bf16.msra.mxu0 0
    %6735 = vmatprep.subr.bf16.mxu0 0
    %6736 = vmatpush1.bf16.msra.mxu0 0
    %6737 = vmatprep.subr.bf16.mxu0 0
    %6738 = vmatpush1.bf16.msra.mxu0 0
    %6739 = vmatprep.subr.bf16.mxu0 0
    %6740 = vmatpush1.bf16.msra.mxu0 0
    %6741 = vmatprep.subr.bf16.mxu0 0
    %6742 = vmatpush1.bf16.msra.mxu0 0
    %6743 = vmatprep.subr.bf16.mxu0 0
    %6744 = vmatpush1.bf16.msra.mxu0 0
    %6745 = vmatprep.subr.bf16.mxu0 0
    %6746 = vmatpush1.bf16.msra.mxu0 0
    %6747 = vmatprep.subr.bf16.mxu0 0
    %6748 = vmatpush1.bf16.msra.mxu0 0
    %6749 = vmatprep.subr.bf16.mxu0 0
    %6750 = vmatpush1.bf16.msra.mxu0 0
    %6751 = vmatprep.subr.bf16.mxu0 0
    %6752 = vmatpush1.bf16.msra.mxu0 0
    %6753 = vmatprep.subr.bf16.mxu0 0
    %6754 = vmatpush1.bf16.msra.mxu0 0
    %6755 = vmatprep.mubr.bf16.mxu0 0
    %6756 = vmatmul.mubr.bf16.gmra.mrb[0].mxu0 %v6712
    %v6757 = vpop.f32.mrb[0].mxu0
    %v6758 = vadd.f32 0.0, %v6757
    %v6759 = vpop.f32.mrb[0].mxu0
    %v6760 = vpop.f32.mrb[0].mxu0
    %v6761 = vadd.f32 0.0, %v6760
    %v6762 = vpop.f32.mrb[0].mxu0
    %6763 = vmatprep.mubr.bf16.mxu0 0
    %6764 = vmatmul.mubr.bf16.gmra.mrb[0].mxu0 %v6715
    %v6765 = vpop.f32.mrb[0].mxu0
    %v6766 = vadd.f32 0.0, %v6765
    %v6767 = vpop.f32.mrb[0].mxu0
    %v6768 = vpop.f32.mrb[0].mxu0
    %v6769 = vadd.f32 0.0, %v6768
    %v6770 = vpop.f32.mrb[0].mxu0
    %6771 = vmatprep.mubr.bf16.mxu0 0
    %6772 = vmatmul.mubr.bf16.gmra.mrb[0].mxu0 %v6718
    %v6773 = vpop.f32.mrb[0].mxu0
    %v6774 = vadd.f32 0.0, %v6773
    %v6775 = vpop.f32.mrb[0].mxu0
    %v6776 = vpop.f32.mrb[0].mxu0
    %v6777 = vadd.f32 0.0, %v6776
    %v6778 = vpop.f32.mrb[0].mxu0
    %6779 = vmatprep.mubr.bf16.mxu0 0
    %6780 = vmatmul.mubr.bf16.gmra.mrb[0].mxu0 %v6721
    %v6781 = vpop.f32.mrb[0].mxu0
    %v6782 = vadd.f32 0.0, %v6781
    %v6783 = vpop.f32.mrb[0].mxu0
    %v6784 = vpop.f32.mrb[0].mxu0
    %v6785 = vadd.f32 0.0, %v6784
    %v6786 = vpop.f32.mrb[0].mxu0
    %6787 = vdwg.mxu0
    %v6788 = vpack.c.bf16 %v6761, %v6758
    %v6789 = vpack.c.bf16 %v6769, %v6766
    %v6790 = vpack.c.bf16 %v6777, %v6774
    %v6791 = vpack.c.bf16 %v6785, %v6782
    %6796 = vrot.lane.b32.xlu0 %v5298, 96
    %v6797 = vpop.permute.xlu0 %6796
    %6798 = vrot.lane.b32.xlu0 %v5299, 96
    %v6799 = vpop.permute.xlu0 %6798
    %6800 = vrot.lane.b32.xlu0 %v5300, 96
    %v6801 = vpop.permute.xlu0 %6800
    %6802 = vrot.lane.b32.xlu0 %v5301, 96
    %v6803 = vpop.permute.xlu0 %6802
    %6808 = vrot.lane.b32.xlu0 %v5306, 96
    %v6809 = vpop.permute.xlu0 %6808
    %6810 = vrot.lane.b32.xlu0 %v5307, 96
    %v6811 = vpop.permute.xlu0 %6810
    %6812 = vrot.lane.b32.xlu0 %v5308, 96
    %v6813 = vpop.permute.xlu0 %6812
    %6814 = vrot.lane.b32.xlu0 %v5309, 96
    %v6815 = vpop.permute.xlu0 %6814
    %v6817 = vsel %vm836, %v6797, 0
    %v6820 = vsel %vm836, %v6799, 0
    %v6823 = vsel %vm836, %v6801, 0
    %v6826 = vsel %vm836, %v6803, 0
    %v6829 = vsel %vm836, %v6809, 0
    %v6832 = vsel %vm836, %v6811, 0
    %v6835 = vsel %vm836, %v6813, 0
    %v6838 = vsel %vm836, %v6815, 0
    %6840 = vmatprep.subr.bf16.mxu0 0
    %6841 = vmatpush1.bf16.xpose.msra.mxu0 %v6829
    %6842 = vmatprep.subr.bf16.mxu0 0
    %6843 = vmatpush1.bf16.xpose.msra.mxu0 %v6832
    %6844 = vmatprep.subr.bf16.mxu0 0
    %6845 = vmatpush1.bf16.xpose.msra.mxu0 %v6835
    %6846 = vmatprep.subr.bf16.mxu0 0
    %6847 = vmatpush1.bf16.xpose.msra.mxu0 %v6838
    %6848 = vmatprep.subr.bf16.mxu0 0
    %6849 = vmatpush1.bf16.xpose.msra.mxu0 0
    %6850 = vmatprep.subr.bf16.mxu0 0
    %6851 = vmatpush1.bf16.xpose.msra.mxu0 0
    %6852 = vmatprep.subr.bf16.mxu0 0
    %6853 = vmatpush1.bf16.xpose.msra.mxu0 0
    %6854 = vmatprep.subr.bf16.mxu0 0
    %6855 = vmatpush1.bf16.xpose.msra.mxu0 0
    %6856 = vmatprep.subr.bf16.mxu0 0
    %6857 = vmatpush1.bf16.xpose.msra.mxu0 0
    %6858 = vmatprep.subr.bf16.mxu0 0
    %6859 = vmatpush1.bf16.xpose.msra.mxu0 0
    %6860 = vmatprep.subr.bf16.mxu0 0
    %6861 = vmatpush1.bf16.xpose.msra.mxu0 0
    %6862 = vmatprep.subr.bf16.mxu0 0
    %6863 = vmatpush1.bf16.xpose.msra.mxu0 0
    %6864 = vmatprep.subr.bf16.mxu0 0
    %6865 = vmatpush1.bf16.xpose.msra.mxu0 0
    %6866 = vmatprep.subr.bf16.mxu0 0
    %6867 = vmatpush1.bf16.xpose.msra.mxu0 0
    %6868 = vmatprep.subr.bf16.mxu0 0
    %6869 = vmatpush1.bf16.xpose.msra.mxu0 0
    %6870 = vmatprep.subr.bf16.mxu0 0
    %6871 = vmatpush1.bf16.xpose.msra.mxu0 0
    %6872 = vmatprep.mubr.bf16.mxu0 0
    %6873 = vmatmul.mubr.bf16.gmra.mrb[0].mxu0 %v6817
    %v6874 = vpop.f32.mrb[0].mxu0
    %v6875 = vadd.f32 %v192, %v6874
    %v6876 = vpop.f32.mrb[0].mxu0
    %v6877 = vpop.f32.mrb[0].mxu0
    %v6878 = vadd.f32 %v193, %v6877
    %v6879 = vpop.f32.mrb[0].mxu0
    %6880 = vmatprep.mubr.bf16.mxu0 0
    %6881 = vmatmul.mubr.bf16.gmra.mrb[0].mxu0 %v6820
    %v6882 = vpop.f32.mrb[0].mxu0
    %v6883 = vadd.f32 %v194, %v6882
    %v6884 = vpop.f32.mrb[0].mxu0
    %v6885 = vpop.f32.mrb[0].mxu0
    %v6886 = vadd.f32 %v195, %v6885
    %v6887 = vpop.f32.mrb[0].mxu0
    %6888 = vmatprep.mubr.bf16.mxu0 0
    %6889 = vmatmul.mubr.bf16.gmra.mrb[0].mxu0 %v6823
    %v6890 = vpop.f32.mrb[0].mxu0
    %v6891 = vadd.f32 %v196, %v6890
    %v6892 = vpop.f32.mrb[0].mxu0
    %v6893 = vpop.f32.mrb[0].mxu0
    %v6894 = vadd.f32 %v197, %v6893
    %v6895 = vpop.f32.mrb[0].mxu0
    %6896 = vmatprep.mubr.bf16.mxu0 0
    %6897 = vmatmul.mubr.bf16.gmra.mrb[0].mxu0 %v6826
    %v6898 = vpop.f32.mrb[0].mxu0
    %v6899 = vadd.f32 %v198, %v6898
    %v6900 = vpop.f32.mrb[0].mxu0
    %v6901 = vpop.f32.mrb[0].mxu0
    %v6902 = vadd.f32 %v199, %v6901
    %v6903 = vpop.f32.mrb[0].mxu0
    %6904 = vdwg.mxu0
    %v6905 = vsel %vm926, %v6875, -inf
    %6906 = vmax.xlane.f32.xlu0 %v6905
    %v6907 = vpop.xlane.xlu0 %6906
    %v6908 = vsel %vm926, %v6878, -inf
    %6909 = vmax.xlane.f32.xlu0 %v6908
    %v6910 = vpop.xlane.xlu0 %6909
    %v6911 = vsel %vm926, %v6883, -inf
    %6912 = vmax.xlane.f32.xlu0 %v6911
    %v6913 = vpop.xlane.xlu0 %6912
    %v6914 = vsel %vm926, %v6886, -inf
    %6915 = vmax.xlane.f32.xlu0 %v6914
    %v6916 = vpop.xlane.xlu0 %6915
    %v6917 = vsel %vm926, %v6891, -inf
    %6918 = vmax.xlane.f32.xlu0 %v6917
    %v6919 = vpop.xlane.xlu0 %6918
    %v6920 = vsel %vm926, %v6894, -inf
    %6921 = vmax.xlane.f32.xlu0 %v6920
    %v6922 = vpop.xlane.xlu0 %6921
    %v6923 = vsel %vm926, %v6899, -inf
    %6924 = vmax.xlane.f32.xlu0 %v6923
    %v6925 = vpop.xlane.xlu0 %6924
    %v6926 = vsel %vm926, %v6902, -inf
    %6927 = vmax.xlane.f32.xlu0 %v6926
    %v6928 = vpop.xlane.xlu0 %6927
    %v6929 = vsub.f32 %v6875, %v6907
    %v6930 = vsub.f32 %v6878, %v6910
    %v6931 = vsub.f32 %v6883, %v6913
    %v6932 = vsub.f32 %v6886, %v6916
    %v6933 = vsub.f32 %v6891, %v6919
    %v6934 = vsub.f32 %v6894, %v6922
    %v6935 = vsub.f32 %v6899, %v6925
    %v6936 = vsub.f32 %v6902, %v6928
    %v6937 = vmul.f32 %v6929, 1.442695
    %v6938 = vpow.pop %v6937
    %v6939 = vmul.f32 %v6930, 1.442695
    %v6940 = vpow.pop %v6939
    %v6941 = vmul.f32 %v6931, 1.442695
    %v6942 = vpow.pop %v6941
    %v6943 = vmul.f32 %v6932, 1.442695
    %v6944 = vpow.pop %v6943
    %v6945 = vmul.f32 %v6933, 1.442695
    %v6946 = vpow.pop %v6945
    %v6947 = vmul.f32 %v6934, 1.442695
    %v6948 = vpow.pop %v6947
    %v6949 = vmul.f32 %v6935, 1.442695
    %v6950 = vpow.pop %v6949
    %v6951 = vmul.f32 %v6936, 1.442695
    %v6952 = vpow.pop %v6951
    %v6953 = vsel %vm926, %v6938, 0.0
    %6954 = vadd.xlane.f32.xlu0 %v6953
    %v6955 = vpop.xlane.xlu0 %6954
    %v6956 = vsel %vm926, %v6940, 0.0
    %6957 = vadd.xlane.f32.xlu0 %v6956
    %v6958 = vpop.xlane.xlu0 %6957
    %v6959 = vsel %vm926, %v6942, 0.0
    %6960 = vadd.xlane.f32.xlu0 %v6959
    %v6961 = vpop.xlane.xlu0 %6960
    %v6962 = vsel %vm926, %v6944, 0.0
    %6963 = vadd.xlane.f32.xlu0 %v6962
    %v6964 = vpop.xlane.xlu0 %6963
    %v6965 = vsel %vm926, %v6946, 0.0
    %6966 = vadd.xlane.f32.xlu0 %v6965
    %v6967 = vpop.xlane.xlu0 %6966
    %v6968 = vsel %vm926, %v6948, 0.0
    %6969 = vadd.xlane.f32.xlu0 %v6968
    %v6970 = vpop.xlane.xlu0 %6969
    %v6971 = vsel %vm926, %v6950, 0.0
    %6972 = vadd.xlane.f32.xlu0 %v6971
    %v6973 = vpop.xlane.xlu0 %6972
    %v6974 = vsel %vm926, %v6952, 0.0
    %6975 = vadd.xlane.f32.xlu0 %v6974
    %v6976 = vpop.xlane.xlu0 %6975
    %v6977 = vrcp.pop %v6955
    %v6978 = vrcp.pop %v6958
    %v6979 = vrcp.pop %v6961
    %v6980 = vrcp.pop %v6964
    %v6981 = vrcp.pop %v6967
    %v6982 = vrcp.pop %v6970
    %v6983 = vrcp.pop %v6973
    %v6984 = vrcp.pop %v6976
    %v6985 = vmul.f32 %v6938, %v6977
    %v6986 = vmul.f32 %v6940, %v6978
    %v6987 = vmul.f32 %v6942, %v6979
    %v6988 = vmul.f32 %v6944, %v6980
    %v6989 = vmul.f32 %v6946, %v6981
    %v6990 = vmul.f32 %v6948, %v6982
    %v6991 = vmul.f32 %v6950, %v6983
    %v6992 = vmul.f32 %v6952, %v6984
    %v6993 = vpack.c.bf16 %v6986, %v6985
    %v6994 = vpack.c.bf16 %v6988, %v6987
    %v6995 = vpack.c.bf16 %v6990, %v6989
    %v6996 = vpack.c.bf16 %v6992, %v6991
    %7001 = vrot.lane.b32.xlu0 %v5314, 96
    %v7002 = vpop.permute.xlu0 %7001
    %7003 = vrot.lane.b32.xlu0 %v5315, 96
    %v7004 = vpop.permute.xlu0 %7003
    %7005 = vrot.lane.b32.xlu0 %v5316, 96
    %v7006 = vpop.permute.xlu0 %7005
    %7007 = vrot.lane.b32.xlu0 %v5317, 96
    %v7008 = vpop.permute.xlu0 %7007
    %v7014 = vsel %vm926, %v6993, 0
    %v7017 = vsel %vm926, %v6994, 0
    %v7020 = vsel %vm926, %v6995, 0
    %v7023 = vsel %vm926, %v6996, 0
    %7025 = vmatprep.subr.bf16.mxu0 0
    %7026 = vmatpush1.bf16.msra.mxu0 %v7002
    %7027 = vmatprep.subr.bf16.mxu0 0
    %7028 = vmatpush1.bf16.msra.mxu0 %v7004
    %7029 = vmatprep.subr.bf16.mxu0 0
    %7030 = vmatpush1.bf16.msra.mxu0 %v7006
    %7031 = vmatprep.subr.bf16.mxu0 0
    %7032 = vmatpush1.bf16.msra.mxu0 %v7008
    %7033 = vmatprep.subr.bf16.mxu0 0
    %7034 = vmatpush1.bf16.msra.mxu0 0
    %7035 = vmatprep.subr.bf16.mxu0 0
    %7036 = vmatpush1.bf16.msra.mxu0 0
    %7037 = vmatprep.subr.bf16.mxu0 0
    %7038 = vmatpush1.bf16.msra.mxu0 0
    %7039 = vmatprep.subr.bf16.mxu0 0
    %7040 = vmatpush1.bf16.msra.mxu0 0
    %7041 = vmatprep.subr.bf16.mxu0 0
    %7042 = vmatpush1.bf16.msra.mxu0 0
    %7043 = vmatprep.subr.bf16.mxu0 0
    %7044 = vmatpush1.bf16.msra.mxu0 0
    %7045 = vmatprep.subr.bf16.mxu0 0
    %7046 = vmatpush1.bf16.msra.mxu0 0
    %7047 = vmatprep.subr.bf16.mxu0 0
    %7048 = vmatpush1.bf16.msra.mxu0 0
    %7049 = vmatprep.subr.bf16.mxu0 0
    %7050 = vmatpush1.bf16.msra.mxu0 0
    %7051 = vmatprep.subr.bf16.mxu0 0
    %7052 = vmatpush1.bf16.msra.mxu0 0
    %7053 = vmatprep.subr.bf16.mxu0 0
    %7054 = vmatpush1.bf16.msra.mxu0 0
    %7055 = vmatprep.subr.bf16.mxu0 0
    %7056 = vmatpush1.bf16.msra.mxu0 0
    %7057 = vmatprep.mubr.bf16.mxu0 0
    %7058 = vmatmul.mubr.bf16.gmra.mrb[0].mxu0 %v7014
    %v7059 = vpop.f32.mrb[0].mxu0
    %v7060 = vadd.f32 0.0, %v7059
    %v7061 = vpop.f32.mrb[0].mxu0
    %v7062 = vpop.f32.mrb[0].mxu0
    %v7063 = vadd.f32 0.0, %v7062
    %v7064 = vpop.f32.mrb[0].mxu0
    %7065 = vmatprep.mubr.bf16.mxu0 0
    %7066 = vmatmul.mubr.bf16.gmra.mrb[0].mxu0 %v7017
    %v7067 = vpop.f32.mrb[0].mxu0
    %v7068 = vadd.f32 0.0, %v7067
    %v7069 = vpop.f32.mrb[0].mxu0
    %v7070 = vpop.f32.mrb[0].mxu0
    %v7071 = vadd.f32 0.0, %v7070
    %v7072 = vpop.f32.mrb[0].mxu0
    %7073 = vmatprep.mubr.bf16.mxu0 0
    %7074 = vmatmul.mubr.bf16.gmra.mrb[0].mxu0 %v7020
    %v7075 = vpop.f32.mrb[0].mxu0
    %v7076 = vadd.f32 0.0, %v7075
    %v7077 = vpop.f32.mrb[0].mxu0
    %v7078 = vpop.f32.mrb[0].mxu0
    %v7079 = vadd.f32 0.0, %v7078
    %v7080 = vpop.f32.mrb[0].mxu0
    %7081 = vmatprep.mubr.bf16.mxu0 0
    %7082 = vmatmul.mubr.bf16.gmra.mrb[0].mxu0 %v7023
    %v7083 = vpop.f32.mrb[0].mxu0
    %v7084 = vadd.f32 0.0, %v7083
    %v7085 = vpop.f32.mrb[0].mxu0
    %v7086 = vpop.f32.mrb[0].mxu0
    %v7087 = vadd.f32 0.0, %v7086
    %v7088 = vpop.f32.mrb[0].mxu0
    %7089 = vdwg.mxu0
    %v7090 = vpack.c.bf16 %v7063, %v7060
    %v7091 = vpack.c.bf16 %v7071, %v7068
    %v7092 = vpack.c.bf16 %v7079, %v7076
    %v7093 = vpack.c.bf16 %v7087, %v7084
    %7094 = vrot.lane.b32.xlu0 %v5298, 64
    %v7095 = vpop.permute.xlu0 %7094
    %7096 = vrot.lane.b32.xlu0 %v5299, 64
    %v7097 = vpop.permute.xlu0 %7096
    %7098 = vrot.lane.b32.xlu0 %v5300, 64
    %v7099 = vpop.permute.xlu0 %7098
    %7100 = vrot.lane.b32.xlu0 %v5301, 64
    %v7101 = vpop.permute.xlu0 %7100
    %7102 = vrot.lane.b32.xlu0 %v5306, 64
    %v7103 = vpop.permute.xlu0 %7102
    %7104 = vrot.lane.b32.xlu0 %v5307, 64
    %v7105 = vpop.permute.xlu0 %7104
    %7106 = vrot.lane.b32.xlu0 %v5308, 64
    %v7107 = vpop.permute.xlu0 %7106
    %7108 = vrot.lane.b32.xlu0 %v5309, 64
    %v7109 = vpop.permute.xlu0 %7108
    %v7111 = vsel %vm836, %v7095, 0
    %v7114 = vsel %vm836, %v7097, 0
    %v7117 = vsel %vm836, %v7099, 0
    %v7120 = vsel %vm836, %v7101, 0
    %v7123 = vsel %vm836, %v7103, 0
    %v7126 = vsel %vm836, %v7105, 0
    %v7129 = vsel %vm836, %v7107, 0
    %v7132 = vsel %vm836, %v7109, 0
    %7134 = vmatprep.subr.bf16.mxu0 0
    %7135 = vmatpush1.bf16.xpose.msra.mxu0 %v7123
    %7136 = vmatprep.subr.bf16.mxu0 0
    %7137 = vmatpush1.bf16.xpose.msra.mxu0 %v7126
    %7138 = vmatprep.subr.bf16.mxu0 0
    %7139 = vmatpush1.bf16.xpose.msra.mxu0 %v7129
    %7140 = vmatprep.subr.bf16.mxu0 0
    %7141 = vmatpush1.bf16.xpose.msra.mxu0 %v7132
    %7142 = vmatprep.subr.bf16.mxu0 0
    %7143 = vmatpush1.bf16.xpose.msra.mxu0 0
    %7144 = vmatprep.subr.bf16.mxu0 0
    %7145 = vmatpush1.bf16.xpose.msra.mxu0 0
    %7146 = vmatprep.subr.bf16.mxu0 0
    %7147 = vmatpush1.bf16.xpose.msra.mxu0 0
    %7148 = vmatprep.subr.bf16.mxu0 0
    %7149 = vmatpush1.bf16.xpose.msra.mxu0 0
    %7150 = vmatprep.subr.bf16.mxu0 0
    %7151 = vmatpush1.bf16.xpose.msra.mxu0 0
    %7152 = vmatprep.subr.bf16.mxu0 0
    %7153 = vmatpush1.bf16.xpose.msra.mxu0 0
    %7154 = vmatprep.subr.bf16.mxu0 0
    %7155 = vmatpush1.bf16.xpose.msra.mxu0 0
    %7156 = vmatprep.subr.bf16.mxu0 0
    %7157 = vmatpush1.bf16.xpose.msra.mxu0 0
    %7158 = vmatprep.subr.bf16.mxu0 0
    %7159 = vmatpush1.bf16.xpose.msra.mxu0 0
    %7160 = vmatprep.subr.bf16.mxu0 0
    %7161 = vmatpush1.bf16.xpose.msra.mxu0 0
    %7162 = vmatprep.subr.bf16.mxu0 0
    %7163 = vmatpush1.bf16.xpose.msra.mxu0 0
    %7164 = vmatprep.subr.bf16.mxu0 0
    %7165 = vmatpush1.bf16.xpose.msra.mxu0 0
    %7166 = vmatprep.mubr.bf16.mxu0 0
    %7167 = vmatmul.mubr.bf16.gmra.mrb[0].mxu0 %v7111
    %v7168 = vpop.f32.mrb[0].mxu0
    %v7169 = vadd.f32 %v192, %v7168
    %v7170 = vpop.f32.mrb[0].mxu0
    %v7171 = vpop.f32.mrb[0].mxu0
    %v7172 = vadd.f32 %v193, %v7171
    %v7173 = vpop.f32.mrb[0].mxu0
    %7174 = vmatprep.mubr.bf16.mxu0 0
    %7175 = vmatmul.mubr.bf16.gmra.mrb[0].mxu0 %v7114
    %v7176 = vpop.f32.mrb[0].mxu0
    %v7177 = vadd.f32 %v194, %v7176
    %v7178 = vpop.f32.mrb[0].mxu0
    %v7179 = vpop.f32.mrb[0].mxu0
    %v7180 = vadd.f32 %v195, %v7179
    %v7181 = vpop.f32.mrb[0].mxu0
    %7182 = vmatprep.mubr.bf16.mxu0 0
    %7183 = vmatmul.mubr.bf16.gmra.mrb[0].mxu0 %v7117
    %v7184 = vpop.f32.mrb[0].mxu0
    %v7185 = vadd.f32 %v196, %v7184
    %v7186 = vpop.f32.mrb[0].mxu0
    %v7187 = vpop.f32.mrb[0].mxu0
    %v7188 = vadd.f32 %v197, %v7187
    %v7189 = vpop.f32.mrb[0].mxu0
    %7190 = vmatprep.mubr.bf16.mxu0 0
    %7191 = vmatmul.mubr.bf16.gmra.mrb[0].mxu0 %v7120
    %v7192 = vpop.f32.mrb[0].mxu0
    %v7193 = vadd.f32 %v198, %v7192
    %v7194 = vpop.f32.mrb[0].mxu0
    %v7195 = vpop.f32.mrb[0].mxu0
    %v7196 = vadd.f32 %v199, %v7195
    %v7197 = vpop.f32.mrb[0].mxu0
    %7198 = vdwg.mxu0
    %v7199 = vsel %vm926, %v7169, -inf
    %7200 = vmax.xlane.f32.xlu0 %v7199
    %v7201 = vpop.xlane.xlu0 %7200
    %v7202 = vsel %vm926, %v7172, -inf
    %7203 = vmax.xlane.f32.xlu0 %v7202
    %v7204 = vpop.xlane.xlu0 %7203
    %v7205 = vsel %vm926, %v7177, -inf
    %7206 = vmax.xlane.f32.xlu0 %v7205
    %v7207 = vpop.xlane.xlu0 %7206
    %v7208 = vsel %vm926, %v7180, -inf
    %7209 = vmax.xlane.f32.xlu0 %v7208
    %v7210 = vpop.xlane.xlu0 %7209
    %v7211 = vsel %vm926, %v7185, -inf
    %7212 = vmax.xlane.f32.xlu0 %v7211
    %v7213 = vpop.xlane.xlu0 %7212
    %v7214 = vsel %vm926, %v7188, -inf
    %7215 = vmax.xlane.f32.xlu0 %v7214
    %v7216 = vpop.xlane.xlu0 %7215
    %v7217 = vsel %vm926, %v7193, -inf
    %7218 = vmax.xlane.f32.xlu0 %v7217
    %v7219 = vpop.xlane.xlu0 %7218
    %v7220 = vsel %vm926, %v7196, -inf
    %7221 = vmax.xlane.f32.xlu0 %v7220
    %v7222 = vpop.xlane.xlu0 %7221
    %v7223 = vsub.f32 %v7169, %v7201
    %v7224 = vsub.f32 %v7172, %v7204
    %v7225 = vsub.f32 %v7177, %v7207
    %v7226 = vsub.f32 %v7180, %v7210
    %v7227 = vsub.f32 %v7185, %v7213
    %v7228 = vsub.f32 %v7188, %v7216
    %v7229 = vsub.f32 %v7193, %v7219
    %v7230 = vsub.f32 %v7196, %v7222
    %v7231 = vmul.f32 %v7223, 1.442695
    %v7232 = vpow.pop %v7231
    %v7233 = vmul.f32 %v7224, 1.442695
    %v7234 = vpow.pop %v7233
    %v7235 = vmul.f32 %v7225, 1.442695
    %v7236 = vpow.pop %v7235
    %v7237 = vmul.f32 %v7226, 1.442695
    %v7238 = vpow.pop %v7237
    %v7239 = vmul.f32 %v7227, 1.442695
    %v7240 = vpow.pop %v7239
    %v7241 = vmul.f32 %v7228, 1.442695
    %v7242 = vpow.pop %v7241
    %v7243 = vmul.f32 %v7229, 1.442695
    %v7244 = vpow.pop %v7243
    %v7245 = vmul.f32 %v7230, 1.442695
    %v7246 = vpow.pop %v7245
    %v7247 = vsel %vm926, %v7232, 0.0
    %7248 = vadd.xlane.f32.xlu0 %v7247
    %v7249 = vpop.xlane.xlu0 %7248
    %v7250 = vsel %vm926, %v7234, 0.0
    %7251 = vadd.xlane.f32.xlu0 %v7250
    %v7252 = vpop.xlane.xlu0 %7251
    %v7253 = vsel %vm926, %v7236, 0.0
    %7254 = vadd.xlane.f32.xlu0 %v7253
    %v7255 = vpop.xlane.xlu0 %7254
    %v7256 = vsel %vm926, %v7238, 0.0
    %7257 = vadd.xlane.f32.xlu0 %v7256
    %v7258 = vpop.xlane.xlu0 %7257
    %v7259 = vsel %vm926, %v7240, 0.0
    %7260 = vadd.xlane.f32.xlu0 %v7259
    %v7261 = vpop.xlane.xlu0 %7260
    %v7262 = vsel %vm926, %v7242, 0.0
    %7263 = vadd.xlane.f32.xlu0 %v7262
    %v7264 = vpop.xlane.xlu0 %7263
    %v7265 = vsel %vm926, %v7244, 0.0
    %7266 = vadd.xlane.f32.xlu0 %v7265
    %v7267 = vpop.xlane.xlu0 %7266
    %v7268 = vsel %vm926, %v7246, 0.0
    %7269 = vadd.xlane.f32.xlu0 %v7268
    %v7270 = vpop.xlane.xlu0 %7269
    %v7271 = vrcp.pop %v7249
    %v7272 = vrcp.pop %v7252
    %v7273 = vrcp.pop %v7255
    %v7274 = vrcp.pop %v7258
    %v7275 = vrcp.pop %v7261
    %v7276 = vrcp.pop %v7264
    %v7277 = vrcp.pop %v7267
    %v7278 = vrcp.pop %v7270
    %v7279 = vmul.f32 %v7232, %v7271
    %v7280 = vmul.f32 %v7234, %v7272
    %v7281 = vmul.f32 %v7236, %v7273
    %v7282 = vmul.f32 %v7238, %v7274
    %v7283 = vmul.f32 %v7240, %v7275
    %v7284 = vmul.f32 %v7242, %v7276
    %v7285 = vmul.f32 %v7244, %v7277
    %v7286 = vmul.f32 %v7246, %v7278
    %v7287 = vpack.c.bf16 %v7280, %v7279
    %v7288 = vpack.c.bf16 %v7282, %v7281
    %v7289 = vpack.c.bf16 %v7284, %v7283
    %v7290 = vpack.c.bf16 %v7286, %v7285
    %7291 = vrot.lane.b32.xlu0 %v5314, 64
    %v7292 = vpop.permute.xlu0 %7291
    %7293 = vrot.lane.b32.xlu0 %v5315, 64
    %v7294 = vpop.permute.xlu0 %7293
    %7295 = vrot.lane.b32.xlu0 %v5316, 64
    %v7296 = vpop.permute.xlu0 %7295
    %7297 = vrot.lane.b32.xlu0 %v5317, 64
    %v7298 = vpop.permute.xlu0 %7297
    %v7304 = vsel %vm926, %v7287, 0
    %v7307 = vsel %vm926, %v7288, 0
    %v7310 = vsel %vm926, %v7289, 0
    %v7313 = vsel %vm926, %v7290, 0
    %7315 = vmatprep.subr.bf16.mxu0 0
    %7316 = vmatpush1.bf16.msra.mxu0 %v7292
    %7317 = vmatprep.subr.bf16.mxu0 0
    %7318 = vmatpush1.bf16.msra.mxu0 %v7294
    %7319 = vmatprep.subr.bf16.mxu0 0
    %7320 = vmatpush1.bf16.msra.mxu0 %v7296
    %7321 = vmatprep.subr.bf16.mxu0 0
    %7322 = vmatpush1.bf16.msra.mxu0 %v7298
    %7323 = vmatprep.subr.bf16.mxu0 0
    %7324 = vmatpush1.bf16.msra.mxu0 0
    %7325 = vmatprep.subr.bf16.mxu0 0
    %7326 = vmatpush1.bf16.msra.mxu0 0
    %7327 = vmatprep.subr.bf16.mxu0 0
    %7328 = vmatpush1.bf16.msra.mxu0 0
    %7329 = vmatprep.subr.bf16.mxu0 0
    %7330 = vmatpush1.bf16.msra.mxu0 0
    %7331 = vmatprep.subr.bf16.mxu0 0
    %7332 = vmatpush1.bf16.msra.mxu0 0
    %7333 = vmatprep.subr.bf16.mxu0 0
    %7334 = vmatpush1.bf16.msra.mxu0 0
    %7335 = vmatprep.subr.bf16.mxu0 0
    %7336 = vmatpush1.bf16.msra.mxu0 0
    %7337 = vmatprep.subr.bf16.mxu0 0
    %7338 = vmatpush1.bf16.msra.mxu0 0
    %7339 = vmatprep.subr.bf16.mxu0 0
    %7340 = vmatpush1.bf16.msra.mxu0 0
    %7341 = vmatprep.subr.bf16.mxu0 0
    %7342 = vmatpush1.bf16.msra.mxu0 0
    %7343 = vmatprep.subr.bf16.mxu0 0
    %7344 = vmatpush1.bf16.msra.mxu0 0
    %7345 = vmatprep.subr.bf16.mxu0 0
    %7346 = vmatpush1.bf16.msra.mxu0 0
    %7347 = vmatprep.mubr.bf16.mxu0 0
    %7348 = vmatmul.mubr.bf16.gmra.mrb[0].mxu0 %v7304
    %v7349 = vpop.f32.mrb[0].mxu0
    %v7350 = vadd.f32 0.0, %v7349
    %v7351 = vpop.f32.mrb[0].mxu0
    %v7352 = vpop.f32.mrb[0].mxu0
    %v7353 = vadd.f32 0.0, %v7352
    %v7354 = vpop.f32.mrb[0].mxu0
    %7355 = vmatprep.mubr.bf16.mxu0 0
    %7356 = vmatmul.mubr.bf16.gmra.mrb[0].mxu0 %v7307
    %v7357 = vpop.f32.mrb[0].mxu0
    %v7358 = vadd.f32 0.0, %v7357
    %v7359 = vpop.f32.mrb[0].mxu0
    %v7360 = vpop.f32.mrb[0].mxu0
    %v7361 = vadd.f32 0.0, %v7360
    %v7362 = vpop.f32.mrb[0].mxu0
    %7363 = vmatprep.mubr.bf16.mxu0 0
    %7364 = vmatmul.mubr.bf16.gmra.mrb[0].mxu0 %v7310
    %v7365 = vpop.f32.mrb[0].mxu0
    %v7366 = vadd.f32 0.0, %v7365
    %v7367 = vpop.f32.mrb[0].mxu0
    %v7368 = vpop.f32.mrb[0].mxu0
    %v7369 = vadd.f32 0.0, %v7368
    %v7370 = vpop.f32.mrb[0].mxu0
    %7371 = vmatprep.mubr.bf16.mxu0 0
    %7372 = vmatmul.mubr.bf16.gmra.mrb[0].mxu0 %v7313
    %v7373 = vpop.f32.mrb[0].mxu0
    %v7374 = vadd.f32 0.0, %v7373
    %v7375 = vpop.f32.mrb[0].mxu0
    %v7376 = vpop.f32.mrb[0].mxu0
    %v7377 = vadd.f32 0.0, %v7376
    %v7378 = vpop.f32.mrb[0].mxu0
    %7379 = vdwg.mxu0
    %v7380 = vpack.c.bf16 %v7353, %v7350
    %v7381 = vpack.c.bf16 %v7361, %v7358
    %v7382 = vpack.c.bf16 %v7369, %v7366
    %v7383 = vpack.c.bf16 %v7377, %v7374
    %7384 = vrot.lane.b32.xlu0 %v5298, 32
    %v7385 = vpop.permute.xlu0 %7384
    %7386 = vrot.lane.b32.xlu0 %v5299, 32
    %v7387 = vpop.permute.xlu0 %7386
    %7388 = vrot.lane.b32.xlu0 %v5300, 32
    %v7389 = vpop.permute.xlu0 %7388
    %7390 = vrot.lane.b32.xlu0 %v5301, 32
    %v7391 = vpop.permute.xlu0 %7390
    %7392 = vrot.lane.b32.xlu0 %v5306, 32
    %v7393 = vpop.permute.xlu0 %7392
    %7394 = vrot.lane.b32.xlu0 %v5307, 32
    %v7395 = vpop.permute.xlu0 %7394
    %7396 = vrot.lane.b32.xlu0 %v5308, 32
    %v7397 = vpop.permute.xlu0 %7396
    %7398 = vrot.lane.b32.xlu0 %v5309, 32
    %v7399 = vpop.permute.xlu0 %7398
    %v7401 = vsel %vm836, %v7385, 0
    %v7404 = vsel %vm836, %v7387, 0
    %v7407 = vsel %vm836, %v7389, 0
    %v7410 = vsel %vm836, %v7391, 0
    %v7413 = vsel %vm836, %v7393, 0
    %v7416 = vsel %vm836, %v7395, 0
    %v7419 = vsel %vm836, %v7397, 0
    %v7422 = vsel %vm836, %v7399, 0
    %7424 = vmatprep.subr.bf16.mxu0 0
    %7425 = vmatpush1.bf16.xpose.msra.mxu0 %v7413
    %7426 = vmatprep.subr.bf16.mxu0 0
    %7427 = vmatpush1.bf16.xpose.msra.mxu0 %v7416
    %7428 = vmatprep.subr.bf16.mxu0 0
    %7429 = vmatpush1.bf16.xpose.msra.mxu0 %v7419
    %7430 = vmatprep.subr.bf16.mxu0 0
    %7431 = vmatpush1.bf16.xpose.msra.mxu0 %v7422
    %7432 = vmatprep.subr.bf16.mxu0 0
    %7433 = vmatpush1.bf16.xpose.msra.mxu0 0
    %7434 = vmatprep.subr.bf16.mxu0 0
    %7435 = vmatpush1.bf16.xpose.msra.mxu0 0
    %7436 = vmatprep.subr.bf16.mxu0 0
    %7437 = vmatpush1.bf16.xpose.msra.mxu0 0
    %7438 = vmatprep.subr.bf16.mxu0 0
    %7439 = vmatpush1.bf16.xpose.msra.mxu0 0
    %7440 = vmatprep.subr.bf16.mxu0 0
    %7441 = vmatpush1.bf16.xpose.msra.mxu0 0
    %7442 = vmatprep.subr.bf16.mxu0 0
    %7443 = vmatpush1.bf16.xpose.msra.mxu0 0
    %7444 = vmatprep.subr.bf16.mxu0 0
    %7445 = vmatpush1.bf16.xpose.msra.mxu0 0
    %7446 = vmatprep.subr.bf16.mxu0 0
    %7447 = vmatpush1.bf16.xpose.msra.mxu0 0
    %7448 = vmatprep.subr.bf16.mxu0 0
    %7449 = vmatpush1.bf16.xpose.msra.mxu0 0
    %7450 = vmatprep.subr.bf16.mxu0 0
    %7451 = vmatpush1.bf16.xpose.msra.mxu0 0
    %7452 = vmatprep.subr.bf16.mxu0 0
    %7453 = vmatpush1.bf16.xpose.msra.mxu0 0
    %7454 = vmatprep.subr.bf16.mxu0 0
    %7455 = vmatpush1.bf16.xpose.msra.mxu0 0
    %7456 = vmatprep.mubr.bf16.mxu0 0
    %7457 = vmatmul.mubr.bf16.gmra.mrb[0].mxu0 %v7401
    %v7458 = vpop.f32.mrb[0].mxu0
    %v7459 = vadd.f32 %v192, %v7458
    %v7460 = vpop.f32.mrb[0].mxu0
    %v7461 = vpop.f32.mrb[0].mxu0
    %v7462 = vadd.f32 %v193, %v7461
    %v7463 = vpop.f32.mrb[0].mxu0
    %7464 = vmatprep.mubr.bf16.mxu0 0
    %7465 = vmatmul.mubr.bf16.gmra.mrb[0].mxu0 %v7404
    %v7466 = vpop.f32.mrb[0].mxu0
    %v7467 = vadd.f32 %v194, %v7466
    %v7468 = vpop.f32.mrb[0].mxu0
    %v7469 = vpop.f32.mrb[0].mxu0
    %v7470 = vadd.f32 %v195, %v7469
    %v7471 = vpop.f32.mrb[0].mxu0
    %7472 = vmatprep.mubr.bf16.mxu0 0
    %7473 = vmatmul.mubr.bf16.gmra.mrb[0].mxu0 %v7407
    %v7474 = vpop.f32.mrb[0].mxu0
    %v7475 = vadd.f32 %v196, %v7474
    %v7476 = vpop.f32.mrb[0].mxu0
    %v7477 = vpop.f32.mrb[0].mxu0
    %v7478 = vadd.f32 %v197, %v7477
    %v7479 = vpop.f32.mrb[0].mxu0
    %7480 = vmatprep.mubr.bf16.mxu0 0
    %7481 = vmatmul.mubr.bf16.gmra.mrb[0].mxu0 %v7410
    %v7482 = vpop.f32.mrb[0].mxu0
    %v7483 = vadd.f32 %v198, %v7482
    %v7484 = vpop.f32.mrb[0].mxu0
    %v7485 = vpop.f32.mrb[0].mxu0
    %v7486 = vadd.f32 %v199, %v7485
    %v7487 = vpop.f32.mrb[0].mxu0
    %7488 = vdwg.mxu0
    %v7489 = vsel %vm926, %v7459, -inf
    %7490 = vmax.xlane.f32.xlu0 %v7489
    %v7491 = vpop.xlane.xlu0 %7490
    %v7492 = vsel %vm926, %v7462, -inf
    %7493 = vmax.xlane.f32.xlu0 %v7492
    %v7494 = vpop.xlane.xlu0 %7493
    %v7495 = vsel %vm926, %v7467, -inf
    %7496 = vmax.xlane.f32.xlu0 %v7495
    %v7497 = vpop.xlane.xlu0 %7496
    %v7498 = vsel %vm926, %v7470, -inf
    %7499 = vmax.xlane.f32.xlu0 %v7498
    %v7500 = vpop.xlane.xlu0 %7499
    %v7501 = vsel %vm926, %v7475, -inf
    %7502 = vmax.xlane.f32.xlu0 %v7501
    %v7503 = vpop.xlane.xlu0 %7502
    %v7504 = vsel %vm926, %v7478, -inf
    %7505 = vmax.xlane.f32.xlu0 %v7504
    %v7506 = vpop.xlane.xlu0 %7505
    %v7507 = vsel %vm926, %v7483, -inf
    %7508 = vmax.xlane.f32.xlu0 %v7507
    %v7509 = vpop.xlane.xlu0 %7508
    %v7510 = vsel %vm926, %v7486, -inf
    %7511 = vmax.xlane.f32.xlu0 %v7510
    %v7512 = vpop.xlane.xlu0 %7511
    %v7513 = vsub.f32 %v7459, %v7491
    %v7514 = vsub.f32 %v7462, %v7494
    %v7515 = vsub.f32 %v7467, %v7497
    %v7516 = vsub.f32 %v7470, %v7500
    %v7517 = vsub.f32 %v7475, %v7503
    %v7518 = vsub.f32 %v7478, %v7506
    %v7519 = vsub.f32 %v7483, %v7509
    %v7520 = vsub.f32 %v7486, %v7512
    %v7521 = vmul.f32 %v7513, 1.442695
    %v7522 = vpow.pop %v7521
    %v7523 = vmul.f32 %v7514, 1.442695
    %v7524 = vpow.pop %v7523
    %v7525 = vmul.f32 %v7515, 1.442695
    %v7526 = vpow.pop %v7525
    %v7527 = vmul.f32 %v7516, 1.442695
    %v7528 = vpow.pop %v7527
    %v7529 = vmul.f32 %v7517, 1.442695
    %v7530 = vpow.pop %v7529
    %v7531 = vmul.f32 %v7518, 1.442695
    %v7532 = vpow.pop %v7531
    %v7533 = vmul.f32 %v7519, 1.442695
    %v7534 = vpow.pop %v7533
    %v7535 = vmul.f32 %v7520, 1.442695
    %v7536 = vpow.pop %v7535
    %v7537 = vsel %vm926, %v7522, 0.0
    %7538 = vadd.xlane.f32.xlu0 %v7537
    %v7539 = vpop.xlane.xlu0 %7538
    %v7540 = vsel %vm926, %v7524, 0.0
    %7541 = vadd.xlane.f32.xlu0 %v7540
    %v7542 = vpop.xlane.xlu0 %7541
    %v7543 = vsel %vm926, %v7526, 0.0
    %7544 = vadd.xlane.f32.xlu0 %v7543
    %v7545 = vpop.xlane.xlu0 %7544
    %v7546 = vsel %vm926, %v7528, 0.0
    %7547 = vadd.xlane.f32.xlu0 %v7546
    %v7548 = vpop.xlane.xlu0 %7547
    %v7549 = vsel %vm926, %v7530, 0.0
    %7550 = vadd.xlane.f32.xlu0 %v7549
    %v7551 = vpop.xlane.xlu0 %7550
    %v7552 = vsel %vm926, %v7532, 0.0
    %7553 = vadd.xlane.f32.xlu0 %v7552
    %v7554 = vpop.xlane.xlu0 %7553
    %v7555 = vsel %vm926, %v7534, 0.0
    %7556 = vadd.xlane.f32.xlu0 %v7555
    %v7557 = vpop.xlane.xlu0 %7556
    %v7558 = vsel %vm926, %v7536, 0.0
    %7559 = vadd.xlane.f32.xlu0 %v7558
    %v7560 = vpop.xlane.xlu0 %7559
    %v7561 = vrcp.pop %v7539
    %v7562 = vrcp.pop %v7542
    %v7563 = vrcp.pop %v7545
    %v7564 = vrcp.pop %v7548
    %v7565 = vrcp.pop %v7551
    %v7566 = vrcp.pop %v7554
    %v7567 = vrcp.pop %v7557
    %v7568 = vrcp.pop %v7560
    %v7569 = vmul.f32 %v7522, %v7561
    %v7570 = vmul.f32 %v7524, %v7562
    %v7571 = vmul.f32 %v7526, %v7563
    %v7572 = vmul.f32 %v7528, %v7564
    %v7573 = vmul.f32 %v7530, %v7565
    %v7574 = vmul.f32 %v7532, %v7566
    %v7575 = vmul.f32 %v7534, %v7567
    %v7576 = vmul.f32 %v7536, %v7568
    %v7577 = vpack.c.bf16 %v7570, %v7569
    %v7578 = vpack.c.bf16 %v7572, %v7571
    %v7579 = vpack.c.bf16 %v7574, %v7573
    %v7580 = vpack.c.bf16 %v7576, %v7575
    %7581 = vrot.lane.b32.xlu0 %v5314, 32
    %v7582 = vpop.permute.xlu0 %7581
    %7583 = vrot.lane.b32.xlu0 %v5315, 32
    %v7584 = vpop.permute.xlu0 %7583
    %7585 = vrot.lane.b32.xlu0 %v5316, 32
    %v7586 = vpop.permute.xlu0 %7585
    %7587 = vrot.lane.b32.xlu0 %v5317, 32
    %v7588 = vpop.permute.xlu0 %7587
    %v7594 = vsel %vm926, %v7577, 0
    %v7597 = vsel %vm926, %v7578, 0
    %v7600 = vsel %vm926, %v7579, 0
    %v7603 = vsel %vm926, %v7580, 0
    %7605 = vmatprep.subr.bf16.mxu0 0
    %7606 = vmatpush1.bf16.msra.mxu0 %v7582
    %7607 = vmatprep.subr.bf16.mxu0 0
    %7608 = vmatpush1.bf16.msra.mxu0 %v7584
    %7609 = vmatprep.subr.bf16.mxu0 0
    %7610 = vmatpush1.bf16.msra.mxu0 %v7586
    %7611 = vmatprep.subr.bf16.mxu0 0
    %7612 = vmatpush1.bf16.msra.mxu0 %v7588
    %7613 = vmatprep.subr.bf16.mxu0 0
    %7614 = vmatpush1.bf16.msra.mxu0 0
    %7615 = vmatprep.subr.bf16.mxu0 0
    %7616 = vmatpush1.bf16.msra.mxu0 0
    %7617 = vmatprep.subr.bf16.mxu0 0
    %7618 = vmatpush1.bf16.msra.mxu0 0
    %7619 = vmatprep.subr.bf16.mxu0 0
    %7620 = vmatpush1.bf16.msra.mxu0 0
    %7621 = vmatprep.subr.bf16.mxu0 0
    %7622 = vmatpush1.bf16.msra.mxu0 0
    %7623 = vmatprep.subr.bf16.mxu0 0
    %7624 = vmatpush1.bf16.msra.mxu0 0
    %7625 = vmatprep.subr.bf16.mxu0 0
    %7626 = vmatpush1.bf16.msra.mxu0 0
    %7627 = vmatprep.subr.bf16.mxu0 0
    %7628 = vmatpush1.bf16.msra.mxu0 0
    %7629 = vmatprep.subr.bf16.mxu0 0
    %7630 = vmatpush1.bf16.msra.mxu0 0
    %7631 = vmatprep.subr.bf16.mxu0 0
    %7632 = vmatpush1.bf16.msra.mxu0 0
    %7633 = vmatprep.subr.bf16.mxu0 0
    %7634 = vmatpush1.bf16.msra.mxu0 0
    %7635 = vmatprep.subr.bf16.mxu0 0
    %7636 = vmatpush1.bf16.msra.mxu0 0
    %7637 = vmatprep.mubr.bf16.mxu0 0
    %7638 = vmatmul.mubr.bf16.gmra.mrb[0].mxu0 %v7594
    %v7639 = vpop.f32.mrb[0].mxu0
    %v7640 = vadd.f32 0.0, %v7639
    %v7641 = vpop.f32.mrb[0].mxu0
    %v7642 = vpop.f32.mrb[0].mxu0
    %v7643 = vadd.f32 0.0, %v7642
    %v7644 = vpop.f32.mrb[0].mxu0
    %7645 = vmatprep.mubr.bf16.mxu0 0
    %7646 = vmatmul.mubr.bf16.gmra.mrb[0].mxu0 %v7597
    %v7647 = vpop.f32.mrb[0].mxu0
    %v7648 = vadd.f32 0.0, %v7647
    %v7649 = vpop.f32.mrb[0].mxu0
    %v7650 = vpop.f32.mrb[0].mxu0
    %v7651 = vadd.f32 0.0, %v7650
    %v7652 = vpop.f32.mrb[0].mxu0
    %7653 = vmatprep.mubr.bf16.mxu0 0
    %7654 = vmatmul.mubr.bf16.gmra.mrb[0].mxu0 %v7600
    %v7655 = vpop.f32.mrb[0].mxu0
    %v7656 = vadd.f32 0.0, %v7655
    %v7657 = vpop.f32.mrb[0].mxu0
    %v7658 = vpop.f32.mrb[0].mxu0
    %v7659 = vadd.f32 0.0, %v7658
    %v7660 = vpop.f32.mrb[0].mxu0
    %7661 = vmatprep.mubr.bf16.mxu0 0
    %7662 = vmatmul.mubr.bf16.gmra.mrb[0].mxu0 %v7603
    %v7663 = vpop.f32.mrb[0].mxu0
    %v7664 = vadd.f32 0.0, %v7663
    %v7665 = vpop.f32.mrb[0].mxu0
    %v7666 = vpop.f32.mrb[0].mxu0
    %v7667 = vadd.f32 0.0, %v7666
    %v7668 = vpop.f32.mrb[0].mxu0
    %7669 = vdwg.mxu0
    %v7670 = vpack.c.bf16 %v7643, %v7640
    %v7671 = vpack.c.bf16 %v7651, %v7648
    %v7672 = vpack.c.bf16 %v7659, %v7656
    %v7673 = vpack.c.bf16 %v7667, %v7664
    %7678 = vrot.lane.b32.xlu0 %v7090, 32
    %v7679 = vpop.permute.xlu0 %7678
    %7680 = vrot.lane.b32.xlu0 %v7091, 32
    %v7681 = vpop.permute.xlu0 %7680
    %7682 = vrot.lane.b32.xlu0 %v7092, 32
    %v7683 = vpop.permute.xlu0 %7682
    %7684 = vrot.lane.b32.xlu0 %v7093, 32
    %v7685 = vpop.permute.xlu0 %7684
    %7690 = vrot.lane.b32.xlu0 %v7380, 64
    %v7691 = vpop.permute.xlu0 %7690
    %7692 = vrot.lane.b32.xlu0 %v7381, 64
    %v7693 = vpop.permute.xlu0 %7692
    %7694 = vrot.lane.b32.xlu0 %v7382, 64
    %v7695 = vpop.permute.xlu0 %7694
    %7696 = vrot.lane.b32.xlu0 %v7383, 64
    %v7697 = vpop.permute.xlu0 %7696
    %7702 = vrot.lane.b32.xlu0 %v7670, 96
    %v7703 = vpop.permute.xlu0 %7702
    %7704 = vrot.lane.b32.xlu0 %v7671, 96
    %v7705 = vpop.permute.xlu0 %7704
    %7706 = vrot.lane.b32.xlu0 %v7672, 96
    %v7707 = vpop.permute.xlu0 %7706
    %7708 = vrot.lane.b32.xlu0 %v7673, 96
    %v7709 = vpop.permute.xlu0 %7708
    %v7712 = vsel %vm836, %v6788, %v7679
    %v7715 = vsel %vm836, %v6789, %v7681
    %v7718 = vsel %vm836, %v6790, %v7683
    %v7721 = vsel %vm836, %v6791, %v7685
    %v7723 = vsel %vm926, %v7712, %v7691
    %v7725 = vsel %vm926, %v7715, %v7693
    %v7727 = vsel %vm926, %v7718, %v7695
    %v7729 = vsel %vm926, %v7721, %v7697
    %v7731 = vsel %vm2038, %v7723, %v7703
    %v7734 = vsel %vm2038, %v7725, %v7705
    %v7737 = vsel %vm2038, %v7727, %v7707
    %v7740 = vsel %vm2038, %v7729, %v7709
    %s7742 = scalar_lea.vmem [#allocation8], 64
    %v7743 = vld [vmem:[%s7742] sm:$0xf]
    %v7744 = vld [vmem:[%s7742 + $0x4] sm:$0xf]
    %v7745 = vld [vmem:[%s7742 + $0x8] sm:$0xf]
    %v7746 = vld [vmem:[%s7742 + $0xc] sm:$0xf]
    %v7747 = vld [vmem:[%s7742 + $0x10] sm:$0xf]
    %v7748 = vld [vmem:[%s7742 + $0x14] sm:$0xf]
    %v7749 = vld [vmem:[%s7742 + $0x18] sm:$0xf]
    %v7750 = vld [vmem:[%s7742 + $0x1c] sm:$0xf]
    %v7751 = vld [vmem:[%s7742 + $0x20] sm:$0xf]
    %v7752 = vld [vmem:[%s7742 + $0x24] sm:$0xf]
    %v7753 = vld [vmem:[%s7742 + $0x28] sm:$0xf]
    %v7754 = vld [vmem:[%s7742 + $0x2c] sm:$0xf]
    %v7755 = vld [vmem:[%s7742 + $0x30] sm:$0xf]
    %v7756 = vld [vmem:[%s7742 + $0x34] sm:$0xf]
    %v7757 = vld [vmem:[%s7742 + $0x38] sm:$0xf]
    %v7758 = vld [vmem:[%s7742 + $0x3c] sm:$0xf]
    %s7759 = scalar_lea.vmem %s4, 1
    %v7760 = vld [vmem:[%s7759] sm:$0x1]
    %v7762 = vlaneseq
    %v7763 = vshrl.u32 %v7762, 7
    %v7764 = vsub.s32 0, %v7763
    %v7765 = vrot.slane %v7760, %v7764
    %v7783 = vunpack.c.l.b16 %v7743
    %v7784 = vunpack.c.l.b16 %v7744
    %v7785 = vunpack.c.l.b16 %v7745
    %v7786 = vunpack.c.l.b16 %v7746
    %v7787 = vunpack.c.l.b16 %v7747
    %v7788 = vunpack.c.l.b16 %v7748
    %v7789 = vunpack.c.l.b16 %v7749
    %v7790 = vunpack.c.l.b16 %v7750
    %v7791 = vunpack.c.l.b16 %v7751
    %v7792 = vunpack.c.l.b16 %v7752
    %v7793 = vunpack.c.l.b16 %v7753
    %v7794 = vunpack.c.l.b16 %v7754
    %v7795 = vunpack.c.l.b16 %v7755
    %v7796 = vunpack.c.l.b16 %v7756
    %v7797 = vunpack.c.l.b16 %v7757
    %v7798 = vunpack.c.l.b16 %v7758
    %v7799 = vpack.c.b16 %v7784, %v7783
    %v7800 = vpack.c.b16 %v7786, %v7785
    %v7801 = vpack.c.b16 %v7788, %v7787
    %v7802 = vpack.c.b16 %v7790, %v7789
    %v7803 = vpack.c.b16 %v7792, %v7791
    %v7804 = vpack.c.b16 %v7794, %v7793
    %v7805 = vpack.c.b16 %v7796, %v7795
    %v7806 = vpack.c.b16 %v7798, %v7797
    %7815 = vmatprep.subr.bf16.mxu0 0
    %7816 = vmatpush1.bf16.msra.mxu0 %v7799
    %7817 = vmatprep.subr.bf16.mxu0 0
    %7818 = vmatpush1.bf16.msra.mxu0 %v7800
    %7819 = vmatprep.subr.bf16.mxu0 0
    %7820 = vmatpush1.bf16.msra.mxu0 %v7801
    %7821 = vmatprep.subr.bf16.mxu0 0
    %7822 = vmatpush1.bf16.msra.mxu0 %v7802
    %7823 = vmatprep.subr.bf16.mxu0 0
    %7824 = vmatpush1.bf16.msra.mxu0 %v7803
    %7825 = vmatprep.subr.bf16.mxu0 0
    %7826 = vmatpush1.bf16.msra.mxu0 %v7804
    %7827 = vmatprep.subr.bf16.mxu0 0
    %7828 = vmatpush1.bf16.msra.mxu0 %v7805
    %7829 = vmatprep.subr.bf16.mxu0 0
    %7830 = vmatpush1.bf16.msra.mxu0 %v7806
    %7831 = vmatprep.subr.bf16.mxu0 0
    %7832 = vmatpush1.bf16.msra.mxu0 0
    %7833 = vmatprep.subr.bf16.mxu0 0
    %7834 = vmatpush1.bf16.msra.mxu0 0
    %7835 = vmatprep.subr.bf16.mxu0 0
    %7836 = vmatpush1.bf16.msra.mxu0 0
    %7837 = vmatprep.subr.bf16.mxu0 0
    %7838 = vmatpush1.bf16.msra.mxu0 0
    %7839 = vmatprep.subr.bf16.mxu0 0
    %7840 = vmatpush1.bf16.msra.mxu0 0
    %7841 = vmatprep.subr.bf16.mxu0 0
    %7842 = vmatpush1.bf16.msra.mxu0 0
    %7843 = vmatprep.subr.bf16.mxu0 0
    %7844 = vmatpush1.bf16.msra.mxu0 0
    %7845 = vmatprep.subr.bf16.mxu0 0
    %7846 = vmatpush1.bf16.msra.mxu0 0
    %7847 = vmatprep.mubr.bf16.mxu0 0
    %7848 = vmatmul.mubr.bf16.gmra.mrb[0].mxu0 %v6519
    %v7849 = vpop.f32.mrb[0].mxu0
    %v7850 = vadd.f32 %v7765, %v7849
    %v7851 = vpop.f32.mrb[0].mxu0
    %v7852 = vpop.f32.mrb[0].mxu0
    %v7853 = vadd.f32 %v7765, %v7852
    %v7854 = vpop.f32.mrb[0].mxu0
    %7855 = vmatprep.mubr.bf16.mxu0 0
    %7856 = vmatmul.mubr.bf16.gmra.mrb[0].mxu0 %v6522
    %v7857 = vpop.f32.mrb[0].mxu0
    %v7858 = vadd.f32 %v7765, %v7857
    %v7859 = vpop.f32.mrb[0].mxu0
    %v7860 = vpop.f32.mrb[0].mxu0
    %v7861 = vadd.f32 %v7765, %v7860
    %v7862 = vpop.f32.mrb[0].mxu0
    %7863 = vmatprep.mubr.bf16.mxu0 0
    %7864 = vmatmul.mubr.bf16.gmra.mrb[0].mxu0 %v6525
    %v7865 = vpop.f32.mrb[0].mxu0
    %v7866 = vadd.f32 %v7765, %v7865
    %v7867 = vpop.f32.mrb[0].mxu0
    %v7868 = vpop.f32.mrb[0].mxu0
    %v7869 = vadd.f32 %v7765, %v7868
    %v7870 = vpop.f32.mrb[0].mxu0
    %7871 = vmatprep.mubr.bf16.mxu0 0
    %7872 = vmatmul.mubr.bf16.gmra.mrb[0].mxu0 %v6528
    %v7873 = vpop.f32.mrb[0].mxu0
    %v7874 = vadd.f32 %v7765, %v7873
    %v7875 = vpop.f32.mrb[0].mxu0
    %v7876 = vpop.f32.mrb[0].mxu0
    %v7877 = vadd.f32 %v7765, %v7876
    %v7878 = vpop.f32.mrb[0].mxu0
    %7879 = vmatprep.mubr.bf16.mxu0 0
    %7880 = vmatmul.mubr.bf16.gmra.mrb[0].mxu0 %v7731
    %v7881 = vpop.f32.mrb[0].mxu0
    %v7882 = vadd.f32 %v7765, %v7881
    %v7883 = vpop.f32.mrb[0].mxu0
    %v7884 = vpop.f32.mrb[0].mxu0
    %v7885 = vadd.f32 %v7765, %v7884
    %v7886 = vpop.f32.mrb[0].mxu0
    %7887 = vmatprep.mubr.bf16.mxu0 0
    %7888 = vmatmul.mubr.bf16.gmra.mrb[0].mxu0 %v7734
    %v7889 = vpop.f32.mrb[0].mxu0
    %v7890 = vadd.f32 %v7765, %v7889
    %v7891 = vpop.f32.mrb[0].mxu0
    %v7892 = vpop.f32.mrb[0].mxu0
    %v7893 = vadd.f32 %v7765, %v7892
    %v7894 = vpop.f32.mrb[0].mxu0
    %7895 = vmatprep.mubr.bf16.mxu0 0
    %7896 = vmatmul.mubr.bf16.gmra.mrb[0].mxu0 %v7737
    %v7897 = vpop.f32.mrb[0].mxu0
    %v7898 = vadd.f32 %v7765, %v7897
    %v7899 = vpop.f32.mrb[0].mxu0
    %v7900 = vpop.f32.mrb[0].mxu0
    %v7901 = vadd.f32 %v7765, %v7900
    %v7902 = vpop.f32.mrb[0].mxu0
    %7903 = vmatprep.mubr.bf16.mxu0 0
    %7904 = vmatmul.mubr.bf16.gmra.mrb[0].mxu0 %v7740
    %v7905 = vpop.f32.mrb[0].mxu0
    %v7906 = vadd.f32 %v7765, %v7905
    %v7907 = vpop.f32.mrb[0].mxu0
    %v7908 = vpop.f32.mrb[0].mxu0
    %v7909 = vadd.f32 %v7765, %v7908
    %v7910 = vpop.f32.mrb[0].mxu0
    %7911 = vdwg.mxu0
    %v7912 = vadd.f32 %v4665, %v7850
    %v7913 = vadd.f32 %v4666, %v7853
    %v7914 = vadd.f32 %v4667, %v7858
    %v7915 = vadd.f32 %v4668, %v7861
    %v7916 = vadd.f32 %v4669, %v7866
    %v7917 = vadd.f32 %v4670, %v7869
    %v7918 = vadd.f32 %v4671, %v7874
    %v7919 = vadd.f32 %v4672, %v7877
    %v7920 = vadd.f32 %v4673, %v7882
    %v7921 = vadd.f32 %v4674, %v7885
    %v7922 = vadd.f32 %v4675, %v7890
    %v7923 = vadd.f32 %v4676, %v7893
    %v7924 = vadd.f32 %v4677, %v7898
    %v7925 = vadd.f32 %v4678, %v7901
    %v7926 = vadd.f32 %v4679, %v7906
    %v7927 = vadd.f32 %v4680, %v7909
    %s7928 = scalar_lea.vmem %s5, 2
    %v7929 = vld [vmem:[%s7928] sm:$0x3]
    %7930 = vadd.xlane.f32.xlu0 %v7912
    %v7931 = vpop.xlane.xlu0 %7930
    %7932 = vadd.xlane.f32.xlu0 %v7913
    %v7933 = vpop.xlane.xlu0 %7932
    %7934 = vadd.xlane.f32.xlu0 %v7914
    %v7935 = vpop.xlane.xlu0 %7934
    %7936 = vadd.xlane.f32.xlu0 %v7915
    %v7937 = vpop.xlane.xlu0 %7936
    %7938 = vadd.xlane.f32.xlu0 %v7916
    %v7939 = vpop.xlane.xlu0 %7938
    %7940 = vadd.xlane.f32.xlu0 %v7917
    %v7941 = vpop.xlane.xlu0 %7940
    %7942 = vadd.xlane.f32.xlu0 %v7918
    %v7943 = vpop.xlane.xlu0 %7942
    %7944 = vadd.xlane.f32.xlu0 %v7919
    %v7945 = vpop.xlane.xlu0 %7944
    %7946 = vadd.xlane.f32.xlu0 %v7920
    %v7947 = vpop.xlane.xlu0 %7946
    %7948 = vadd.xlane.f32.xlu0 %v7921
    %v7949 = vpop.xlane.xlu0 %7948
    %7950 = vadd.xlane.f32.xlu0 %v7922
    %v7951 = vpop.xlane.xlu0 %7950
    %7952 = vadd.xlane.f32.xlu0 %v7923
    %v7953 = vpop.xlane.xlu0 %7952
    %7954 = vadd.xlane.f32.xlu0 %v7924
    %v7955 = vpop.xlane.xlu0 %7954
    %7956 = vadd.xlane.f32.xlu0 %v7925
    %v7957 = vpop.xlane.xlu0 %7956
    %7958 = vadd.xlane.f32.xlu0 %v7926
    %v7959 = vpop.xlane.xlu0 %7958
    %7960 = vadd.xlane.f32.xlu0 %v7927
    %v7961 = vpop.xlane.xlu0 %7960
    %v7962 = vmul.f32 %v7931, %v233
    %v7963 = vmul.f32 %v7933, %v233
    %v7964 = vmul.f32 %v7935, %v233
    %v7965 = vmul.f32 %v7937, %v233
    %v7966 = vmul.f32 %v7939, %v233
    %v7967 = vmul.f32 %v7941, %v233
    %v7968 = vmul.f32 %v7943, %v233
    %v7969 = vmul.f32 %v7945, %v233
    %v7970 = vmul.f32 %v7947, %v233
    %v7971 = vmul.f32 %v7949, %v233
    %v7972 = vmul.f32 %v7951, %v233
    %v7973 = vmul.f32 %v7953, %v233
    %v7974 = vmul.f32 %v7955, %v233
    %v7975 = vmul.f32 %v7957, %v233
    %v7976 = vmul.f32 %v7959, %v233
    %v7977 = vmul.f32 %v7961, %v233
    %v7978 = vsub.f32 %v7912, %v7962
    %v7979 = vsub.f32 %v7913, %v7963
    %v7980 = vsub.f32 %v7914, %v7964
    %v7981 = vsub.f32 %v7915, %v7965
    %v7982 = vsub.f32 %v7916, %v7966
    %v7983 = vsub.f32 %v7917, %v7967
    %v7984 = vsub.f32 %v7918, %v7968
    %v7985 = vsub.f32 %v7919, %v7969
    %v7986 = vsub.f32 %v7920, %v7970
    %v7987 = vsub.f32 %v7921, %v7971
    %v7988 = vsub.f32 %v7922, %v7972
    %v7989 = vsub.f32 %v7923, %v7973
    %v7990 = vsub.f32 %v7924, %v7974
    %v7991 = vsub.f32 %v7925, %v7975
    %v7992 = vsub.f32 %v7926, %v7976
    %v7993 = vsub.f32 %v7927, %v7977
    %v7994 = vmul.f32 %v7978, %v7978
    %v7995 = vmul.f32 %v7979, %v7979
    %v7996 = vmul.f32 %v7980, %v7980
    %v7997 = vmul.f32 %v7981, %v7981
    %v7998 = vmul.f32 %v7982, %v7982
    %v7999 = vmul.f32 %v7983, %v7983
    %v8000 = vmul.f32 %v7984, %v7984
    %v8001 = vmul.f32 %v7985, %v7985
    %v8002 = vmul.f32 %v7986, %v7986
    %v8003 = vmul.f32 %v7987, %v7987
    %v8004 = vmul.f32 %v7988, %v7988
    %v8005 = vmul.f32 %v7989, %v7989
    %v8006 = vmul.f32 %v7990, %v7990
    %v8007 = vmul.f32 %v7991, %v7991
    %v8008 = vmul.f32 %v7992, %v7992
    %v8009 = vmul.f32 %v7993, %v7993
    %8010 = vadd.xlane.f32.xlu0 %v7994
    %v8011 = vpop.xlane.xlu0 %8010
    %8012 = vadd.xlane.f32.xlu0 %v7995
    %v8013 = vpop.xlane.xlu0 %8012
    %8014 = vadd.xlane.f32.xlu0 %v7996
    %v8015 = vpop.xlane.xlu0 %8014
    %8016 = vadd.xlane.f32.xlu0 %v7997
    %v8017 = vpop.xlane.xlu0 %8016
    %8018 = vadd.xlane.f32.xlu0 %v7998
    %v8019 = vpop.xlane.xlu0 %8018
    %8020 = vadd.xlane.f32.xlu0 %v7999
    %v8021 = vpop.xlane.xlu0 %8020
    %8022 = vadd.xlane.f32.xlu0 %v8000
    %v8023 = vpop.xlane.xlu0 %8022
    %8024 = vadd.xlane.f32.xlu0 %v8001
    %v8025 = vpop.xlane.xlu0 %8024
    %8026 = vadd.xlane.f32.xlu0 %v8002
    %v8027 = vpop.xlane.xlu0 %8026
    %8028 = vadd.xlane.f32.xlu0 %v8003
    %v8029 = vpop.xlane.xlu0 %8028
    %8030 = vadd.xlane.f32.xlu0 %v8004
    %v8031 = vpop.xlane.xlu0 %8030
    %8032 = vadd.xlane.f32.xlu0 %v8005
    %v8033 = vpop.xlane.xlu0 %8032
    %8034 = vadd.xlane.f32.xlu0 %v8006
    %v8035 = vpop.xlane.xlu0 %8034
    %8036 = vadd.xlane.f32.xlu0 %v8007
    %v8037 = vpop.xlane.xlu0 %8036
    %8038 = vadd.xlane.f32.xlu0 %v8008
    %v8039 = vpop.xlane.xlu0 %8038
    %8040 = vadd.xlane.f32.xlu0 %v8009
    %v8041 = vpop.xlane.xlu0 %8040
    %v8042 = vmul.f32 %v8011, %v233
    %v8043 = vmul.f32 %v8013, %v233
    %v8044 = vmul.f32 %v8015, %v233
    %v8045 = vmul.f32 %v8017, %v233
    %v8046 = vmul.f32 %v8019, %v233
    %v8047 = vmul.f32 %v8021, %v233
    %v8048 = vmul.f32 %v8023, %v233
    %v8049 = vmul.f32 %v8025, %v233
    %v8050 = vmul.f32 %v8027, %v233
    %v8051 = vmul.f32 %v8029, %v233
    %v8052 = vmul.f32 %v8031, %v233
    %v8053 = vmul.f32 %v8033, %v233
    %v8054 = vmul.f32 %v8035, %v233
    %v8055 = vmul.f32 %v8037, %v233
    %v8056 = vmul.f32 %v8039, %v233
    %v8057 = vmul.f32 %v8041, %v233
    %v8058 = vadd.f32 %v8042, 1e-05
    %v8059 = vadd.f32 %v8043, 1e-05
    %v8060 = vadd.f32 %v8044, 1e-05
    %v8061 = vadd.f32 %v8045, 1e-05
    %v8062 = vadd.f32 %v8046, 1e-05
    %v8063 = vadd.f32 %v8047, 1e-05
    %v8064 = vadd.f32 %v8048, 1e-05
    %v8065 = vadd.f32 %v8049, 1e-05
    %v8066 = vadd.f32 %v8050, 1e-05
    %v8067 = vadd.f32 %v8051, 1e-05
    %v8068 = vadd.f32 %v8052, 1e-05
    %v8069 = vadd.f32 %v8053, 1e-05
    %v8070 = vadd.f32 %v8054, 1e-05
    %v8071 = vadd.f32 %v8055, 1e-05
    %v8072 = vadd.f32 %v8056, 1e-05
    %v8073 = vadd.f32 %v8057, 1e-05
    %v8074 = vrsqrt.pop %v8058
    %v8075 = vrsqrt.pop %v8059
    %v8076 = vrsqrt.pop %v8060
    %v8077 = vrsqrt.pop %v8061
    %v8078 = vrsqrt.pop %v8062
    %v8079 = vrsqrt.pop %v8063
    %v8080 = vrsqrt.pop %v8064
    %v8081 = vrsqrt.pop %v8065
    %v8082 = vrsqrt.pop %v8066
    %v8083 = vrsqrt.pop %v8067
    %v8084 = vrsqrt.pop %v8068
    %v8085 = vrsqrt.pop %v8069
    %v8086 = vrsqrt.pop %v8070
    %v8087 = vrsqrt.pop %v8071
    %v8088 = vrsqrt.pop %v8072
    %v8089 = vrsqrt.pop %v8073
    %v8090 = vmul.f32 %v7978, %v8074
    %v8091 = vmul.f32 %v7979, %v8075
    %v8092 = vmul.f32 %v7980, %v8076
    %v8093 = vmul.f32 %v7981, %v8077
    %v8094 = vmul.f32 %v7982, %v8078
    %v8095 = vmul.f32 %v7983, %v8079
    %v8096 = vmul.f32 %v7984, %v8080
    %v8097 = vmul.f32 %v7985, %v8081
    %v8098 = vmul.f32 %v7986, %v8082
    %v8099 = vmul.f32 %v7987, %v8083
    %v8100 = vmul.f32 %v7988, %v8084
    %v8101 = vmul.f32 %v7989, %v8085
    %v8102 = vmul.f32 %v7990, %v8086
    %v8103 = vmul.f32 %v7991, %v8087
    %v8104 = vmul.f32 %v7992, %v8088
    %v8105 = vmul.f32 %v7993, %v8089
    %v8106 = vlaneseq
    %v8107 = vshrl.u32 %v8106, 7
    %v8108 = vsub.s32 0, %v8107
    %v8109 = vrot.slane %v7929, %v8108
    %v8110 = vmul.f32 %v8090, %v8109
    %v8111 = vmul.f32 %v8091, %v8109
    %v8112 = vmul.f32 %v8092, %v8109
    %v8113 = vmul.f32 %v8093, %v8109
    %v8114 = vmul.f32 %v8094, %v8109
    %v8115 = vmul.f32 %v8095, %v8109
    %v8116 = vmul.f32 %v8096, %v8109
    %v8117 = vmul.f32 %v8097, %v8109
    %v8118 = vmul.f32 %v8098, %v8109
    %v8119 = vmul.f32 %v8099, %v8109
    %v8120 = vmul.f32 %v8100, %v8109
    %v8121 = vmul.f32 %v8101, %v8109
    %v8122 = vmul.f32 %v8102, %v8109
    %v8123 = vmul.f32 %v8103, %v8109
    %v8124 = vmul.f32 %v8104, %v8109
    %v8125 = vmul.f32 %v8105, %v8109
    %v8126 = vlaneseq
    %v8127 = vshrl.u32 %v8126, 7
    %v8128 = vsub.s32 1, %v8127
    %v8129 = vrot.slane %v7929, %v8128
    %v8130 = vadd.f32 %v8110, %v8129
    %v8131 = vadd.f32 %v8111, %v8129
    %v8132 = vadd.f32 %v8112, %v8129
    %v8133 = vadd.f32 %v8113, %v8129
    %v8134 = vadd.f32 %v8114, %v8129
    %v8135 = vadd.f32 %v8115, %v8129
    %v8136 = vadd.f32 %v8116, %v8129
    %v8137 = vadd.f32 %v8117, %v8129
    %v8138 = vadd.f32 %v8118, %v8129
    %v8139 = vadd.f32 %v8119, %v8129
    %v8140 = vadd.f32 %v8120, %v8129
    %v8141 = vadd.f32 %v8121, %v8129
    %v8142 = vadd.f32 %v8122, %v8129
    %v8143 = vadd.f32 %v8123, %v8129
    %v8144 = vadd.f32 %v8124, %v8129
    %v8145 = vadd.f32 %v8125, %v8129
    %v8146 = vpack.c.bf16 %v8131, %v8130
    %v8147 = vpack.c.bf16 %v8133, %v8132
    %v8148 = vpack.c.bf16 %v8135, %v8134
    %v8149 = vpack.c.bf16 %v8137, %v8136
    %v8150 = vpack.c.bf16 %v8139, %v8138
    %v8151 = vpack.c.bf16 %v8141, %v8140
    %v8152 = vpack.c.bf16 %v8143, %v8142
    %v8153 = vpack.c.bf16 %v8145, %v8144
    %s8154 = scalar_lea.vmem [#allocation10], 256
    %v8155 = vld [vmem:[%s8154] sm:$0xff]
    %v8156 = vld [vmem:[%s8154 + $0x8] sm:$0xff]
    %v8157 = vld [vmem:[%s8154 + $0x10] sm:$0xff]
    %v8158 = vld [vmem:[%s8154 + $0x18] sm:$0xff]
    %v8159 = vld [vmem:[%s8154 + $0x20] sm:$0xff]
    %v8160 = vld [vmem:[%s8154 + $0x28] sm:$0xff]
    %v8161 = vld [vmem:[%s8154 + $0x30] sm:$0xff]
    %v8162 = vld [vmem:[%s8154 + $0x38] sm:$0xff]
    %v8163 = vld [vmem:[%s8154 + $0x40] sm:$0xff]
    %v8164 = vld [vmem:[%s8154 + $0x48] sm:$0xff]
    %v8165 = vld [vmem:[%s8154 + $0x50] sm:$0xff]
    %v8166 = vld [vmem:[%s8154 + $0x58] sm:$0xff]
    %v8167 = vld [vmem:[%s8154 + $0x60] sm:$0xff]
    %v8168 = vld [vmem:[%s8154 + $0x68] sm:$0xff]
    %v8169 = vld [vmem:[%s8154 + $0x70] sm:$0xff]
    %v8170 = vld [vmem:[%s8154 + $0x78] sm:$0xff]
    %v8171 = vld [vmem:[%s8154 + $0x80] sm:$0xff]
    %v8172 = vld [vmem:[%s8154 + $0x88] sm:$0xff]
    %v8173 = vld [vmem:[%s8154 + $0x90] sm:$0xff]
    %v8174 = vld [vmem:[%s8154 + $0x98] sm:$0xff]
    %v8175 = vld [vmem:[%s8154 + $0xa0] sm:$0xff]
    %v8176 = vld [vmem:[%s8154 + $0xa8] sm:$0xff]
    %v8177 = vld [vmem:[%s8154 + $0xb0] sm:$0xff]
    %v8178 = vld [vmem:[%s8154 + $0xb8] sm:$0xff]
    %v8179 = vld [vmem:[%s8154 + $0xc0] sm:$0xff]
    %v8180 = vld [vmem:[%s8154 + $0xc8] sm:$0xff]
    %v8181 = vld [vmem:[%s8154 + $0xd0] sm:$0xff]
    %v8182 = vld [vmem:[%s8154 + $0xd8] sm:$0xff]
    %v8183 = vld [vmem:[%s8154 + $0xe0] sm:$0xff]
    %v8184 = vld [vmem:[%s8154 + $0xe8] sm:$0xff]
    %v8185 = vld [vmem:[%s8154 + $0xf0] sm:$0xff]
    %v8186 = vld [vmem:[%s8154 + $0xf8] sm:$0xff]
    %s8187 = scalar_lea.vmem %s7, 4
    %v8188 = vld [vmem:[%s8187] sm:$0xf]
    %v8190 = vlaneseq
    %v8191 = vshrl.u32 %v8190, 7
    %v8192 = vsub.s32 0, %v8191
    %v8193 = vrot.slane %v8188, %v8192
    %v8194 = vlaneseq
    %v8195 = vshrl.u32 %v8194, 7
    %v8196 = vsub.s32 1, %v8195
    %v8197 = vrot.slane %v8188, %v8196
    %v8198 = vlaneseq
    %v8199 = vshrl.u32 %v8198, 7
    %v8200 = vsub.s32 2, %v8199
    %v8201 = vrot.slane %v8188, %v8200
    %v8202 = vlaneseq
    %v8203 = vshrl.u32 %v8202, 7
    %v8204 = vsub.s32 3, %v8203
    %v8205 = vrot.slane %v8188, %v8204
    %v8242 = vunpack.c.l.b16 %v8155
    %v8243 = vunpack.c.h.b16 %v8155
    %v8244 = vunpack.c.l.b16 %v8156
    %v8245 = vunpack.c.h.b16 %v8156
    %v8246 = vunpack.c.l.b16 %v8157
    %v8247 = vunpack.c.h.b16 %v8157
    %v8248 = vunpack.c.l.b16 %v8158
    %v8249 = vunpack.c.h.b16 %v8158
    %v8250 = vunpack.c.l.b16 %v8159
    %v8251 = vunpack.c.h.b16 %v8159
    %v8252 = vunpack.c.l.b16 %v8160
    %v8253 = vunpack.c.h.b16 %v8160
    %v8254 = vunpack.c.l.b16 %v8161
    %v8255 = vunpack.c.h.b16 %v8161
    %v8256 = vunpack.c.l.b16 %v8162
    %v8257 = vunpack.c.h.b16 %v8162
    %v8258 = vunpack.c.l.b16 %v8163
    %v8259 = vunpack.c.h.b16 %v8163
    %v8260 = vunpack.c.l.b16 %v8164
    %v8261 = vunpack.c.h.b16 %v8164
    %v8262 = vunpack.c.l.b16 %v8165
    %v8263 = vunpack.c.h.b16 %v8165
    %v8264 = vunpack.c.l.b16 %v8166
    %v8265 = vunpack.c.h.b16 %v8166
    %v8266 = vunpack.c.l.b16 %v8167
    %v8267 = vunpack.c.h.b16 %v8167
    %v8268 = vunpack.c.l.b16 %v8168
    %v8269 = vunpack.c.h.b16 %v8168
    %v8270 = vunpack.c.l.b16 %v8169
    %v8271 = vunpack.c.h.b16 %v8169
    %v8272 = vunpack.c.l.b16 %v8170
    %v8273 = vunpack.c.h.b16 %v8170
    %v8274 = vunpack.c.l.b16 %v8171
    %v8275 = vunpack.c.h.b16 %v8171
    %v8276 = vunpack.c.l.b16 %v8172
    %v8277 = vunpack.c.h.b16 %v8172
    %v8278 = vunpack.c.l.b16 %v8173
    %v8279 = vunpack.c.h.b16 %v8173
    %v8280 = vunpack.c.l.b16 %v8174
    %v8281 = vunpack.c.h.b16 %v8174
    %v8282 = vunpack.c.l.b16 %v8175
    %v8283 = vunpack.c.h.b16 %v8175
    %v8284 = vunpack.c.l.b16 %v8176
    %v8285 = vunpack.c.h.b16 %v8176
    %v8286 = vunpack.c.l.b16 %v8177
    %v8287 = vunpack.c.h.b16 %v8177
    %v8288 = vunpack.c.l.b16 %v8178
    %v8289 = vunpack.c.h.b16 %v8178
    %v8290 = vunpack.c.l.b16 %v8179
    %v8291 = vunpack.c.h.b16 %v8179
    %v8292 = vunpack.c.l.b16 %v8180
    %v8293 = vunpack.c.h.b16 %v8180
    %v8294 = vunpack.c.l.b16 %v8181
    %v8295 = vunpack.c.h.b16 %v8181
    %v8296 = vunpack.c.l.b16 %v8182
    %v8297 = vunpack.c.h.b16 %v8182
    %v8298 = vunpack.c.l.b16 %v8183
    %v8299 = vunpack.c.h.b16 %v8183
    %v8300 = vunpack.c.l.b16 %v8184
    %v8301 = vunpack.c.h.b16 %v8184
    %v8302 = vunpack.c.l.b16 %v8185
    %v8303 = vunpack.c.h.b16 %v8185
    %v8304 = vunpack.c.l.b16 %v8186
    %v8305 = vunpack.c.h.b16 %v8186
    %v8306 = vpack.c.b16 %v8246, %v8242
    %v8307 = vpack.c.b16 %v8247, %v8243
    %v8308 = vpack.c.b16 %v8248, %v8244
    %v8309 = vpack.c.b16 %v8249, %v8245
    %v8310 = vpack.c.b16 %v8254, %v8250
    %v8311 = vpack.c.b16 %v8255, %v8251
    %v8312 = vpack.c.b16 %v8256, %v8252
    %v8313 = vpack.c.b16 %v8257, %v8253
    %v8314 = vpack.c.b16 %v8262, %v8258
    %v8315 = vpack.c.b16 %v8263, %v8259
    %v8316 = vpack.c.b16 %v8264, %v8260
    %v8317 = vpack.c.b16 %v8265, %v8261
    %v8318 = vpack.c.b16 %v8270, %v8266
    %v8319 = vpack.c.b16 %v8271, %v8267
    %v8320 = vpack.c.b16 %v8272, %v8268
    %v8321 = vpack.c.b16 %v8273, %v8269
    %v8322 = vpack.c.b16 %v8278, %v8274
    %v8323 = vpack.c.b16 %v8279, %v8275
    %v8324 = vpack.c.b16 %v8280, %v8276
    %v8325 = vpack.c.b16 %v8281, %v8277
    %v8326 = vpack.c.b16 %v8286, %v8282
    %v8327 = vpack.c.b16 %v8287, %v8283
    %v8328 = vpack.c.b16 %v8288, %v8284
    %v8329 = vpack.c.b16 %v8289, %v8285
    %v8330 = vpack.c.b16 %v8294, %v8290
    %v8331 = vpack.c.b16 %v8295, %v8291
    %v8332 = vpack.c.b16 %v8296, %v8292
    %v8333 = vpack.c.b16 %v8297, %v8293
    %v8334 = vpack.c.b16 %v8302, %v8298
    %v8335 = vpack.c.b16 %v8303, %v8299
    %v8336 = vpack.c.b16 %v8304, %v8300
    %v8337 = vpack.c.b16 %v8305, %v8301
    %8370 = vmatprep.subr.bf16.mxu0 %v8307
    %8371 = vmatpush1.bf16.msra.mxu0 %v8306
    %8372 = vmatprep.subr.bf16.mxu0 %v8311
    %8373 = vmatpush1.bf16.msra.mxu0 %v8310
    %8374 = vmatprep.subr.bf16.mxu0 %v8315
    %8375 = vmatpush1.bf16.msra.mxu0 %v8314
    %8376 = vmatprep.subr.bf16.mxu0 %v8319
    %8377 = vmatpush1.bf16.msra.mxu0 %v8318
    %8378 = vmatprep.subr.bf16.mxu0 %v8323
    %8379 = vmatpush1.bf16.msra.mxu0 %v8322
    %8380 = vmatprep.subr.bf16.mxu0 %v8327
    %8381 = vmatpush1.bf16.msra.mxu0 %v8326
    %8382 = vmatprep.subr.bf16.mxu0 %v8331
    %8383 = vmatpush1.bf16.msra.mxu0 %v8330
    %8384 = vmatprep.subr.bf16.mxu0 %v8335
    %8385 = vmatpush1.bf16.msra.mxu0 %v8334
    %8386 = vmatprep.subr.bf16.mxu0 0
    %8387 = vmatpush1.bf16.msra.mxu0 0
    %8388 = vmatprep.subr.bf16.mxu0 0
    %8389 = vmatpush1.bf16.msra.mxu0 0
    %8390 = vmatprep.subr.bf16.mxu0 0
    %8391 = vmatpush1.bf16.msra.mxu0 0
    %8392 = vmatprep.subr.bf16.mxu0 0
    %8393 = vmatpush1.bf16.msra.mxu0 0
    %8394 = vmatprep.subr.bf16.mxu0 0
    %8395 = vmatpush1.bf16.msra.mxu0 0
    %8396 = vmatprep.subr.bf16.mxu0 0
    %8397 = vmatpush1.bf16.msra.mxu0 0
    %8398 = vmatprep.subr.bf16.mxu0 0
    %8399 = vmatpush1.bf16.msra.mxu0 0
    %8400 = vmatprep.subr.bf16.mxu0 0
    %8401 = vmatpush1.bf16.msra.mxu0 0
    %8402 = vmatprep.mubr.bf16.mxu0 0
    %8403 = vmatmul.mubr.bf16.gmra.mrb[0].mxu0 %v8146
    %v8404 = vpop.f32.mrb[0].mxu0
    %v8405 = vadd.f32 %v8193, %v8404
    %v8406 = vpop.f32.mrb[0].mxu0
    %v8407 = vadd.f32 %v8197, %v8406
    %v8408 = vpop.f32.mrb[0].mxu0
    %v8409 = vadd.f32 %v8193, %v8408
    %v8410 = vpop.f32.mrb[0].mxu0
    %v8411 = vadd.f32 %v8197, %v8410
    %8412 = vmatprep.mubr.bf16.mxu0 0
    %8413 = vmatmul.mubr.bf16.gmra.mrb[0].mxu0 %v8147
    %v8414 = vpop.f32.mrb[0].mxu0
    %v8415 = vadd.f32 %v8193, %v8414
    %v8416 = vpop.f32.mrb[0].mxu0
    %v8417 = vadd.f32 %v8197, %v8416
    %v8418 = vpop.f32.mrb[0].mxu0
    %v8419 = vadd.f32 %v8193, %v8418
    %v8420 = vpop.f32.mrb[0].mxu0
    %v8421 = vadd.f32 %v8197, %v8420
    %8422 = vmatprep.mubr.bf16.mxu0 0
    %8423 = vmatmul.mubr.bf16.gmra.mrb[0].mxu0 %v8148
    %v8424 = vpop.f32.mrb[0].mxu0
    %v8425 = vadd.f32 %v8193, %v8424
    %v8426 = vpop.f32.mrb[0].mxu0
    %v8427 = vadd.f32 %v8197, %v8426
    %v8428 = vpop.f32.mrb[0].mxu0
    %v8429 = vadd.f32 %v8193, %v8428
    %v8430 = vpop.f32.mrb[0].mxu0
    %v8431 = vadd.f32 %v8197, %v8430
    %8432 = vmatprep.mubr.bf16.mxu0 0
    %8433 = vmatmul.mubr.bf16.gmra.mrb[0].mxu0 %v8149
    %v8434 = vpop.f32.mrb[0].mxu0
    %v8435 = vadd.f32 %v8193, %v8434
    %v8436 = vpop.f32.mrb[0].mxu0
    %v8437 = vadd.f32 %v8197, %v8436
    %v8438 = vpop.f32.mrb[0].mxu0
    %v8439 = vadd.f32 %v8193, %v8438
    %v8440 = vpop.f32.mrb[0].mxu0
    %v8441 = vadd.f32 %v8197, %v8440
    %8442 = vmatprep.mubr.bf16.mxu0 0
    %8443 = vmatmul.mubr.bf16.gmra.mrb[0].mxu0 %v8150
    %v8444 = vpop.f32.mrb[0].mxu0
    %v8445 = vadd.f32 %v8193, %v8444
    %v8446 = vpop.f32.mrb[0].mxu0
    %v8447 = vadd.f32 %v8197, %v8446
    %v8448 = vpop.f32.mrb[0].mxu0
    %v8449 = vadd.f32 %v8193, %v8448
    %v8450 = vpop.f32.mrb[0].mxu0
    %v8451 = vadd.f32 %v8197, %v8450
    %8452 = vmatprep.mubr.bf16.mxu0 0
    %8453 = vmatmul.mubr.bf16.gmra.mrb[0].mxu0 %v8151
    %v8454 = vpop.f32.mrb[0].mxu0
    %v8455 = vadd.f32 %v8193, %v8454
    %v8456 = vpop.f32.mrb[0].mxu0
    %v8457 = vadd.f32 %v8197, %v8456
    %v8458 = vpop.f32.mrb[0].mxu0
    %v8459 = vadd.f32 %v8193, %v8458
    %v8460 = vpop.f32.mrb[0].mxu0
    %v8461 = vadd.f32 %v8197, %v8460
    %8462 = vmatprep.mubr.bf16.mxu0 0
    %8463 = vmatmul.mubr.bf16.gmra.mrb[0].mxu0 %v8152
    %v8464 = vpop.f32.mrb[0].mxu0
    %v8465 = vadd.f32 %v8193, %v8464
    %v8466 = vpop.f32.mrb[0].mxu0
    %v8467 = vadd.f32 %v8197, %v8466
    %v8468 = vpop.f32.mrb[0].mxu0
    %v8469 = vadd.f32 %v8193, %v8468
    %v8470 = vpop.f32.mrb[0].mxu0
    %v8471 = vadd.f32 %v8197, %v8470
    %8472 = vmatprep.mubr.bf16.mxu0 0
    %8473 = vmatmul.mubr.bf16.gmra.mrb[0].mxu0 %v8153
    %v8474 = vpop.f32.mrb[0].mxu0
    %v8475 = vadd.f32 %v8193, %v8474
    %v8476 = vpop.f32.mrb[0].mxu0
    %v8477 = vadd.f32 %v8197, %v8476
    %v8478 = vpop.f32.mrb[0].mxu0
    %v8479 = vadd.f32 %v8193, %v8478
    %v8480 = vpop.f32.mrb[0].mxu0
    %v8481 = vadd.f32 %v8197, %v8480
    %8482 = vdwg.mxu0
    %8483 = vmatprep.subr.bf16.mxu0 %v8309
    %8484 = vmatpush1.bf16.msra.mxu0 %v8308
    %8485 = vmatprep.subr.bf16.mxu0 %v8313
    %8486 = vmatpush1.bf16.msra.mxu0 %v8312
    %8487 = vmatprep.subr.bf16.mxu0 %v8317
    %8488 = vmatpush1.bf16.msra.mxu0 %v8316
    %8489 = vmatprep.subr.bf16.mxu0 %v8321
    %8490 = vmatpush1.bf16.msra.mxu0 %v8320
    %8491 = vmatprep.subr.bf16.mxu0 %v8325
    %8492 = vmatpush1.bf16.msra.mxu0 %v8324
    %8493 = vmatprep.subr.bf16.mxu0 %v8329
    %8494 = vmatpush1.bf16.msra.mxu0 %v8328
    %8495 = vmatprep.subr.bf16.mxu0 %v8333
    %8496 = vmatpush1.bf16.msra.mxu0 %v8332
    %8497 = vmatprep.subr.bf16.mxu0 %v8337
    %8498 = vmatpush1.bf16.msra.mxu0 %v8336
    %8499 = vmatprep.subr.bf16.mxu0 0
    %8500 = vmatpush1.bf16.msra.mxu0 0
    %8501 = vmatprep.subr.bf16.mxu0 0
    %8502 = vmatpush1.bf16.msra.mxu0 0
    %8503 = vmatprep.subr.bf16.mxu0 0
    %8504 = vmatpush1.bf16.msra.mxu0 0
    %8505 = vmatprep.subr.bf16.mxu0 0
    %8506 = vmatpush1.bf16.msra.mxu0 0
    %8507 = vmatprep.subr.bf16.mxu0 0
    %8508 = vmatpush1.bf16.msra.mxu0 0
    %8509 = vmatprep.subr.bf16.mxu0 0
    %8510 = vmatpush1.bf16.msra.mxu0 0
    %8511 = vmatprep.subr.bf16.mxu0 0
    %8512 = vmatpush1.bf16.msra.mxu0 0
    %8513 = vmatprep.subr.bf16.mxu0 0
    %8514 = vmatpush1.bf16.msra.mxu0 0
    %8515 = vmatprep.mubr.bf16.mxu0 0
    %8516 = vmatmul.mubr.bf16.gmra.mrb[0].mxu0 %v8146
    %v8517 = vpop.f32.mrb[0].mxu0
    %v8518 = vadd.f32 %v8201, %v8517
    %v8519 = vpop.f32.mrb[0].mxu0
    %v8520 = vadd.f32 %v8205, %v8519
    %v8521 = vpop.f32.mrb[0].mxu0
    %v8522 = vadd.f32 %v8201, %v8521
    %v8523 = vpop.f32.mrb[0].mxu0
    %v8524 = vadd.f32 %v8205, %v8523
    %8525 = vmatprep.mubr.bf16.mxu0 0
    %8526 = vmatmul.mubr.bf16.gmra.mrb[0].mxu0 %v8147
    %v8527 = vpop.f32.mrb[0].mxu0
    %v8528 = vadd.f32 %v8201, %v8527
    %v8529 = vpop.f32.mrb[0].mxu0
    %v8530 = vadd.f32 %v8205, %v8529
    %v8531 = vpop.f32.mrb[0].mxu0
    %v8532 = vadd.f32 %v8201, %v8531
    %v8533 = vpop.f32.mrb[0].mxu0
    %v8534 = vadd.f32 %v8205, %v8533
    %8535 = vmatprep.mubr.bf16.mxu0 0
    %8536 = vmatmul.mubr.bf16.gmra.mrb[0].mxu0 %v8148
    %v8537 = vpop.f32.mrb[0].mxu0
    %v8538 = vadd.f32 %v8201, %v8537
    %v8539 = vpop.f32.mrb[0].mxu0
    %v8540 = vadd.f32 %v8205, %v8539
    %v8541 = vpop.f32.mrb[0].mxu0
    %v8542 = vadd.f32 %v8201, %v8541
    %v8543 = vpop.f32.mrb[0].mxu0
    %v8544 = vadd.f32 %v8205, %v8543
    %8545 = vmatprep.mubr.bf16.mxu0 0
    %8546 = vmatmul.mubr.bf16.gmra.mrb[0].mxu0 %v8149
    %v8547 = vpop.f32.mrb[0].mxu0
    %v8548 = vadd.f32 %v8201, %v8547
    %v8549 = vpop.f32.mrb[0].mxu0
    %v8550 = vadd.f32 %v8205, %v8549
    %v8551 = vpop.f32.mrb[0].mxu0
    %v8552 = vadd.f32 %v8201, %v8551
    %v8553 = vpop.f32.mrb[0].mxu0
    %v8554 = vadd.f32 %v8205, %v8553
    %8555 = vmatprep.mubr.bf16.mxu0 0
    %8556 = vmatmul.mubr.bf16.gmra.mrb[0].mxu0 %v8150
    %v8557 = vpop.f32.mrb[0].mxu0
    %v8558 = vadd.f32 %v8201, %v8557
    %v8559 = vpop.f32.mrb[0].mxu0
    %v8560 = vadd.f32 %v8205, %v8559
    %v8561 = vpop.f32.mrb[0].mxu0
    %v8562 = vadd.f32 %v8201, %v8561
    %v8563 = vpop.f32.mrb[0].mxu0
    %v8564 = vadd.f32 %v8205, %v8563
    %8565 = vmatprep.mubr.bf16.mxu0 0
    %8566 = vmatmul.mubr.bf16.gmra.mrb[0].mxu0 %v8151
    %v8567 = vpop.f32.mrb[0].mxu0
    %v8568 = vadd.f32 %v8201, %v8567
    %v8569 = vpop.f32.mrb[0].mxu0
    %v8570 = vadd.f32 %v8205, %v8569
    %v8571 = vpop.f32.mrb[0].mxu0
    %v8572 = vadd.f32 %v8201, %v8571
    %v8573 = vpop.f32.mrb[0].mxu0
    %v8574 = vadd.f32 %v8205, %v8573
    %8575 = vmatprep.mubr.bf16.mxu0 0
    %8576 = vmatmul.mubr.bf16.gmra.mrb[0].mxu0 %v8152
    %v8577 = vpop.f32.mrb[0].mxu0
    %v8578 = vadd.f32 %v8201, %v8577
    %v8579 = vpop.f32.mrb[0].mxu0
    %v8580 = vadd.f32 %v8205, %v8579
    %v8581 = vpop.f32.mrb[0].mxu0
    %v8582 = vadd.f32 %v8201, %v8581
    %v8583 = vpop.f32.mrb[0].mxu0
    %v8584 = vadd.f32 %v8205, %v8583
    %8585 = vmatprep.mubr.bf16.mxu0 0
    %8586 = vmatmul.mubr.bf16.gmra.mrb[0].mxu0 %v8153
    %v8587 = vpop.f32.mrb[0].mxu0
    %v8588 = vadd.f32 %v8201, %v8587
    %v8589 = vpop.f32.mrb[0].mxu0
    %v8590 = vadd.f32 %v8205, %v8589
    %v8591 = vpop.f32.mrb[0].mxu0
    %v8592 = vadd.f32 %v8201, %v8591
    %v8593 = vpop.f32.mrb[0].mxu0
    %v8594 = vadd.f32 %v8205, %v8593
    %8595 = vdwg.mxu0
    %v8596 = vmax.f32 %v8405, 0.0
    %v8597 = vmax.f32 %v8407, 0.0
    %v8598 = vmax.f32 %v8518, 0.0
    %v8599 = vmax.f32 %v8520, 0.0
    %v8600 = vmax.f32 %v8409, 0.0
    %v8601 = vmax.f32 %v8411, 0.0
    %v8602 = vmax.f32 %v8522, 0.0
    %v8603 = vmax.f32 %v8524, 0.0
    %v8604 = vmax.f32 %v8415, 0.0
    %v8605 = vmax.f32 %v8417, 0.0
    %v8606 = vmax.f32 %v8528, 0.0
    %v8607 = vmax.f32 %v8530, 0.0
    %v8608 = vmax.f32 %v8419, 0.0
    %v8609 = vmax.f32 %v8421, 0.0
    %v8610 = vmax.f32 %v8532, 0.0
    %v8611 = vmax.f32 %v8534, 0.0
    %v8612 = vmax.f32 %v8425, 0.0
    %v8613 = vmax.f32 %v8427, 0.0
    %v8614 = vmax.f32 %v8538, 0.0
    %v8615 = vmax.f32 %v8540, 0.0
    %v8616 = vmax.f32 %v8429, 0.0
    %v8617 = vmax.f32 %v8431, 0.0
    %v8618 = vmax.f32 %v8542, 0.0
    %v8619 = vmax.f32 %v8544, 0.0
    %v8620 = vmax.f32 %v8435, 0.0
    %v8621 = vmax.f32 %v8437, 0.0
    %v8622 = vmax.f32 %v8548, 0.0
    %v8623 = vmax.f32 %v8550, 0.0
    %v8624 = vmax.f32 %v8439, 0.0
    %v8625 = vmax.f32 %v8441, 0.0
    %v8626 = vmax.f32 %v8552, 0.0
    %v8627 = vmax.f32 %v8554, 0.0
    %v8628 = vmax.f32 %v8445, 0.0
    %v8629 = vmax.f32 %v8447, 0.0
    %v8630 = vmax.f32 %v8558, 0.0
    %v8631 = vmax.f32 %v8560, 0.0
    %v8632 = vmax.f32 %v8449, 0.0
    %v8633 = vmax.f32 %v8451, 0.0
    %v8634 = vmax.f32 %v8562, 0.0
    %v8635 = vmax.f32 %v8564, 0.0
    %v8636 = vmax.f32 %v8455, 0.0
    %v8637 = vmax.f32 %v8457, 0.0
    %v8638 = vmax.f32 %v8568, 0.0
    %v8639 = vmax.f32 %v8570, 0.0
    %v8640 = vmax.f32 %v8459, 0.0
    %v8641 = vmax.f32 %v8461, 0.0
    %v8642 = vmax.f32 %v8572, 0.0
    %v8643 = vmax.f32 %v8574, 0.0
    %v8644 = vmax.f32 %v8465, 0.0
    %v8645 = vmax.f32 %v8467, 0.0
    %v8646 = vmax.f32 %v8578, 0.0
    %v8647 = vmax.f32 %v8580, 0.0
    %v8648 = vmax.f32 %v8469, 0.0
    %v8649 = vmax.f32 %v8471, 0.0
    %v8650 = vmax.f32 %v8582, 0.0
    %v8651 = vmax.f32 %v8584, 0.0
    %v8652 = vmax.f32 %v8475, 0.0
    %v8653 = vmax.f32 %v8477, 0.0
    %v8654 = vmax.f32 %v8588, 0.0
    %v8655 = vmax.f32 %v8590, 0.0
    %v8656 = vmax.f32 %v8479, 0.0
    %v8657 = vmax.f32 %v8481, 0.0
    %v8658 = vmax.f32 %v8592, 0.0
    %v8659 = vmax.f32 %v8594, 0.0
    %v8660 = vpack.c.bf16 %v8600, %v8596
    %v8661 = vpack.c.bf16 %v8601, %v8597
    %v8662 = vpack.c.bf16 %v8602, %v8598
    %v8663 = vpack.c.bf16 %v8603, %v8599
    %v8664 = vpack.c.bf16 %v8608, %v8604
    %v8665 = vpack.c.bf16 %v8609, %v8605
    %v8666 = vpack.c.bf16 %v8610, %v8606
    %v8667 = vpack.c.bf16 %v8611, %v8607
    %v8668 = vpack.c.bf16 %v8616, %v8612
    %v8669 = vpack.c.bf16 %v8617, %v8613
    %v8670 = vpack.c.bf16 %v8618, %v8614
    %v8671 = vpack.c.bf16 %v8619, %v8615
    %v8672 = vpack.c.bf16 %v8624, %v8620
    %v8673 = vpack.c.bf16 %v8625, %v8621
    %v8674 = vpack.c.bf16 %v8626, %v8622
    %v8675 = vpack.c.bf16 %v8627, %v8623
    %v8676 = vpack.c.bf16 %v8632, %v8628
    %v8677 = vpack.c.bf16 %v8633, %v8629
    %v8678 = vpack.c.bf16 %v8634, %v8630
    %v8679 = vpack.c.bf16 %v8635, %v8631
    %v8680 = vpack.c.bf16 %v8640, %v8636
    %v8681 = vpack.c.bf16 %v8641, %v8637
    %v8682 = vpack.c.bf16 %v8642, %v8638
    %v8683 = vpack.c.bf16 %v8643, %v8639
    %v8684 = vpack.c.bf16 %v8648, %v8644
    %v8685 = vpack.c.bf16 %v8649, %v8645
    %v8686 = vpack.c.bf16 %v8650, %v8646
    %v8687 = vpack.c.bf16 %v8651, %v8647
    %v8688 = vpack.c.bf16 %v8656, %v8652
    %v8689 = vpack.c.bf16 %v8657, %v8653
    %v8690 = vpack.c.bf16 %v8658, %v8654
    %v8691 = vpack.c.bf16 %v8659, %v8655
    %s8692 = scalar_lea.vmem [#allocation11], 256
    %v8693 = vld [vmem:[%s8692] sm:$0xf]
    %v8694 = vld [vmem:[%s8692 + $0x4] sm:$0xf]
    %v8695 = vld [vmem:[%s8692 + $0x8] sm:$0xf]
    %v8696 = vld [vmem:[%s8692 + $0xc] sm:$0xf]
    %v8697 = vld [vmem:[%s8692 + $0x10] sm:$0xf]
    %v8698 = vld [vmem:[%s8692 + $0x14] sm:$0xf]
    %v8699 = vld [vmem:[%s8692 + $0x18] sm:$0xf]
    %v8700 = vld [vmem:[%s8692 + $0x1c] sm:$0xf]
    %v8701 = vld [vmem:[%s8692 + $0x20] sm:$0xf]
    %v8702 = vld [vmem:[%s8692 + $0x24] sm:$0xf]
    %v8703 = vld [vmem:[%s8692 + $0x28] sm:$0xf]
    %v8704 = vld [vmem:[%s8692 + $0x2c] sm:$0xf]
    %v8705 = vld [vmem:[%s8692 + $0x30] sm:$0xf]
    %v8706 = vld [vmem:[%s8692 + $0x34] sm:$0xf]
    %v8707 = vld [vmem:[%s8692 + $0x38] sm:$0xf]
    %v8708 = vld [vmem:[%s8692 + $0x3c] sm:$0xf]
    %v8709 = vld [vmem:[%s8692 + $0x40] sm:$0xf]
    %v8710 = vld [vmem:[%s8692 + $0x44] sm:$0xf]
    %v8711 = vld [vmem:[%s8692 + $0x48] sm:$0xf]
    %v8712 = vld [vmem:[%s8692 + $0x4c] sm:$0xf]
    %v8713 = vld [vmem:[%s8692 + $0x50] sm:$0xf]
    %v8714 = vld [vmem:[%s8692 + $0x54] sm:$0xf]
    %v8715 = vld [vmem:[%s8692 + $0x58] sm:$0xf]
    %v8716 = vld [vmem:[%s8692 + $0x5c] sm:$0xf]
    %v8717 = vld [vmem:[%s8692 + $0x60] sm:$0xf]
    %v8718 = vld [vmem:[%s8692 + $0x64] sm:$0xf]
    %v8719 = vld [vmem:[%s8692 + $0x68] sm:$0xf]
    %v8720 = vld [vmem:[%s8692 + $0x6c] sm:$0xf]
    %v8721 = vld [vmem:[%s8692 + $0x70] sm:$0xf]
    %v8722 = vld [vmem:[%s8692 + $0x74] sm:$0xf]
    %v8723 = vld [vmem:[%s8692 + $0x78] sm:$0xf]
    %v8724 = vld [vmem:[%s8692 + $0x7c] sm:$0xf]
    %v8725 = vld [vmem:[%s8692 + $0x80] sm:$0xf]
    %v8726 = vld [vmem:[%s8692 + $0x84] sm:$0xf]
    %v8727 = vld [vmem:[%s8692 + $0x88] sm:$0xf]
    %v8728 = vld [vmem:[%s8692 + $0x8c] sm:$0xf]
    %v8729 = vld [vmem:[%s8692 + $0x90] sm:$0xf]
    %v8730 = vld [vmem:[%s8692 + $0x94] sm:$0xf]
    %v8731 = vld [vmem:[%s8692 + $0x98] sm:$0xf]
    %v8732 = vld [vmem:[%s8692 + $0x9c] sm:$0xf]
    %v8733 = vld [vmem:[%s8692 + $0xa0] sm:$0xf]
    %v8734 = vld [vmem:[%s8692 + $0xa4] sm:$0xf]
    %v8735 = vld [vmem:[%s8692 + $0xa8] sm:$0xf]
    %v8736 = vld [vmem:[%s8692 + $0xac] sm:$0xf]
    %v8737 = vld [vmem:[%s8692 + $0xb0] sm:$0xf]
    %v8738 = vld [vmem:[%s8692 + $0xb4] sm:$0xf]
    %v8739 = vld [vmem:[%s8692 + $0xb8] sm:$0xf]
    %v8740 = vld [vmem:[%s8692 + $0xbc] sm:$0xf]
    %v8741 = vld [vmem:[%s8692 + $0xc0] sm:$0xf]
    %v8742 = vld [vmem:[%s8692 + $0xc4] sm:$0xf]
    %v8743 = vld [vmem:[%s8692 + $0xc8] sm:$0xf]
    %v8744 = vld [vmem:[%s8692 + $0xcc] sm:$0xf]
    %v8745 = vld [vmem:[%s8692 + $0xd0] sm:$0xf]
    %v8746 = vld [vmem:[%s8692 + $0xd4] sm:$0xf]
    %v8747 = vld [vmem:[%s8692 + $0xd8] sm:$0xf]
    %v8748 = vld [vmem:[%s8692 + $0xdc] sm:$0xf]
    %v8749 = vld [vmem:[%s8692 + $0xe0] sm:$0xf]
    %v8750 = vld [vmem:[%s8692 + $0xe4] sm:$0xf]
    %v8751 = vld [vmem:[%s8692 + $0xe8] sm:$0xf]
    %v8752 = vld [vmem:[%s8692 + $0xec] sm:$0xf]
    %v8753 = vld [vmem:[%s8692 + $0xf0] sm:$0xf]
    %v8754 = vld [vmem:[%s8692 + $0xf4] sm:$0xf]
    %v8755 = vld [vmem:[%s8692 + $0xf8] sm:$0xf]
    %v8756 = vld [vmem:[%s8692 + $0xfc] sm:$0xf]
    %s8757 = scalar_lea.vmem %s9, 1
    %v8758 = vld [vmem:[%s8757] sm:$0x1]
    %v8760 = vlaneseq
    %v8761 = vshrl.u32 %v8760, 7
    %v8762 = vsub.s32 0, %v8761
    %v8763 = vrot.slane %v8758, %v8762
    %v8829 = vunpack.c.l.b16 %v8693
    %v8830 = vunpack.c.l.b16 %v8694
    %v8831 = vunpack.c.l.b16 %v8695
    %v8832 = vunpack.c.l.b16 %v8696
    %v8833 = vunpack.c.l.b16 %v8697
    %v8834 = vunpack.c.l.b16 %v8698
    %v8835 = vunpack.c.l.b16 %v8699
    %v8836 = vunpack.c.l.b16 %v8700
    %v8837 = vunpack.c.l.b16 %v8701
    %v8838 = vunpack.c.l.b16 %v8702
    %v8839 = vunpack.c.l.b16 %v8703
    %v8840 = vunpack.c.l.b16 %v8704
    %v8841 = vunpack.c.l.b16 %v8705
    %v8842 = vunpack.c.l.b16 %v8706
    %v8843 = vunpack.c.l.b16 %v8707
    %v8844 = vunpack.c.l.b16 %v8708
    %v8845 = vunpack.c.l.b16 %v8709
    %v8846 = vunpack.c.l.b16 %v8710
    %v8847 = vunpack.c.l.b16 %v8711
    %v8848 = vunpack.c.l.b16 %v8712
    %v8849 = vunpack.c.l.b16 %v8713
    %v8850 = vunpack.c.l.b16 %v8714
    %v8851 = vunpack.c.l.b16 %v8715
    %v8852 = vunpack.c.l.b16 %v8716
    %v8853 = vunpack.c.l.b16 %v8717
    %v8854 = vunpack.c.l.b16 %v8718
    %v8855 = vunpack.c.l.b16 %v8719
    %v8856 = vunpack.c.l.b16 %v8720
    %v8857 = vunpack.c.l.b16 %v8721
    %v8858 = vunpack.c.l.b16 %v8722
    %v8859 = vunpack.c.l.b16 %v8723
    %v8860 = vunpack.c.l.b16 %v8724
    %v8861 = vunpack.c.l.b16 %v8725
    %v8862 = vunpack.c.l.b16 %v8726
    %v8863 = vunpack.c.l.b16 %v8727
    %v8864 = vunpack.c.l.b16 %v8728
    %v8865 = vunpack.c.l.b16 %v8729
    %v8866 = vunpack.c.l.b16 %v8730
    %v8867 = vunpack.c.l.b16 %v8731
    %v8868 = vunpack.c.l.b16 %v8732
    %v8869 = vunpack.c.l.b16 %v8733
    %v8870 = vunpack.c.l.b16 %v8734
    %v8871 = vunpack.c.l.b16 %v8735
    %v8872 = vunpack.c.l.b16 %v8736
    %v8873 = vunpack.c.l.b16 %v8737
    %v8874 = vunpack.c.l.b16 %v8738
    %v8875 = vunpack.c.l.b16 %v8739
    %v8876 = vunpack.c.l.b16 %v8740
    %v8877 = vunpack.c.l.b16 %v8741
    %v8878 = vunpack.c.l.b16 %v8742
    %v8879 = vunpack.c.l.b16 %v8743
    %v8880 = vunpack.c.l.b16 %v8744
    %v8881 = vunpack.c.l.b16 %v8745
    %v8882 = vunpack.c.l.b16 %v8746
    %v8883 = vunpack.c.l.b16 %v8747
    %v8884 = vunpack.c.l.b16 %v8748
    %v8885 = vunpack.c.l.b16 %v8749
    %v8886 = vunpack.c.l.b16 %v8750
    %v8887 = vunpack.c.l.b16 %v8751
    %v8888 = vunpack.c.l.b16 %v8752
    %v8889 = vunpack.c.l.b16 %v8753
    %v8890 = vunpack.c.l.b16 %v8754
    %v8891 = vunpack.c.l.b16 %v8755
    %v8892 = vunpack.c.l.b16 %v8756
    %v8893 = vpack.c.b16 %v8830, %v8829
    %v8894 = vpack.c.b16 %v8832, %v8831
    %v8895 = vpack.c.b16 %v8834, %v8833
    %v8896 = vpack.c.b16 %v8836, %v8835
    %v8897 = vpack.c.b16 %v8838, %v8837
    %v8898 = vpack.c.b16 %v8840, %v8839
    %v8899 = vpack.c.b16 %v8842, %v8841
    %v8900 = vpack.c.b16 %v8844, %v8843
    %v8901 = vpack.c.b16 %v8846, %v8845
    %v8902 = vpack.c.b16 %v8848, %v8847
    %v8903 = vpack.c.b16 %v8850, %v8849
    %v8904 = vpack.c.b16 %v8852, %v8851
    %v8905 = vpack.c.b16 %v8854, %v8853
    %v8906 = vpack.c.b16 %v8856, %v8855
    %v8907 = vpack.c.b16 %v8858, %v8857
    %v8908 = vpack.c.b16 %v8860, %v8859
    %v8909 = vpack.c.b16 %v8862, %v8861
    %v8910 = vpack.c.b16 %v8864, %v8863
    %v8911 = vpack.c.b16 %v8866, %v8865
    %v8912 = vpack.c.b16 %v8868, %v8867
    %v8913 = vpack.c.b16 %v8870, %v8869
    %v8914 = vpack.c.b16 %v8872, %v8871
    %v8915 = vpack.c.b16 %v8874, %v8873
    %v8916 = vpack.c.b16 %v8876, %v8875
    %v8917 = vpack.c.b16 %v8878, %v8877
    %v8918 = vpack.c.b16 %v8880, %v8879
    %v8919 = vpack.c.b16 %v8882, %v8881
    %v8920 = vpack.c.b16 %v8884, %v8883
    %v8921 = vpack.c.b16 %v8886, %v8885
    %v8922 = vpack.c.b16 %v8888, %v8887
    %v8923 = vpack.c.b16 %v8890, %v8889
    %v8924 = vpack.c.b16 %v8892, %v8891
    %8957 = vmatprep.subr.bf16.mxu0 0
    %8958 = vmatpush1.bf16.msra.mxu0 %v8893
    %8959 = vmatprep.subr.bf16.mxu0 0
    %8960 = vmatpush1.bf16.msra.mxu0 %v8894
    %8961 = vmatprep.subr.bf16.mxu0 0
    %8962 = vmatpush1.bf16.msra.mxu0 %v8895
    %8963 = vmatprep.subr.bf16.mxu0 0
    %8964 = vmatpush1.bf16.msra.mxu0 %v8896
    %8965 = vmatprep.subr.bf16.mxu0 0
    %8966 = vmatpush1.bf16.msra.mxu0 %v8897
    %8967 = vmatprep.subr.bf16.mxu0 0
    %8968 = vmatpush1.bf16.msra.mxu0 %v8898
    %8969 = vmatprep.subr.bf16.mxu0 0
    %8970 = vmatpush1.bf16.msra.mxu0 %v8899
    %8971 = vmatprep.subr.bf16.mxu0 0
    %8972 = vmatpush1.bf16.msra.mxu0 %v8900
    %8973 = vmatprep.subr.bf16.mxu0 0
    %8974 = vmatpush1.bf16.msra.mxu0 %v8901
    %8975 = vmatprep.subr.bf16.mxu0 0
    %8976 = vmatpush1.bf16.msra.mxu0 %v8902
    %8977 = vmatprep.subr.bf16.mxu0 0
    %8978 = vmatpush1.bf16.msra.mxu0 %v8903
    %8979 = vmatprep.subr.bf16.mxu0 0
    %8980 = vmatpush1.bf16.msra.mxu0 %v8904
    %8981 = vmatprep.subr.bf16.mxu0 0
    %8982 = vmatpush1.bf16.msra.mxu0 %v8905
    %8983 = vmatprep.subr.bf16.mxu0 0
    %8984 = vmatpush1.bf16.msra.mxu0 %v8906
    %8985 = vmatprep.subr.bf16.mxu0 0
    %8986 = vmatpush1.bf16.msra.mxu0 %v8907
    %8987 = vmatprep.subr.bf16.mxu0 0
    %8988 = vmatpush1.bf16.msra.mxu0 %v8908
    %8989 = vmatprep.mubr.bf16.mxu0 %v8661
    %8990 = vmatmul.mubr.bf16.gmra.mrb[0].mxu0 %v8660
    %v8991 = vpop.f32.mrb[0].mxu0
    %v8992 = vadd.f32 %v8763, %v8991
    %v8993 = vpop.f32.mrb[0].mxu0
    %v8994 = vpop.f32.mrb[0].mxu0
    %v8995 = vadd.f32 %v8763, %v8994
    %v8996 = vpop.f32.mrb[0].mxu0
    %8997 = vmatprep.mubr.bf16.mxu0 %v8665
    %8998 = vmatmul.mubr.bf16.gmra.mrb[0].mxu0 %v8664
    %v8999 = vpop.f32.mrb[0].mxu0
    %v9000 = vadd.f32 %v8763, %v8999
    %v9001 = vpop.f32.mrb[0].mxu0
    %v9002 = vpop.f32.mrb[0].mxu0
    %v9003 = vadd.f32 %v8763, %v9002
    %v9004 = vpop.f32.mrb[0].mxu0
    %9005 = vmatprep.mubr.bf16.mxu0 %v8669
    %9006 = vmatmul.mubr.bf16.gmra.mrb[0].mxu0 %v8668
    %v9007 = vpop.f32.mrb[0].mxu0
    %v9008 = vadd.f32 %v8763, %v9007
    %v9009 = vpop.f32.mrb[0].mxu0
    %v9010 = vpop.f32.mrb[0].mxu0
    %v9011 = vadd.f32 %v8763, %v9010
    %v9012 = vpop.f32.mrb[0].mxu0
    %9013 = vmatprep.mubr.bf16.mxu0 %v8673
    %9014 = vmatmul.mubr.bf16.gmra.mrb[0].mxu0 %v8672
    %v9015 = vpop.f32.mrb[0].mxu0
    %v9016 = vadd.f32 %v8763, %v9015
    %v9017 = vpop.f32.mrb[0].mxu0
    %v9018 = vpop.f32.mrb[0].mxu0
    %v9019 = vadd.f32 %v8763, %v9018
    %v9020 = vpop.f32.mrb[0].mxu0
    %9021 = vmatprep.mubr.bf16.mxu0 %v8677
    %9022 = vmatmul.mubr.bf16.gmra.mrb[0].mxu0 %v8676
    %v9023 = vpop.f32.mrb[0].mxu0
    %v9024 = vadd.f32 %v8763, %v9023
    %v9025 = vpop.f32.mrb[0].mxu0
    %v9026 = vpop.f32.mrb[0].mxu0
    %v9027 = vadd.f32 %v8763, %v9026
    %v9028 = vpop.f32.mrb[0].mxu0
    %9029 = vmatprep.mubr.bf16.mxu0 %v8681
    %9030 = vmatmul.mubr.bf16.gmra.mrb[0].mxu0 %v8680
    %v9031 = vpop.f32.mrb[0].mxu0
    %v9032 = vadd.f32 %v8763, %v9031
    %v9033 = vpop.f32.mrb[0].mxu0
    %v9034 = vpop.f32.mrb[0].mxu0
    %v9035 = vadd.f32 %v8763, %v9034
    %v9036 = vpop.f32.mrb[0].mxu0
    %9037 = vmatprep.mubr.bf16.mxu0 %v8685
    %9038 = vmatmul.mubr.bf16.gmra.mrb[0].mxu0 %v8684
    %v9039 = vpop.f32.mrb[0].mxu0
    %v9040 = vadd.f32 %v8763, %v9039
    %v9041 = vpop.f32.mrb[0].mxu0
    %v9042 = vpop.f32.mrb[0].mxu0
    %v9043 = vadd.f32 %v8763, %v9042
    %v9044 = vpop.f32.mrb[0].mxu0
    %9045 = vmatprep.mubr.bf16.mxu0 %v8689
    %9046 = vmatmul.mubr.bf16.gmra.mrb[0].mxu0 %v8688
    %v9047 = vpop.f32.mrb[0].mxu0
    %v9048 = vadd.f32 %v8763, %v9047
    %v9049 = vpop.f32.mrb[0].mxu0
    %v9050 = vpop.f32.mrb[0].mxu0
    %v9051 = vadd.f32 %v8763, %v9050
    %v9052 = vpop.f32.mrb[0].mxu0
    %9053 = vdwg.mxu0
    %9054 = vmatprep.subr.bf16.mxu0 0
    %9055 = vmatpush1.bf16.msra.mxu0 %v8909
    %9056 = vmatprep.subr.bf16.mxu0 0
    %9057 = vmatpush1.bf16.msra.mxu0 %v8910
    %9058 = vmatprep.subr.bf16.mxu0 0
    %9059 = vmatpush1.bf16.msra.mxu0 %v8911
    %9060 = vmatprep.subr.bf16.mxu0 0
    %9061 = vmatpush1.bf16.msra.mxu0 %v8912
    %9062 = vmatprep.subr.bf16.mxu0 0
    %9063 = vmatpush1.bf16.msra.mxu0 %v8913
    %9064 = vmatprep.subr.bf16.mxu0 0
    %9065 = vmatpush1.bf16.msra.mxu0 %v8914
    %9066 = vmatprep.subr.bf16.mxu0 0
    %9067 = vmatpush1.bf16.msra.mxu0 %v8915
    %9068 = vmatprep.subr.bf16.mxu0 0
    %9069 = vmatpush1.bf16.msra.mxu0 %v8916
    %9070 = vmatprep.subr.bf16.mxu0 0
    %9071 = vmatpush1.bf16.msra.mxu0 %v8917
    %9072 = vmatprep.subr.bf16.mxu0 0
    %9073 = vmatpush1.bf16.msra.mxu0 %v8918
    %9074 = vmatprep.subr.bf16.mxu0 0
    %9075 = vmatpush1.bf16.msra.mxu0 %v8919
    %9076 = vmatprep.subr.bf16.mxu0 0
    %9077 = vmatpush1.bf16.msra.mxu0 %v8920
    %9078 = vmatprep.subr.bf16.mxu0 0
    %9079 = vmatpush1.bf16.msra.mxu0 %v8921
    %9080 = vmatprep.subr.bf16.mxu0 0
    %9081 = vmatpush1.bf16.msra.mxu0 %v8922
    %9082 = vmatprep.subr.bf16.mxu0 0
    %9083 = vmatpush1.bf16.msra.mxu0 %v8923
    %9084 = vmatprep.subr.bf16.mxu0 0
    %9085 = vmatpush1.bf16.msra.mxu0 %v8924
    %9086 = vmatprep.mubr.bf16.mxu0 %v8663
    %9087 = vmatmul.mubr.bf16.gmra.mrb[0].mxu0 %v8662
    %v9088 = vpop.f32.mrb[0].mxu0
    %v9089 = vadd.f32 %v8992, %v9088
    %v9090 = vpop.f32.mrb[0].mxu0
    %v9091 = vpop.f32.mrb[0].mxu0
    %v9092 = vadd.f32 %v8995, %v9091
    %v9093 = vpop.f32.mrb[0].mxu0
    %9094 = vmatprep.mubr.bf16.mxu0 %v8667
    %9095 = vmatmul.mubr.bf16.gmra.mrb[0].mxu0 %v8666
    %v9096 = vpop.f32.mrb[0].mxu0
    %v9097 = vadd.f32 %v9000, %v9096
    %v9098 = vpop.f32.mrb[0].mxu0
    %v9099 = vpop.f32.mrb[0].mxu0
    %v9100 = vadd.f32 %v9003, %v9099
    %v9101 = vpop.f32.mrb[0].mxu0
    %9102 = vmatprep.mubr.bf16.mxu0 %v8671
    %9103 = vmatmul.mubr.bf16.gmra.mrb[0].mxu0 %v8670
    %v9104 = vpop.f32.mrb[0].mxu0
    %v9105 = vadd.f32 %v9008, %v9104
    %v9106 = vpop.f32.mrb[0].mxu0
    %v9107 = vpop.f32.mrb[0].mxu0
    %v9108 = vadd.f32 %v9011, %v9107
    %v9109 = vpop.f32.mrb[0].mxu0
    %9110 = vmatprep.mubr.bf16.mxu0 %v8675
    %9111 = vmatmul.mubr.bf16.gmra.mrb[0].mxu0 %v8674
    %v9112 = vpop.f32.mrb[0].mxu0
    %v9113 = vadd.f32 %v9016, %v9112
    %v9114 = vpop.f32.mrb[0].mxu0
    %v9115 = vpop.f32.mrb[0].mxu0
    %v9116 = vadd.f32 %v9019, %v9115
    %v9117 = vpop.f32.mrb[0].mxu0
    %9118 = vmatprep.mubr.bf16.mxu0 %v8679
    %9119 = vmatmul.mubr.bf16.gmra.mrb[0].mxu0 %v8678
    %v9120 = vpop.f32.mrb[0].mxu0
    %v9121 = vadd.f32 %v9024, %v9120
    %v9122 = vpop.f32.mrb[0].mxu0
    %v9123 = vpop.f32.mrb[0].mxu0
    %v9124 = vadd.f32 %v9027, %v9123
    %v9125 = vpop.f32.mrb[0].mxu0
    %9126 = vmatprep.mubr.bf16.mxu0 %v8683
    %9127 = vmatmul.mubr.bf16.gmra.mrb[0].mxu0 %v8682
    %v9128 = vpop.f32.mrb[0].mxu0
    %v9129 = vadd.f32 %v9032, %v9128
    %v9130 = vpop.f32.mrb[0].mxu0
    %v9131 = vpop.f32.mrb[0].mxu0
    %v9132 = vadd.f32 %v9035, %v9131
    %v9133 = vpop.f32.mrb[0].mxu0
    %9134 = vmatprep.mubr.bf16.mxu0 %v8687
    %9135 = vmatmul.mubr.bf16.gmra.mrb[0].mxu0 %v8686
    %v9136 = vpop.f32.mrb[0].mxu0
    %v9137 = vadd.f32 %v9040, %v9136
    %v9138 = vpop.f32.mrb[0].mxu0
    %v9139 = vpop.f32.mrb[0].mxu0
    %v9140 = vadd.f32 %v9043, %v9139
    %v9141 = vpop.f32.mrb[0].mxu0
    %9142 = vmatprep.mubr.bf16.mxu0 %v8691
    %9143 = vmatmul.mubr.bf16.gmra.mrb[0].mxu0 %v8690
    %v9144 = vpop.f32.mrb[0].mxu0
    %v9145 = vadd.f32 %v9048, %v9144
    %v9146 = vpop.f32.mrb[0].mxu0
    %v9147 = vpop.f32.mrb[0].mxu0
    %v9148 = vadd.f32 %v9051, %v9147
    %v9149 = vpop.f32.mrb[0].mxu0
    %9150 = vdwg.mxu0
    %v9151 = vadd.f32 %v7912, %v9089
    %v9152 = vadd.f32 %v7913, %v9092
    %v9153 = vadd.f32 %v7914, %v9097
    %v9154 = vadd.f32 %v7915, %v9100
    %v9155 = vadd.f32 %v7916, %v9105
    %v9156 = vadd.f32 %v7917, %v9108
    %v9157 = vadd.f32 %v7918, %v9113
    %v9158 = vadd.f32 %v7919, %v9116
    %v9159 = vadd.f32 %v7920, %v9121
    %v9160 = vadd.f32 %v7921, %v9124
    %v9161 = vadd.f32 %v7922, %v9129
    %v9162 = vadd.f32 %v7923, %v9132
    %v9163 = vadd.f32 %v7924, %v9137
    %v9164 = vadd.f32 %v7925, %v9140
    %v9165 = vadd.f32 %v7926, %v9145
    %v9166 = vadd.f32 %v7927, %v9148
    %v9167 = vld [vmem:[%s10] sm:$0x3]
    %9168 = vadd.xlane.f32.xlu0 %v9151
    %v9169 = vpop.xlane.xlu0 %9168
    %9170 = vadd.xlane.f32.xlu0 %v9152
    %v9171 = vpop.xlane.xlu0 %9170
    %9172 = vadd.xlane.f32.xlu0 %v9153
    %v9173 = vpop.xlane.xlu0 %9172
    %9174 = vadd.xlane.f32.xlu0 %v9154
    %v9175 = vpop.xlane.xlu0 %9174
    %9176 = vadd.xlane.f32.xlu0 %v9155
    %v9177 = vpop.xlane.xlu0 %9176
    %9178 = vadd.xlane.f32.xlu0 %v9156
    %v9179 = vpop.xlane.xlu0 %9178
    %9180 = vadd.xlane.f32.xlu0 %v9157
    %v9181 = vpop.xlane.xlu0 %9180
    %9182 = vadd.xlane.f32.xlu0 %v9158
    %v9183 = vpop.xlane.xlu0 %9182
    %9184 = vadd.xlane.f32.xlu0 %v9159
    %v9185 = vpop.xlane.xlu0 %9184
    %9186 = vadd.xlane.f32.xlu0 %v9160
    %v9187 = vpop.xlane.xlu0 %9186
    %9188 = vadd.xlane.f32.xlu0 %v9161
    %v9189 = vpop.xlane.xlu0 %9188
    %9190 = vadd.xlane.f32.xlu0 %v9162
    %v9191 = vpop.xlane.xlu0 %9190
    %9192 = vadd.xlane.f32.xlu0 %v9163
    %v9193 = vpop.xlane.xlu0 %9192
    %9194 = vadd.xlane.f32.xlu0 %v9164
    %v9195 = vpop.xlane.xlu0 %9194
    %9196 = vadd.xlane.f32.xlu0 %v9165
    %v9197 = vpop.xlane.xlu0 %9196
    %9198 = vadd.xlane.f32.xlu0 %v9166
    %v9199 = vpop.xlane.xlu0 %9198
    %v9200 = vmul.f32 %v9169, %v233
    %v9201 = vmul.f32 %v9171, %v233
    %v9202 = vmul.f32 %v9173, %v233
    %v9203 = vmul.f32 %v9175, %v233
    %v9204 = vmul.f32 %v9177, %v233
    %v9205 = vmul.f32 %v9179, %v233
    %v9206 = vmul.f32 %v9181, %v233
    %v9207 = vmul.f32 %v9183, %v233
    %v9208 = vmul.f32 %v9185, %v233
    %v9209 = vmul.f32 %v9187, %v233
    %v9210 = vmul.f32 %v9189, %v233
    %v9211 = vmul.f32 %v9191, %v233
    %v9212 = vmul.f32 %v9193, %v233
    %v9213 = vmul.f32 %v9195, %v233
    %v9214 = vmul.f32 %v9197, %v233
    %v9215 = vmul.f32 %v9199, %v233
    %v9216 = vsub.f32 %v9151, %v9200
    %v9217 = vsub.f32 %v9152, %v9201
    %v9218 = vsub.f32 %v9153, %v9202
    %v9219 = vsub.f32 %v9154, %v9203
    %v9220 = vsub.f32 %v9155, %v9204
    %v9221 = vsub.f32 %v9156, %v9205
    %v9222 = vsub.f32 %v9157, %v9206
    %v9223 = vsub.f32 %v9158, %v9207
    %v9224 = vsub.f32 %v9159, %v9208
    %v9225 = vsub.f32 %v9160, %v9209
    %v9226 = vsub.f32 %v9161, %v9210
    %v9227 = vsub.f32 %v9162, %v9211
    %v9228 = vsub.f32 %v9163, %v9212
    %v9229 = vsub.f32 %v9164, %v9213
    %v9230 = vsub.f32 %v9165, %v9214
    %v9231 = vsub.f32 %v9166, %v9215
    %v9232 = vmul.f32 %v9216, %v9216
    %v9233 = vmul.f32 %v9217, %v9217
    %v9234 = vmul.f32 %v9218, %v9218
    %v9235 = vmul.f32 %v9219, %v9219
    %v9236 = vmul.f32 %v9220, %v9220
    %v9237 = vmul.f32 %v9221, %v9221
    %v9238 = vmul.f32 %v9222, %v9222
    %v9239 = vmul.f32 %v9223, %v9223
    %v9240 = vmul.f32 %v9224, %v9224
    %v9241 = vmul.f32 %v9225, %v9225
    %v9242 = vmul.f32 %v9226, %v9226
    %v9243 = vmul.f32 %v9227, %v9227
    %v9244 = vmul.f32 %v9228, %v9228
    %v9245 = vmul.f32 %v9229, %v9229
    %v9246 = vmul.f32 %v9230, %v9230
    %v9247 = vmul.f32 %v9231, %v9231
    %9248 = vadd.xlane.f32.xlu0 %v9232
    %v9249 = vpop.xlane.xlu0 %9248
    %9250 = vadd.xlane.f32.xlu0 %v9233
    %v9251 = vpop.xlane.xlu0 %9250
    %9252 = vadd.xlane.f32.xlu0 %v9234
    %v9253 = vpop.xlane.xlu0 %9252
    %9254 = vadd.xlane.f32.xlu0 %v9235
    %v9255 = vpop.xlane.xlu0 %9254
    %9256 = vadd.xlane.f32.xlu0 %v9236
    %v9257 = vpop.xlane.xlu0 %9256
    %9258 = vadd.xlane.f32.xlu0 %v9237
    %v9259 = vpop.xlane.xlu0 %9258
    %9260 = vadd.xlane.f32.xlu0 %v9238
    %v9261 = vpop.xlane.xlu0 %9260
    %9262 = vadd.xlane.f32.xlu0 %v9239
    %v9263 = vpop.xlane.xlu0 %9262
    %9264 = vadd.xlane.f32.xlu0 %v9240
    %v9265 = vpop.xlane.xlu0 %9264
    %9266 = vadd.xlane.f32.xlu0 %v9241
    %v9267 = vpop.xlane.xlu0 %9266
    %9268 = vadd.xlane.f32.xlu0 %v9242
    %v9269 = vpop.xlane.xlu0 %9268
    %9270 = vadd.xlane.f32.xlu0 %v9243
    %v9271 = vpop.xlane.xlu0 %9270
    %9272 = vadd.xlane.f32.xlu0 %v9244
    %v9273 = vpop.xlane.xlu0 %9272
    %9274 = vadd.xlane.f32.xlu0 %v9245
    %v9275 = vpop.xlane.xlu0 %9274
    %9276 = vadd.xlane.f32.xlu0 %v9246
    %v9277 = vpop.xlane.xlu0 %9276
    %9278 = vadd.xlane.f32.xlu0 %v9247
    %v9279 = vpop.xlane.xlu0 %9278
    %v9280 = vmul.f32 %v9249, %v233
    %v9281 = vmul.f32 %v9251, %v233
    %v9282 = vmul.f32 %v9253, %v233
    %v9283 = vmul.f32 %v9255, %v233
    %v9284 = vmul.f32 %v9257, %v233
    %v9285 = vmul.f32 %v9259, %v233
    %v9286 = vmul.f32 %v9261, %v233
    %v9287 = vmul.f32 %v9263, %v233
    %v9288 = vmul.f32 %v9265, %v233
    %v9289 = vmul.f32 %v9267, %v233
    %v9290 = vmul.f32 %v9269, %v233
    %v9291 = vmul.f32 %v9271, %v233
    %v9292 = vmul.f32 %v9273, %v233
    %v9293 = vmul.f32 %v9275, %v233
    %v9294 = vmul.f32 %v9277, %v233
    %v9295 = vmul.f32 %v9279, %v233
    %v9296 = vadd.f32 %v9280, 1e-05
    %v9297 = vadd.f32 %v9281, 1e-05
    %v9298 = vadd.f32 %v9282, 1e-05
    %v9299 = vadd.f32 %v9283, 1e-05
    %v9300 = vadd.f32 %v9284, 1e-05
    %v9301 = vadd.f32 %v9285, 1e-05
    %v9302 = vadd.f32 %v9286, 1e-05
    %v9303 = vadd.f32 %v9287, 1e-05
    %v9304 = vadd.f32 %v9288, 1e-05
    %v9305 = vadd.f32 %v9289, 1e-05
    %v9306 = vadd.f32 %v9290, 1e-05
    %v9307 = vadd.f32 %v9291, 1e-05
    %v9308 = vadd.f32 %v9292, 1e-05
    %v9309 = vadd.f32 %v9293, 1e-05
    %v9310 = vadd.f32 %v9294, 1e-05
    %v9311 = vadd.f32 %v9295, 1e-05
    %v9312 = vrsqrt.pop %v9296
    %v9313 = vrsqrt.pop %v9297
    %v9314 = vrsqrt.pop %v9298
    %v9315 = vrsqrt.pop %v9299
    %v9316 = vrsqrt.pop %v9300
    %v9317 = vrsqrt.pop %v9301
    %v9318 = vrsqrt.pop %v9302
    %v9319 = vrsqrt.pop %v9303
    %v9320 = vrsqrt.pop %v9304
    %v9321 = vrsqrt.pop %v9305
    %v9322 = vrsqrt.pop %v9306
    %v9323 = vrsqrt.pop %v9307
    %v9324 = vrsqrt.pop %v9308
    %v9325 = vrsqrt.pop %v9309
    %v9326 = vrsqrt.pop %v9310
    %v9327 = vrsqrt.pop %v9311
    %v9328 = vmul.f32 %v9216, %v9312
    %v9329 = vmul.f32 %v9217, %v9313
    %v9330 = vmul.f32 %v9218, %v9314
    %v9331 = vmul.f32 %v9219, %v9315
    %v9332 = vmul.f32 %v9220, %v9316
    %v9333 = vmul.f32 %v9221, %v9317
    %v9334 = vmul.f32 %v9222, %v9318
    %v9335 = vmul.f32 %v9223, %v9319
    %v9336 = vmul.f32 %v9224, %v9320
    %v9337 = vmul.f32 %v9225, %v9321
    %v9338 = vmul.f32 %v9226, %v9322
    %v9339 = vmul.f32 %v9227, %v9323
    %v9340 = vmul.f32 %v9228, %v9324
    %v9341 = vmul.f32 %v9229, %v9325
    %v9342 = vmul.f32 %v9230, %v9326
    %v9343 = vmul.f32 %v9231, %v9327
    %v9344 = vlaneseq
    %v9345 = vshrl.u32 %v9344, 7
    %v9346 = vsub.s32 0, %v9345
    %v9347 = vrot.slane %v9167, %v9346
    %v9348 = vmul.f32 %v9328, %v9347
    %v9349 = vmul.f32 %v9329, %v9347
    %v9350 = vmul.f32 %v9330, %v9347
    %v9351 = vmul.f32 %v9331, %v9347
    %v9352 = vmul.f32 %v9332, %v9347
    %v9353 = vmul.f32 %v9333, %v9347
    %v9354 = vmul.f32 %v9334, %v9347
    %v9355 = vmul.f32 %v9335, %v9347
    %v9356 = vmul.f32 %v9336, %v9347
    %v9357 = vmul.f32 %v9337, %v9347
    %v9358 = vmul.f32 %v9338, %v9347
    %v9359 = vmul.f32 %v9339, %v9347
    %v9360 = vmul.f32 %v9340, %v9347
    %v9361 = vmul.f32 %v9341, %v9347
    %v9362 = vmul.f32 %v9342, %v9347
    %v9363 = vmul.f32 %v9343, %v9347
    %v9364 = vlaneseq
    %v9365 = vshrl.u32 %v9364, 7
    %v9366 = vsub.s32 1, %v9365
    %v9367 = vrot.slane %v9167, %v9366
    %v9368 = vadd.f32 %v9348, %v9367
    %v9369 = vadd.f32 %v9349, %v9367
    %v9370 = vadd.f32 %v9350, %v9367
    %v9371 = vadd.f32 %v9351, %v9367
    %v9372 = vadd.f32 %v9352, %v9367
    %v9373 = vadd.f32 %v9353, %v9367
    %v9374 = vadd.f32 %v9354, %v9367
    %v9375 = vadd.f32 %v9355, %v9367
    %v9376 = vadd.f32 %v9356, %v9367
    %v9377 = vadd.f32 %v9357, %v9367
    %v9378 = vadd.f32 %v9358, %v9367
    %v9379 = vadd.f32 %v9359, %v9367
    %v9380 = vadd.f32 %v9360, %v9367
    %v9381 = vadd.f32 %v9361, %v9367
    %v9382 = vadd.f32 %v9362, %v9367
    %v9383 = vadd.f32 %v9363, %v9367
    %v9384 = vpack.c.bf16 %v9369, %v9368
    %v9385 = vpack.c.bf16 %v9371, %v9370
    %v9386 = vpack.c.bf16 %v9373, %v9372
    %v9387 = vpack.c.bf16 %v9375, %v9374
    %v9388 = vpack.c.bf16 %v9377, %v9376
    %v9389 = vpack.c.bf16 %v9379, %v9378
    %v9390 = vpack.c.bf16 %v9381, %v9380
    %v9391 = vpack.c.bf16 %v9383, %v9382
    %v9392 = vld [vmem:[#allocation13] sm:$0xf]
    %v9393 = vld [vmem:[#allocation13 + $0x4] sm:$0xf]
    %v9394 = vld [vmem:[#allocation13 + $0x8] sm:$0xf]
    %v9395 = vld [vmem:[#allocation13 + $0xc] sm:$0xf]
    %v9396 = vld [vmem:[#allocation13 + $0x10] sm:$0xf]
    %v9397 = vld [vmem:[#allocation13 + $0x14] sm:$0xf]
    %v9398 = vld [vmem:[#allocation13 + $0x18] sm:$0xf]
    %v9399 = vld [vmem:[#allocation13 + $0x1c] sm:$0xf]
    %v9400 = vld [vmem:[#allocation13 + $0x20] sm:$0xf]
    %v9401 = vld [vmem:[#allocation13 + $0x24] sm:$0xf]
    %v9402 = vld [vmem:[#allocation13 + $0x28] sm:$0xf]
    %v9403 = vld [vmem:[#allocation13 + $0x2c] sm:$0xf]
    %v9404 = vld [vmem:[#allocation13 + $0x30] sm:$0xf]
    %v9405 = vld [vmem:[#allocation13 + $0x34] sm:$0xf]
    %v9406 = vld [vmem:[#allocation13 + $0x38] sm:$0xf]
    %v9407 = vld [vmem:[#allocation13 + $0x3c] sm:$0xf]
    %v9408 = vld [vmem:[%s12] sm:$0x1]
    %v9410 = vlaneseq
    %v9411 = vshrl.u32 %v9410, 7
    %v9412 = vsub.s32 0, %v9411
    %v9413 = vrot.slane %v9408, %v9412
    %v9431 = vunpack.c.l.b16 %v9392
    %v9432 = vunpack.c.l.b16 %v9393
    %v9433 = vunpack.c.l.b16 %v9394
    %v9434 = vunpack.c.l.b16 %v9395
    %v9435 = vunpack.c.l.b16 %v9396
    %v9436 = vunpack.c.l.b16 %v9397
    %v9437 = vunpack.c.l.b16 %v9398
    %v9438 = vunpack.c.l.b16 %v9399
    %v9439 = vunpack.c.l.b16 %v9400
    %v9440 = vunpack.c.l.b16 %v9401
    %v9441 = vunpack.c.l.b16 %v9402
    %v9442 = vunpack.c.l.b16 %v9403
    %v9443 = vunpack.c.l.b16 %v9404
    %v9444 = vunpack.c.l.b16 %v9405
    %v9445 = vunpack.c.l.b16 %v9406
    %v9446 = vunpack.c.l.b16 %v9407
    %v9447 = vpack.c.b16 %v9432, %v9431
    %v9448 = vpack.c.b16 %v9434, %v9433
    %v9449 = vpack.c.b16 %v9436, %v9435
    %v9450 = vpack.c.b16 %v9438, %v9437
    %v9451 = vpack.c.b16 %v9440, %v9439
    %v9452 = vpack.c.b16 %v9442, %v9441
    %v9453 = vpack.c.b16 %v9444, %v9443
    %v9454 = vpack.c.b16 %v9446, %v9445
    %9463 = vmatprep.subr.bf16.mxu0 0
    %9464 = vmatpush1.bf16.msra.mxu0 %v9447
    %9465 = vmatprep.subr.bf16.mxu0 0
    %9466 = vmatpush1.bf16.msra.mxu0 %v9448
    %9467 = vmatprep.subr.bf16.mxu0 0
    %9468 = vmatpush1.bf16.msra.mxu0 %v9449
    %9469 = vmatprep.subr.bf16.mxu0 0
    %9470 = vmatpush1.bf16.msra.mxu0 %v9450
    %9471 = vmatprep.subr.bf16.mxu0 0
    %9472 = vmatpush1.bf16.msra.mxu0 %v9451
    %9473 = vmatprep.subr.bf16.mxu0 0
    %9474 = vmatpush1.bf16.msra.mxu0 %v9452
    %9475 = vmatprep.subr.bf16.mxu0 0
    %9476 = vmatpush1.bf16.msra.mxu0 %v9453
    %9477 = vmatprep.subr.bf16.mxu0 0
    %9478 = vmatpush1.bf16.msra.mxu0 %v9454
    %9479 = vmatprep.subr.bf16.mxu0 0
    %9480 = vmatpush1.bf16.msra.mxu0 0
    %9481 = vmatprep.subr.bf16.mxu0 0
    %9482 = vmatpush1.bf16.msra.mxu0 0
    %9483 = vmatprep.subr.bf16.mxu0 0
    %9484 = vmatpush1.bf16.msra.mxu0 0
    %9485 = vmatprep.subr.bf16.mxu0 0
    %9486 = vmatpush1.bf16.msra.mxu0 0
    %9487 = vmatprep.subr.bf16.mxu0 0
    %9488 = vmatpush1.bf16.msra.mxu0 0
    %9489 = vmatprep.subr.bf16.mxu0 0
    %9490 = vmatpush1.bf16.msra.mxu0 0
    %9491 = vmatprep.subr.bf16.mxu0 0
    %9492 = vmatpush1.bf16.msra.mxu0 0
    %9493 = vmatprep.subr.bf16.mxu0 0
    %9494 = vmatpush1.bf16.msra.mxu0 0
    %9495 = vmatprep.mubr.bf16.mxu0 0
    %9496 = vmatmul.mubr.bf16.gmra.mrb[0].mxu0 %v9384
    %v9497 = vpop.f32.mrb[0].mxu0
    %v9498 = vadd.f32 %v9413, %v9497
    %v9499 = vpop.f32.mrb[0].mxu0
    %v9500 = vpop.f32.mrb[0].mxu0
    %v9501 = vadd.f32 %v9413, %v9500
    %v9502 = vpop.f32.mrb[0].mxu0
    %9503 = vmatprep.mubr.bf16.mxu0 0
    %9504 = vmatmul.mubr.bf16.gmra.mrb[0].mxu0 %v9385
    %v9505 = vpop.f32.mrb[0].mxu0
    %v9506 = vadd.f32 %v9413, %v9505
    %v9507 = vpop.f32.mrb[0].mxu0
    %v9508 = vpop.f32.mrb[0].mxu0
    %v9509 = vadd.f32 %v9413, %v9508
    %v9510 = vpop.f32.mrb[0].mxu0
    %9511 = vmatprep.mubr.bf16.mxu0 0
    %9512 = vmatmul.mubr.bf16.gmra.mrb[0].mxu0 %v9386
    %v9513 = vpop.f32.mrb[0].mxu0
    %v9514 = vadd.f32 %v9413, %v9513
    %v9515 = vpop.f32.mrb[0].mxu0
    %v9516 = vpop.f32.mrb[0].mxu0
    %v9517 = vadd.f32 %v9413, %v9516
    %v9518 = vpop.f32.mrb[0].mxu0
    %9519 = vmatprep.mubr.bf16.mxu0 0
    %9520 = vmatmul.mubr.bf16.gmra.mrb[0].mxu0 %v9387
    %v9521 = vpop.f32.mrb[0].mxu0
    %v9522 = vadd.f32 %v9413, %v9521
    %v9523 = vpop.f32.mrb[0].mxu0
    %v9524 = vpop.f32.mrb[0].mxu0
    %v9525 = vadd.f32 %v9413, %v9524
    %v9526 = vpop.f32.mrb[0].mxu0
    %9527 = vmatprep.mubr.bf16.mxu0 0
    %9528 = vmatmul.mubr.bf16.gmra.mrb[0].mxu0 %v9388
    %v9529 = vpop.f32.mrb[0].mxu0
    %v9530 = vadd.f32 %v9413, %v9529
    %v9531 = vpop.f32.mrb[0].mxu0
    %v9532 = vpop.f32.mrb[0].mxu0
    %v9533 = vadd.f32 %v9413, %v9532
    %v9534 = vpop.f32.mrb[0].mxu0
    %9535 = vmatprep.mubr.bf16.mxu0 0
    %9536 = vmatmul.mubr.bf16.gmra.mrb[0].mxu0 %v9389
    %v9537 = vpop.f32.mrb[0].mxu0
    %v9538 = vadd.f32 %v9413, %v9537
    %v9539 = vpop.f32.mrb[0].mxu0
    %v9540 = vpop.f32.mrb[0].mxu0
    %v9541 = vadd.f32 %v9413, %v9540
    %v9542 = vpop.f32.mrb[0].mxu0
    %9543 = vmatprep.mubr.bf16.mxu0 0
    %9544 = vmatmul.mubr.bf16.gmra.mrb[0].mxu0 %v9390
    %v9545 = vpop.f32.mrb[0].mxu0
    %v9546 = vadd.f32 %v9413, %v9545
    %v9547 = vpop.f32.mrb[0].mxu0
    %v9548 = vpop.f32.mrb[0].mxu0
    %v9549 = vadd.f32 %v9413, %v9548
    %v9550 = vpop.f32.mrb[0].mxu0
    %9551 = vmatprep.mubr.bf16.mxu0 0
    %9552 = vmatmul.mubr.bf16.gmra.mrb[0].mxu0 %v9391
    %v9553 = vpop.f32.mrb[0].mxu0
    %v9554 = vadd.f32 %v9413, %v9553
    %v9555 = vpop.f32.mrb[0].mxu0
    %v9556 = vpop.f32.mrb[0].mxu0
    %v9557 = vadd.f32 %v9413, %v9556
    %v9558 = vpop.f32.mrb[0].mxu0
    %9559 = vdwg.mxu0
    %9560 = vst [vmem:[#allocation14] sm:$0xff] %v9498
    %9561 = vst [vmem:[#allocation14 + $0x8] sm:$0xff] %v9501
    %9562 = vst [vmem:[#allocation14 + $0x10] sm:$0xff] %v9506
    %9563 = vst [vmem:[#allocation14 + $0x18] sm:$0xff] %v9509
    %9564 = vst [vmem:[#allocation14 + $0x20] sm:$0xff] %v9514
    %9565 = vst [vmem:[#allocation14 + $0x28] sm:$0xff] %v9517
    %9566 = vst [vmem:[#allocation14 + $0x30] sm:$0xff] %v9522
    %9567 = vst [vmem:[#allocation14 + $0x38] sm:$0xff] %v9525
    %9568 = vst [vmem:[#allocation14 + $0x40] sm:$0xff] %v9530
    %9569 = vst [vmem:[#allocation14 + $0x48] sm:$0xff] %v9533
    %9570 = vst [vmem:[#allocation14 + $0x50] sm:$0xff] %v9538
    %9571 = vst [vmem:[#allocation14 + $0x58] sm:$0xff] %v9541
    %9572 = vst [vmem:[#allocation14 + $0x60] sm:$0xff] %v9546
    %9573 = vst [vmem:[#allocation14 + $0x68] sm:$0xff] %v9549
    %9574 = vst [vmem:[#allocation14 + $0x70] sm:$0xff] %v9554
    %9575 = vst [vmem:[#allocation14 + $0x78] sm:$0xff] %v9557
    // Predicated region
    $region82: #{tpu_custom_call.1} parent=1 // pred_check
      _
    $region83: #{tpu_custom_call.1} parent=1 // pred_check_branch
      %9577 = sbr.rel (0) target = $region85
    $region84: #{tpu_custom_call.1} parent=1 // pred_region
      %s9579 = ssub.s32 2048, 2048
      %9580 = vsyncadd [#allocation4], %s9579
      %s9581 = sshll.u32 [#allocation14], 4
      %s9582 = int_to_ptr.vmem [resolvable:$true] %s9581
      %9587 = dma.vmem_to_hbm [thread:$0]  %s9582, 2048, %s13, [#allocation4], 128, 128, 8
    $region85: #{tpu_custom_call.1} parent=1 // pred_fallthru
      _
    // Predicated region
    $region86: #{tpu_custom_call.1} parent=1 // pred_check
      _
    $region87: #{tpu_custom_call.1} parent=1 // pred_check_branch
      %9589 = sbr.rel (0) target = $region89
    $region88: #{tpu_custom_call.1} parent=1 // pred_region
      %9590 = dma.done [#allocation4], 2048
    $region89: #{tpu_custom_call.1} parent=1 // pred_fallthru
      _
    %9591 = vsyncpa [#allocation3], 1
    %9592 = vsyncpa [#allocation6], 1
    %9593 = vsyncpa [#allocation9], 1
    %9594 = vsyncpa [#allocation12], 1
    %9595 = vsyncpa [#allocation4], 1

</llo_original>
